<compile_context>
chip_gen: v6e
topology: v6e:2x2x1
jax: 0.10.0
libtpu: 0.0.40
codegen_flags: <defaults>
</compile_context>

<pallas_src>
import functools

import jax
import jax.numpy as jnp
from jax import lax
from jax.experimental import pallas as pl
from jax.experimental.pallas import tpu as pltpu

DQN_A = 4
KSIZE = 5
STRIDE = 2
BN_EPS = 1e-5


def conv_out_size(s, k=KSIZE, stride=STRIDE):
    return (s - k) // stride + 1


# ---------------------------------------------------------------------------
# Pallas kernel: single-step fused matmul  y = relu?(x @ w + bias)
#   bf16 operands -> MXU, f32 accumulation, f32 epilogue (v5e has no bf16 VPU),
#   cast on store.
# ---------------------------------------------------------------------------
def fused_matmul_kernel(x_ref, w_ref, bias_ref, o_ref, *, apply_relu):
    acc = jnp.dot(x_ref[...], w_ref[...], preferred_element_type=jnp.float32)
    y = acc + bias_ref[...]
    if apply_relu:
        y = jnp.maximum(y, 0.0)
    o_ref[...] = y.astype(o_ref.dtype)


def fused_matmul(x, w, bias, *, apply_relu, out_dtype):
    """y[m, n] = relu?( sum_k x[m,k] w[k,n] + bias[n] ), one grid step."""
    M, K = x.shape
    K2, N = w.shape
    assert K == K2 and bias.shape == (1, N)
    return pl.pallas_call(
        functools.partial(fused_matmul_kernel, apply_relu=apply_relu),
        out_shape=jax.ShapeDtypeStruct((M, N), out_dtype),
        grid_spec=pltpu.PrefetchScalarGridSpec(
            num_scalar_prefetch=0,
            grid=(1,),
            in_specs=[
                pl.BlockSpec((M, K), lambda i: (0, 0)),   # full-extent blocks:
                pl.BlockSpec((K, N), lambda i: (0, 0)),   # no padding copies
                pl.BlockSpec((1, N), lambda i: (0, 0)),
            ],
            out_specs=pl.BlockSpec((M, N), lambda i: (0, 0)),
        ),
        compiler_params=pltpu.CompilerParams(
            dimension_semantics=("arbitrary",)),
    )(x, w, bias)


# ---------------------------------------------------------------------------
# XLA glue: im2col patch extraction (static slicing, NHWC, bf16)
# ---------------------------------------------------------------------------
def im2col(x_nhwc, k=KSIZE, stride=STRIDE):
    B, H, W, C = x_nhwc.shape
    Ho = conv_out_size(H)
    Wo = conv_out_size(W)
    cols = []
    for i in range(k):
        for j in range(k):
            cols.append(
                x_nhwc[:, i:i + stride * Ho:stride, j:j + stride * Wo:stride, :])
    p = jnp.stack(cols, axis=3)               # (B, Ho, Wo, k*k, C) -- (kh,kw) major
    return p.reshape(B * Ho * Wo, k * k * C), (B, Ho, Wo)


def conv_bn_relu(x_nhwc, layer_prep):
    w_mat, bias = layer_prep                  # (k*k*Cin, Cout) bf16, (1, Cout) f32
    cols, (B, Ho, Wo) = im2col(x_nhwc)
    y = fused_matmul(cols, w_mat, bias, apply_relu=True, out_dtype=jnp.bfloat16)
    return y.reshape(B, Ho, Wo, w_mat.shape[1])


def dqn_forward(prep, x_nchw):
    # NCHW f32 -> NHWC bf16 once at the top (bf16 MXU operands, half DMA bytes).
    x = jnp.transpose(x_nchw, (0, 2, 3, 1)).astype(jnp.bfloat16)
    x = conv_bn_relu(x, prep["layer1"])
    x = conv_bn_relu(x, prep["layer2"])
    x = conv_bn_relu(x, prep["layer3"])
    # Head weight rows were pre-permuted to NHWC flatten order -> direct flatten.
    feat = x.reshape(x.shape[0], -1)          # (B, 448*dqn_a) = (B, 1792)
    return fused_matmul(feat, prep["head_w"], prep["head_b"],
                        apply_relu=False, out_dtype=jnp.float32)


# ---------------------------------------------------------------------------
# One-time parameter prep (outside jit): fold BN, transpose, permute, cast bf16
# ---------------------------------------------------------------------------
def prepare_params(params, input_hw):
    def prep_conv(w_oihw, conv_b, gamma, beta, mean, var):
        c_out = w_oihw.shape[0]
        bn_scale = gamma / jnp.sqrt(var + BN_EPS)
        # PyTorch (O,I,kh,kw) -> (kh,kw,I,O) -> (kh*kw*I, O); fold BN scale in.
        w_mat = jnp.transpose(w_oihw, (2, 3, 1, 0)).reshape(-1, c_out)
        w_mat = (w_mat * bn_scale[None, :]).astype(jnp.bfloat16)
        bias = ((conv_b - mean) * bn_scale + beta).astype(jnp.float32)
        return (w_mat, bias.reshape(1, c_out))

    prep = {
        "layer1": prep_conv(*params["layer1"]),
        "layer2": prep_conv(*params["layer2"]),
        "layer3": prep_conv(*params["layer3"]),
    }
    # PyTorch flattens NCHW (C,H,W); activations here are NHWC (H,W,C):
    # permute head weight columns once so feat can be a plain NHWC flatten.
    H, W = input_hw
    for _ in range(3):
        H, W = conv_out_size(H), conv_out_size(W)
    C3 = params["layer3"][0].shape[0]
    hw = params["head_w"]                                          # (2, C3*H*W)
    hw = hw.reshape(2, C3, H, W).transpose(0, 2, 3, 1).reshape(2, -1)
    prep["head_w"] = jnp.transpose(hw).astype(jnp.bfloat16)        # (H*W*C3, 2)
    prep["head_b"] = params["head_b"].astype(jnp.float32).reshape(1, -1)
    return prep


# ---------------------------------------------------------------------------
# Deterministic parameter init (shapes from DQN.__init__ with dqn_a = 4)
# ---------------------------------------------------------------------------
def init_params(key):
    def conv_layer(k, cin, cout):
        k1, k2, k3, k4, k5, k6 = jax.random.split(k, 6)
        w = 0.05 * jax.random.normal(k1, (cout, cin, KSIZE, KSIZE), jnp.float32)
        b = 0.05 * jax.random.normal(k2, (cout,), jnp.float32)
        gamma = 1.0 + 0.1 * jax.random.normal(k3, (cout,), jnp.float32)
        beta = 0.1 * jax.random.normal(k4, (cout,), jnp.float32)
        mean = 0.1 * jax.random.normal(k5, (cout,), jnp.float32)
        var = jnp.abs(jax.random.normal(k6, (cout,), jnp.float32)) + 0.5
        return (w, b, gamma, beta, mean, var)

    k1, k2, k3, k4, k5 = jax.random.split(key, 5)
    return {
        "layer1": conv_layer(k1, 3, 16 * DQN_A),
        "layer2": conv_layer(k2, 16 * DQN_A, 32 * DQN_A),
        "layer3": conv_layer(k3, 32 * DQN_A, 32 * DQN_A),
        "head_w": 0.02 * jax.random.normal(k4, (2, 448 * DQN_A), jnp.float32),
        "head_b": 0.02 * jax.random.normal(k5, (2,), jnp.float32),
    }


# ---------------------------------------------------------------------------
# Pure-JAX reference (lax.conv, NCHW, f32) for correctness checking
# ---------------------------------------------------------------------------
def reference_forward(params, x_nchw):
    def layer(x, w, b, gamma, beta, mean, var):
        y = lax.conv_general_dilated(
            x, w, (STRIDE, STRIDE), "VALID",
            dimension_numbers=("NCHW", "OIHW", "NCHW"))
        y = y + b[None, :, None, None]
        scale = gamma / jnp.sqrt(var + BN_EPS)
        y = (y - mean[None, :, None, None]) * scale[None, :, None, None] \
            + beta[None, :, None, None]
        return jnp.maximum(y, 0.0)

    x = layer(x_nchw, *params["layer1"])
    x = layer(x, *params["layer2"])
    x = layer(x, *params["layer3"])
    feat = x.reshape(x.shape[0], -1)
    return feat @ params["head_w"].T + params["head_b"]


if __name__ == "__main__":
    key = jax.random.PRNGKey(0)
    pkey, xkey = jax.random.split(key)
    params = init_params(pkey)

    # Input: batch=2, NCHW, 3x40x80 screen (gives 448*dqn_a = 1792 head features).
    x = jax.random.normal(xkey, (2, 3, 40, 80), jnp.float32)

    prep = prepare_params(params, (40, 80))   # one-time, outside jit

    out = jax.block_until_ready(jax.jit(dqn_forward)(prep, x))
    assert out.shape == (2, 2), out.shape

    ref = jax.block_until_ready(reference_forward(params, x))
    max_err = float(jnp.max(jnp.abs(out - ref)))
    scale = float(jnp.max(jnp.abs(ref))) + 1.0
    assert jnp.all(jnp.isfinite(out)), "non-finite output"
    assert max_err <= 5e-2 * scale, f"mismatch vs reference: {max_err}"

    print("KERNEL_OK")
</pallas_src>

<mosaic_0001>
module attributes {stable_mosaic.version = 11 : i64} {
  func.func @fused_matmul_kernel(%arg0: i32, %arg1: memref<1368x75xbf16, #tpu.memory_space<vmem>>, %arg2: memref<75x64xbf16, #tpu.memory_space<vmem>>, %arg3: memref<1x64xf32, #tpu.memory_space<vmem>>, %arg4: memref<1368x64xbf16, #tpu.memory_space<vmem>>) attributes {dimension_semantics = [#tpu.dimension_semantics<arbitrary>], iteration_bounds = array<i64: 1>, scalar_prefetch = 0 : i64, scratch_operands = 0 : i64, tpu.core_type = #tpu.core_type<tc>, window_params = [{pipeline_mode = #tpu.pipeline_mode<synchronous>, transform_indices = @transform_0, window_bounds = array<i64: 1368, 75>}, {pipeline_mode = #tpu.pipeline_mode<synchronous>, transform_indices = @transform_1, window_bounds = array<i64: 75, 64>}, {pipeline_mode = #tpu.pipeline_mode<synchronous>, transform_indices = @transform_2, window_bounds = array<i64: 1, 64>}, {pipeline_mode = #tpu.pipeline_mode<synchronous>, transform_indices = @transform_3, window_bounds = array<i64: 1368, 64>}]} {
    %c0 = arith.constant 0 : index
    %c0_0 = arith.constant 0 : index
    %0 = vector.load %arg1[%c0, %c0_0] : memref<1368x75xbf16, #tpu.memory_space<vmem>>, vector<1368x75xbf16>
    %c0_1 = arith.constant 0 : index
    %c0_2 = arith.constant 0 : index
    %1 = vector.load %arg2[%c0_1, %c0_2] : memref<75x64xbf16, #tpu.memory_space<vmem>>, vector<75x64xbf16>
    %cst = arith.constant dense<0.000000e+00> : vector<1368x64xf32>
    %2 = tpu.matmul %0, %1, %cst {dimension_numbers = #tpu.dot_dimension_numbers<[1], [0], [0], [1], [0, 0, 1, 1], [], []>} : vector<1368x75xbf16>, vector<75x64xbf16>, vector<1368x64xf32> -> vector<1368x64xf32>
    %c0_3 = arith.constant 0 : index
    %c0_4 = arith.constant 0 : index
    %3 = vector.load %arg3[%c0_3, %c0_4] : memref<1x64xf32, #tpu.memory_space<vmem>>, vector<1x64xf32>
    %4 = vector.broadcast %3 : vector<1x64xf32> to vector<1368x64xf32>
    %5 = arith.addf %2, %4 : vector<1368x64xf32>
    %cst_5 = arith.constant 0.000000e+00 : f32
    %6 = vector.broadcast %cst_5 : f32 to vector<1368x64xf32>
    %7 = arith.maximumf %5, %6 : vector<1368x64xf32>
    %8 = arith.truncf %7 : vector<1368x64xf32> to vector<1368x64xbf16>
    %c0_6 = arith.constant 0 : index
    %c0_7 = arith.constant 0 : index
    %9 = vector.load %arg4[%c0_6, %c0_7] : memref<1368x64xbf16, #tpu.memory_space<vmem>>, vector<1368x64xbf16>
    tpu.vector_store %arg4[%c0_6, %c0_7], %8 {strides = array<i32>} : memref<1368x64xbf16, #tpu.memory_space<vmem>>, vector<1368x64xbf16>,
    return
  }
  func.func @transform_0(%arg0: i32) -> (i32, i32) {
    %c0_i32 = arith.constant 0 : i32
    %c0_i32_0 = arith.constant 0 : i32
    %c0_i32_1 = arith.constant 0 : i32
    return %c0_i32, %c0_i32_0 : i32, i32
  }
  func.func @transform_1(%arg0: i32) -> (i32, i32) {
    %c0_i32 = arith.constant 0 : i32
    %c0_i32_0 = arith.constant 0 : i32
    %c0_i32_1 = arith.constant 0 : i32
    return %c0_i32, %c0_i32_0 : i32, i32
  }
  func.func @transform_2(%arg0: i32) -> (i32, i32) {
    %c0_i32 = arith.constant 0 : i32
    %c0_i32_0 = arith.constant 0 : i32
    %c0_i32_1 = arith.constant 0 : i32
    return %c0_i32, %c0_i32_0 : i32, i32
  }
  func.func @transform_3(%arg0: i32) -> (i32, i32) {
    %c0_i32 = arith.constant 0 : i32
    %c0_i32_0 = arith.constant 0 : i32
    %c0_i32_1 = arith.constant 0 : i32
    return %c0_i32, %c0_i32_0 : i32, i32
  }
}

module attributes {stable_mosaic.version = 11 : i64} {
  func.func @fused_matmul_kernel(%arg0: i32, %arg1: memref<238x1600xbf16, #tpu.memory_space<vmem>>, %arg2: memref<1600x128xbf16, #tpu.memory_space<vmem>>, %arg3: memref<1x128xf32, #tpu.memory_space<vmem>>, %arg4: memref<238x128xbf16, #tpu.memory_space<vmem>>) attributes {dimension_semantics = [#tpu.dimension_semantics<arbitrary>], iteration_bounds = array<i64: 1>, scalar_prefetch = 0 : i64, scratch_operands = 0 : i64, tpu.core_type = #tpu.core_type<tc>, window_params = [{pipeline_mode = #tpu.pipeline_mode<synchronous>, transform_indices = @transform_0, window_bounds = array<i64: 238, 1600>}, {pipeline_mode = #tpu.pipeline_mode<synchronous>, transform_indices = @transform_1, window_bounds = array<i64: 1600, 128>}, {pipeline_mode = #tpu.pipeline_mode<synchronous>, transform_indices = @transform_2, window_bounds = array<i64: 1, 128>}, {pipeline_mode = #tpu.pipeline_mode<synchronous>, transform_indices = @transform_3, window_bounds = array<i64: 238, 128>}]} {
    %c0 = arith.constant 0 : index
    %c0_0 = arith.constant 0 : index
    %0 = vector.load %arg1[%c0, %c0_0] : memref<238x1600xbf16, #tpu.memory_space<vmem>>, vector<238x1600xbf16>
    %c0_1 = arith.constant 0 : index
    %c0_2 = arith.constant 0 : index
    %1 = vector.load %arg2[%c0_1, %c0_2] : memref<1600x128xbf16, #tpu.memory_space<vmem>>, vector<1600x128xbf16>
    %cst = arith.constant dense<0.000000e+00> : vector<238x128xf32>
    %2 = tpu.matmul %0, %1, %cst {dimension_numbers = #tpu.dot_dimension_numbers<[1], [0], [0], [1], [0, 0, 1, 1], [], []>} : vector<238x1600xbf16>, vector<1600x128xbf16>, vector<238x128xf32> -> vector<238x128xf32>
    %c0_3 = arith.constant 0 : index
    %c0_4 = arith.constant 0 : index
    %3 = vector.load %arg3[%c0_3, %c0_4] : memref<1x128xf32, #tpu.memory_space<vmem>>, vector<1x128xf32>
    %4 = vector.broadcast %3 : vector<1x128xf32> to vector<238x128xf32>
    %5 = arith.addf %2, %4 : vector<238x128xf32>
    %cst_5 = arith.constant 0.000000e+00 : f32
    %6 = vector.broadcast %cst_5 : f32 to vector<238x128xf32>
    %7 = arith.maximumf %5, %6 : vector<238x128xf32>
    %8 = arith.truncf %7 : vector<238x128xf32> to vector<238x128xbf16>
    %c0_6 = arith.constant 0 : index
    %c0_7 = arith.constant 0 : index
    %9 = vector.load %arg4[%c0_6, %c0_7] : memref<238x128xbf16, #tpu.memory_space<vmem>>, vector<238x128xbf16>
    tpu.vector_store %arg4[%c0_6, %c0_7], %8 {strides = array<i32>} : memref<238x128xbf16, #tpu.memory_space<vmem>>, vector<238x128xbf16>,
    return
  }
  func.func @transform_0(%arg0: i32) -> (i32, i32) {
    %c0_i32 = arith.constant 0 : i32
    %c0_i32_0 = arith.constant 0 : i32
    %c0_i32_1 = arith.constant 0 : i32
    return %c0_i32, %c0_i32_0 : i32, i32
  }
  func.func @transform_1(%arg0: i32) -> (i32, i32) {
    %c0_i32 = arith.constant 0 : i32
    %c0_i32_0 = arith.constant 0 : i32
    %c0_i32_1 = arith.constant 0 : i32
    return %c0_i32, %c0_i32_0 : i32, i32
  }
  func.func @transform_2(%arg0: i32) -> (i32, i32) {
    %c0_i32 = arith.constant 0 : i32
    %c0_i32_0 = arith.constant 0 : i32
    %c0_i32_1 = arith.constant 0 : i32
    return %c0_i32, %c0_i32_0 : i32, i32
  }
  func.func @transform_3(%arg0: i32) -> (i32, i32) {
    %c0_i32 = arith.constant 0 : i32
    %c0_i32_0 = arith.constant 0 : i32
    %c0_i32_1 = arith.constant 0 : i32
    return %c0_i32, %c0_i32_0 : i32, i32
  }
}

module attributes {stable_mosaic.version = 11 : i64} {
  func.func @fused_matmul_kernel(%arg0: i32, %arg1: memref<28x3200xbf16, #tpu.memory_space<vmem>>, %arg2: memref<3200x128xbf16, #tpu.memory_space<vmem>>, %arg3: memref<1x128xf32, #tpu.memory_space<vmem>>, %arg4: memref<28x128xbf16, #tpu.memory_space<vmem>>) attributes {dimension_semantics = [#tpu.dimension_semantics<arbitrary>], iteration_bounds = array<i64: 1>, scalar_prefetch = 0 : i64, scratch_operands = 0 : i64, tpu.core_type = #tpu.core_type<tc>, window_params = [{pipeline_mode = #tpu.pipeline_mode<synchronous>, transform_indices = @transform_0, window_bounds = array<i64: 28, 3200>}, {pipeline_mode = #tpu.pipeline_mode<synchronous>, transform_indices = @transform_1, window_bounds = array<i64: 3200, 128>}, {pipeline_mode = #tpu.pipeline_mode<synchronous>, transform_indices = @transform_2, window_bounds = array<i64: 1, 128>}, {pipeline_mode = #tpu.pipeline_mode<synchronous>, transform_indices = @transform_3, window_bounds = array<i64: 28, 128>}]} {
    %c0 = arith.constant 0 : index
    %c0_0 = arith.constant 0 : index
    %0 = vector.load %arg1[%c0, %c0_0] : memref<28x3200xbf16, #tpu.memory_space<vmem>>, vector<28x3200xbf16>
    %c0_1 = arith.constant 0 : index
    %c0_2 = arith.constant 0 : index
    %1 = vector.load %arg2[%c0_1, %c0_2] : memref<3200x128xbf16, #tpu.memory_space<vmem>>, vector<3200x128xbf16>
    %cst = arith.constant dense<0.000000e+00> : vector<28x128xf32>
    %2 = tpu.matmul %0, %1, %cst {dimension_numbers = #tpu.dot_dimension_numbers<[1], [0], [0], [1], [0, 0, 1, 1], [], []>} : vector<28x3200xbf16>, vector<3200x128xbf16>, vector<28x128xf32> -> vector<28x128xf32>
    %c0_3 = arith.constant 0 : index
    %c0_4 = arith.constant 0 : index
    %3 = vector.load %arg3[%c0_3, %c0_4] : memref<1x128xf32, #tpu.memory_space<vmem>>, vector<1x128xf32>
    %4 = vector.broadcast %3 : vector<1x128xf32> to vector<28x128xf32>
    %5 = arith.addf %2, %4 : vector<28x128xf32>
    %cst_5 = arith.constant 0.000000e+00 : f32
    %6 = vector.broadcast %cst_5 : f32 to vector<28x128xf32>
    %7 = arith.maximumf %5, %6 : vector<28x128xf32>
    %8 = arith.truncf %7 : vector<28x128xf32> to vector<28x128xbf16>
    %c0_6 = arith.constant 0 : index
    %c0_7 = arith.constant 0 : index
    %9 = vector.load %arg4[%c0_6, %c0_7] : memref<28x128xbf16, #tpu.memory_space<vmem>>, vector<28x128xbf16>
    tpu.vector_store %arg4[%c0_6, %c0_7], %8 {strides = array<i32>} : memref<28x128xbf16, #tpu.memory_space<vmem>>, vector<28x128xbf16>,
    return
  }
  func.func @transform_0(%arg0: i32) -> (i32, i32) {
    %c0_i32 = arith.constant 0 : i32
    %c0_i32_0 = arith.constant 0 : i32
    %c0_i32_1 = arith.constant 0 : i32
    return %c0_i32, %c0_i32_0 : i32, i32
  }
  func.func @transform_1(%arg0: i32) -> (i32, i32) {
    %c0_i32 = arith.constant 0 : i32
    %c0_i32_0 = arith.constant 0 : i32
    %c0_i32_1 = arith.constant 0 : i32
    return %c0_i32, %c0_i32_0 : i32, i32
  }
  func.func @transform_2(%arg0: i32) -> (i32, i32) {
    %c0_i32 = arith.constant 0 : i32
    %c0_i32_0 = arith.constant 0 : i32
    %c0_i32_1 = arith.constant 0 : i32
    return %c0_i32, %c0_i32_0 : i32, i32
  }
  func.func @transform_3(%arg0: i32) -> (i32, i32) {
    %c0_i32 = arith.constant 0 : i32
    %c0_i32_0 = arith.constant 0 : i32
    %c0_i32_1 = arith.constant 0 : i32
    return %c0_i32, %c0_i32_0 : i32, i32
  }
}

module attributes {stable_mosaic.version = 11 : i64} {
  func.func @fused_matmul_kernel(%arg0: i32, %arg1: memref<2x1792xbf16, #tpu.memory_space<vmem>>, %arg2: memref<1792x2xbf16, #tpu.memory_space<vmem>>, %arg3: memref<1x2xf32, #tpu.memory_space<vmem>>, %arg4: memref<2x2xf32, #tpu.memory_space<vmem>>) attributes {dimension_semantics = [#tpu.dimension_semantics<arbitrary>], iteration_bounds = array<i64: 1>, scalar_prefetch = 0 : i64, scratch_operands = 0 : i64, tpu.core_type = #tpu.core_type<tc>, window_params = [{pipeline_mode = #tpu.pipeline_mode<synchronous>, transform_indices = @transform_0, window_bounds = array<i64: 2, 1792>}, {pipeline_mode = #tpu.pipeline_mode<synchronous>, transform_indices = @transform_1, window_bounds = array<i64: 1792, 2>}, {pipeline_mode = #tpu.pipeline_mode<synchronous>, transform_indices = @transform_2, window_bounds = array<i64: 1, 2>}, {pipeline_mode = #tpu.pipeline_mode<synchronous>, transform_indices = @transform_3, window_bounds = array<i64: 2, 2>}]} {
    %c0 = arith.constant 0 : index
    %c0_0 = arith.constant 0 : index
    %0 = vector.load %arg1[%c0, %c0_0] : memref<2x1792xbf16, #tpu.memory_space<vmem>>, vector<2x1792xbf16>
    %c0_1 = arith.constant 0 : index
    %c0_2 = arith.constant 0 : index
    %1 = vector.load %arg2[%c0_1, %c0_2] : memref<1792x2xbf16, #tpu.memory_space<vmem>>, vector<1792x2xbf16>
    %cst = arith.constant dense<0.000000e+00> : vector<2x2xf32>
    %2 = tpu.matmul %0, %1, %cst {dimension_numbers = #tpu.dot_dimension_numbers<[1], [0], [0], [1], [0, 0, 1, 1], [], []>} : vector<2x1792xbf16>, vector<1792x2xbf16>, vector<2x2xf32> -> vector<2x2xf32>
    %c0_3 = arith.constant 0 : index
    %c0_4 = arith.constant 0 : index
    %3 = vector.load %arg3[%c0_3, %c0_4] : memref<1x2xf32, #tpu.memory_space<vmem>>, vector<1x2xf32>
    %4 = vector.broadcast %3 : vector<1x2xf32> to vector<2x2xf32>
    %5 = arith.addf %2, %4 : vector<2x2xf32>
    %c0_5 = arith.constant 0 : index
    %c0_6 = arith.constant 0 : index
    %6 = vector.load %arg4[%c0_5, %c0_6] : memref<2x2xf32, #tpu.memory_space<vmem>>, vector<2x2xf32>
    tpu.vector_store %arg4[%c0_5, %c0_6], %5 {strides = array<i32>} : memref<2x2xf32, #tpu.memory_space<vmem>>, vector<2x2xf32>,
    return
  }
  func.func @transform_0(%arg0: i32) -> (i32, i32) {
    %c0_i32 = arith.constant 0 : i32
    %c0_i32_0 = arith.constant 0 : i32
    %c0_i32_1 = arith.constant 0 : i32
    return %c0_i32, %c0_i32_0 : i32, i32
  }
  func.func @transform_1(%arg0: i32) -> (i32, i32) {
    %c0_i32 = arith.constant 0 : i32
    %c0_i32_0 = arith.constant 0 : i32
    %c0_i32_1 = arith.constant 0 : i32
    return %c0_i32, %c0_i32_0 : i32, i32
  }
  func.func @transform_2(%arg0: i32) -> (i32, i32) {
    %c0_i32 = arith.constant 0 : i32
    %c0_i32_0 = arith.constant 0 : i32
    %c0_i32_1 = arith.constant 0 : i32
    return %c0_i32, %c0_i32_0 : i32, i32
  }
  func.func @transform_3(%arg0: i32) -> (i32, i32) {
    %c0_i32 = arith.constant 0 : i32
    %c0_i32_0 = arith.constant 0 : i32
    %c0_i32_1 = arith.constant 0 : i32
    return %c0_i32, %c0_i32_0 : i32, i32
  }
}

</mosaic_0001>

<llo_original>
// kernel: dqn_forward.4
$region0: #{dqn_forward.4}
  #allocation0 [shape = 'u32[]', space=smem, size = 0x4, offset = 0x4, fixed_abs, tag = 'smem constant byte address 0x4 - core index']
  #allocation1 [shape = 'u32[144,128]{1,0:T(1,128)}', space=vmem, size = 0x12000, scoped, tag = 'internal scratch']
  %s0 = inlined_call_operand.vmem [shape: bf16[1368,75], index: 0, kind: input, shape index: {}]
  %s1 = inlined_call_operand.vmem [shape: bf16[75,64], index: 1, kind: input, shape index: {}]
  %s2 = inlined_call_operand.vmem [shape: f32[1,64], index: 2, kind: input, shape index: {}]
  %s3 = inlined_call_operand.vmem [shape: bf16[1368,64], index: 3, kind: output, shape index: {}]
  %s4 = sld [smem:[#allocation0]]
  $region22: #{dqn_forward.4} parent=0
    _
  %s6 = ssub.s32 1, %s4
  %s7 = scalar_select 0, %s6, %s4
  // Predicated region
  $region2: #{dqn_forward.4} parent=0 // pred_check
    _
  $region3: #{dqn_forward.4} parent=0 // pred_check_branch
    %9 = sbr.rel (0) target = $region5
  $region4: #{dqn_forward.4} parent=0 // pred_region
    _
  $region5: #{dqn_forward.4} parent=0 // pred_fallthru
    _
  // Predicated region
  $region6: #{dqn_forward.4} parent=0 // pred_check
    _
  $region7: #{dqn_forward.4} parent=0 // pred_check_branch
    %11 = sbr.rel (0) target = $region9
  $region8: #{dqn_forward.4} parent=0 // pred_region
    _
  $region9: #{dqn_forward.4} parent=0 // pred_fallthru
    _
  // Predicated region
  $region10: #{dqn_forward.4} parent=0 // pred_check
    _
  $region11: #{dqn_forward.4} parent=0 // pred_check_branch
    %13 = sbr.rel (0) target = $region13
  $region12: #{dqn_forward.4} parent=0 // pred_region
    _
  $region13: #{dqn_forward.4} parent=0 // pred_fallthru
    _
  %v15 = vld [vmem:[%s0] sm:$0xf]
  %v16 = vld [vmem:[%s0 + $0x4] sm:$0xf]
  %v17 = vld [vmem:[%s0 + $0x8] sm:$0xf]
  %v18 = vld [vmem:[%s0 + $0xc] sm:$0xf]
  %v19 = vld [vmem:[%s0 + $0x10] sm:$0xf]
  %v20 = vld [vmem:[%s0 + $0x14] sm:$0xf]
  %v21 = vld [vmem:[%s0 + $0x18] sm:$0xf]
  %v22 = vld [vmem:[%s0 + $0x1c] sm:$0xf]
  %v23 = vld [vmem:[%s0 + $0x20] sm:$0xf]
  %v24 = vld [vmem:[%s0 + $0x24] sm:$0xf]
  %v25 = vld [vmem:[%s0 + $0x28] sm:$0xf]
  %v26 = vld [vmem:[%s0 + $0x2c] sm:$0xf]
  %v27 = vld [vmem:[%s0 + $0x30] sm:$0xf]
  %v28 = vld [vmem:[%s0 + $0x34] sm:$0xf]
  %v29 = vld [vmem:[%s0 + $0x38] sm:$0xf]
  %v30 = vld [vmem:[%s0 + $0x3c] sm:$0xf]
  %v31 = vld [vmem:[%s0 + $0x40] sm:$0xf]
  %v32 = vld [vmem:[%s0 + $0x44] sm:$0xf]
  %v33 = vld [vmem:[%s0 + $0x48] sm:$0xf]
  %v34 = vld [vmem:[%s0 + $0x4c] sm:$0xf]
  %v35 = vld [vmem:[%s0 + $0x50] sm:$0xf]
  %v36 = vld [vmem:[%s0 + $0x54] sm:$0xf]
  %v37 = vld [vmem:[%s0 + $0x58] sm:$0xf]
  %v38 = vld [vmem:[%s0 + $0x5c] sm:$0xf]
  %v39 = vld [vmem:[%s0 + $0x60] sm:$0xf]
  %v40 = vld [vmem:[%s0 + $0x64] sm:$0xf]
  %v41 = vld [vmem:[%s0 + $0x68] sm:$0xf]
  %v42 = vld [vmem:[%s0 + $0x6c] sm:$0xf]
  %v43 = vld [vmem:[%s0 + $0x70] sm:$0xf]
  %v44 = vld [vmem:[%s0 + $0x74] sm:$0xf]
  %v45 = vld [vmem:[%s0 + $0x78] sm:$0xf]
  %v46 = vld [vmem:[%s0 + $0x7c] sm:$0xf]
  %v47 = vld [vmem:[%s0 + $0x80] sm:$0xf]
  %v48 = vld [vmem:[%s0 + $0x84] sm:$0xf]
  %v49 = vld [vmem:[%s0 + $0x88] sm:$0xf]
  %v50 = vld [vmem:[%s0 + $0x8c] sm:$0xf]
  %v51 = vld [vmem:[%s0 + $0x90] sm:$0xf]
  %v52 = vld [vmem:[%s0 + $0x94] sm:$0xf]
  %v53 = vld [vmem:[%s0 + $0x98] sm:$0xf]
  %v54 = vld [vmem:[%s0 + $0x9c] sm:$0xf]
  %v55 = vld [vmem:[%s0 + $0xa0] sm:$0xf]
  %v56 = vld [vmem:[%s0 + $0xa4] sm:$0xf]
  %v57 = vld [vmem:[%s0 + $0xa8] sm:$0xf]
  %v58 = vld [vmem:[%s0 + $0xac] sm:$0xf]
  %v59 = vld [vmem:[%s0 + $0xb0] sm:$0xf]
  %v60 = vld [vmem:[%s0 + $0xb4] sm:$0xf]
  %v61 = vld [vmem:[%s0 + $0xb8] sm:$0xf]
  %v62 = vld [vmem:[%s0 + $0xbc] sm:$0xf]
  %v63 = vld [vmem:[%s0 + $0xc0] sm:$0xf]
  %v64 = vld [vmem:[%s0 + $0xc4] sm:$0xf]
  %v65 = vld [vmem:[%s0 + $0xc8] sm:$0xf]
  %v66 = vld [vmem:[%s0 + $0xcc] sm:$0xf]
  %v67 = vld [vmem:[%s0 + $0xd0] sm:$0xf]
  %v68 = vld [vmem:[%s0 + $0xd4] sm:$0xf]
  %v69 = vld [vmem:[%s0 + $0xd8] sm:$0xf]
  %v70 = vld [vmem:[%s0 + $0xdc] sm:$0xf]
  %v71 = vld [vmem:[%s0 + $0xe0] sm:$0xf]
  %v72 = vld [vmem:[%s0 + $0xe4] sm:$0xf]
  %v73 = vld [vmem:[%s0 + $0xe8] sm:$0xf]
  %v74 = vld [vmem:[%s0 + $0xec] sm:$0xf]
  %v75 = vld [vmem:[%s0 + $0xf0] sm:$0xf]
  %v76 = vld [vmem:[%s0 + $0xf4] sm:$0xf]
  %v77 = vld [vmem:[%s0 + $0xf8] sm:$0xf]
  %v78 = vld [vmem:[%s0 + $0xfc] sm:$0xf]
  %v79 = vld [vmem:[%s0 + $0x100] sm:$0xf]
  %v80 = vld [vmem:[%s0 + $0x104] sm:$0xf]
  %v81 = vld [vmem:[%s0 + $0x108] sm:$0xf]
  %v82 = vld [vmem:[%s0 + $0x10c] sm:$0xf]
  %v83 = vld [vmem:[%s0 + $0x110] sm:$0xf]
  %v84 = vld [vmem:[%s0 + $0x114] sm:$0xf]
  %v85 = vld [vmem:[%s0 + $0x118] sm:$0xf]
  %v86 = vld [vmem:[%s0 + $0x11c] sm:$0xf]
  %v87 = vld [vmem:[%s0 + $0x120] sm:$0xf]
  %v88 = vld [vmem:[%s0 + $0x124] sm:$0xf]
  %v89 = vld [vmem:[%s0 + $0x128] sm:$0xf]
  %v90 = vld [vmem:[%s0 + $0x12c] sm:$0xf]
  %v91 = vld [vmem:[%s0 + $0x130] sm:$0xf]
  %v92 = vld [vmem:[%s0 + $0x134] sm:$0xf]
  %v93 = vld [vmem:[%s0 + $0x138] sm:$0xf]
  %v94 = vld [vmem:[%s0 + $0x13c] sm:$0xf]
  %v95 = vld [vmem:[%s0 + $0x140] sm:$0xf]
  %v96 = vld [vmem:[%s0 + $0x144] sm:$0xf]
  %v97 = vld [vmem:[%s0 + $0x148] sm:$0xf]
  %v98 = vld [vmem:[%s0 + $0x14c] sm:$0xf]
  %v99 = vld [vmem:[%s0 + $0x150] sm:$0xf]
  %v100 = vld [vmem:[%s0 + $0x154] sm:$0xf]
  %v101 = vld [vmem:[%s0 + $0x158] sm:$0xf]
  %v102 = vld [vmem:[%s0 + $0x15c] sm:$0xf]
  %v103 = vld [vmem:[%s0 + $0x160] sm:$0xf]
  %v104 = vld [vmem:[%s0 + $0x164] sm:$0xf]
  %v105 = vld [vmem:[%s0 + $0x168] sm:$0xf]
  %v106 = vld [vmem:[%s0 + $0x16c] sm:$0xf]
  %v107 = vld [vmem:[%s0 + $0x170] sm:$0xf]
  %v108 = vld [vmem:[%s0 + $0x174] sm:$0xf]
  %v109 = vld [vmem:[%s0 + $0x178] sm:$0xf]
  %v110 = vld [vmem:[%s0 + $0x17c] sm:$0xf]
  %v111 = vld [vmem:[%s0 + $0x180] sm:$0xf]
  %v112 = vld [vmem:[%s0 + $0x184] sm:$0xf]
  %v113 = vld [vmem:[%s0 + $0x188] sm:$0xf]
  %v114 = vld [vmem:[%s0 + $0x18c] sm:$0xf]
  %v115 = vld [vmem:[%s0 + $0x190] sm:$0xf]
  %v116 = vld [vmem:[%s0 + $0x194] sm:$0xf]
  %v117 = vld [vmem:[%s0 + $0x198] sm:$0xf]
  %v118 = vld [vmem:[%s0 + $0x19c] sm:$0xf]
  %v119 = vld [vmem:[%s0 + $0x1a0] sm:$0xf]
  %v120 = vld [vmem:[%s0 + $0x1a4] sm:$0xf]
  %v121 = vld [vmem:[%s0 + $0x1a8] sm:$0xf]
  %v122 = vld [vmem:[%s0 + $0x1ac] sm:$0xf]
  %v123 = vld [vmem:[%s0 + $0x1b0] sm:$0xf]
  %v124 = vld [vmem:[%s0 + $0x1b4] sm:$0xf]
  %v125 = vld [vmem:[%s0 + $0x1b8] sm:$0xf]
  %v126 = vld [vmem:[%s0 + $0x1bc] sm:$0xf]
  %v127 = vld [vmem:[%s0 + $0x1c0] sm:$0xf]
  %v128 = vld [vmem:[%s0 + $0x1c4] sm:$0xf]
  %v129 = vld [vmem:[%s0 + $0x1c8] sm:$0xf]
  %v130 = vld [vmem:[%s0 + $0x1cc] sm:$0xf]
  %v131 = vld [vmem:[%s0 + $0x1d0] sm:$0xf]
  %v132 = vld [vmem:[%s0 + $0x1d4] sm:$0xf]
  %v133 = vld [vmem:[%s0 + $0x1d8] sm:$0xf]
  %v134 = vld [vmem:[%s0 + $0x1dc] sm:$0xf]
  %v135 = vld [vmem:[%s0 + $0x1e0] sm:$0xf]
  %v136 = vld [vmem:[%s0 + $0x1e4] sm:$0xf]
  %v137 = vld [vmem:[%s0 + $0x1e8] sm:$0xf]
  %v138 = vld [vmem:[%s0 + $0x1ec] sm:$0xf]
  %v139 = vld [vmem:[%s0 + $0x1f0] sm:$0xf]
  %v140 = vld [vmem:[%s0 + $0x1f4] sm:$0xf]
  %v141 = vld [vmem:[%s0 + $0x1f8] sm:$0xf]
  %v142 = vld [vmem:[%s0 + $0x1fc] sm:$0xf]
  %v143 = vld [vmem:[%s0 + $0x200] sm:$0xf]
  %v144 = vld [vmem:[%s0 + $0x204] sm:$0xf]
  %v145 = vld [vmem:[%s0 + $0x208] sm:$0xf]
  %v146 = vld [vmem:[%s0 + $0x20c] sm:$0xf]
  %v147 = vld [vmem:[%s0 + $0x210] sm:$0xf]
  %v148 = vld [vmem:[%s0 + $0x214] sm:$0xf]
  %v149 = vld [vmem:[%s0 + $0x218] sm:$0xf]
  %v150 = vld [vmem:[%s0 + $0x21c] sm:$0xf]
  %v151 = vld [vmem:[%s0 + $0x220] sm:$0xf]
  %v152 = vld [vmem:[%s0 + $0x224] sm:$0xf]
  %v153 = vld [vmem:[%s0 + $0x228] sm:$0xf]
  %v154 = vld [vmem:[%s0 + $0x22c] sm:$0xf]
  %v155 = vld [vmem:[%s0 + $0x230] sm:$0xf]
  %v156 = vld [vmem:[%s0 + $0x234] sm:$0xf]
  %v157 = vld [vmem:[%s0 + $0x238] sm:$0xf]
  %v158 = vld [vmem:[%s0 + $0x23c] sm:$0xf]
  %v159 = vld [vmem:[%s0 + $0x240] sm:$0xf]
  %v160 = vld [vmem:[%s0 + $0x244] sm:$0xf]
  %v161 = vld [vmem:[%s0 + $0x248] sm:$0xf]
  %v162 = vld [vmem:[%s0 + $0x24c] sm:$0xf]
  %v163 = vld [vmem:[%s0 + $0x250] sm:$0xf]
  %v164 = vld [vmem:[%s0 + $0x254] sm:$0xf]
  %v165 = vld [vmem:[%s0 + $0x258] sm:$0xf]
  %v166 = vld [vmem:[%s0 + $0x25c] sm:$0xf]
  %v167 = vld [vmem:[%s0 + $0x260] sm:$0xf]
  %v168 = vld [vmem:[%s0 + $0x264] sm:$0xf]
  %v169 = vld [vmem:[%s0 + $0x268] sm:$0xf]
  %v170 = vld [vmem:[%s0 + $0x26c] sm:$0xf]
  %v171 = vld [vmem:[%s0 + $0x270] sm:$0xf]
  %v172 = vld [vmem:[%s0 + $0x274] sm:$0xf]
  %v173 = vld [vmem:[%s0 + $0x278] sm:$0xf]
  %v174 = vld [vmem:[%s0 + $0x27c] sm:$0xf]
  %v175 = vld [vmem:[%s0 + $0x280] sm:$0xf]
  %v176 = vld [vmem:[%s0 + $0x284] sm:$0xf]
  %v177 = vld [vmem:[%s0 + $0x288] sm:$0xf]
  %v178 = vld [vmem:[%s0 + $0x28c] sm:$0xf]
  %v179 = vld [vmem:[%s0 + $0x290] sm:$0xf]
  %v180 = vld [vmem:[%s0 + $0x294] sm:$0xf]
  %v181 = vld [vmem:[%s0 + $0x298] sm:$0xf]
  %v182 = vld [vmem:[%s0 + $0x29c] sm:$0xf]
  %v183 = vld [vmem:[%s0 + $0x2a0] sm:$0xf]
  %v184 = vld [vmem:[%s0 + $0x2a4] sm:$0xf]
  %v185 = vld [vmem:[%s0 + $0x2a8] sm:$0xf]
  %v186 = vld [vmem:[%s1] sm:$0xf]
  %v187 = vld [vmem:[%s1 + $0x4] sm:$0xf]
  %v188 = vld [vmem:[%s1 + $0x8] sm:$0xf]
  %v189 = vld [vmem:[%s1 + $0xc] sm:$0xf]
  %v190 = vld [vmem:[%s1 + $0x10] sm:$0xf]
  %v191 = vld [vmem:[%s1 + $0x14] sm:$0xf]
  %v192 = vld [vmem:[%s1 + $0x18] sm:$0xf]
  %v193 = vld [vmem:[%s1 + $0x1c] sm:$0xf]
  %v194 = vld [vmem:[%s1 + $0x20] sm:$0xf]
  %v195 = vld [vmem:[%s1 + $0x24] sm:$0x3]
  %v196 = vld [vmem:[%s2] sm:$0x1]
  %v198 = vlaneseq
  %v199 = vshrl.u32 %v198, 7
  %v200 = vsub.s32 0, %v199
  %v201 = vrot.slane %v196, %v200
  %v374 = vunpack.c.l.b16 %v15
  %v375 = vunpack.c.l.b16 %v16
  %v376 = vunpack.c.l.b16 %v17
  %v377 = vunpack.c.l.b16 %v18
  %v378 = vunpack.c.l.b16 %v19
  %v379 = vunpack.c.l.b16 %v20
  %v380 = vunpack.c.l.b16 %v21
  %v381 = vunpack.c.l.b16 %v22
  %v382 = vunpack.c.l.b16 %v23
  %v383 = vunpack.c.l.b16 %v24
  %v384 = vunpack.c.l.b16 %v25
  %v385 = vunpack.c.l.b16 %v26
  %v386 = vunpack.c.l.b16 %v27
  %v387 = vunpack.c.l.b16 %v28
  %v388 = vunpack.c.l.b16 %v29
  %v389 = vunpack.c.l.b16 %v30
  %v390 = vunpack.c.l.b16 %v31
  %v391 = vunpack.c.l.b16 %v32
  %v392 = vunpack.c.l.b16 %v33
  %v393 = vunpack.c.l.b16 %v34
  %v394 = vunpack.c.l.b16 %v35
  %v395 = vunpack.c.l.b16 %v36
  %v396 = vunpack.c.l.b16 %v37
  %v397 = vunpack.c.l.b16 %v38
  %v398 = vunpack.c.l.b16 %v39
  %v399 = vunpack.c.l.b16 %v40
  %v400 = vunpack.c.l.b16 %v41
  %v401 = vunpack.c.l.b16 %v42
  %v402 = vunpack.c.l.b16 %v43
  %v403 = vunpack.c.l.b16 %v44
  %v404 = vunpack.c.l.b16 %v45
  %v405 = vunpack.c.l.b16 %v46
  %v406 = vunpack.c.l.b16 %v47
  %v407 = vunpack.c.l.b16 %v48
  %v408 = vunpack.c.l.b16 %v49
  %v409 = vunpack.c.l.b16 %v50
  %v410 = vunpack.c.l.b16 %v51
  %v411 = vunpack.c.l.b16 %v52
  %v412 = vunpack.c.l.b16 %v53
  %v413 = vunpack.c.l.b16 %v54
  %v414 = vunpack.c.l.b16 %v55
  %v415 = vunpack.c.l.b16 %v56
  %v416 = vunpack.c.l.b16 %v57
  %v417 = vunpack.c.l.b16 %v58
  %v418 = vunpack.c.l.b16 %v59
  %v419 = vunpack.c.l.b16 %v60
  %v420 = vunpack.c.l.b16 %v61
  %v421 = vunpack.c.l.b16 %v62
  %v422 = vunpack.c.l.b16 %v63
  %v423 = vunpack.c.l.b16 %v64
  %v424 = vunpack.c.l.b16 %v65
  %v425 = vunpack.c.l.b16 %v66
  %v426 = vunpack.c.l.b16 %v67
  %v427 = vunpack.c.l.b16 %v68
  %v428 = vunpack.c.l.b16 %v69
  %v429 = vunpack.c.l.b16 %v70
  %v430 = vunpack.c.l.b16 %v71
  %v431 = vunpack.c.l.b16 %v72
  %v432 = vunpack.c.l.b16 %v73
  %v433 = vunpack.c.l.b16 %v74
  %v434 = vunpack.c.l.b16 %v75
  %v435 = vunpack.c.l.b16 %v76
  %v436 = vunpack.c.l.b16 %v77
  %v437 = vunpack.c.l.b16 %v78
  %v438 = vunpack.c.l.b16 %v79
  %v439 = vunpack.c.l.b16 %v80
  %v440 = vunpack.c.l.b16 %v81
  %v441 = vunpack.c.l.b16 %v82
  %v442 = vunpack.c.l.b16 %v83
  %v443 = vunpack.c.l.b16 %v84
  %v444 = vunpack.c.l.b16 %v85
  %v445 = vunpack.c.l.b16 %v86
  %v446 = vunpack.c.l.b16 %v87
  %v447 = vunpack.c.l.b16 %v88
  %v448 = vunpack.c.l.b16 %v89
  %v449 = vunpack.c.l.b16 %v90
  %v450 = vunpack.c.l.b16 %v91
  %v451 = vunpack.c.l.b16 %v92
  %v452 = vunpack.c.l.b16 %v93
  %v453 = vunpack.c.l.b16 %v94
  %v454 = vunpack.c.l.b16 %v95
  %v455 = vunpack.c.l.b16 %v96
  %v456 = vunpack.c.l.b16 %v97
  %v457 = vunpack.c.l.b16 %v98
  %v458 = vunpack.c.l.b16 %v99
  %v459 = vunpack.c.l.b16 %v100
  %v460 = vunpack.c.l.b16 %v101
  %v461 = vunpack.c.l.b16 %v102
  %v462 = vunpack.c.l.b16 %v103
  %v463 = vunpack.c.l.b16 %v104
  %v464 = vunpack.c.l.b16 %v105
  %v465 = vunpack.c.l.b16 %v106
  %v466 = vunpack.c.l.b16 %v107
  %v467 = vunpack.c.l.b16 %v108
  %v468 = vunpack.c.l.b16 %v109
  %v469 = vunpack.c.l.b16 %v110
  %v470 = vunpack.c.l.b16 %v111
  %v471 = vunpack.c.l.b16 %v112
  %v472 = vunpack.c.l.b16 %v113
  %v473 = vunpack.c.l.b16 %v114
  %v474 = vunpack.c.l.b16 %v115
  %v475 = vunpack.c.l.b16 %v116
  %v476 = vunpack.c.l.b16 %v117
  %v477 = vunpack.c.l.b16 %v118
  %v478 = vunpack.c.l.b16 %v119
  %v479 = vunpack.c.l.b16 %v120
  %v480 = vunpack.c.l.b16 %v121
  %v481 = vunpack.c.l.b16 %v122
  %v482 = vunpack.c.l.b16 %v123
  %v483 = vunpack.c.l.b16 %v124
  %v484 = vunpack.c.l.b16 %v125
  %v485 = vunpack.c.l.b16 %v126
  %v486 = vunpack.c.l.b16 %v127
  %v487 = vunpack.c.l.b16 %v128
  %v488 = vunpack.c.l.b16 %v129
  %v489 = vunpack.c.l.b16 %v130
  %v490 = vunpack.c.l.b16 %v131
  %v491 = vunpack.c.l.b16 %v132
  %v492 = vunpack.c.l.b16 %v133
  %v493 = vunpack.c.l.b16 %v134
  %v494 = vunpack.c.l.b16 %v135
  %v495 = vunpack.c.l.b16 %v136
  %v496 = vunpack.c.l.b16 %v137
  %v497 = vunpack.c.l.b16 %v138
  %v498 = vunpack.c.l.b16 %v139
  %v499 = vunpack.c.l.b16 %v140
  %v500 = vunpack.c.l.b16 %v141
  %v501 = vunpack.c.l.b16 %v142
  %v502 = vunpack.c.l.b16 %v143
  %v503 = vunpack.c.l.b16 %v144
  %v504 = vunpack.c.l.b16 %v145
  %v505 = vunpack.c.l.b16 %v146
  %v506 = vunpack.c.l.b16 %v147
  %v507 = vunpack.c.l.b16 %v148
  %v508 = vunpack.c.l.b16 %v149
  %v509 = vunpack.c.l.b16 %v150
  %v510 = vunpack.c.l.b16 %v151
  %v511 = vunpack.c.l.b16 %v152
  %v512 = vunpack.c.l.b16 %v153
  %v513 = vunpack.c.l.b16 %v154
  %v514 = vunpack.c.l.b16 %v155
  %v515 = vunpack.c.l.b16 %v156
  %v516 = vunpack.c.l.b16 %v157
  %v517 = vunpack.c.l.b16 %v158
  %v518 = vunpack.c.l.b16 %v159
  %v519 = vunpack.c.l.b16 %v160
  %v520 = vunpack.c.l.b16 %v161
  %v521 = vunpack.c.l.b16 %v162
  %v522 = vunpack.c.l.b16 %v163
  %v523 = vunpack.c.l.b16 %v164
  %v524 = vunpack.c.l.b16 %v165
  %v525 = vunpack.c.l.b16 %v166
  %v526 = vunpack.c.l.b16 %v167
  %v527 = vunpack.c.l.b16 %v168
  %v528 = vunpack.c.l.b16 %v169
  %v529 = vunpack.c.l.b16 %v170
  %v530 = vunpack.c.l.b16 %v171
  %v531 = vunpack.c.l.b16 %v172
  %v532 = vunpack.c.l.b16 %v173
  %v533 = vunpack.c.l.b16 %v174
  %v534 = vunpack.c.l.b16 %v175
  %v535 = vunpack.c.l.b16 %v176
  %v536 = vunpack.c.l.b16 %v177
  %v537 = vunpack.c.l.b16 %v178
  %v538 = vunpack.c.l.b16 %v179
  %v539 = vunpack.c.l.b16 %v180
  %v540 = vunpack.c.l.b16 %v181
  %v541 = vunpack.c.l.b16 %v182
  %v542 = vunpack.c.l.b16 %v183
  %v543 = vunpack.c.l.b16 %v184
  %v544 = vunpack.c.l.b16 %v185
  %v545 = vpack.c.b16 %v375, %v374
  %v546 = vpack.c.b16 %v377, %v376
  %v547 = vpack.c.b16 %v379, %v378
  %v548 = vpack.c.b16 %v381, %v380
  %v549 = vpack.c.b16 %v383, %v382
  %v550 = vpack.c.b16 %v385, %v384
  %v551 = vpack.c.b16 %v387, %v386
  %v552 = vpack.c.b16 %v389, %v388
  %v553 = vpack.c.b16 %v391, %v390
  %v554 = vpack.c.b16 %v393, %v392
  %v555 = vpack.c.b16 %v395, %v394
  %v556 = vpack.c.b16 %v397, %v396
  %v557 = vpack.c.b16 %v399, %v398
  %v558 = vpack.c.b16 %v401, %v400
  %v559 = vpack.c.b16 %v403, %v402
  %v560 = vpack.c.b16 %v405, %v404
  %v561 = vpack.c.b16 %v407, %v406
  %v562 = vpack.c.b16 %v409, %v408
  %v563 = vpack.c.b16 %v411, %v410
  %v564 = vpack.c.b16 %v413, %v412
  %v565 = vpack.c.b16 %v415, %v414
  %v566 = vpack.c.b16 %v417, %v416
  %v567 = vpack.c.b16 %v419, %v418
  %v568 = vpack.c.b16 %v421, %v420
  %v569 = vpack.c.b16 %v423, %v422
  %v570 = vpack.c.b16 %v425, %v424
  %v571 = vpack.c.b16 %v427, %v426
  %v572 = vpack.c.b16 %v429, %v428
  %v573 = vpack.c.b16 %v431, %v430
  %v574 = vpack.c.b16 %v433, %v432
  %v575 = vpack.c.b16 %v435, %v434
  %v576 = vpack.c.b16 %v437, %v436
  %v577 = vpack.c.b16 %v439, %v438
  %v578 = vpack.c.b16 %v441, %v440
  %v579 = vpack.c.b16 %v443, %v442
  %v580 = vpack.c.b16 %v445, %v444
  %v581 = vpack.c.b16 %v447, %v446
  %v582 = vpack.c.b16 %v449, %v448
  %v583 = vpack.c.b16 %v451, %v450
  %v584 = vpack.c.b16 %v453, %v452
  %v585 = vpack.c.b16 %v455, %v454
  %v586 = vpack.c.b16 %v457, %v456
  %v587 = vpack.c.b16 %v459, %v458
  %v588 = vpack.c.b16 %v461, %v460
  %v589 = vpack.c.b16 %v463, %v462
  %v590 = vpack.c.b16 %v465, %v464
  %v591 = vpack.c.b16 %v467, %v466
  %v592 = vpack.c.b16 %v469, %v468
  %v593 = vpack.c.b16 %v471, %v470
  %v594 = vpack.c.b16 %v473, %v472
  %v595 = vpack.c.b16 %v475, %v474
  %v596 = vpack.c.b16 %v477, %v476
  %v597 = vpack.c.b16 %v479, %v478
  %v598 = vpack.c.b16 %v481, %v480
  %v599 = vpack.c.b16 %v483, %v482
  %v600 = vpack.c.b16 %v485, %v484
  %v601 = vpack.c.b16 %v487, %v486
  %v602 = vpack.c.b16 %v489, %v488
  %v603 = vpack.c.b16 %v491, %v490
  %v604 = vpack.c.b16 %v493, %v492
  %v605 = vpack.c.b16 %v495, %v494
  %v606 = vpack.c.b16 %v497, %v496
  %v607 = vpack.c.b16 %v499, %v498
  %v608 = vpack.c.b16 %v501, %v500
  %v609 = vpack.c.b16 %v503, %v502
  %v610 = vpack.c.b16 %v505, %v504
  %v611 = vpack.c.b16 %v507, %v506
  %v612 = vpack.c.b16 %v509, %v508
  %v613 = vpack.c.b16 %v511, %v510
  %v614 = vpack.c.b16 %v513, %v512
  %v615 = vpack.c.b16 %v515, %v514
  %v616 = vpack.c.b16 %v517, %v516
  %v617 = vpack.c.b16 %v519, %v518
  %v618 = vpack.c.b16 %v521, %v520
  %v619 = vpack.c.b16 %v523, %v522
  %v620 = vpack.c.b16 %v525, %v524
  %v621 = vpack.c.b16 %v527, %v526
  %v622 = vpack.c.b16 %v529, %v528
  %v623 = vpack.c.b16 %v531, %v530
  %v624 = vpack.c.b16 %v533, %v532
  %v625 = vpack.c.b16 %v535, %v534
  %v626 = vpack.c.b16 %v537, %v536
  %v627 = vpack.c.b16 %v539, %v538
  %v628 = vpack.c.b16 %v541, %v540
  %v629 = vpack.c.b16 %v543, %v542
  %v630 = vpack.c.b16 %v544, %v544
  %v641 = vunpack.c.l.b16 %v186
  %v642 = vunpack.c.l.b16 %v187
  %v643 = vunpack.c.l.b16 %v188
  %v644 = vunpack.c.l.b16 %v189
  %v645 = vunpack.c.l.b16 %v190
  %v646 = vunpack.c.l.b16 %v191
  %v647 = vunpack.c.l.b16 %v192
  %v648 = vunpack.c.l.b16 %v193
  %v649 = vunpack.c.l.b16 %v194
  %v650 = vunpack.c.l.b16 %v195
  %v651 = vpack.c.b16 %v642, %v641
  %v652 = vpack.c.b16 %v644, %v643
  %v653 = vpack.c.b16 %v646, %v645
  %v654 = vpack.c.b16 %v648, %v647
  %v655 = vpack.c.b16 %v650, %v649
  %vm660 = vcmask 613376
  %v662 = vsel %vm660, %v545, 0
  %v665 = vsel %vm660, %v546, 0
  %v668 = vsel %vm660, %v547, 0
  %v671 = vsel %vm660, %v548, 0
  %v674 = vsel %vm660, %v549, 0
  %v677 = vsel %vm660, %v550, 0
  %v680 = vsel %vm660, %v551, 0
  %v683 = vsel %vm660, %v552, 0
  %v686 = vsel %vm660, %v553, 0
  %v689 = vsel %vm660, %v554, 0
  %v692 = vsel %vm660, %v555, 0
  %v695 = vsel %vm660, %v556, 0
  %v698 = vsel %vm660, %v557, 0
  %v701 = vsel %vm660, %v558, 0
  %v704 = vsel %vm660, %v559, 0
  %v707 = vsel %vm660, %v560, 0
  %v710 = vsel %vm660, %v561, 0
  %v713 = vsel %vm660, %v562, 0
  %v716 = vsel %vm660, %v563, 0
  %v719 = vsel %vm660, %v564, 0
  %v722 = vsel %vm660, %v565, 0
  %v725 = vsel %vm660, %v566, 0
  %v728 = vsel %vm660, %v567, 0
  %v731 = vsel %vm660, %v568, 0
  %v734 = vsel %vm660, %v569, 0
  %v737 = vsel %vm660, %v570, 0
  %v740 = vsel %vm660, %v571, 0
  %v743 = vsel %vm660, %v572, 0
  %v746 = vsel %vm660, %v573, 0
  %v749 = vsel %vm660, %v574, 0
  %v752 = vsel %vm660, %v575, 0
  %v755 = vsel %vm660, %v576, 0
  %v758 = vsel %vm660, %v577, 0
  %v761 = vsel %vm660, %v578, 0
  %v764 = vsel %vm660, %v579, 0
  %v767 = vsel %vm660, %v580, 0
  %v770 = vsel %vm660, %v581, 0
  %v773 = vsel %vm660, %v582, 0
  %v776 = vsel %vm660, %v583, 0
  %v779 = vsel %vm660, %v584, 0
  %v782 = vsel %vm660, %v585, 0
  %v785 = vsel %vm660, %v586, 0
  %v788 = vsel %vm660, %v587, 0
  %v791 = vsel %vm660, %v588, 0
  %v794 = vsel %vm660, %v589, 0
  %v797 = vsel %vm660, %v590, 0
  %v800 = vsel %vm660, %v591, 0
  %v803 = vsel %vm660, %v592, 0
  %v806 = vsel %vm660, %v593, 0
  %v809 = vsel %vm660, %v594, 0
  %v812 = vsel %vm660, %v595, 0
  %v815 = vsel %vm660, %v596, 0
  %v818 = vsel %vm660, %v597, 0
  %v821 = vsel %vm660, %v598, 0
  %v824 = vsel %vm660, %v599, 0
  %v827 = vsel %vm660, %v600, 0
  %v830 = vsel %vm660, %v601, 0
  %v833 = vsel %vm660, %v602, 0
  %v836 = vsel %vm660, %v603, 0
  %v839 = vsel %vm660, %v604, 0
  %v842 = vsel %vm660, %v605, 0
  %v845 = vsel %vm660, %v606, 0
  %v848 = vsel %vm660, %v607, 0
  %v851 = vsel %vm660, %v608, 0
  %v854 = vsel %vm660, %v609, 0
  %v857 = vsel %vm660, %v610, 0
  %v860 = vsel %vm660, %v611, 0
  %v863 = vsel %vm660, %v612, 0
  %v866 = vsel %vm660, %v613, 0
  %v869 = vsel %vm660, %v614, 0
  %v872 = vsel %vm660, %v615, 0
  %v875 = vsel %vm660, %v616, 0
  %v878 = vsel %vm660, %v617, 0
  %v881 = vsel %vm660, %v618, 0
  %v884 = vsel %vm660, %v619, 0
  %v887 = vsel %vm660, %v620, 0
  %v890 = vsel %vm660, %v621, 0
  %v893 = vsel %vm660, %v622, 0
  %v896 = vsel %vm660, %v623, 0
  %v899 = vsel %vm660, %v624, 0
  %v902 = vsel %vm660, %v625, 0
  %v905 = vsel %vm660, %v626, 0
  %v908 = vsel %vm660, %v627, 0
  %v911 = vsel %vm660, %v628, 0
  %v914 = vsel %vm660, %v629, 0
  %v917 = vsel %vm660, %v630, 0
  %vm919 = vcmask 1044480
  %vm920 = vcmask 1045504
  %v921 = vsel %vm919, 4294967295, 65535
  %v922 = vsel %vm920, %v921, 0
  %v924 = vand.u32 %v655, %v922
  %926 = vmatprep.subr.bf16.mxu0 0
  %927 = vmatpush1.bf16.msra.mxu0 0
  %928 = vmatprep.subr.bf16.mxu0 0
  %929 = vmatpush1.bf16.msra.mxu0 0
  %930 = vmatprep.subr.bf16.mxu0 0
  %931 = vmatpush1.bf16.msra.mxu0 0
  %932 = vmatprep.subr.bf16.mxu0 0
  %933 = vmatpush1.bf16.msra.mxu0 %v924
  %934 = vmatprep.subr.bf16.mxu0 0
  %935 = vmatpush1.bf16.msra.mxu0 %v654
  %936 = vmatprep.subr.bf16.mxu0 0
  %937 = vmatpush1.bf16.msra.mxu0 %v653
  %938 = vmatprep.subr.bf16.mxu0 0
  %939 = vmatpush1.bf16.msra.mxu0 %v652
  %940 = vmatprep.subr.bf16.mxu0 0
  %941 = vmatpush1.bf16.msra.mxu0 %v651
  %942 = vmatprep.subr.bf16.mxu0 0
  %943 = vmatpush2.bf16.msra.mxu0 0
  %944 = vmatprep.subr.bf16.mxu0 0
  %945 = vmatpush2.bf16.msra.mxu0 0
  %946 = vmatprep.subr.bf16.mxu0 0
  %947 = vmatpush2.bf16.msra.mxu0 0
  %948 = vmatprep.subr.bf16.mxu0 0
  %949 = vmatpush2.bf16.msra.mxu0 0
  %950 = vmatprep.subr.bf16.mxu0 0
  %951 = vmatpush2.bf16.msra.mxu0 0
  %952 = vmatprep.subr.bf16.mxu0 0
  %953 = vmatpush2.bf16.msra.mxu0 0
  %954 = vmatprep.subr.bf16.mxu0 0
  %955 = vmatpush2.bf16.msra.mxu0 0
  %956 = vmatprep.subr.bf16.mxu0 0
  %957 = vmatpush2.bf16.msra.mxu0 0
  %958 = vmatprep.mubr.bf16.mxu0 0
  %959 = vmatmul.mubr.bf16.gmra.mxu0 %v662
  %v960 = vpop.f32.mrf.mxu0
  %v961 = vadd.f32 %v201, %v960
  %v962 = vpop.f32.mrf.mxu0
  %v963 = vpop.f32.mrf.mxu0
  %v964 = vadd.f32 %v201, %v963
  %v965 = vpop.f32.mrf.mxu0
  %966 = vmatprep.mubr.bf16.mxu0 0
  %967 = vmatmul.mubr.bf16.gmra.mxu0 %v665
  %v968 = vpop.f32.mrf.mxu0
  %v969 = vadd.f32 %v201, %v968
  %v970 = vpop.f32.mrf.mxu0
  %v971 = vpop.f32.mrf.mxu0
  %v972 = vadd.f32 %v201, %v971
  %v973 = vpop.f32.mrf.mxu0
  %974 = vmatprep.mubr.bf16.mxu0 0
  %975 = vmatmul.mubr.bf16.gmra.mxu0 %v668
  %v976 = vpop.f32.mrf.mxu0
  %v977 = vadd.f32 %v201, %v976
  %v978 = vpop.f32.mrf.mxu0
  %v979 = vpop.f32.mrf.mxu0
  %v980 = vadd.f32 %v201, %v979
  %v981 = vpop.f32.mrf.mxu0
  %982 = vmatprep.mubr.bf16.mxu0 0
  %983 = vmatmul.mubr.bf16.gmra.mxu0 %v671
  %v984 = vpop.f32.mrf.mxu0
  %v985 = vadd.f32 %v201, %v984
  %v986 = vpop.f32.mrf.mxu0
  %v987 = vpop.f32.mrf.mxu0
  %v988 = vadd.f32 %v201, %v987
  %v989 = vpop.f32.mrf.mxu0
  %990 = vmatprep.mubr.bf16.mxu0 0
  %991 = vmatmul.mubr.bf16.gmra.mxu0 %v674
  %v992 = vpop.f32.mrf.mxu0
  %v993 = vadd.f32 %v201, %v992
  %v994 = vpop.f32.mrf.mxu0
  %v995 = vpop.f32.mrf.mxu0
  %v996 = vadd.f32 %v201, %v995
  %v997 = vpop.f32.mrf.mxu0
  %998 = vmatprep.mubr.bf16.mxu0 0
  %999 = vmatmul.mubr.bf16.gmra.mxu0 %v677
  %v1000 = vpop.f32.mrf.mxu0
  %v1001 = vadd.f32 %v201, %v1000
  %v1002 = vpop.f32.mrf.mxu0
  %v1003 = vpop.f32.mrf.mxu0
  %v1004 = vadd.f32 %v201, %v1003
  %v1005 = vpop.f32.mrf.mxu0
  %1006 = vmatprep.mubr.bf16.mxu0 0
  %1007 = vmatmul.mubr.bf16.gmra.mxu0 %v680
  %v1008 = vpop.f32.mrf.mxu0
  %v1009 = vadd.f32 %v201, %v1008
  %v1010 = vpop.f32.mrf.mxu0
  %v1011 = vpop.f32.mrf.mxu0
  %v1012 = vadd.f32 %v201, %v1011
  %v1013 = vpop.f32.mrf.mxu0
  %1014 = vmatprep.mubr.bf16.mxu0 0
  %1015 = vmatmul.mubr.bf16.gmra.mxu0 %v683
  %v1016 = vpop.f32.mrf.mxu0
  %v1017 = vadd.f32 %v201, %v1016
  %v1018 = vpop.f32.mrf.mxu0
  %v1019 = vpop.f32.mrf.mxu0
  %v1020 = vadd.f32 %v201, %v1019
  %v1021 = vpop.f32.mrf.mxu0
  %1022 = vmatprep.mubr.bf16.mxu0 0
  %1023 = vmatmul.mubr.bf16.gmra.mxu0 %v686
  %v1024 = vpop.f32.mrf.mxu0
  %v1025 = vadd.f32 %v201, %v1024
  %v1026 = vpop.f32.mrf.mxu0
  %v1027 = vpop.f32.mrf.mxu0
  %v1028 = vadd.f32 %v201, %v1027
  %v1029 = vpop.f32.mrf.mxu0
  %1030 = vmatprep.mubr.bf16.mxu0 0
  %1031 = vmatmul.mubr.bf16.gmra.mxu0 %v689
  %v1032 = vpop.f32.mrf.mxu0
  %v1033 = vadd.f32 %v201, %v1032
  %v1034 = vpop.f32.mrf.mxu0
  %v1035 = vpop.f32.mrf.mxu0
  %v1036 = vadd.f32 %v201, %v1035
  %v1037 = vpop.f32.mrf.mxu0
  %1038 = vmatprep.mubr.bf16.mxu0 0
  %1039 = vmatmul.mubr.bf16.gmra.mxu0 %v692
  %v1040 = vpop.f32.mrf.mxu0
  %v1041 = vadd.f32 %v201, %v1040
  %v1042 = vpop.f32.mrf.mxu0
  %v1043 = vpop.f32.mrf.mxu0
  %v1044 = vadd.f32 %v201, %v1043
  %v1045 = vpop.f32.mrf.mxu0
  %1046 = vmatprep.mubr.bf16.mxu0 0
  %1047 = vmatmul.mubr.bf16.gmra.mxu0 %v695
  %v1048 = vpop.f32.mrf.mxu0
  %v1049 = vadd.f32 %v201, %v1048
  %v1050 = vpop.f32.mrf.mxu0
  %v1051 = vpop.f32.mrf.mxu0
  %v1052 = vadd.f32 %v201, %v1051
  %v1053 = vpop.f32.mrf.mxu0
  %1054 = vmatprep.mubr.bf16.mxu0 0
  %1055 = vmatmul.mubr.bf16.gmra.mxu0 %v698
  %v1056 = vpop.f32.mrf.mxu0
  %v1057 = vadd.f32 %v201, %v1056
  %v1058 = vpop.f32.mrf.mxu0
  %v1059 = vpop.f32.mrf.mxu0
  %v1060 = vadd.f32 %v201, %v1059
  %v1061 = vpop.f32.mrf.mxu0
  %1062 = vmatprep.mubr.bf16.mxu0 0
  %1063 = vmatmul.mubr.bf16.gmra.mxu0 %v701
  %v1064 = vpop.f32.mrf.mxu0
  %v1065 = vadd.f32 %v201, %v1064
  %v1066 = vpop.f32.mrf.mxu0
  %v1067 = vpop.f32.mrf.mxu0
  %v1068 = vadd.f32 %v201, %v1067
  %v1069 = vpop.f32.mrf.mxu0
  %1070 = vmatprep.mubr.bf16.mxu0 0
  %1071 = vmatmul.mubr.bf16.gmra.mxu0 %v704
  %v1072 = vpop.f32.mrf.mxu0
  %v1073 = vadd.f32 %v201, %v1072
  %v1074 = vpop.f32.mrf.mxu0
  %v1075 = vpop.f32.mrf.mxu0
  %v1076 = vadd.f32 %v201, %v1075
  %v1077 = vpop.f32.mrf.mxu0
  %1078 = vmatprep.mubr.bf16.mxu0 0
  %1079 = vmatmul.mubr.bf16.gmra.mxu0 %v707
  %v1080 = vpop.f32.mrf.mxu0
  %v1081 = vadd.f32 %v201, %v1080
  %v1082 = vpop.f32.mrf.mxu0
  %v1083 = vpop.f32.mrf.mxu0
  %v1084 = vadd.f32 %v201, %v1083
  %v1085 = vpop.f32.mrf.mxu0
  %1086 = vmatprep.mubr.bf16.mxu0 0
  %1087 = vmatmul.mubr.bf16.gmra.mxu0 %v710
  %v1088 = vpop.f32.mrf.mxu0
  %v1089 = vadd.f32 %v201, %v1088
  %v1090 = vpop.f32.mrf.mxu0
  %v1091 = vpop.f32.mrf.mxu0
  %v1092 = vadd.f32 %v201, %v1091
  %v1093 = vpop.f32.mrf.mxu0
  %1094 = vmatprep.mubr.bf16.mxu0 0
  %1095 = vmatmul.mubr.bf16.gmra.mxu0 %v713
  %v1096 = vpop.f32.mrf.mxu0
  %v1097 = vadd.f32 %v201, %v1096
  %v1098 = vpop.f32.mrf.mxu0
  %v1099 = vpop.f32.mrf.mxu0
  %v1100 = vadd.f32 %v201, %v1099
  %v1101 = vpop.f32.mrf.mxu0
  %1102 = vmatprep.mubr.bf16.mxu0 0
  %1103 = vmatmul.mubr.bf16.gmra.mxu0 %v716
  %v1104 = vpop.f32.mrf.mxu0
  %v1105 = vadd.f32 %v201, %v1104
  %v1106 = vpop.f32.mrf.mxu0
  %v1107 = vpop.f32.mrf.mxu0
  %v1108 = vadd.f32 %v201, %v1107
  %v1109 = vpop.f32.mrf.mxu0
  %1110 = vmatprep.mubr.bf16.mxu0 0
  %1111 = vmatmul.mubr.bf16.gmra.mxu0 %v719
  %v1112 = vpop.f32.mrf.mxu0
  %v1113 = vadd.f32 %v201, %v1112
  %v1114 = vpop.f32.mrf.mxu0
  %v1115 = vpop.f32.mrf.mxu0
  %v1116 = vadd.f32 %v201, %v1115
  %v1117 = vpop.f32.mrf.mxu0
  %1118 = vmatprep.mubr.bf16.mxu0 0
  %1119 = vmatmul.mubr.bf16.gmra.mxu0 %v722
  %v1120 = vpop.f32.mrf.mxu0
  %v1121 = vadd.f32 %v201, %v1120
  %v1122 = vpop.f32.mrf.mxu0
  %v1123 = vpop.f32.mrf.mxu0
  %v1124 = vadd.f32 %v201, %v1123
  %v1125 = vpop.f32.mrf.mxu0
  %1126 = vmatprep.mubr.bf16.mxu0 0
  %1127 = vmatmul.mubr.bf16.gmra.mxu0 %v725
  %v1128 = vpop.f32.mrf.mxu0
  %v1129 = vadd.f32 %v201, %v1128
  %v1130 = vpop.f32.mrf.mxu0
  %v1131 = vpop.f32.mrf.mxu0
  %v1132 = vadd.f32 %v201, %v1131
  %v1133 = vpop.f32.mrf.mxu0
  %1134 = vmatprep.mubr.bf16.mxu0 0
  %1135 = vmatmul.mubr.bf16.gmra.mxu0 %v728
  %v1136 = vpop.f32.mrf.mxu0
  %v1137 = vadd.f32 %v201, %v1136
  %v1138 = vpop.f32.mrf.mxu0
  %v1139 = vpop.f32.mrf.mxu0
  %v1140 = vadd.f32 %v201, %v1139
  %v1141 = vpop.f32.mrf.mxu0
  %1142 = vmatprep.mubr.bf16.mxu0 0
  %1143 = vmatmul.mubr.bf16.gmra.mxu0 %v731
  %v1144 = vpop.f32.mrf.mxu0
  %v1145 = vadd.f32 %v201, %v1144
  %v1146 = vpop.f32.mrf.mxu0
  %v1147 = vpop.f32.mrf.mxu0
  %v1148 = vadd.f32 %v201, %v1147
  %v1149 = vpop.f32.mrf.mxu0
  %1150 = vmatprep.mubr.bf16.mxu0 0
  %1151 = vmatmul.mubr.bf16.gmra.mxu0 %v734
  %v1152 = vpop.f32.mrf.mxu0
  %v1153 = vadd.f32 %v201, %v1152
  %v1154 = vpop.f32.mrf.mxu0
  %v1155 = vpop.f32.mrf.mxu0
  %v1156 = vadd.f32 %v201, %v1155
  %v1157 = vpop.f32.mrf.mxu0
  %1158 = vmatprep.mubr.bf16.mxu0 0
  %1159 = vmatmul.mubr.bf16.gmra.mxu0 %v737
  %v1160 = vpop.f32.mrf.mxu0
  %v1161 = vadd.f32 %v201, %v1160
  %v1162 = vpop.f32.mrf.mxu0
  %v1163 = vpop.f32.mrf.mxu0
  %v1164 = vadd.f32 %v201, %v1163
  %v1165 = vpop.f32.mrf.mxu0
  %1166 = vmatprep.mubr.bf16.mxu0 0
  %1167 = vmatmul.mubr.bf16.gmra.mxu0 %v740
  %v1168 = vpop.f32.mrf.mxu0
  %v1169 = vadd.f32 %v201, %v1168
  %v1170 = vpop.f32.mrf.mxu0
  %v1171 = vpop.f32.mrf.mxu0
  %v1172 = vadd.f32 %v201, %v1171
  %v1173 = vpop.f32.mrf.mxu0
  %1174 = vmatprep.mubr.bf16.mxu0 0
  %1175 = vmatmul.mubr.bf16.gmra.mxu0 %v743
  %v1176 = vpop.f32.mrf.mxu0
  %v1177 = vadd.f32 %v201, %v1176
  %v1178 = vpop.f32.mrf.mxu0
  %v1179 = vpop.f32.mrf.mxu0
  %v1180 = vadd.f32 %v201, %v1179
  %v1181 = vpop.f32.mrf.mxu0
  %1182 = vmatprep.mubr.bf16.mxu0 0
  %1183 = vmatmul.mubr.bf16.gmra.mxu0 %v746
  %v1184 = vpop.f32.mrf.mxu0
  %v1185 = vadd.f32 %v201, %v1184
  %v1186 = vpop.f32.mrf.mxu0
  %v1187 = vpop.f32.mrf.mxu0
  %v1188 = vadd.f32 %v201, %v1187
  %v1189 = vpop.f32.mrf.mxu0
  %1190 = vmatprep.mubr.bf16.mxu0 0
  %1191 = vmatmul.mubr.bf16.gmra.mxu0 %v749
  %v1192 = vpop.f32.mrf.mxu0
  %v1193 = vadd.f32 %v201, %v1192
  %v1194 = vpop.f32.mrf.mxu0
  %v1195 = vpop.f32.mrf.mxu0
  %v1196 = vadd.f32 %v201, %v1195
  %v1197 = vpop.f32.mrf.mxu0
  %1198 = vmatprep.mubr.bf16.mxu0 0
  %1199 = vmatmul.mubr.bf16.gmra.mxu0 %v752
  %v1200 = vpop.f32.mrf.mxu0
  %v1201 = vadd.f32 %v201, %v1200
  %v1202 = vpop.f32.mrf.mxu0
  %v1203 = vpop.f32.mrf.mxu0
  %v1204 = vadd.f32 %v201, %v1203
  %v1205 = vpop.f32.mrf.mxu0
  %1206 = vmatprep.mubr.bf16.mxu0 0
  %1207 = vmatmul.mubr.bf16.gmra.mxu0 %v755
  %v1208 = vpop.f32.mrf.mxu0
  %v1209 = vadd.f32 %v201, %v1208
  %v1210 = vpop.f32.mrf.mxu0
  %v1211 = vpop.f32.mrf.mxu0
  %v1212 = vadd.f32 %v201, %v1211
  %v1213 = vpop.f32.mrf.mxu0
  %1214 = vmatprep.mubr.bf16.mxu0 0
  %1215 = vmatmul.mubr.bf16.gmra.mxu0 %v758
  %v1216 = vpop.f32.mrf.mxu0
  %v1217 = vadd.f32 %v201, %v1216
  %v1218 = vpop.f32.mrf.mxu0
  %v1219 = vpop.f32.mrf.mxu0
  %v1220 = vadd.f32 %v201, %v1219
  %v1221 = vpop.f32.mrf.mxu0
  %1222 = vmatprep.mubr.bf16.mxu0 0
  %1223 = vmatmul.mubr.bf16.gmra.mxu0 %v761
  %v1224 = vpop.f32.mrf.mxu0
  %v1225 = vadd.f32 %v201, %v1224
  %v1226 = vpop.f32.mrf.mxu0
  %v1227 = vpop.f32.mrf.mxu0
  %v1228 = vadd.f32 %v201, %v1227
  %v1229 = vpop.f32.mrf.mxu0
  %1230 = vmatprep.mubr.bf16.mxu0 0
  %1231 = vmatmul.mubr.bf16.gmra.mxu0 %v764
  %v1232 = vpop.f32.mrf.mxu0
  %v1233 = vadd.f32 %v201, %v1232
  %v1234 = vpop.f32.mrf.mxu0
  %v1235 = vpop.f32.mrf.mxu0
  %v1236 = vadd.f32 %v201, %v1235
  %v1237 = vpop.f32.mrf.mxu0
  %1238 = vmatprep.mubr.bf16.mxu0 0
  %1239 = vmatmul.mubr.bf16.gmra.mxu0 %v767
  %v1240 = vpop.f32.mrf.mxu0
  %v1241 = vadd.f32 %v201, %v1240
  %v1242 = vpop.f32.mrf.mxu0
  %v1243 = vpop.f32.mrf.mxu0
  %v1244 = vadd.f32 %v201, %v1243
  %v1245 = vpop.f32.mrf.mxu0
  %1246 = vmatprep.mubr.bf16.mxu0 0
  %1247 = vmatmul.mubr.bf16.gmra.mxu0 %v770
  %v1248 = vpop.f32.mrf.mxu0
  %v1249 = vadd.f32 %v201, %v1248
  %v1250 = vpop.f32.mrf.mxu0
  %v1251 = vpop.f32.mrf.mxu0
  %v1252 = vadd.f32 %v201, %v1251
  %v1253 = vpop.f32.mrf.mxu0
  %1254 = vmatprep.mubr.bf16.mxu0 0
  %1255 = vmatmul.mubr.bf16.gmra.mxu0 %v773
  %v1256 = vpop.f32.mrf.mxu0
  %v1257 = vadd.f32 %v201, %v1256
  %v1258 = vpop.f32.mrf.mxu0
  %v1259 = vpop.f32.mrf.mxu0
  %v1260 = vadd.f32 %v201, %v1259
  %v1261 = vpop.f32.mrf.mxu0
  %1262 = vmatprep.mubr.bf16.mxu0 0
  %1263 = vmatmul.mubr.bf16.gmra.mxu0 %v776
  %v1264 = vpop.f32.mrf.mxu0
  %v1265 = vadd.f32 %v201, %v1264
  %v1266 = vpop.f32.mrf.mxu0
  %v1267 = vpop.f32.mrf.mxu0
  %v1268 = vadd.f32 %v201, %v1267
  %v1269 = vpop.f32.mrf.mxu0
  %1270 = vmatprep.mubr.bf16.mxu0 0
  %1271 = vmatmul.mubr.bf16.gmra.mxu0 %v779
  %v1272 = vpop.f32.mrf.mxu0
  %v1273 = vadd.f32 %v201, %v1272
  %v1274 = vpop.f32.mrf.mxu0
  %v1275 = vpop.f32.mrf.mxu0
  %v1276 = vadd.f32 %v201, %v1275
  %v1277 = vpop.f32.mrf.mxu0
  %1278 = vmatprep.mubr.bf16.mxu0 0
  %1279 = vmatmul.mubr.bf16.gmra.mxu0 %v782
  %v1280 = vpop.f32.mrf.mxu0
  %v1281 = vadd.f32 %v201, %v1280
  %v1282 = vpop.f32.mrf.mxu0
  %v1283 = vpop.f32.mrf.mxu0
  %v1284 = vadd.f32 %v201, %v1283
  %v1285 = vpop.f32.mrf.mxu0
  %1286 = vmatprep.mubr.bf16.mxu0 0
  %1287 = vmatmul.mubr.bf16.gmra.mxu0 %v785
  %v1288 = vpop.f32.mrf.mxu0
  %v1289 = vadd.f32 %v201, %v1288
  %v1290 = vpop.f32.mrf.mxu0
  %v1291 = vpop.f32.mrf.mxu0
  %v1292 = vadd.f32 %v201, %v1291
  %v1293 = vpop.f32.mrf.mxu0
  %1294 = vmatprep.mubr.bf16.mxu0 0
  %1295 = vmatmul.mubr.bf16.gmra.mxu0 %v788
  %v1296 = vpop.f32.mrf.mxu0
  %v1297 = vadd.f32 %v201, %v1296
  %v1298 = vpop.f32.mrf.mxu0
  %v1299 = vpop.f32.mrf.mxu0
  %v1300 = vadd.f32 %v201, %v1299
  %v1301 = vpop.f32.mrf.mxu0
  %1302 = vmatprep.mubr.bf16.mxu0 0
  %1303 = vmatmul.mubr.bf16.gmra.mxu0 %v791
  %v1304 = vpop.f32.mrf.mxu0
  %v1305 = vadd.f32 %v201, %v1304
  %v1306 = vpop.f32.mrf.mxu0
  %v1307 = vpop.f32.mrf.mxu0
  %v1308 = vadd.f32 %v201, %v1307
  %v1309 = vpop.f32.mrf.mxu0
  %1310 = vmatprep.mubr.bf16.mxu0 0
  %1311 = vmatmul.mubr.bf16.gmra.mxu0 %v794
  %v1312 = vpop.f32.mrf.mxu0
  %v1313 = vadd.f32 %v201, %v1312
  %v1314 = vpop.f32.mrf.mxu0
  %v1315 = vpop.f32.mrf.mxu0
  %v1316 = vadd.f32 %v201, %v1315
  %v1317 = vpop.f32.mrf.mxu0
  %1318 = vmatprep.mubr.bf16.mxu0 0
  %1319 = vmatmul.mubr.bf16.gmra.mxu0 %v797
  %v1320 = vpop.f32.mrf.mxu0
  %v1321 = vadd.f32 %v201, %v1320
  %v1322 = vpop.f32.mrf.mxu0
  %v1323 = vpop.f32.mrf.mxu0
  %v1324 = vadd.f32 %v201, %v1323
  %v1325 = vpop.f32.mrf.mxu0
  %1326 = vmatprep.mubr.bf16.mxu0 0
  %1327 = vmatmul.mubr.bf16.gmra.mxu0 %v800
  %v1328 = vpop.f32.mrf.mxu0
  %v1329 = vadd.f32 %v201, %v1328
  %v1330 = vpop.f32.mrf.mxu0
  %v1331 = vpop.f32.mrf.mxu0
  %v1332 = vadd.f32 %v201, %v1331
  %v1333 = vpop.f32.mrf.mxu0
  %1334 = vmatprep.mubr.bf16.mxu0 0
  %1335 = vmatmul.mubr.bf16.gmra.mxu0 %v803
  %v1336 = vpop.f32.mrf.mxu0
  %v1337 = vadd.f32 %v201, %v1336
  %v1338 = vpop.f32.mrf.mxu0
  %v1339 = vpop.f32.mrf.mxu0
  %v1340 = vadd.f32 %v201, %v1339
  %v1341 = vpop.f32.mrf.mxu0
  %1342 = vmatprep.mubr.bf16.mxu0 0
  %1343 = vmatmul.mubr.bf16.gmra.mxu0 %v806
  %v1344 = vpop.f32.mrf.mxu0
  %v1345 = vadd.f32 %v201, %v1344
  %v1346 = vpop.f32.mrf.mxu0
  %v1347 = vpop.f32.mrf.mxu0
  %v1348 = vadd.f32 %v201, %v1347
  %v1349 = vpop.f32.mrf.mxu0
  %1350 = vmatprep.mubr.bf16.mxu0 0
  %1351 = vmatmul.mubr.bf16.gmra.mxu0 %v809
  %v1352 = vpop.f32.mrf.mxu0
  %v1353 = vadd.f32 %v201, %v1352
  %v1354 = vpop.f32.mrf.mxu0
  %v1355 = vpop.f32.mrf.mxu0
  %v1356 = vadd.f32 %v201, %v1355
  %v1357 = vpop.f32.mrf.mxu0
  %1358 = vmatprep.mubr.bf16.mxu0 0
  %1359 = vmatmul.mubr.bf16.gmra.mxu0 %v812
  %v1360 = vpop.f32.mrf.mxu0
  %v1361 = vadd.f32 %v201, %v1360
  %v1362 = vpop.f32.mrf.mxu0
  %v1363 = vpop.f32.mrf.mxu0
  %v1364 = vadd.f32 %v201, %v1363
  %v1365 = vpop.f32.mrf.mxu0
  %1366 = vmatprep.mubr.bf16.mxu0 0
  %1367 = vmatmul.mubr.bf16.gmra.mxu0 %v815
  %v1368 = vpop.f32.mrf.mxu0
  %v1369 = vadd.f32 %v201, %v1368
  %v1370 = vpop.f32.mrf.mxu0
  %v1371 = vpop.f32.mrf.mxu0
  %v1372 = vadd.f32 %v201, %v1371
  %v1373 = vpop.f32.mrf.mxu0
  %1374 = vmatprep.mubr.bf16.mxu0 0
  %1375 = vmatmul.mubr.bf16.gmra.mxu0 %v818
  %v1376 = vpop.f32.mrf.mxu0
  %v1377 = vadd.f32 %v201, %v1376
  %v1378 = vpop.f32.mrf.mxu0
  %v1379 = vpop.f32.mrf.mxu0
  %v1380 = vadd.f32 %v201, %v1379
  %v1381 = vpop.f32.mrf.mxu0
  %1382 = vmatprep.mubr.bf16.mxu0 0
  %1383 = vmatmul.mubr.bf16.gmra.mxu0 %v821
  %v1384 = vpop.f32.mrf.mxu0
  %v1385 = vadd.f32 %v201, %v1384
  %v1386 = vpop.f32.mrf.mxu0
  %v1387 = vpop.f32.mrf.mxu0
  %v1388 = vadd.f32 %v201, %v1387
  %v1389 = vpop.f32.mrf.mxu0
  %1390 = vmatprep.mubr.bf16.mxu0 0
  %1391 = vmatmul.mubr.bf16.gmra.mxu0 %v824
  %v1392 = vpop.f32.mrf.mxu0
  %v1393 = vadd.f32 %v201, %v1392
  %v1394 = vpop.f32.mrf.mxu0
  %v1395 = vpop.f32.mrf.mxu0
  %v1396 = vadd.f32 %v201, %v1395
  %v1397 = vpop.f32.mrf.mxu0
  %1398 = vmatprep.mubr.bf16.mxu0 0
  %1399 = vmatmul.mubr.bf16.gmra.mxu0 %v827
  %v1400 = vpop.f32.mrf.mxu0
  %v1401 = vadd.f32 %v201, %v1400
  %v1402 = vpop.f32.mrf.mxu0
  %v1403 = vpop.f32.mrf.mxu0
  %v1404 = vadd.f32 %v201, %v1403
  %v1405 = vpop.f32.mrf.mxu0
  %1406 = vmatprep.mubr.bf16.mxu0 0
  %1407 = vmatmul.mubr.bf16.gmra.mxu0 %v830
  %v1408 = vpop.f32.mrf.mxu0
  %v1409 = vadd.f32 %v201, %v1408
  %v1410 = vpop.f32.mrf.mxu0
  %v1411 = vpop.f32.mrf.mxu0
  %v1412 = vadd.f32 %v201, %v1411
  %v1413 = vpop.f32.mrf.mxu0
  %1414 = vmatprep.mubr.bf16.mxu0 0
  %1415 = vmatmul.mubr.bf16.gmra.mxu0 %v833
  %v1416 = vpop.f32.mrf.mxu0
  %v1417 = vadd.f32 %v201, %v1416
  %v1418 = vpop.f32.mrf.mxu0
  %v1419 = vpop.f32.mrf.mxu0
  %v1420 = vadd.f32 %v201, %v1419
  %v1421 = vpop.f32.mrf.mxu0
  %1422 = vmatprep.mubr.bf16.mxu0 0
  %1423 = vmatmul.mubr.bf16.gmra.mxu0 %v836
  %v1424 = vpop.f32.mrf.mxu0
  %v1425 = vadd.f32 %v201, %v1424
  %v1426 = vpop.f32.mrf.mxu0
  %v1427 = vpop.f32.mrf.mxu0
  %v1428 = vadd.f32 %v201, %v1427
  %v1429 = vpop.f32.mrf.mxu0
  %1430 = vmatprep.mubr.bf16.mxu0 0
  %1431 = vmatmul.mubr.bf16.gmra.mxu0 %v839
  %v1432 = vpop.f32.mrf.mxu0
  %v1433 = vadd.f32 %v201, %v1432
  %v1434 = vpop.f32.mrf.mxu0
  %v1435 = vpop.f32.mrf.mxu0
  %v1436 = vadd.f32 %v201, %v1435
  %v1437 = vpop.f32.mrf.mxu0
  %1438 = vmatprep.mubr.bf16.mxu0 0
  %1439 = vmatmul.mubr.bf16.gmra.mxu0 %v842
  %v1440 = vpop.f32.mrf.mxu0
  %v1441 = vadd.f32 %v201, %v1440
  %v1442 = vpop.f32.mrf.mxu0
  %v1443 = vpop.f32.mrf.mxu0
  %v1444 = vadd.f32 %v201, %v1443
  %v1445 = vpop.f32.mrf.mxu0
  %1446 = vmatprep.mubr.bf16.mxu0 0
  %1447 = vmatmul.mubr.bf16.gmra.mxu0 %v845
  %v1448 = vpop.f32.mrf.mxu0
  %v1449 = vadd.f32 %v201, %v1448
  %v1450 = vpop.f32.mrf.mxu0
  %v1451 = vpop.f32.mrf.mxu0
  %v1452 = vadd.f32 %v201, %v1451
  %v1453 = vpop.f32.mrf.mxu0
  %1454 = vmatprep.mubr.bf16.mxu0 0
  %1455 = vmatmul.mubr.bf16.gmra.mxu0 %v848
  %v1456 = vpop.f32.mrf.mxu0
  %v1457 = vadd.f32 %v201, %v1456
  %v1458 = vpop.f32.mrf.mxu0
  %v1459 = vpop.f32.mrf.mxu0
  %v1460 = vadd.f32 %v201, %v1459
  %v1461 = vpop.f32.mrf.mxu0
  %1462 = vmatprep.mubr.bf16.mxu0 0
  %1463 = vmatmul.mubr.bf16.gmra.mxu0 %v851
  %v1464 = vpop.f32.mrf.mxu0
  %v1465 = vadd.f32 %v201, %v1464
  %v1466 = vpop.f32.mrf.mxu0
  %v1467 = vpop.f32.mrf.mxu0
  %v1468 = vadd.f32 %v201, %v1467
  %v1469 = vpop.f32.mrf.mxu0
  %1470 = vmatprep.mubr.bf16.mxu0 0
  %1471 = vmatmul.mubr.bf16.gmra.mxu0 %v854
  %v1472 = vpop.f32.mrf.mxu0
  %v1473 = vadd.f32 %v201, %v1472
  %v1474 = vpop.f32.mrf.mxu0
  %v1475 = vpop.f32.mrf.mxu0
  %v1476 = vadd.f32 %v201, %v1475
  %v1477 = vpop.f32.mrf.mxu0
  %1478 = vmatprep.mubr.bf16.mxu0 0
  %1479 = vmatmul.mubr.bf16.gmra.mxu0 %v857
  %v1480 = vpop.f32.mrf.mxu0
  %v1481 = vadd.f32 %v201, %v1480
  %v1482 = vpop.f32.mrf.mxu0
  %v1483 = vpop.f32.mrf.mxu0
  %v1484 = vadd.f32 %v201, %v1483
  %v1485 = vpop.f32.mrf.mxu0
  %1486 = vmatprep.mubr.bf16.mxu0 0
  %1487 = vmatmul.mubr.bf16.gmra.mxu0 %v860
  %v1488 = vpop.f32.mrf.mxu0
  %v1489 = vadd.f32 %v201, %v1488
  %v1490 = vpop.f32.mrf.mxu0
  %v1491 = vpop.f32.mrf.mxu0
  %v1492 = vadd.f32 %v201, %v1491
  %v1493 = vpop.f32.mrf.mxu0
  %1494 = vmatprep.mubr.bf16.mxu0 0
  %1495 = vmatmul.mubr.bf16.gmra.mxu0 %v863
  %v1496 = vpop.f32.mrf.mxu0
  %v1497 = vadd.f32 %v201, %v1496
  %v1498 = vpop.f32.mrf.mxu0
  %v1499 = vpop.f32.mrf.mxu0
  %v1500 = vadd.f32 %v201, %v1499
  %v1501 = vpop.f32.mrf.mxu0
  %1502 = vmatprep.mubr.bf16.mxu0 0
  %1503 = vmatmul.mubr.bf16.gmra.mxu0 %v866
  %v1504 = vpop.f32.mrf.mxu0
  %v1505 = vadd.f32 %v201, %v1504
  %v1506 = vpop.f32.mrf.mxu0
  %v1507 = vpop.f32.mrf.mxu0
  %v1508 = vadd.f32 %v201, %v1507
  %v1509 = vpop.f32.mrf.mxu0
  %1510 = vmatprep.mubr.bf16.mxu0 0
  %1511 = vmatmul.mubr.bf16.gmra.mxu0 %v869
  %v1512 = vpop.f32.mrf.mxu0
  %v1513 = vadd.f32 %v201, %v1512
  %v1514 = vpop.f32.mrf.mxu0
  %v1515 = vpop.f32.mrf.mxu0
  %v1516 = vadd.f32 %v201, %v1515
  %v1517 = vpop.f32.mrf.mxu0
  %1518 = vmatprep.mubr.bf16.mxu0 0
  %1519 = vmatmul.mubr.bf16.gmra.mxu0 %v872
  %v1520 = vpop.f32.mrf.mxu0
  %v1521 = vadd.f32 %v201, %v1520
  %v1522 = vpop.f32.mrf.mxu0
  %v1523 = vpop.f32.mrf.mxu0
  %v1524 = vadd.f32 %v201, %v1523
  %v1525 = vpop.f32.mrf.mxu0
  %1526 = vmatprep.mubr.bf16.mxu0 0
  %1527 = vmatmul.mubr.bf16.gmra.mxu0 %v875
  %v1528 = vpop.f32.mrf.mxu0
  %v1529 = vadd.f32 %v201, %v1528
  %v1530 = vpop.f32.mrf.mxu0
  %v1531 = vpop.f32.mrf.mxu0
  %v1532 = vadd.f32 %v201, %v1531
  %v1533 = vpop.f32.mrf.mxu0
  %1534 = vmatprep.mubr.bf16.mxu0 0
  %1535 = vmatmul.mubr.bf16.gmra.mxu0 %v878
  %v1536 = vpop.f32.mrf.mxu0
  %v1537 = vadd.f32 %v201, %v1536
  %v1538 = vpop.f32.mrf.mxu0
  %v1539 = vpop.f32.mrf.mxu0
  %v1540 = vadd.f32 %v201, %v1539
  %v1541 = vpop.f32.mrf.mxu0
  %1542 = vmatprep.mubr.bf16.mxu0 0
  %1543 = vmatmul.mubr.bf16.gmra.mxu0 %v881
  %v1544 = vpop.f32.mrf.mxu0
  %v1545 = vadd.f32 %v201, %v1544
  %v1546 = vpop.f32.mrf.mxu0
  %v1547 = vpop.f32.mrf.mxu0
  %v1548 = vadd.f32 %v201, %v1547
  %v1549 = vpop.f32.mrf.mxu0
  %1550 = vmatprep.mubr.bf16.mxu0 0
  %1551 = vmatmul.mubr.bf16.gmra.mxu0 %v884
  %v1552 = vpop.f32.mrf.mxu0
  %v1553 = vadd.f32 %v201, %v1552
  %v1554 = vpop.f32.mrf.mxu0
  %v1555 = vpop.f32.mrf.mxu0
  %v1556 = vadd.f32 %v201, %v1555
  %v1557 = vpop.f32.mrf.mxu0
  %1558 = vmatprep.mubr.bf16.mxu0 0
  %1559 = vmatmul.mubr.bf16.gmra.mxu0 %v887
  %v1560 = vpop.f32.mrf.mxu0
  %v1561 = vadd.f32 %v201, %v1560
  %v1562 = vpop.f32.mrf.mxu0
  %v1563 = vpop.f32.mrf.mxu0
  %v1564 = vadd.f32 %v201, %v1563
  %v1565 = vpop.f32.mrf.mxu0
  %1566 = vmatprep.mubr.bf16.mxu0 0
  %1567 = vmatmul.mubr.bf16.gmra.mxu0 %v890
  %v1568 = vpop.f32.mrf.mxu0
  %v1569 = vadd.f32 %v201, %v1568
  %v1570 = vpop.f32.mrf.mxu0
  %v1571 = vpop.f32.mrf.mxu0
  %v1572 = vadd.f32 %v201, %v1571
  %v1573 = vpop.f32.mrf.mxu0
  %1574 = vmatprep.mubr.bf16.mxu0 0
  %1575 = vmatmul.mubr.bf16.gmra.mxu0 %v893
  %v1576 = vpop.f32.mrf.mxu0
  %v1577 = vadd.f32 %v201, %v1576
  %v1578 = vpop.f32.mrf.mxu0
  %v1579 = vpop.f32.mrf.mxu0
  %v1580 = vadd.f32 %v201, %v1579
  %v1581 = vpop.f32.mrf.mxu0
  %1582 = vmatprep.mubr.bf16.mxu0 0
  %1583 = vmatmul.mubr.bf16.gmra.mxu0 %v896
  %v1584 = vpop.f32.mrf.mxu0
  %v1585 = vadd.f32 %v201, %v1584
  %v1586 = vpop.f32.mrf.mxu0
  %v1587 = vpop.f32.mrf.mxu0
  %v1588 = vadd.f32 %v201, %v1587
  %v1589 = vpop.f32.mrf.mxu0
  %1590 = vmatprep.mubr.bf16.mxu0 0
  %1591 = vmatmul.mubr.bf16.gmra.mxu0 %v899
  %v1592 = vpop.f32.mrf.mxu0
  %v1593 = vadd.f32 %v201, %v1592
  %v1594 = vpop.f32.mrf.mxu0
  %v1595 = vpop.f32.mrf.mxu0
  %v1596 = vadd.f32 %v201, %v1595
  %v1597 = vpop.f32.mrf.mxu0
  %1598 = vmatprep.mubr.bf16.mxu0 0
  %1599 = vmatmul.mubr.bf16.gmra.mxu0 %v902
  %v1600 = vpop.f32.mrf.mxu0
  %v1601 = vadd.f32 %v201, %v1600
  %v1602 = vpop.f32.mrf.mxu0
  %v1603 = vpop.f32.mrf.mxu0
  %v1604 = vadd.f32 %v201, %v1603
  %v1605 = vpop.f32.mrf.mxu0
  %1606 = vmatprep.mubr.bf16.mxu0 0
  %1607 = vmatmul.mubr.bf16.gmra.mxu0 %v905
  %v1608 = vpop.f32.mrf.mxu0
  %v1609 = vadd.f32 %v201, %v1608
  %v1610 = vpop.f32.mrf.mxu0
  %v1611 = vpop.f32.mrf.mxu0
  %v1612 = vadd.f32 %v201, %v1611
  %v1613 = vpop.f32.mrf.mxu0
  %1614 = vmatprep.mubr.bf16.mxu0 0
  %1615 = vmatmul.mubr.bf16.gmra.mxu0 %v908
  %v1616 = vpop.f32.mrf.mxu0
  %v1617 = vadd.f32 %v201, %v1616
  %v1618 = vpop.f32.mrf.mxu0
  %v1619 = vpop.f32.mrf.mxu0
  %v1620 = vadd.f32 %v201, %v1619
  %v1621 = vpop.f32.mrf.mxu0
  %1622 = vmatprep.mubr.bf16.mxu0 0
  %1623 = vmatmul.mubr.bf16.gmra.mxu0 %v911
  %v1624 = vpop.f32.mrf.mxu0
  %v1625 = vadd.f32 %v201, %v1624
  %v1626 = vpop.f32.mrf.mxu0
  %v1627 = vpop.f32.mrf.mxu0
  %v1628 = vadd.f32 %v201, %v1627
  %v1629 = vpop.f32.mrf.mxu0
  %1630 = vmatprep.mubr.bf16.mxu0 0
  %1631 = vmatmul.mubr.bf16.gmra.mxu0 %v914
  %v1632 = vpop.f32.mrf.mxu0
  %v1633 = vadd.f32 %v201, %v1632
  %v1634 = vpop.f32.mrf.mxu0
  %v1635 = vpop.f32.mrf.mxu0
  %v1636 = vadd.f32 %v201, %v1635
  %v1637 = vpop.f32.mrf.mxu0
  %1638 = vmatprep.mubr.bf16.mxu0 0
  %1639 = vmatmul.mubr.bf16.gmra.mxu0 %v917
  %v1640 = vpop.f32.mrf.mxu0
  %v1641 = vadd.f32 %v201, %v1640
  %v1642 = vpop.f32.mrf.mxu0
  %v1643 = vpop.f32.mrf.mxu0
  %v1644 = vpop.f32.mrf.mxu0
  %1645 = vdwg.mxu0
  %v1646 = vmax.f32 %v961, 0.0
  %v1647 = vmax.f32 %v964, 0.0
  %v1648 = vmax.f32 %v969, 0.0
  %v1649 = vmax.f32 %v972, 0.0
  %v1650 = vmax.f32 %v977, 0.0
  %v1651 = vmax.f32 %v980, 0.0
  %v1652 = vmax.f32 %v985, 0.0
  %v1653 = vmax.f32 %v988, 0.0
  %v1654 = vmax.f32 %v993, 0.0
  %v1655 = vmax.f32 %v996, 0.0
  %v1656 = vmax.f32 %v1001, 0.0
  %v1657 = vmax.f32 %v1004, 0.0
  %v1658 = vmax.f32 %v1009, 0.0
  %v1659 = vmax.f32 %v1012, 0.0
  %v1660 = vmax.f32 %v1017, 0.0
  %v1661 = vmax.f32 %v1020, 0.0
  %v1662 = vmax.f32 %v1025, 0.0
  %v1663 = vmax.f32 %v1028, 0.0
  %v1664 = vmax.f32 %v1033, 0.0
  %v1665 = vmax.f32 %v1036, 0.0
  %v1666 = vmax.f32 %v1041, 0.0
  %v1667 = vmax.f32 %v1044, 0.0
  %v1668 = vmax.f32 %v1049, 0.0
  %v1669 = vmax.f32 %v1052, 0.0
  %v1670 = vmax.f32 %v1057, 0.0
  %v1671 = vmax.f32 %v1060, 0.0
  %v1672 = vmax.f32 %v1065, 0.0
  %v1673 = vmax.f32 %v1068, 0.0
  %v1674 = vmax.f32 %v1073, 0.0
  %v1675 = vmax.f32 %v1076, 0.0
  %v1676 = vmax.f32 %v1081, 0.0
  %v1677 = vmax.f32 %v1084, 0.0
  %v1678 = vmax.f32 %v1089, 0.0
  %v1679 = vmax.f32 %v1092, 0.0
  %v1680 = vmax.f32 %v1097, 0.0
  %v1681 = vmax.f32 %v1100, 0.0
  %v1682 = vmax.f32 %v1105, 0.0
  %v1683 = vmax.f32 %v1108, 0.0
  %v1684 = vmax.f32 %v1113, 0.0
  %v1685 = vmax.f32 %v1116, 0.0
  %v1686 = vmax.f32 %v1121, 0.0
  %v1687 = vmax.f32 %v1124, 0.0
  %v1688 = vmax.f32 %v1129, 0.0
  %v1689 = vmax.f32 %v1132, 0.0
  %v1690 = vmax.f32 %v1137, 0.0
  %v1691 = vmax.f32 %v1140, 0.0
  %v1692 = vmax.f32 %v1145, 0.0
  %v1693 = vmax.f32 %v1148, 0.0
  %v1694 = vmax.f32 %v1153, 0.0
  %v1695 = vmax.f32 %v1156, 0.0
  %v1696 = vmax.f32 %v1161, 0.0
  %v1697 = vmax.f32 %v1164, 0.0
  %v1698 = vmax.f32 %v1169, 0.0
  %v1699 = vmax.f32 %v1172, 0.0
  %v1700 = vmax.f32 %v1177, 0.0
  %v1701 = vmax.f32 %v1180, 0.0
  %v1702 = vmax.f32 %v1185, 0.0
  %v1703 = vmax.f32 %v1188, 0.0
  %v1704 = vmax.f32 %v1193, 0.0
  %v1705 = vmax.f32 %v1196, 0.0
  %v1706 = vmax.f32 %v1201, 0.0
  %v1707 = vmax.f32 %v1204, 0.0
  %v1708 = vmax.f32 %v1209, 0.0
  %v1709 = vmax.f32 %v1212, 0.0
  %v1710 = vmax.f32 %v1217, 0.0
  %v1711 = vmax.f32 %v1220, 0.0
  %v1712 = vmax.f32 %v1225, 0.0
  %v1713 = vmax.f32 %v1228, 0.0
  %v1714 = vmax.f32 %v1233, 0.0
  %v1715 = vmax.f32 %v1236, 0.0
  %v1716 = vmax.f32 %v1241, 0.0
  %v1717 = vmax.f32 %v1244, 0.0
  %v1718 = vmax.f32 %v1249, 0.0
  %v1719 = vmax.f32 %v1252, 0.0
  %v1720 = vmax.f32 %v1257, 0.0
  %v1721 = vmax.f32 %v1260, 0.0
  %v1722 = vmax.f32 %v1265, 0.0
  %v1723 = vmax.f32 %v1268, 0.0
  %v1724 = vmax.f32 %v1273, 0.0
  %v1725 = vmax.f32 %v1276, 0.0
  %v1726 = vmax.f32 %v1281, 0.0
  %v1727 = vmax.f32 %v1284, 0.0
  %v1728 = vmax.f32 %v1289, 0.0
  %v1729 = vmax.f32 %v1292, 0.0
  %v1730 = vmax.f32 %v1297, 0.0
  %v1731 = vmax.f32 %v1300, 0.0
  %v1732 = vmax.f32 %v1305, 0.0
  %v1733 = vmax.f32 %v1308, 0.0
  %v1734 = vmax.f32 %v1313, 0.0
  %v1735 = vmax.f32 %v1316, 0.0
  %v1736 = vmax.f32 %v1321, 0.0
  %v1737 = vmax.f32 %v1324, 0.0
  %v1738 = vmax.f32 %v1329, 0.0
  %v1739 = vmax.f32 %v1332, 0.0
  %v1740 = vmax.f32 %v1337, 0.0
  %v1741 = vmax.f32 %v1340, 0.0
  %v1742 = vmax.f32 %v1345, 0.0
  %v1743 = vmax.f32 %v1348, 0.0
  %v1744 = vmax.f32 %v1353, 0.0
  %v1745 = vmax.f32 %v1356, 0.0
  %v1746 = vmax.f32 %v1361, 0.0
  %v1747 = vmax.f32 %v1364, 0.0
  %v1748 = vmax.f32 %v1369, 0.0
  %v1749 = vmax.f32 %v1372, 0.0
  %v1750 = vmax.f32 %v1377, 0.0
  %v1751 = vmax.f32 %v1380, 0.0
  %v1752 = vmax.f32 %v1385, 0.0
  %v1753 = vmax.f32 %v1388, 0.0
  %v1754 = vmax.f32 %v1393, 0.0
  %v1755 = vmax.f32 %v1396, 0.0
  %v1756 = vmax.f32 %v1401, 0.0
  %v1757 = vmax.f32 %v1404, 0.0
  %v1758 = vmax.f32 %v1409, 0.0
  %v1759 = vmax.f32 %v1412, 0.0
  %v1760 = vmax.f32 %v1417, 0.0
  %v1761 = vmax.f32 %v1420, 0.0
  %v1762 = vmax.f32 %v1425, 0.0
  %v1763 = vmax.f32 %v1428, 0.0
  %v1764 = vmax.f32 %v1433, 0.0
  %v1765 = vmax.f32 %v1436, 0.0
  %v1766 = vmax.f32 %v1441, 0.0
  %v1767 = vmax.f32 %v1444, 0.0
  %v1768 = vmax.f32 %v1449, 0.0
  %v1769 = vmax.f32 %v1452, 0.0
  %v1770 = vmax.f32 %v1457, 0.0
  %v1771 = vmax.f32 %v1460, 0.0
  %v1772 = vmax.f32 %v1465, 0.0
  %v1773 = vmax.f32 %v1468, 0.0
  %v1774 = vmax.f32 %v1473, 0.0
  %v1775 = vmax.f32 %v1476, 0.0
  %v1776 = vmax.f32 %v1481, 0.0
  %v1777 = vmax.f32 %v1484, 0.0
  %v1778 = vmax.f32 %v1489, 0.0
  %v1779 = vmax.f32 %v1492, 0.0
  %v1780 = vmax.f32 %v1497, 0.0
  %v1781 = vmax.f32 %v1500, 0.0
  %v1782 = vmax.f32 %v1505, 0.0
  %v1783 = vmax.f32 %v1508, 0.0
  %v1784 = vmax.f32 %v1513, 0.0
  %v1785 = vmax.f32 %v1516, 0.0
  %v1786 = vmax.f32 %v1521, 0.0
  %v1787 = vmax.f32 %v1524, 0.0
  %v1788 = vmax.f32 %v1529, 0.0
  %v1789 = vmax.f32 %v1532, 0.0
  %v1790 = vmax.f32 %v1537, 0.0
  %v1791 = vmax.f32 %v1540, 0.0
  %v1792 = vmax.f32 %v1545, 0.0
  %v1793 = vmax.f32 %v1548, 0.0
  %v1794 = vmax.f32 %v1553, 0.0
  %v1795 = vmax.f32 %v1556, 0.0
  %v1796 = vmax.f32 %v1561, 0.0
  %v1797 = vmax.f32 %v1564, 0.0
  %v1798 = vmax.f32 %v1569, 0.0
  %v1799 = vmax.f32 %v1572, 0.0
  %v1800 = vmax.f32 %v1577, 0.0
  %v1801 = vmax.f32 %v1580, 0.0
  %v1802 = vmax.f32 %v1585, 0.0
  %v1803 = vmax.f32 %v1588, 0.0
  %v1804 = vmax.f32 %v1593, 0.0
  %v1805 = vmax.f32 %v1596, 0.0
  %v1806 = vmax.f32 %v1601, 0.0
  %v1807 = vmax.f32 %v1604, 0.0
  %v1808 = vmax.f32 %v1609, 0.0
  %v1809 = vmax.f32 %v1612, 0.0
  %v1810 = vmax.f32 %v1617, 0.0
  %v1811 = vmax.f32 %v1620, 0.0
  %v1812 = vmax.f32 %v1625, 0.0
  %v1813 = vmax.f32 %v1628, 0.0
  %v1814 = vmax.f32 %v1633, 0.0
  %v1815 = vmax.f32 %v1636, 0.0
  %v1816 = vmax.f32 %v1641, 0.0
  %v1817 = vpack.c.bf16 %v1647, %v1646
  %v1818 = vpack.c.bf16 %v1649, %v1648
  %v1819 = vpack.c.bf16 %v1651, %v1650
  %v1820 = vpack.c.bf16 %v1653, %v1652
  %v1821 = vpack.c.bf16 %v1655, %v1654
  %v1822 = vpack.c.bf16 %v1657, %v1656
  %v1823 = vpack.c.bf16 %v1659, %v1658
  %v1824 = vpack.c.bf16 %v1661, %v1660
  %v1825 = vpack.c.bf16 %v1663, %v1662
  %v1826 = vpack.c.bf16 %v1665, %v1664
  %v1827 = vpack.c.bf16 %v1667, %v1666
  %v1828 = vpack.c.bf16 %v1669, %v1668
  %v1829 = vpack.c.bf16 %v1671, %v1670
  %v1830 = vpack.c.bf16 %v1673, %v1672
  %v1831 = vpack.c.bf16 %v1675, %v1674
  %v1832 = vpack.c.bf16 %v1677, %v1676
  %v1833 = vpack.c.bf16 %v1679, %v1678
  %v1834 = vpack.c.bf16 %v1681, %v1680
  %v1835 = vpack.c.bf16 %v1683, %v1682
  %v1836 = vpack.c.bf16 %v1685, %v1684
  %v1837 = vpack.c.bf16 %v1687, %v1686
  %v1838 = vpack.c.bf16 %v1689, %v1688
  %v1839 = vpack.c.bf16 %v1691, %v1690
  %v1840 = vpack.c.bf16 %v1693, %v1692
  %v1841 = vpack.c.bf16 %v1695, %v1694
  %v1842 = vpack.c.bf16 %v1697, %v1696
  %v1843 = vpack.c.bf16 %v1699, %v1698
  %v1844 = vpack.c.bf16 %v1701, %v1700
  %v1845 = vpack.c.bf16 %v1703, %v1702
  %v1846 = vpack.c.bf16 %v1705, %v1704
  %v1847 = vpack.c.bf16 %v1707, %v1706
  %v1848 = vpack.c.bf16 %v1709, %v1708
  %v1849 = vpack.c.bf16 %v1711, %v1710
  %v1850 = vpack.c.bf16 %v1713, %v1712
  %v1851 = vpack.c.bf16 %v1715, %v1714
  %v1852 = vpack.c.bf16 %v1717, %v1716
  %v1853 = vpack.c.bf16 %v1719, %v1718
  %v1854 = vpack.c.bf16 %v1721, %v1720
  %v1855 = vpack.c.bf16 %v1723, %v1722
  %v1856 = vpack.c.bf16 %v1725, %v1724
  %v1857 = vpack.c.bf16 %v1727, %v1726
  %v1858 = vpack.c.bf16 %v1729, %v1728
  %v1859 = vpack.c.bf16 %v1731, %v1730
  %v1860 = vpack.c.bf16 %v1733, %v1732
  %v1861 = vpack.c.bf16 %v1735, %v1734
  %v1862 = vpack.c.bf16 %v1737, %v1736
  %v1863 = vpack.c.bf16 %v1739, %v1738
  %v1864 = vpack.c.bf16 %v1741, %v1740
  %v1865 = vpack.c.bf16 %v1743, %v1742
  %v1866 = vpack.c.bf16 %v1745, %v1744
  %v1867 = vpack.c.bf16 %v1747, %v1746
  %v1868 = vpack.c.bf16 %v1749, %v1748
  %v1869 = vpack.c.bf16 %v1751, %v1750
  %v1870 = vpack.c.bf16 %v1753, %v1752
  %v1871 = vpack.c.bf16 %v1755, %v1754
  %v1872 = vpack.c.bf16 %v1757, %v1756
  %v1873 = vpack.c.bf16 %v1759, %v1758
  %v1874 = vpack.c.bf16 %v1761, %v1760
  %v1875 = vpack.c.bf16 %v1763, %v1762
  %v1876 = vpack.c.bf16 %v1765, %v1764
  %v1877 = vpack.c.bf16 %v1767, %v1766
  %v1878 = vpack.c.bf16 %v1769, %v1768
  %v1879 = vpack.c.bf16 %v1771, %v1770
  %v1880 = vpack.c.bf16 %v1773, %v1772
  %v1881 = vpack.c.bf16 %v1775, %v1774
  %v1882 = vpack.c.bf16 %v1777, %v1776
  %v1883 = vpack.c.bf16 %v1779, %v1778
  %v1884 = vpack.c.bf16 %v1781, %v1780
  %v1885 = vpack.c.bf16 %v1783, %v1782
  %v1886 = vpack.c.bf16 %v1785, %v1784
  %v1887 = vpack.c.bf16 %v1787, %v1786
  %v1888 = vpack.c.bf16 %v1789, %v1788
  %v1889 = vpack.c.bf16 %v1791, %v1790
  %v1890 = vpack.c.bf16 %v1793, %v1792
  %v1891 = vpack.c.bf16 %v1795, %v1794
  %v1892 = vpack.c.bf16 %v1797, %v1796
  %v1893 = vpack.c.bf16 %v1799, %v1798
  %v1894 = vpack.c.bf16 %v1801, %v1800
  %v1895 = vpack.c.bf16 %v1803, %v1802
  %v1896 = vpack.c.bf16 %v1805, %v1804
  %v1897 = vpack.c.bf16 %v1807, %v1806
  %v1898 = vpack.c.bf16 %v1809, %v1808
  %v1899 = vpack.c.bf16 %v1811, %v1810
  %v1900 = vpack.c.bf16 %v1813, %v1812
  %v1901 = vpack.c.bf16 %v1815, %v1814
  %v1902 = vpack.c.bf16 %v1816, %v1816
  %v1989 = vunpack.c.l.b16 %v1817
  %v1990 = vunpack.c.h.b16 %v1817
  %v1991 = vunpack.c.l.b16 %v1818
  %v1992 = vunpack.c.h.b16 %v1818
  %v1993 = vunpack.c.l.b16 %v1819
  %v1994 = vunpack.c.h.b16 %v1819
  %v1995 = vunpack.c.l.b16 %v1820
  %v1996 = vunpack.c.h.b16 %v1820
  %v1997 = vunpack.c.l.b16 %v1821
  %v1998 = vunpack.c.h.b16 %v1821
  %v1999 = vunpack.c.l.b16 %v1822
  %v2000 = vunpack.c.h.b16 %v1822
  %v2001 = vunpack.c.l.b16 %v1823
  %v2002 = vunpack.c.h.b16 %v1823
  %v2003 = vunpack.c.l.b16 %v1824
  %v2004 = vunpack.c.h.b16 %v1824
  %v2005 = vunpack.c.l.b16 %v1825
  %v2006 = vunpack.c.h.b16 %v1825
  %v2007 = vunpack.c.l.b16 %v1826
  %v2008 = vunpack.c.h.b16 %v1826
  %v2009 = vunpack.c.l.b16 %v1827
  %v2010 = vunpack.c.h.b16 %v1827
  %v2011 = vunpack.c.l.b16 %v1828
  %v2012 = vunpack.c.h.b16 %v1828
  %v2013 = vunpack.c.l.b16 %v1829
  %v2014 = vunpack.c.h.b16 %v1829
  %v2015 = vunpack.c.l.b16 %v1830
  %v2016 = vunpack.c.h.b16 %v1830
  %v2017 = vunpack.c.l.b16 %v1831
  %v2018 = vunpack.c.h.b16 %v1831
  %v2019 = vunpack.c.l.b16 %v1832
  %v2020 = vunpack.c.h.b16 %v1832
  %v2021 = vunpack.c.l.b16 %v1833
  %v2022 = vunpack.c.h.b16 %v1833
  %v2023 = vunpack.c.l.b16 %v1834
  %v2024 = vunpack.c.h.b16 %v1834
  %v2025 = vunpack.c.l.b16 %v1835
  %v2026 = vunpack.c.h.b16 %v1835
  %v2027 = vunpack.c.l.b16 %v1836
  %v2028 = vunpack.c.h.b16 %v1836
  %v2029 = vunpack.c.l.b16 %v1837
  %v2030 = vunpack.c.h.b16 %v1837
  %v2031 = vunpack.c.l.b16 %v1838
  %v2032 = vunpack.c.h.b16 %v1838
  %v2033 = vunpack.c.l.b16 %v1839
  %v2034 = vunpack.c.h.b16 %v1839
  %v2035 = vunpack.c.l.b16 %v1840
  %v2036 = vunpack.c.h.b16 %v1840
  %v2037 = vunpack.c.l.b16 %v1841
  %v2038 = vunpack.c.h.b16 %v1841
  %v2039 = vunpack.c.l.b16 %v1842
  %v2040 = vunpack.c.h.b16 %v1842
  %v2041 = vunpack.c.l.b16 %v1843
  %v2042 = vunpack.c.h.b16 %v1843
  %v2043 = vunpack.c.l.b16 %v1844
  %v2044 = vunpack.c.h.b16 %v1844
  %v2045 = vunpack.c.l.b16 %v1845
  %v2046 = vunpack.c.h.b16 %v1845
  %v2047 = vunpack.c.l.b16 %v1846
  %v2048 = vunpack.c.h.b16 %v1846
  %v2049 = vunpack.c.l.b16 %v1847
  %v2050 = vunpack.c.h.b16 %v1847
  %v2051 = vunpack.c.l.b16 %v1848
  %v2052 = vunpack.c.h.b16 %v1848
  %v2053 = vunpack.c.l.b16 %v1849
  %v2054 = vunpack.c.h.b16 %v1849
  %v2055 = vunpack.c.l.b16 %v1850
  %v2056 = vunpack.c.h.b16 %v1850
  %v2057 = vunpack.c.l.b16 %v1851
  %v2058 = vunpack.c.h.b16 %v1851
  %v2059 = vunpack.c.l.b16 %v1852
  %v2060 = vunpack.c.h.b16 %v1852
  %v2061 = vunpack.c.l.b16 %v1853
  %v2062 = vunpack.c.h.b16 %v1853
  %v2063 = vunpack.c.l.b16 %v1854
  %v2064 = vunpack.c.h.b16 %v1854
  %v2065 = vunpack.c.l.b16 %v1855
  %v2066 = vunpack.c.h.b16 %v1855
  %v2067 = vunpack.c.l.b16 %v1856
  %v2068 = vunpack.c.h.b16 %v1856
  %v2069 = vunpack.c.l.b16 %v1857
  %v2070 = vunpack.c.h.b16 %v1857
  %v2071 = vunpack.c.l.b16 %v1858
  %v2072 = vunpack.c.h.b16 %v1858
  %v2073 = vunpack.c.l.b16 %v1859
  %v2074 = vunpack.c.h.b16 %v1859
  %v2075 = vunpack.c.l.b16 %v1860
  %v2076 = vunpack.c.h.b16 %v1860
  %v2077 = vunpack.c.l.b16 %v1861
  %v2078 = vunpack.c.h.b16 %v1861
  %v2079 = vunpack.c.l.b16 %v1862
  %v2080 = vunpack.c.h.b16 %v1862
  %v2081 = vunpack.c.l.b16 %v1863
  %v2082 = vunpack.c.h.b16 %v1863
  %v2083 = vunpack.c.l.b16 %v1864
  %v2084 = vunpack.c.h.b16 %v1864
  %v2085 = vunpack.c.l.b16 %v1865
  %v2086 = vunpack.c.h.b16 %v1865
  %v2087 = vunpack.c.l.b16 %v1866
  %v2088 = vunpack.c.h.b16 %v1866
  %v2089 = vunpack.c.l.b16 %v1867
  %v2090 = vunpack.c.h.b16 %v1867
  %v2091 = vunpack.c.l.b16 %v1868
  %v2092 = vunpack.c.h.b16 %v1868
  %v2093 = vunpack.c.l.b16 %v1869
  %v2094 = vunpack.c.h.b16 %v1869
  %v2095 = vunpack.c.l.b16 %v1870
  %v2096 = vunpack.c.h.b16 %v1870
  %v2097 = vunpack.c.l.b16 %v1871
  %v2098 = vunpack.c.h.b16 %v1871
  %v2099 = vunpack.c.l.b16 %v1872
  %v2100 = vunpack.c.h.b16 %v1872
  %v2101 = vunpack.c.l.b16 %v1873
  %v2102 = vunpack.c.h.b16 %v1873
  %v2103 = vunpack.c.l.b16 %v1874
  %v2104 = vunpack.c.h.b16 %v1874
  %v2105 = vunpack.c.l.b16 %v1875
  %v2106 = vunpack.c.h.b16 %v1875
  %v2107 = vunpack.c.l.b16 %v1876
  %v2108 = vunpack.c.h.b16 %v1876
  %v2109 = vunpack.c.l.b16 %v1877
  %v2110 = vunpack.c.h.b16 %v1877
  %v2111 = vunpack.c.l.b16 %v1878
  %v2112 = vunpack.c.h.b16 %v1878
  %v2113 = vunpack.c.l.b16 %v1879
  %v2114 = vunpack.c.h.b16 %v1879
  %v2115 = vunpack.c.l.b16 %v1880
  %v2116 = vunpack.c.h.b16 %v1880
  %v2117 = vunpack.c.l.b16 %v1881
  %v2118 = vunpack.c.h.b16 %v1881
  %v2119 = vunpack.c.l.b16 %v1882
  %v2120 = vunpack.c.h.b16 %v1882
  %v2121 = vunpack.c.l.b16 %v1883
  %v2122 = vunpack.c.h.b16 %v1883
  %v2123 = vunpack.c.l.b16 %v1884
  %v2124 = vunpack.c.h.b16 %v1884
  %v2125 = vunpack.c.l.b16 %v1885
  %v2126 = vunpack.c.h.b16 %v1885
  %v2127 = vunpack.c.l.b16 %v1886
  %v2128 = vunpack.c.h.b16 %v1886
  %v2129 = vunpack.c.l.b16 %v1887
  %v2130 = vunpack.c.h.b16 %v1887
  %v2131 = vunpack.c.l.b16 %v1888
  %v2132 = vunpack.c.h.b16 %v1888
  %v2133 = vunpack.c.l.b16 %v1889
  %v2134 = vunpack.c.h.b16 %v1889
  %v2135 = vunpack.c.l.b16 %v1890
  %v2136 = vunpack.c.h.b16 %v1890
  %v2137 = vunpack.c.l.b16 %v1891
  %v2138 = vunpack.c.h.b16 %v1891
  %v2139 = vunpack.c.l.b16 %v1892
  %v2140 = vunpack.c.h.b16 %v1892
  %v2141 = vunpack.c.l.b16 %v1893
  %v2142 = vunpack.c.h.b16 %v1893
  %v2143 = vunpack.c.l.b16 %v1894
  %v2144 = vunpack.c.h.b16 %v1894
  %v2145 = vunpack.c.l.b16 %v1895
  %v2146 = vunpack.c.h.b16 %v1895
  %v2147 = vunpack.c.l.b16 %v1896
  %v2148 = vunpack.c.h.b16 %v1896
  %v2149 = vunpack.c.l.b16 %v1897
  %v2150 = vunpack.c.h.b16 %v1897
  %v2151 = vunpack.c.l.b16 %v1898
  %v2152 = vunpack.c.h.b16 %v1898
  %v2153 = vunpack.c.l.b16 %v1899
  %v2154 = vunpack.c.h.b16 %v1899
  %v2155 = vunpack.c.l.b16 %v1900
  %v2156 = vunpack.c.h.b16 %v1900
  %v2157 = vunpack.c.l.b16 %v1901
  %v2158 = vunpack.c.h.b16 %v1901
  %v2159 = vunpack.c.l.b16 %v1902
  %v2160 = vpack.c.b16 %v1989, %v1989
  %v2161 = vpack.c.b16 %v1990, %v1990
  %v2162 = vpack.c.b16 %v1991, %v1991
  %v2163 = vpack.c.b16 %v1992, %v1992
  %v2164 = vpack.c.b16 %v1993, %v1993
  %v2165 = vpack.c.b16 %v1994, %v1994
  %v2166 = vpack.c.b16 %v1995, %v1995
  %v2167 = vpack.c.b16 %v1996, %v1996
  %v2168 = vpack.c.b16 %v1997, %v1997
  %v2169 = vpack.c.b16 %v1998, %v1998
  %v2170 = vpack.c.b16 %v1999, %v1999
  %v2171 = vpack.c.b16 %v2000, %v2000
  %v2172 = vpack.c.b16 %v2001, %v2001
  %v2173 = vpack.c.b16 %v2002, %v2002
  %v2174 = vpack.c.b16 %v2003, %v2003
  %v2175 = vpack.c.b16 %v2004, %v2004
  %v2176 = vpack.c.b16 %v2005, %v2005
  %v2177 = vpack.c.b16 %v2006, %v2006
  %v2178 = vpack.c.b16 %v2007, %v2007
  %v2179 = vpack.c.b16 %v2008, %v2008
  %v2180 = vpack.c.b16 %v2009, %v2009
  %v2181 = vpack.c.b16 %v2010, %v2010
  %v2182 = vpack.c.b16 %v2011, %v2011
  %v2183 = vpack.c.b16 %v2012, %v2012
  %v2184 = vpack.c.b16 %v2013, %v2013
  %v2185 = vpack.c.b16 %v2014, %v2014
  %v2186 = vpack.c.b16 %v2015, %v2015
  %v2187 = vpack.c.b16 %v2016, %v2016
  %v2188 = vpack.c.b16 %v2017, %v2017
  %v2189 = vpack.c.b16 %v2018, %v2018
  %v2190 = vpack.c.b16 %v2019, %v2019
  %v2191 = vpack.c.b16 %v2020, %v2020
  %v2192 = vpack.c.b16 %v2021, %v2021
  %v2193 = vpack.c.b16 %v2022, %v2022
  %v2194 = vpack.c.b16 %v2023, %v2023
  %v2195 = vpack.c.b16 %v2024, %v2024
  %v2196 = vpack.c.b16 %v2025, %v2025
  %v2197 = vpack.c.b16 %v2026, %v2026
  %v2198 = vpack.c.b16 %v2027, %v2027
  %v2199 = vpack.c.b16 %v2028, %v2028
  %v2200 = vpack.c.b16 %v2029, %v2029
  %v2201 = vpack.c.b16 %v2030, %v2030
  %v2202 = vpack.c.b16 %v2031, %v2031
  %v2203 = vpack.c.b16 %v2032, %v2032
  %v2204 = vpack.c.b16 %v2033, %v2033
  %v2205 = vpack.c.b16 %v2034, %v2034
  %v2206 = vpack.c.b16 %v2035, %v2035
  %v2207 = vpack.c.b16 %v2036, %v2036
  %v2208 = vpack.c.b16 %v2037, %v2037
  %v2209 = vpack.c.b16 %v2038, %v2038
  %v2210 = vpack.c.b16 %v2039, %v2039
  %v2211 = vpack.c.b16 %v2040, %v2040
  %v2212 = vpack.c.b16 %v2041, %v2041
  %v2213 = vpack.c.b16 %v2042, %v2042
  %v2214 = vpack.c.b16 %v2043, %v2043
  %v2215 = vpack.c.b16 %v2044, %v2044
  %v2216 = vpack.c.b16 %v2045, %v2045
  %v2217 = vpack.c.b16 %v2046, %v2046
  %v2218 = vpack.c.b16 %v2047, %v2047
  %v2219 = vpack.c.b16 %v2048, %v2048
  %v2220 = vpack.c.b16 %v2049, %v2049
  %v2221 = vpack.c.b16 %v2050, %v2050
  %v2222 = vpack.c.b16 %v2051, %v2051
  %v2223 = vpack.c.b16 %v2052, %v2052
  %v2224 = vpack.c.b16 %v2053, %v2053
  %v2225 = vpack.c.b16 %v2054, %v2054
  %v2226 = vpack.c.b16 %v2055, %v2055
  %v2227 = vpack.c.b16 %v2056, %v2056
  %v2228 = vpack.c.b16 %v2057, %v2057
  %v2229 = vpack.c.b16 %v2058, %v2058
  %v2230 = vpack.c.b16 %v2059, %v2059
  %v2231 = vpack.c.b16 %v2060, %v2060
  %v2232 = vpack.c.b16 %v2061, %v2061
  %v2233 = vpack.c.b16 %v2062, %v2062
  %v2234 = vpack.c.b16 %v2063, %v2063
  %v2235 = vpack.c.b16 %v2064, %v2064
  %v2236 = vpack.c.b16 %v2065, %v2065
  %v2237 = vpack.c.b16 %v2066, %v2066
  %v2238 = vpack.c.b16 %v2067, %v2067
  %v2239 = vpack.c.b16 %v2068, %v2068
  %v2240 = vpack.c.b16 %v2069, %v2069
  %v2241 = vpack.c.b16 %v2070, %v2070
  %v2242 = vpack.c.b16 %v2071, %v2071
  %v2243 = vpack.c.b16 %v2072, %v2072
  %v2244 = vpack.c.b16 %v2073, %v2073
  %v2245 = vpack.c.b16 %v2074, %v2074
  %v2246 = vpack.c.b16 %v2075, %v2075
  %v2247 = vpack.c.b16 %v2076, %v2076
  %v2248 = vpack.c.b16 %v2077, %v2077
  %v2249 = vpack.c.b16 %v2078, %v2078
  %v2250 = vpack.c.b16 %v2079, %v2079
  %v2251 = vpack.c.b16 %v2080, %v2080
  %v2252 = vpack.c.b16 %v2081, %v2081
  %v2253 = vpack.c.b16 %v2082, %v2082
  %v2254 = vpack.c.b16 %v2083, %v2083
  %v2255 = vpack.c.b16 %v2084, %v2084
  %v2256 = vpack.c.b16 %v2085, %v2085
  %v2257 = vpack.c.b16 %v2086, %v2086
  %v2258 = vpack.c.b16 %v2087, %v2087
  %v2259 = vpack.c.b16 %v2088, %v2088
  %v2260 = vpack.c.b16 %v2089, %v2089
  %v2261 = vpack.c.b16 %v2090, %v2090
  %v2262 = vpack.c.b16 %v2091, %v2091
  %v2263 = vpack.c.b16 %v2092, %v2092
  %v2264 = vpack.c.b16 %v2093, %v2093
  %v2265 = vpack.c.b16 %v2094, %v2094
  %v2266 = vpack.c.b16 %v2095, %v2095
  %v2267 = vpack.c.b16 %v2096, %v2096
  %v2268 = vpack.c.b16 %v2097, %v2097
  %v2269 = vpack.c.b16 %v2098, %v2098
  %v2270 = vpack.c.b16 %v2099, %v2099
  %v2271 = vpack.c.b16 %v2100, %v2100
  %v2272 = vpack.c.b16 %v2101, %v2101
  %v2273 = vpack.c.b16 %v2102, %v2102
  %v2274 = vpack.c.b16 %v2103, %v2103
  %v2275 = vpack.c.b16 %v2104, %v2104
  %v2276 = vpack.c.b16 %v2105, %v2105
  %v2277 = vpack.c.b16 %v2106, %v2106
  %v2278 = vpack.c.b16 %v2107, %v2107
  %v2279 = vpack.c.b16 %v2108, %v2108
  %v2280 = vpack.c.b16 %v2109, %v2109
  %v2281 = vpack.c.b16 %v2110, %v2110
  %v2282 = vpack.c.b16 %v2111, %v2111
  %v2283 = vpack.c.b16 %v2112, %v2112
  %v2284 = vpack.c.b16 %v2113, %v2113
  %v2285 = vpack.c.b16 %v2114, %v2114
  %v2286 = vpack.c.b16 %v2115, %v2115
  %v2287 = vpack.c.b16 %v2116, %v2116
  %v2288 = vpack.c.b16 %v2117, %v2117
  %v2289 = vpack.c.b16 %v2118, %v2118
  %v2290 = vpack.c.b16 %v2119, %v2119
  %v2291 = vpack.c.b16 %v2120, %v2120
  %v2292 = vpack.c.b16 %v2121, %v2121
  %v2293 = vpack.c.b16 %v2122, %v2122
  %v2294 = vpack.c.b16 %v2123, %v2123
  %v2295 = vpack.c.b16 %v2124, %v2124
  %v2296 = vpack.c.b16 %v2125, %v2125
  %v2297 = vpack.c.b16 %v2126, %v2126
  %v2298 = vpack.c.b16 %v2127, %v2127
  %v2299 = vpack.c.b16 %v2128, %v2128
  %v2300 = vpack.c.b16 %v2129, %v2129
  %v2301 = vpack.c.b16 %v2130, %v2130
  %v2302 = vpack.c.b16 %v2131, %v2131
  %v2303 = vpack.c.b16 %v2132, %v2132
  %v2304 = vpack.c.b16 %v2133, %v2133
  %v2305 = vpack.c.b16 %v2134, %v2134
  %v2306 = vpack.c.b16 %v2135, %v2135
  %v2307 = vpack.c.b16 %v2136, %v2136
  %v2308 = vpack.c.b16 %v2137, %v2137
  %v2309 = vpack.c.b16 %v2138, %v2138
  %v2310 = vpack.c.b16 %v2139, %v2139
  %v2311 = vpack.c.b16 %v2140, %v2140
  %v2312 = vpack.c.b16 %v2141, %v2141
  %v2313 = vpack.c.b16 %v2142, %v2142
  %v2314 = vpack.c.b16 %v2143, %v2143
  %v2315 = vpack.c.b16 %v2144, %v2144
  %v2316 = vpack.c.b16 %v2145, %v2145
  %v2317 = vpack.c.b16 %v2146, %v2146
  %v2318 = vpack.c.b16 %v2147, %v2147
  %v2319 = vpack.c.b16 %v2148, %v2148
  %v2320 = vpack.c.b16 %v2149, %v2149
  %v2321 = vpack.c.b16 %v2150, %v2150
  %v2322 = vpack.c.b16 %v2151, %v2151
  %v2323 = vpack.c.b16 %v2152, %v2152
  %v2324 = vpack.c.b16 %v2153, %v2153
  %v2325 = vpack.c.b16 %v2154, %v2154
  %v2326 = vpack.c.b16 %v2155, %v2155
  %v2327 = vpack.c.b16 %v2156, %v2156
  %v2328 = vpack.c.b16 %v2157, %v2157
  %v2329 = vpack.c.b16 %v2158, %v2158
  %v2330 = vpack.c.b16 %v2159, %v2159
  %vm2502 = vcmask 519168
  %2503 = vst.msk [vmem:[%s3] sm:$0xf] %vm2502, %v2160
  %2504 = vst.msk [vmem:[%s3 + $0x4] sm:$0xf] %vm2502, %v2161
  %2505 = vst.msk [vmem:[%s3 + $0x8] sm:$0xf] %vm2502, %v2162
  %2506 = vst.msk [vmem:[%s3 + $0xc] sm:$0xf] %vm2502, %v2163
  %2507 = vst.msk [vmem:[%s3 + $0x10] sm:$0xf] %vm2502, %v2164
  %2508 = vst.msk [vmem:[%s3 + $0x14] sm:$0xf] %vm2502, %v2165
  %2509 = vst.msk [vmem:[%s3 + $0x18] sm:$0xf] %vm2502, %v2166
  %2510 = vst.msk [vmem:[%s3 + $0x1c] sm:$0xf] %vm2502, %v2167
  %2511 = vst.msk [vmem:[%s3 + $0x20] sm:$0xf] %vm2502, %v2168
  %2512 = vst.msk [vmem:[%s3 + $0x24] sm:$0xf] %vm2502, %v2169
  %2513 = vst.msk [vmem:[%s3 + $0x28] sm:$0xf] %vm2502, %v2170
  %2514 = vst.msk [vmem:[%s3 + $0x2c] sm:$0xf] %vm2502, %v2171
  %2515 = vst.msk [vmem:[%s3 + $0x30] sm:$0xf] %vm2502, %v2172
  %2516 = vst.msk [vmem:[%s3 + $0x34] sm:$0xf] %vm2502, %v2173
  %2517 = vst.msk [vmem:[%s3 + $0x38] sm:$0xf] %vm2502, %v2174
  %2518 = vst.msk [vmem:[%s3 + $0x3c] sm:$0xf] %vm2502, %v2175
  %2519 = vst.msk [vmem:[%s3 + $0x40] sm:$0xf] %vm2502, %v2176
  %2520 = vst.msk [vmem:[%s3 + $0x44] sm:$0xf] %vm2502, %v2177
  %2521 = vst.msk [vmem:[%s3 + $0x48] sm:$0xf] %vm2502, %v2178
  %2522 = vst.msk [vmem:[%s3 + $0x4c] sm:$0xf] %vm2502, %v2179
  %2523 = vst.msk [vmem:[%s3 + $0x50] sm:$0xf] %vm2502, %v2180
  %2524 = vst.msk [vmem:[%s3 + $0x54] sm:$0xf] %vm2502, %v2181
  %2525 = vst.msk [vmem:[%s3 + $0x58] sm:$0xf] %vm2502, %v2182
  %2526 = vst.msk [vmem:[%s3 + $0x5c] sm:$0xf] %vm2502, %v2183
  %2527 = vst.msk [vmem:[%s3 + $0x60] sm:$0xf] %vm2502, %v2184
  %2528 = vst.msk [vmem:[%s3 + $0x64] sm:$0xf] %vm2502, %v2185
  %2529 = vst.msk [vmem:[%s3 + $0x68] sm:$0xf] %vm2502, %v2186
  %2530 = vst.msk [vmem:[%s3 + $0x6c] sm:$0xf] %vm2502, %v2187
  %2531 = vst.msk [vmem:[%s3 + $0x70] sm:$0xf] %vm2502, %v2188
  %2532 = vst.msk [vmem:[%s3 + $0x74] sm:$0xf] %vm2502, %v2189
  %2533 = vst.msk [vmem:[%s3 + $0x78] sm:$0xf] %vm2502, %v2190
  %2534 = vst.msk [vmem:[%s3 + $0x7c] sm:$0xf] %vm2502, %v2191
  %2535 = vst.msk [vmem:[%s3 + $0x80] sm:$0xf] %vm2502, %v2192
  %2536 = vst.msk [vmem:[%s3 + $0x84] sm:$0xf] %vm2502, %v2193
  %2537 = vst.msk [vmem:[%s3 + $0x88] sm:$0xf] %vm2502, %v2194
  %2538 = vst.msk [vmem:[%s3 + $0x8c] sm:$0xf] %vm2502, %v2195
  %2539 = vst.msk [vmem:[%s3 + $0x90] sm:$0xf] %vm2502, %v2196
  %2540 = vst.msk [vmem:[%s3 + $0x94] sm:$0xf] %vm2502, %v2197
  %2541 = vst.msk [vmem:[%s3 + $0x98] sm:$0xf] %vm2502, %v2198
  %2542 = vst.msk [vmem:[%s3 + $0x9c] sm:$0xf] %vm2502, %v2199
  %2543 = vst.msk [vmem:[%s3 + $0xa0] sm:$0xf] %vm2502, %v2200
  %2544 = vst.msk [vmem:[%s3 + $0xa4] sm:$0xf] %vm2502, %v2201
  %2545 = vst.msk [vmem:[%s3 + $0xa8] sm:$0xf] %vm2502, %v2202
  %2546 = vst.msk [vmem:[%s3 + $0xac] sm:$0xf] %vm2502, %v2203
  %2547 = vst.msk [vmem:[%s3 + $0xb0] sm:$0xf] %vm2502, %v2204
  %2548 = vst.msk [vmem:[%s3 + $0xb4] sm:$0xf] %vm2502, %v2205
  %2549 = vst.msk [vmem:[%s3 + $0xb8] sm:$0xf] %vm2502, %v2206
  %2550 = vst.msk [vmem:[%s3 + $0xbc] sm:$0xf] %vm2502, %v2207
  %2551 = vst.msk [vmem:[%s3 + $0xc0] sm:$0xf] %vm2502, %v2208
  %2552 = vst.msk [vmem:[%s3 + $0xc4] sm:$0xf] %vm2502, %v2209
  %2553 = vst.msk [vmem:[%s3 + $0xc8] sm:$0xf] %vm2502, %v2210
  %2554 = vst.msk [vmem:[%s3 + $0xcc] sm:$0xf] %vm2502, %v2211
  %2555 = vst.msk [vmem:[%s3 + $0xd0] sm:$0xf] %vm2502, %v2212
  %2556 = vst.msk [vmem:[%s3 + $0xd4] sm:$0xf] %vm2502, %v2213
  %2557 = vst.msk [vmem:[%s3 + $0xd8] sm:$0xf] %vm2502, %v2214
  %2558 = vst.msk [vmem:[%s3 + $0xdc] sm:$0xf] %vm2502, %v2215
  %2559 = vst.msk [vmem:[%s3 + $0xe0] sm:$0xf] %vm2502, %v2216
  %2560 = vst.msk [vmem:[%s3 + $0xe4] sm:$0xf] %vm2502, %v2217
  %2561 = vst.msk [vmem:[%s3 + $0xe8] sm:$0xf] %vm2502, %v2218
  %2562 = vst.msk [vmem:[%s3 + $0xec] sm:$0xf] %vm2502, %v2219
  %2563 = vst.msk [vmem:[%s3 + $0xf0] sm:$0xf] %vm2502, %v2220
  %2564 = vst.msk [vmem:[%s3 + $0xf4] sm:$0xf] %vm2502, %v2221
  %2565 = vst.msk [vmem:[%s3 + $0xf8] sm:$0xf] %vm2502, %v2222
  %2566 = vst.msk [vmem:[%s3 + $0xfc] sm:$0xf] %vm2502, %v2223
  %2567 = vst.msk [vmem:[%s3 + $0x100] sm:$0xf] %vm2502, %v2224
  %2568 = vst.msk [vmem:[%s3 + $0x104] sm:$0xf] %vm2502, %v2225
  %2569 = vst.msk [vmem:[%s3 + $0x108] sm:$0xf] %vm2502, %v2226
  %2570 = vst.msk [vmem:[%s3 + $0x10c] sm:$0xf] %vm2502, %v2227
  %2571 = vst.msk [vmem:[%s3 + $0x110] sm:$0xf] %vm2502, %v2228
  %2572 = vst.msk [vmem:[%s3 + $0x114] sm:$0xf] %vm2502, %v2229
  %2573 = vst.msk [vmem:[%s3 + $0x118] sm:$0xf] %vm2502, %v2230
  %2574 = vst.msk [vmem:[%s3 + $0x11c] sm:$0xf] %vm2502, %v2231
  %2575 = vst.msk [vmem:[%s3 + $0x120] sm:$0xf] %vm2502, %v2232
  %2576 = vst.msk [vmem:[%s3 + $0x124] sm:$0xf] %vm2502, %v2233
  %2577 = vst.msk [vmem:[%s3 + $0x128] sm:$0xf] %vm2502, %v2234
  %2578 = vst.msk [vmem:[%s3 + $0x12c] sm:$0xf] %vm2502, %v2235
  %2579 = vst.msk [vmem:[%s3 + $0x130] sm:$0xf] %vm2502, %v2236
  %2580 = vst.msk [vmem:[%s3 + $0x134] sm:$0xf] %vm2502, %v2237
  %2581 = vst.msk [vmem:[%s3 + $0x138] sm:$0xf] %vm2502, %v2238
  %2582 = vst.msk [vmem:[%s3 + $0x13c] sm:$0xf] %vm2502, %v2239
  %2583 = vst.msk [vmem:[%s3 + $0x140] sm:$0xf] %vm2502, %v2240
  %2584 = vst.msk [vmem:[%s3 + $0x144] sm:$0xf] %vm2502, %v2241
  %2585 = vst.msk [vmem:[%s3 + $0x148] sm:$0xf] %vm2502, %v2242
  %2586 = vst.msk [vmem:[%s3 + $0x14c] sm:$0xf] %vm2502, %v2243
  %2587 = vst.msk [vmem:[%s3 + $0x150] sm:$0xf] %vm2502, %v2244
  %2588 = vst.msk [vmem:[%s3 + $0x154] sm:$0xf] %vm2502, %v2245
  %2589 = vst.msk [vmem:[%s3 + $0x158] sm:$0xf] %vm2502, %v2246
  %2590 = vst.msk [vmem:[%s3 + $0x15c] sm:$0xf] %vm2502, %v2247
  %2591 = vst.msk [vmem:[%s3 + $0x160] sm:$0xf] %vm2502, %v2248
  %2592 = vst.msk [vmem:[%s3 + $0x164] sm:$0xf] %vm2502, %v2249
  %2593 = vst.msk [vmem:[%s3 + $0x168] sm:$0xf] %vm2502, %v2250
  %2594 = vst.msk [vmem:[%s3 + $0x16c] sm:$0xf] %vm2502, %v2251
  %2595 = vst.msk [vmem:[%s3 + $0x170] sm:$0xf] %vm2502, %v2252
  %2596 = vst.msk [vmem:[%s3 + $0x174] sm:$0xf] %vm2502, %v2253
  %2597 = vst.msk [vmem:[%s3 + $0x178] sm:$0xf] %vm2502, %v2254
  %2598 = vst.msk [vmem:[%s3 + $0x17c] sm:$0xf] %vm2502, %v2255
  %2599 = vst.msk [vmem:[%s3 + $0x180] sm:$0xf] %vm2502, %v2256
  %2600 = vst.msk [vmem:[%s3 + $0x184] sm:$0xf] %vm2502, %v2257
  %2601 = vst.msk [vmem:[%s3 + $0x188] sm:$0xf] %vm2502, %v2258
  %2602 = vst.msk [vmem:[%s3 + $0x18c] sm:$0xf] %vm2502, %v2259
  %2603 = vst.msk [vmem:[%s3 + $0x190] sm:$0xf] %vm2502, %v2260
  %2604 = vst.msk [vmem:[%s3 + $0x194] sm:$0xf] %vm2502, %v2261
  %2605 = vst.msk [vmem:[%s3 + $0x198] sm:$0xf] %vm2502, %v2262
  %2606 = vst.msk [vmem:[%s3 + $0x19c] sm:$0xf] %vm2502, %v2263
  %2607 = vst.msk [vmem:[%s3 + $0x1a0] sm:$0xf] %vm2502, %v2264
  %2608 = vst.msk [vmem:[%s3 + $0x1a4] sm:$0xf] %vm2502, %v2265
  %2609 = vst.msk [vmem:[%s3 + $0x1a8] sm:$0xf] %vm2502, %v2266
  %2610 = vst.msk [vmem:[%s3 + $0x1ac] sm:$0xf] %vm2502, %v2267
  %2611 = vst.msk [vmem:[%s3 + $0x1b0] sm:$0xf] %vm2502, %v2268
  %2612 = vst.msk [vmem:[%s3 + $0x1b4] sm:$0xf] %vm2502, %v2269
  %2613 = vst.msk [vmem:[%s3 + $0x1b8] sm:$0xf] %vm2502, %v2270
  %2614 = vst.msk [vmem:[%s3 + $0x1bc] sm:$0xf] %vm2502, %v2271
  %2615 = vst.msk [vmem:[%s3 + $0x1c0] sm:$0xf] %vm2502, %v2272
  %2616 = vst.msk [vmem:[%s3 + $0x1c4] sm:$0xf] %vm2502, %v2273
  %2617 = vst.msk [vmem:[%s3 + $0x1c8] sm:$0xf] %vm2502, %v2274
  %2618 = vst.msk [vmem:[%s3 + $0x1cc] sm:$0xf] %vm2502, %v2275
  %2619 = vst.msk [vmem:[%s3 + $0x1d0] sm:$0xf] %vm2502, %v2276
  %2620 = vst.msk [vmem:[%s3 + $0x1d4] sm:$0xf] %vm2502, %v2277
  %2621 = vst.msk [vmem:[%s3 + $0x1d8] sm:$0xf] %vm2502, %v2278
  %2622 = vst.msk [vmem:[%s3 + $0x1dc] sm:$0xf] %vm2502, %v2279
  %2623 = vst.msk [vmem:[%s3 + $0x1e0] sm:$0xf] %vm2502, %v2280
  %2624 = vst.msk [vmem:[%s3 + $0x1e4] sm:$0xf] %vm2502, %v2281
  %2625 = vst.msk [vmem:[%s3 + $0x1e8] sm:$0xf] %vm2502, %v2282
  %2626 = vst.msk [vmem:[%s3 + $0x1ec] sm:$0xf] %vm2502, %v2283
  %2627 = vst.msk [vmem:[%s3 + $0x1f0] sm:$0xf] %vm2502, %v2284
  %2628 = vst.msk [vmem:[%s3 + $0x1f4] sm:$0xf] %vm2502, %v2285
  %2629 = vst.msk [vmem:[%s3 + $0x1f8] sm:$0xf] %vm2502, %v2286
  %2630 = vst.msk [vmem:[%s3 + $0x1fc] sm:$0xf] %vm2502, %v2287
  %2631 = vst.msk [vmem:[%s3 + $0x200] sm:$0xf] %vm2502, %v2288
  %2632 = vst.msk [vmem:[%s3 + $0x204] sm:$0xf] %vm2502, %v2289
  %2633 = vst.msk [vmem:[%s3 + $0x208] sm:$0xf] %vm2502, %v2290
  %2634 = vst.msk [vmem:[%s3 + $0x20c] sm:$0xf] %vm2502, %v2291
  %2635 = vst.msk [vmem:[%s3 + $0x210] sm:$0xf] %vm2502, %v2292
  %2636 = vst.msk [vmem:[%s3 + $0x214] sm:$0xf] %vm2502, %v2293
  %2637 = vst.msk [vmem:[%s3 + $0x218] sm:$0xf] %vm2502, %v2294
  %2638 = vst.msk [vmem:[%s3 + $0x21c] sm:$0xf] %vm2502, %v2295
  %2639 = vst.msk [vmem:[%s3 + $0x220] sm:$0xf] %vm2502, %v2296
  %2640 = vst.msk [vmem:[%s3 + $0x224] sm:$0xf] %vm2502, %v2297
  %2641 = vst.msk [vmem:[%s3 + $0x228] sm:$0xf] %vm2502, %v2298
  %2642 = vst.msk [vmem:[%s3 + $0x22c] sm:$0xf] %vm2502, %v2299
  %2643 = vst.msk [vmem:[%s3 + $0x230] sm:$0xf] %vm2502, %v2300
  %2644 = vst.msk [vmem:[%s3 + $0x234] sm:$0xf] %vm2502, %v2301
  %2645 = vst.msk [vmem:[%s3 + $0x238] sm:$0xf] %vm2502, %v2302
  %2646 = vst.msk [vmem:[%s3 + $0x23c] sm:$0xf] %vm2502, %v2303
  %2647 = vst.msk [vmem:[%s3 + $0x240] sm:$0xf] %vm2502, %v2304
  %2648 = vst.msk [vmem:[%s3 + $0x244] sm:$0xf] %vm2502, %v2305
  %2649 = vst.msk [vmem:[%s3 + $0x248] sm:$0xf] %vm2502, %v2306
  %2650 = vst.msk [vmem:[%s3 + $0x24c] sm:$0xf] %vm2502, %v2307
  %2651 = vst.msk [vmem:[%s3 + $0x250] sm:$0xf] %vm2502, %v2308
  %2652 = vst.msk [vmem:[%s3 + $0x254] sm:$0xf] %vm2502, %v2309
  %2653 = vst.msk [vmem:[%s3 + $0x258] sm:$0xf] %vm2502, %v2310
  %2654 = vst.msk [vmem:[%s3 + $0x25c] sm:$0xf] %vm2502, %v2311
  %2655 = vst.msk [vmem:[%s3 + $0x260] sm:$0xf] %vm2502, %v2312
  %2656 = vst.msk [vmem:[%s3 + $0x264] sm:$0xf] %vm2502, %v2313
  %2657 = vst.msk [vmem:[%s3 + $0x268] sm:$0xf] %vm2502, %v2314
  %2658 = vst.msk [vmem:[%s3 + $0x26c] sm:$0xf] %vm2502, %v2315
  %2659 = vst.msk [vmem:[%s3 + $0x270] sm:$0xf] %vm2502, %v2316
  %2660 = vst.msk [vmem:[%s3 + $0x274] sm:$0xf] %vm2502, %v2317
  %2661 = vst.msk [vmem:[%s3 + $0x278] sm:$0xf] %vm2502, %v2318
  %2662 = vst.msk [vmem:[%s3 + $0x27c] sm:$0xf] %vm2502, %v2319
  %2663 = vst.msk [vmem:[%s3 + $0x280] sm:$0xf] %vm2502, %v2320
  %2664 = vst.msk [vmem:[%s3 + $0x284] sm:$0xf] %vm2502, %v2321
  %2665 = vst.msk [vmem:[%s3 + $0x288] sm:$0xf] %vm2502, %v2322
  %2666 = vst.msk [vmem:[%s3 + $0x28c] sm:$0xf] %vm2502, %v2323
  %2667 = vst.msk [vmem:[%s3 + $0x290] sm:$0xf] %vm2502, %v2324
  %2668 = vst.msk [vmem:[%s3 + $0x294] sm:$0xf] %vm2502, %v2325
  %2669 = vst.msk [vmem:[%s3 + $0x298] sm:$0xf] %vm2502, %v2326
  %2670 = vst.msk [vmem:[%s3 + $0x29c] sm:$0xf] %vm2502, %v2327
  %2671 = vst.msk [vmem:[%s3 + $0x2a0] sm:$0xf] %vm2502, %v2328
  %2672 = vst.msk [vmem:[%s3 + $0x2a4] sm:$0xf] %vm2502, %v2329
  %2673 = vst.msk [vmem:[%s3 + $0x2a8] sm:$0xf] %vm2502, %v2330
  // Predicated region
  $region14: #{dqn_forward.4} parent=0 // pred_check
    _
  $region15: #{dqn_forward.4} parent=0 // pred_check_branch
    %2675 = sbr.rel (0) target = $region17
  $region16: #{dqn_forward.4} parent=0 // pred_region
    _
  $region17: #{dqn_forward.4} parent=0 // pred_fallthru
    _
  // Predicated region
  $region18: #{dqn_forward.4} parent=0 // pred_check
    _
  $region19: #{dqn_forward.4} parent=0 // pred_check_branch
    %2677 = sbr.rel (0) target = $region21
  $region20: #{dqn_forward.4} parent=0 // pred_region
    _
  $region21: #{dqn_forward.4} parent=0 // pred_fallthru
    _

// kernel: dqn_forward.5
$region0: #{dqn_forward.5}
  #allocation0 [shape = 'u32[]', space=smem, size = 0x4, offset = 0x4, fixed_abs, tag = 'smem constant byte address 0x4 - core index']
  #allocation1 [shape = 'u32[144,128]{1,0:T(1,128)}', space=vmem, size = 0x12000, scoped, tag = 'internal scratch']
  %s0 = inlined_call_operand.vmem [shape: bf16[238,1600], index: 0, kind: input, shape index: {}]
  %s1 = inlined_call_operand.vmem [shape: bf16[1600,128], index: 1, kind: input, shape index: {}]
  %s2 = inlined_call_operand.vmem [shape: f32[1,128], index: 2, kind: input, shape index: {}]
  %s3 = inlined_call_operand.vmem [shape: bf16[238,128], index: 3, kind: output, shape index: {}]
  %s4 = sld [smem:[#allocation0]]
  $region22: #{dqn_forward.5} parent=0
    _
  %s6 = ssub.s32 1, %s4
  %s7 = scalar_select 0, %s6, %s4
  // Predicated region
  $region2: #{dqn_forward.5} parent=0 // pred_check
    _
  $region3: #{dqn_forward.5} parent=0 // pred_check_branch
    %9 = sbr.rel (0) target = $region5
  $region4: #{dqn_forward.5} parent=0 // pred_region
    _
  $region5: #{dqn_forward.5} parent=0 // pred_fallthru
    _
  // Predicated region
  $region6: #{dqn_forward.5} parent=0 // pred_check
    _
  $region7: #{dqn_forward.5} parent=0 // pred_check_branch
    %11 = sbr.rel (0) target = $region9
  $region8: #{dqn_forward.5} parent=0 // pred_region
    _
  $region9: #{dqn_forward.5} parent=0 // pred_fallthru
    _
  // Predicated region
  $region10: #{dqn_forward.5} parent=0 // pred_check
    _
  $region11: #{dqn_forward.5} parent=0 // pred_check_branch
    %13 = sbr.rel (0) target = $region13
  $region12: #{dqn_forward.5} parent=0 // pred_region
    _
  $region13: #{dqn_forward.5} parent=0 // pred_fallthru
    _
  %v15 = vld [vmem:[%s0] sm:$0xff]
  %v16 = vld [vmem:[%s0 + $0x8] sm:$0xff]
  %v17 = vld [vmem:[%s0 + $0x10] sm:$0xff]
  %v18 = vld [vmem:[%s0 + $0x18] sm:$0xff]
  %v19 = vld [vmem:[%s0 + $0x20] sm:$0xff]
  %v20 = vld [vmem:[%s0 + $0x28] sm:$0xff]
  %v21 = vld [vmem:[%s0 + $0x30] sm:$0xf]
  %v22 = vld [vmem:[%s0 + $0x34] sm:$0xff]
  %v23 = vld [vmem:[%s0 + $0x3c] sm:$0xff]
  %v24 = vld [vmem:[%s0 + $0x44] sm:$0xff]
  %v25 = vld [vmem:[%s0 + $0x4c] sm:$0xff]
  %v26 = vld [vmem:[%s0 + $0x54] sm:$0xff]
  %v27 = vld [vmem:[%s0 + $0x5c] sm:$0xff]
  %v28 = vld [vmem:[%s0 + $0x64] sm:$0xf]
  %v29 = vld [vmem:[%s0 + $0x68] sm:$0xff]
  %v30 = vld [vmem:[%s0 + $0x70] sm:$0xff]
  %v31 = vld [vmem:[%s0 + $0x78] sm:$0xff]
  %v32 = vld [vmem:[%s0 + $0x80] sm:$0xff]
  %v33 = vld [vmem:[%s0 + $0x88] sm:$0xff]
  %v34 = vld [vmem:[%s0 + $0x90] sm:$0xff]
  %v35 = vld [vmem:[%s0 + $0x98] sm:$0xf]
  %v36 = vld [vmem:[%s0 + $0x9c] sm:$0xff]
  %v37 = vld [vmem:[%s0 + $0xa4] sm:$0xff]
  %v38 = vld [vmem:[%s0 + $0xac] sm:$0xff]
  %v39 = vld [vmem:[%s0 + $0xb4] sm:$0xff]
  %v40 = vld [vmem:[%s0 + $0xbc] sm:$0xff]
  %v41 = vld [vmem:[%s0 + $0xc4] sm:$0xff]
  %v42 = vld [vmem:[%s0 + $0xcc] sm:$0xf]
  %v43 = vld [vmem:[%s0 + $0xd0] sm:$0xff]
  %v44 = vld [vmem:[%s0 + $0xd8] sm:$0xff]
  %v45 = vld [vmem:[%s0 + $0xe0] sm:$0xff]
  %v46 = vld [vmem:[%s0 + $0xe8] sm:$0xff]
  %v47 = vld [vmem:[%s0 + $0xf0] sm:$0xff]
  %v48 = vld [vmem:[%s0 + $0xf8] sm:$0xff]
  %v49 = vld [vmem:[%s0 + $0x100] sm:$0xf]
  %v50 = vld [vmem:[%s0 + $0x104] sm:$0xff]
  %v51 = vld [vmem:[%s0 + $0x10c] sm:$0xff]
  %v52 = vld [vmem:[%s0 + $0x114] sm:$0xff]
  %v53 = vld [vmem:[%s0 + $0x11c] sm:$0xff]
  %v54 = vld [vmem:[%s0 + $0x124] sm:$0xff]
  %v55 = vld [vmem:[%s0 + $0x12c] sm:$0xff]
  %v56 = vld [vmem:[%s0 + $0x134] sm:$0xf]
  %v57 = vld [vmem:[%s0 + $0x138] sm:$0xff]
  %v58 = vld [vmem:[%s0 + $0x140] sm:$0xff]
  %v59 = vld [vmem:[%s0 + $0x148] sm:$0xff]
  %v60 = vld [vmem:[%s0 + $0x150] sm:$0xff]
  %v61 = vld [vmem:[%s0 + $0x158] sm:$0xff]
  %v62 = vld [vmem:[%s0 + $0x160] sm:$0xff]
  %v63 = vld [vmem:[%s0 + $0x168] sm:$0xf]
  %v64 = vld [vmem:[%s0 + $0x16c] sm:$0xff]
  %v65 = vld [vmem:[%s0 + $0x174] sm:$0xff]
  %v66 = vld [vmem:[%s0 + $0x17c] sm:$0xff]
  %v67 = vld [vmem:[%s0 + $0x184] sm:$0xff]
  %v68 = vld [vmem:[%s0 + $0x18c] sm:$0xff]
  %v69 = vld [vmem:[%s0 + $0x194] sm:$0xff]
  %v70 = vld [vmem:[%s0 + $0x19c] sm:$0xf]
  %v71 = vld [vmem:[%s0 + $0x1a0] sm:$0xff]
  %v72 = vld [vmem:[%s0 + $0x1a8] sm:$0xff]
  %v73 = vld [vmem:[%s0 + $0x1b0] sm:$0xff]
  %v74 = vld [vmem:[%s0 + $0x1b8] sm:$0xff]
  %v75 = vld [vmem:[%s0 + $0x1c0] sm:$0xff]
  %v76 = vld [vmem:[%s0 + $0x1c8] sm:$0xff]
  %v77 = vld [vmem:[%s0 + $0x1d0] sm:$0xf]
  %v78 = vld [vmem:[%s0 + $0x1d4] sm:$0xff]
  %v79 = vld [vmem:[%s0 + $0x1dc] sm:$0xff]
  %v80 = vld [vmem:[%s0 + $0x1e4] sm:$0xff]
  %v81 = vld [vmem:[%s0 + $0x1ec] sm:$0xff]
  %v82 = vld [vmem:[%s0 + $0x1f4] sm:$0xff]
  %v83 = vld [vmem:[%s0 + $0x1fc] sm:$0xff]
  %v84 = vld [vmem:[%s0 + $0x204] sm:$0xf]
  %v85 = vld [vmem:[%s0 + $0x208] sm:$0xff]
  %v86 = vld [vmem:[%s0 + $0x210] sm:$0xff]
  %v87 = vld [vmem:[%s0 + $0x218] sm:$0xff]
  %v88 = vld [vmem:[%s0 + $0x220] sm:$0xff]
  %v89 = vld [vmem:[%s0 + $0x228] sm:$0xff]
  %v90 = vld [vmem:[%s0 + $0x230] sm:$0xff]
  %v91 = vld [vmem:[%s0 + $0x238] sm:$0xf]
  %v92 = vld [vmem:[%s0 + $0x23c] sm:$0xff]
  %v93 = vld [vmem:[%s0 + $0x244] sm:$0xff]
  %v94 = vld [vmem:[%s0 + $0x24c] sm:$0xff]
  %v95 = vld [vmem:[%s0 + $0x254] sm:$0xff]
  %v96 = vld [vmem:[%s0 + $0x25c] sm:$0xff]
  %v97 = vld [vmem:[%s0 + $0x264] sm:$0xff]
  %v98 = vld [vmem:[%s0 + $0x26c] sm:$0xf]
  %v99 = vld [vmem:[%s0 + $0x270] sm:$0xff]
  %v100 = vld [vmem:[%s0 + $0x278] sm:$0xff]
  %v101 = vld [vmem:[%s0 + $0x280] sm:$0xff]
  %v102 = vld [vmem:[%s0 + $0x288] sm:$0xff]
  %v103 = vld [vmem:[%s0 + $0x290] sm:$0xff]
  %v104 = vld [vmem:[%s0 + $0x298] sm:$0xff]
  %v105 = vld [vmem:[%s0 + $0x2a0] sm:$0xf]
  %v106 = vld [vmem:[%s0 + $0x2a4] sm:$0xff]
  %v107 = vld [vmem:[%s0 + $0x2ac] sm:$0xff]
  %v108 = vld [vmem:[%s0 + $0x2b4] sm:$0xff]
  %v109 = vld [vmem:[%s0 + $0x2bc] sm:$0xff]
  %v110 = vld [vmem:[%s0 + $0x2c4] sm:$0xff]
  %v111 = vld [vmem:[%s0 + $0x2cc] sm:$0xff]
  %v112 = vld [vmem:[%s0 + $0x2d4] sm:$0xf]
  %v113 = vld [vmem:[%s0 + $0x2d8] sm:$0xff]
  %v114 = vld [vmem:[%s0 + $0x2e0] sm:$0xff]
  %v115 = vld [vmem:[%s0 + $0x2e8] sm:$0xff]
  %v116 = vld [vmem:[%s0 + $0x2f0] sm:$0xff]
  %v117 = vld [vmem:[%s0 + $0x2f8] sm:$0xff]
  %v118 = vld [vmem:[%s0 + $0x300] sm:$0xff]
  %v119 = vld [vmem:[%s0 + $0x308] sm:$0xf]
  %v120 = vld [vmem:[%s0 + $0x30c] sm:$0xff]
  %v121 = vld [vmem:[%s0 + $0x314] sm:$0xff]
  %v122 = vld [vmem:[%s0 + $0x31c] sm:$0xff]
  %v123 = vld [vmem:[%s0 + $0x324] sm:$0xff]
  %v124 = vld [vmem:[%s0 + $0x32c] sm:$0xff]
  %v125 = vld [vmem:[%s0 + $0x334] sm:$0xff]
  %v126 = vld [vmem:[%s0 + $0x33c] sm:$0xf]
  %v127 = vld [vmem:[%s0 + $0x340] sm:$0xff]
  %v128 = vld [vmem:[%s0 + $0x348] sm:$0xff]
  %v129 = vld [vmem:[%s0 + $0x350] sm:$0xff]
  %v130 = vld [vmem:[%s0 + $0x358] sm:$0xff]
  %v131 = vld [vmem:[%s0 + $0x360] sm:$0xff]
  %v132 = vld [vmem:[%s0 + $0x368] sm:$0xff]
  %v133 = vld [vmem:[%s0 + $0x370] sm:$0xf]
  %v134 = vld [vmem:[%s0 + $0x374] sm:$0xff]
  %v135 = vld [vmem:[%s0 + $0x37c] sm:$0xff]
  %v136 = vld [vmem:[%s0 + $0x384] sm:$0xff]
  %v137 = vld [vmem:[%s0 + $0x38c] sm:$0xff]
  %v138 = vld [vmem:[%s0 + $0x394] sm:$0xff]
  %v139 = vld [vmem:[%s0 + $0x39c] sm:$0xff]
  %v140 = vld [vmem:[%s0 + $0x3a4] sm:$0xf]
  %v141 = vld [vmem:[%s0 + $0x3a8] sm:$0xff]
  %v142 = vld [vmem:[%s0 + $0x3b0] sm:$0xff]
  %v143 = vld [vmem:[%s0 + $0x3b8] sm:$0xff]
  %v144 = vld [vmem:[%s0 + $0x3c0] sm:$0xff]
  %v145 = vld [vmem:[%s0 + $0x3c8] sm:$0xff]
  %v146 = vld [vmem:[%s0 + $0x3d0] sm:$0xff]
  %v147 = vld [vmem:[%s0 + $0x3d8] sm:$0xf]
  %v148 = vld [vmem:[%s0 + $0x3dc] sm:$0xff]
  %v149 = vld [vmem:[%s0 + $0x3e4] sm:$0xff]
  %v150 = vld [vmem:[%s0 + $0x3ec] sm:$0xff]
  %v151 = vld [vmem:[%s0 + $0x3f4] sm:$0xff]
  %v152 = vld [vmem:[%s0 + $0x3fc] sm:$0xff]
  %v153 = vld [vmem:[%s0 + $0x404] sm:$0xff]
  %v154 = vld [vmem:[%s0 + $0x40c] sm:$0xf]
  %v155 = vld [vmem:[%s0 + $0x410] sm:$0xff]
  %v156 = vld [vmem:[%s0 + $0x418] sm:$0xff]
  %v157 = vld [vmem:[%s0 + $0x420] sm:$0xff]
  %v158 = vld [vmem:[%s0 + $0x428] sm:$0xff]
  %v159 = vld [vmem:[%s0 + $0x430] sm:$0xff]
  %v160 = vld [vmem:[%s0 + $0x438] sm:$0xff]
  %v161 = vld [vmem:[%s0 + $0x440] sm:$0xf]
  %v162 = vld [vmem:[%s0 + $0x444] sm:$0xff]
  %v163 = vld [vmem:[%s0 + $0x44c] sm:$0xff]
  %v164 = vld [vmem:[%s0 + $0x454] sm:$0xff]
  %v165 = vld [vmem:[%s0 + $0x45c] sm:$0xff]
  %v166 = vld [vmem:[%s0 + $0x464] sm:$0xff]
  %v167 = vld [vmem:[%s0 + $0x46c] sm:$0xff]
  %v168 = vld [vmem:[%s0 + $0x474] sm:$0xf]
  %v169 = vld [vmem:[%s0 + $0x478] sm:$0xff]
  %v170 = vld [vmem:[%s0 + $0x480] sm:$0xff]
  %v171 = vld [vmem:[%s0 + $0x488] sm:$0xff]
  %v172 = vld [vmem:[%s0 + $0x490] sm:$0xff]
  %v173 = vld [vmem:[%s0 + $0x498] sm:$0xff]
  %v174 = vld [vmem:[%s0 + $0x4a0] sm:$0xff]
  %v175 = vld [vmem:[%s0 + $0x4a8] sm:$0xf]
  %v176 = vld [vmem:[%s0 + $0x4ac] sm:$0xff]
  %v177 = vld [vmem:[%s0 + $0x4b4] sm:$0xff]
  %v178 = vld [vmem:[%s0 + $0x4bc] sm:$0xff]
  %v179 = vld [vmem:[%s0 + $0x4c4] sm:$0xff]
  %v180 = vld [vmem:[%s0 + $0x4cc] sm:$0xff]
  %v181 = vld [vmem:[%s0 + $0x4d4] sm:$0xff]
  %v182 = vld [vmem:[%s0 + $0x4dc] sm:$0xf]
  %v183 = vld [vmem:[%s0 + $0x4e0] sm:$0xff]
  %v184 = vld [vmem:[%s0 + $0x4e8] sm:$0xff]
  %v185 = vld [vmem:[%s0 + $0x4f0] sm:$0xff]
  %v186 = vld [vmem:[%s0 + $0x4f8] sm:$0xff]
  %v187 = vld [vmem:[%s0 + $0x500] sm:$0xff]
  %v188 = vld [vmem:[%s0 + $0x508] sm:$0xff]
  %v189 = vld [vmem:[%s0 + $0x510] sm:$0xf]
  %v190 = vld [vmem:[%s0 + $0x514] sm:$0xff]
  %v191 = vld [vmem:[%s0 + $0x51c] sm:$0xff]
  %v192 = vld [vmem:[%s0 + $0x524] sm:$0xff]
  %v193 = vld [vmem:[%s0 + $0x52c] sm:$0xff]
  %v194 = vld [vmem:[%s0 + $0x534] sm:$0xff]
  %v195 = vld [vmem:[%s0 + $0x53c] sm:$0xff]
  %v196 = vld [vmem:[%s0 + $0x544] sm:$0xf]
  %v197 = vld [vmem:[%s0 + $0x548] sm:$0xff]
  %v198 = vld [vmem:[%s0 + $0x550] sm:$0xff]
  %v199 = vld [vmem:[%s0 + $0x558] sm:$0xff]
  %v200 = vld [vmem:[%s0 + $0x560] sm:$0xff]
  %v201 = vld [vmem:[%s0 + $0x568] sm:$0xff]
  %v202 = vld [vmem:[%s0 + $0x570] sm:$0xff]
  %v203 = vld [vmem:[%s0 + $0x578] sm:$0xf]
  %v204 = vld [vmem:[%s0 + $0x57c] sm:$0xff]
  %v205 = vld [vmem:[%s0 + $0x584] sm:$0xff]
  %v206 = vld [vmem:[%s0 + $0x58c] sm:$0xff]
  %v207 = vld [vmem:[%s0 + $0x594] sm:$0xff]
  %v208 = vld [vmem:[%s0 + $0x59c] sm:$0xff]
  %v209 = vld [vmem:[%s0 + $0x5a4] sm:$0xff]
  %v210 = vld [vmem:[%s0 + $0x5ac] sm:$0xf]
  %v211 = vld [vmem:[%s0 + $0x5b0] sm:$0xff]
  %v212 = vld [vmem:[%s0 + $0x5b8] sm:$0xff]
  %v213 = vld [vmem:[%s0 + $0x5c0] sm:$0xff]
  %v214 = vld [vmem:[%s0 + $0x5c8] sm:$0xff]
  %v215 = vld [vmem:[%s0 + $0x5d0] sm:$0xff]
  %v216 = vld [vmem:[%s0 + $0x5d8] sm:$0xff]
  %v217 = vld [vmem:[%s0 + $0x5e0] sm:$0xf]
  %v218 = vld [vmem:[%s0 + $0x5e4] sm:$0x77]
  %v219 = vld [vmem:[%s0 + $0x5ec] sm:$0x77]
  %v220 = vld [vmem:[%s0 + $0x5f4] sm:$0x77]
  %v221 = vld [vmem:[%s0 + $0x5fc] sm:$0x77]
  %v222 = vld [vmem:[%s0 + $0x604] sm:$0x77]
  %v223 = vld [vmem:[%s0 + $0x60c] sm:$0x77]
  %v224 = vld [vmem:[%s0 + $0x614] sm:$0x7]
  %v225 = vld [vmem:[%s1] sm:$0xf]
  %v226 = vld [vmem:[%s1 + $0x4] sm:$0xf]
  %v227 = vld [vmem:[%s1 + $0x8] sm:$0xf]
  %v228 = vld [vmem:[%s1 + $0xc] sm:$0xf]
  %v229 = vld [vmem:[%s1 + $0x10] sm:$0xf]
  %v230 = vld [vmem:[%s1 + $0x14] sm:$0xf]
  %v231 = vld [vmem:[%s1 + $0x18] sm:$0xf]
  %v232 = vld [vmem:[%s1 + $0x1c] sm:$0xf]
  %v233 = vld [vmem:[%s1 + $0x20] sm:$0xf]
  %v234 = vld [vmem:[%s1 + $0x24] sm:$0xf]
  %v235 = vld [vmem:[%s1 + $0x28] sm:$0xf]
  %v236 = vld [vmem:[%s1 + $0x2c] sm:$0xf]
  %v237 = vld [vmem:[%s1 + $0x30] sm:$0xf]
  %v238 = vld [vmem:[%s1 + $0x34] sm:$0xf]
  %v239 = vld [vmem:[%s1 + $0x38] sm:$0xf]
  %v240 = vld [vmem:[%s1 + $0x3c] sm:$0xf]
  %v241 = vld [vmem:[%s1 + $0x40] sm:$0xf]
  %v242 = vld [vmem:[%s1 + $0x44] sm:$0xf]
  %v243 = vld [vmem:[%s1 + $0x48] sm:$0xf]
  %v244 = vld [vmem:[%s1 + $0x4c] sm:$0xf]
  %v245 = vld [vmem:[%s1 + $0x50] sm:$0xf]
  %v246 = vld [vmem:[%s1 + $0x54] sm:$0xf]
  %v247 = vld [vmem:[%s1 + $0x58] sm:$0xf]
  %v248 = vld [vmem:[%s1 + $0x5c] sm:$0xf]
  %v249 = vld [vmem:[%s1 + $0x60] sm:$0xf]
  %v250 = vld [vmem:[%s1 + $0x64] sm:$0xf]
  %v251 = vld [vmem:[%s1 + $0x68] sm:$0xf]
  %v252 = vld [vmem:[%s1 + $0x6c] sm:$0xf]
  %v253 = vld [vmem:[%s1 + $0x70] sm:$0xf]
  %v254 = vld [vmem:[%s1 + $0x74] sm:$0xf]
  %v255 = vld [vmem:[%s1 + $0x78] sm:$0xf]
  %v256 = vld [vmem:[%s1 + $0x7c] sm:$0xf]
  %v257 = vld [vmem:[%s1 + $0x80] sm:$0xf]
  %v258 = vld [vmem:[%s1 + $0x84] sm:$0xf]
  %v259 = vld [vmem:[%s1 + $0x88] sm:$0xf]
  %v260 = vld [vmem:[%s1 + $0x8c] sm:$0xf]
  %v261 = vld [vmem:[%s1 + $0x90] sm:$0xf]
  %v262 = vld [vmem:[%s1 + $0x94] sm:$0xf]
  %v263 = vld [vmem:[%s1 + $0x98] sm:$0xf]
  %v264 = vld [vmem:[%s1 + $0x9c] sm:$0xf]
  %v265 = vld [vmem:[%s1 + $0xa0] sm:$0xf]
  %v266 = vld [vmem:[%s1 + $0xa4] sm:$0xf]
  %v267 = vld [vmem:[%s1 + $0xa8] sm:$0xf]
  %v268 = vld [vmem:[%s1 + $0xac] sm:$0xf]
  %v269 = vld [vmem:[%s1 + $0xb0] sm:$0xf]
  %v270 = vld [vmem:[%s1 + $0xb4] sm:$0xf]
  %v271 = vld [vmem:[%s1 + $0xb8] sm:$0xf]
  %v272 = vld [vmem:[%s1 + $0xbc] sm:$0xf]
  %v273 = vld [vmem:[%s1 + $0xc0] sm:$0xf]
  %v274 = vld [vmem:[%s1 + $0xc4] sm:$0xf]
  %v275 = vld [vmem:[%s1 + $0xc8] sm:$0xf]
  %v276 = vld [vmem:[%s1 + $0xcc] sm:$0xf]
  %v277 = vld [vmem:[%s1 + $0xd0] sm:$0xf]
  %v278 = vld [vmem:[%s1 + $0xd4] sm:$0xf]
  %v279 = vld [vmem:[%s1 + $0xd8] sm:$0xf]
  %v280 = vld [vmem:[%s1 + $0xdc] sm:$0xf]
  %v281 = vld [vmem:[%s1 + $0xe0] sm:$0xf]
  %v282 = vld [vmem:[%s1 + $0xe4] sm:$0xf]
  %v283 = vld [vmem:[%s1 + $0xe8] sm:$0xf]
  %v284 = vld [vmem:[%s1 + $0xec] sm:$0xf]
  %v285 = vld [vmem:[%s1 + $0xf0] sm:$0xf]
  %v286 = vld [vmem:[%s1 + $0xf4] sm:$0xf]
  %v287 = vld [vmem:[%s1 + $0xf8] sm:$0xf]
  %v288 = vld [vmem:[%s1 + $0xfc] sm:$0xf]
  %v289 = vld [vmem:[%s1 + $0x100] sm:$0xf]
  %v290 = vld [vmem:[%s1 + $0x104] sm:$0xf]
  %v291 = vld [vmem:[%s1 + $0x108] sm:$0xf]
  %v292 = vld [vmem:[%s1 + $0x10c] sm:$0xf]
  %v293 = vld [vmem:[%s1 + $0x110] sm:$0xf]
  %v294 = vld [vmem:[%s1 + $0x114] sm:$0xf]
  %v295 = vld [vmem:[%s1 + $0x118] sm:$0xf]
  %v296 = vld [vmem:[%s1 + $0x11c] sm:$0xf]
  %v297 = vld [vmem:[%s1 + $0x120] sm:$0xf]
  %v298 = vld [vmem:[%s1 + $0x124] sm:$0xf]
  %v299 = vld [vmem:[%s1 + $0x128] sm:$0xf]
  %v300 = vld [vmem:[%s1 + $0x12c] sm:$0xf]
  %v301 = vld [vmem:[%s1 + $0x130] sm:$0xf]
  %v302 = vld [vmem:[%s1 + $0x134] sm:$0xf]
  %v303 = vld [vmem:[%s1 + $0x138] sm:$0xf]
  %v304 = vld [vmem:[%s1 + $0x13c] sm:$0xf]
  %v305 = vld [vmem:[%s1 + $0x140] sm:$0xf]
  %v306 = vld [vmem:[%s1 + $0x144] sm:$0xf]
  %v307 = vld [vmem:[%s1 + $0x148] sm:$0xf]
  %v308 = vld [vmem:[%s1 + $0x14c] sm:$0xf]
  %v309 = vld [vmem:[%s1 + $0x150] sm:$0xf]
  %v310 = vld [vmem:[%s1 + $0x154] sm:$0xf]
  %v311 = vld [vmem:[%s1 + $0x158] sm:$0xf]
  %v312 = vld [vmem:[%s1 + $0x15c] sm:$0xf]
  %v313 = vld [vmem:[%s1 + $0x160] sm:$0xf]
  %v314 = vld [vmem:[%s1 + $0x164] sm:$0xf]
  %v315 = vld [vmem:[%s1 + $0x168] sm:$0xf]
  %v316 = vld [vmem:[%s1 + $0x16c] sm:$0xf]
  %v317 = vld [vmem:[%s1 + $0x170] sm:$0xf]
  %v318 = vld [vmem:[%s1 + $0x174] sm:$0xf]
  %v319 = vld [vmem:[%s1 + $0x178] sm:$0xf]
  %v320 = vld [vmem:[%s1 + $0x17c] sm:$0xf]
  %v321 = vld [vmem:[%s1 + $0x180] sm:$0xf]
  %v322 = vld [vmem:[%s1 + $0x184] sm:$0xf]
  %v323 = vld [vmem:[%s1 + $0x188] sm:$0xf]
  %v324 = vld [vmem:[%s1 + $0x18c] sm:$0xf]
  %v325 = vld [vmem:[%s1 + $0x190] sm:$0xf]
  %v326 = vld [vmem:[%s1 + $0x194] sm:$0xf]
  %v327 = vld [vmem:[%s1 + $0x198] sm:$0xf]
  %v328 = vld [vmem:[%s1 + $0x19c] sm:$0xf]
  %v329 = vld [vmem:[%s1 + $0x1a0] sm:$0xf]
  %v330 = vld [vmem:[%s1 + $0x1a4] sm:$0xf]
  %v331 = vld [vmem:[%s1 + $0x1a8] sm:$0xf]
  %v332 = vld [vmem:[%s1 + $0x1ac] sm:$0xf]
  %v333 = vld [vmem:[%s1 + $0x1b0] sm:$0xf]
  %v334 = vld [vmem:[%s1 + $0x1b4] sm:$0xf]
  %v335 = vld [vmem:[%s1 + $0x1b8] sm:$0xf]
  %v336 = vld [vmem:[%s1 + $0x1bc] sm:$0xf]
  %v337 = vld [vmem:[%s1 + $0x1c0] sm:$0xf]
  %v338 = vld [vmem:[%s1 + $0x1c4] sm:$0xf]
  %v339 = vld [vmem:[%s1 + $0x1c8] sm:$0xf]
  %v340 = vld [vmem:[%s1 + $0x1cc] sm:$0xf]
  %v341 = vld [vmem:[%s1 + $0x1d0] sm:$0xf]
  %v342 = vld [vmem:[%s1 + $0x1d4] sm:$0xf]
  %v343 = vld [vmem:[%s1 + $0x1d8] sm:$0xf]
  %v344 = vld [vmem:[%s1 + $0x1dc] sm:$0xf]
  %v345 = vld [vmem:[%s1 + $0x1e0] sm:$0xf]
  %v346 = vld [vmem:[%s1 + $0x1e4] sm:$0xf]
  %v347 = vld [vmem:[%s1 + $0x1e8] sm:$0xf]
  %v348 = vld [vmem:[%s1 + $0x1ec] sm:$0xf]
  %v349 = vld [vmem:[%s1 + $0x1f0] sm:$0xf]
  %v350 = vld [vmem:[%s1 + $0x1f4] sm:$0xf]
  %v351 = vld [vmem:[%s1 + $0x1f8] sm:$0xf]
  %v352 = vld [vmem:[%s1 + $0x1fc] sm:$0xf]
  %v353 = vld [vmem:[%s1 + $0x200] sm:$0xf]
  %v354 = vld [vmem:[%s1 + $0x204] sm:$0xf]
  %v355 = vld [vmem:[%s1 + $0x208] sm:$0xf]
  %v356 = vld [vmem:[%s1 + $0x20c] sm:$0xf]
  %v357 = vld [vmem:[%s1 + $0x210] sm:$0xf]
  %v358 = vld [vmem:[%s1 + $0x214] sm:$0xf]
  %v359 = vld [vmem:[%s1 + $0x218] sm:$0xf]
  %v360 = vld [vmem:[%s1 + $0x21c] sm:$0xf]
  %v361 = vld [vmem:[%s1 + $0x220] sm:$0xf]
  %v362 = vld [vmem:[%s1 + $0x224] sm:$0xf]
  %v363 = vld [vmem:[%s1 + $0x228] sm:$0xf]
  %v364 = vld [vmem:[%s1 + $0x22c] sm:$0xf]
  %v365 = vld [vmem:[%s1 + $0x230] sm:$0xf]
  %v366 = vld [vmem:[%s1 + $0x234] sm:$0xf]
  %v367 = vld [vmem:[%s1 + $0x238] sm:$0xf]
  %v368 = vld [vmem:[%s1 + $0x23c] sm:$0xf]
  %v369 = vld [vmem:[%s1 + $0x240] sm:$0xf]
  %v370 = vld [vmem:[%s1 + $0x244] sm:$0xf]
  %v371 = vld [vmem:[%s1 + $0x248] sm:$0xf]
  %v372 = vld [vmem:[%s1 + $0x24c] sm:$0xf]
  %v373 = vld [vmem:[%s1 + $0x250] sm:$0xf]
  %v374 = vld [vmem:[%s1 + $0x254] sm:$0xf]
  %v375 = vld [vmem:[%s1 + $0x258] sm:$0xf]
  %v376 = vld [vmem:[%s1 + $0x25c] sm:$0xf]
  %v377 = vld [vmem:[%s1 + $0x260] sm:$0xf]
  %v378 = vld [vmem:[%s1 + $0x264] sm:$0xf]
  %v379 = vld [vmem:[%s1 + $0x268] sm:$0xf]
  %v380 = vld [vmem:[%s1 + $0x26c] sm:$0xf]
  %v381 = vld [vmem:[%s1 + $0x270] sm:$0xf]
  %v382 = vld [vmem:[%s1 + $0x274] sm:$0xf]
  %v383 = vld [vmem:[%s1 + $0x278] sm:$0xf]
  %v384 = vld [vmem:[%s1 + $0x27c] sm:$0xf]
  %v385 = vld [vmem:[%s1 + $0x280] sm:$0xf]
  %v386 = vld [vmem:[%s1 + $0x284] sm:$0xf]
  %v387 = vld [vmem:[%s1 + $0x288] sm:$0xf]
  %v388 = vld [vmem:[%s1 + $0x28c] sm:$0xf]
  %v389 = vld [vmem:[%s1 + $0x290] sm:$0xf]
  %v390 = vld [vmem:[%s1 + $0x294] sm:$0xf]
  %v391 = vld [vmem:[%s1 + $0x298] sm:$0xf]
  %v392 = vld [vmem:[%s1 + $0x29c] sm:$0xf]
  %v393 = vld [vmem:[%s1 + $0x2a0] sm:$0xf]
  %v394 = vld [vmem:[%s1 + $0x2a4] sm:$0xf]
  %v395 = vld [vmem:[%s1 + $0x2a8] sm:$0xf]
  %v396 = vld [vmem:[%s1 + $0x2ac] sm:$0xf]
  %v397 = vld [vmem:[%s1 + $0x2b0] sm:$0xf]
  %v398 = vld [vmem:[%s1 + $0x2b4] sm:$0xf]
  %v399 = vld [vmem:[%s1 + $0x2b8] sm:$0xf]
  %v400 = vld [vmem:[%s1 + $0x2bc] sm:$0xf]
  %v401 = vld [vmem:[%s1 + $0x2c0] sm:$0xf]
  %v402 = vld [vmem:[%s1 + $0x2c4] sm:$0xf]
  %v403 = vld [vmem:[%s1 + $0x2c8] sm:$0xf]
  %v404 = vld [vmem:[%s1 + $0x2cc] sm:$0xf]
  %v405 = vld [vmem:[%s1 + $0x2d0] sm:$0xf]
  %v406 = vld [vmem:[%s1 + $0x2d4] sm:$0xf]
  %v407 = vld [vmem:[%s1 + $0x2d8] sm:$0xf]
  %v408 = vld [vmem:[%s1 + $0x2dc] sm:$0xf]
  %v409 = vld [vmem:[%s1 + $0x2e0] sm:$0xf]
  %v410 = vld [vmem:[%s1 + $0x2e4] sm:$0xf]
  %v411 = vld [vmem:[%s1 + $0x2e8] sm:$0xf]
  %v412 = vld [vmem:[%s1 + $0x2ec] sm:$0xf]
  %v413 = vld [vmem:[%s1 + $0x2f0] sm:$0xf]
  %v414 = vld [vmem:[%s1 + $0x2f4] sm:$0xf]
  %v415 = vld [vmem:[%s1 + $0x2f8] sm:$0xf]
  %v416 = vld [vmem:[%s1 + $0x2fc] sm:$0xf]
  %v417 = vld [vmem:[%s1 + $0x300] sm:$0xf]
  %v418 = vld [vmem:[%s1 + $0x304] sm:$0xf]
  %v419 = vld [vmem:[%s1 + $0x308] sm:$0xf]
  %v420 = vld [vmem:[%s1 + $0x30c] sm:$0xf]
  %v421 = vld [vmem:[%s1 + $0x310] sm:$0xf]
  %v422 = vld [vmem:[%s1 + $0x314] sm:$0xf]
  %v423 = vld [vmem:[%s1 + $0x318] sm:$0xf]
  %v424 = vld [vmem:[%s1 + $0x31c] sm:$0xf]
  %v425 = vld [vmem:[%s2] sm:$0x1]
  %v427 = vlaneseq
  %v428 = vshrl.u32 %v427, 7
  %v429 = vsub.s32 0, %v428
  %v430 = vrot.slane %v425, %v429
  %v642 = vunpack.c.l.b16 %v15
  %v643 = vunpack.c.h.b16 %v15
  %v644 = vunpack.c.l.b16 %v16
  %v645 = vunpack.c.h.b16 %v16
  %v646 = vunpack.c.l.b16 %v17
  %v647 = vunpack.c.h.b16 %v17
  %v648 = vunpack.c.l.b16 %v18
  %v649 = vunpack.c.h.b16 %v18
  %v650 = vunpack.c.l.b16 %v19
  %v651 = vunpack.c.h.b16 %v19
  %v652 = vunpack.c.l.b16 %v20
  %v653 = vunpack.c.h.b16 %v20
  %v654 = vunpack.c.l.b16 %v21
  %v655 = vunpack.c.l.b16 %v22
  %v656 = vunpack.c.h.b16 %v22
  %v657 = vunpack.c.l.b16 %v23
  %v658 = vunpack.c.h.b16 %v23
  %v659 = vunpack.c.l.b16 %v24
  %v660 = vunpack.c.h.b16 %v24
  %v661 = vunpack.c.l.b16 %v25
  %v662 = vunpack.c.h.b16 %v25
  %v663 = vunpack.c.l.b16 %v26
  %v664 = vunpack.c.h.b16 %v26
  %v665 = vunpack.c.l.b16 %v27
  %v666 = vunpack.c.h.b16 %v27
  %v667 = vunpack.c.l.b16 %v28
  %v668 = vunpack.c.l.b16 %v29
  %v669 = vunpack.c.h.b16 %v29
  %v670 = vunpack.c.l.b16 %v30
  %v671 = vunpack.c.h.b16 %v30
  %v672 = vunpack.c.l.b16 %v31
  %v673 = vunpack.c.h.b16 %v31
  %v674 = vunpack.c.l.b16 %v32
  %v675 = vunpack.c.h.b16 %v32
  %v676 = vunpack.c.l.b16 %v33
  %v677 = vunpack.c.h.b16 %v33
  %v678 = vunpack.c.l.b16 %v34
  %v679 = vunpack.c.h.b16 %v34
  %v680 = vunpack.c.l.b16 %v35
  %v681 = vunpack.c.l.b16 %v36
  %v682 = vunpack.c.h.b16 %v36
  %v683 = vunpack.c.l.b16 %v37
  %v684 = vunpack.c.h.b16 %v37
  %v685 = vunpack.c.l.b16 %v38
  %v686 = vunpack.c.h.b16 %v38
  %v687 = vunpack.c.l.b16 %v39
  %v688 = vunpack.c.h.b16 %v39
  %v689 = vunpack.c.l.b16 %v40
  %v690 = vunpack.c.h.b16 %v40
  %v691 = vunpack.c.l.b16 %v41
  %v692 = vunpack.c.h.b16 %v41
  %v693 = vunpack.c.l.b16 %v42
  %v694 = vunpack.c.l.b16 %v43
  %v695 = vunpack.c.h.b16 %v43
  %v696 = vunpack.c.l.b16 %v44
  %v697 = vunpack.c.h.b16 %v44
  %v698 = vunpack.c.l.b16 %v45
  %v699 = vunpack.c.h.b16 %v45
  %v700 = vunpack.c.l.b16 %v46
  %v701 = vunpack.c.h.b16 %v46
  %v702 = vunpack.c.l.b16 %v47
  %v703 = vunpack.c.h.b16 %v47
  %v704 = vunpack.c.l.b16 %v48
  %v705 = vunpack.c.h.b16 %v48
  %v706 = vunpack.c.l.b16 %v49
  %v707 = vunpack.c.l.b16 %v50
  %v708 = vunpack.c.h.b16 %v50
  %v709 = vunpack.c.l.b16 %v51
  %v710 = vunpack.c.h.b16 %v51
  %v711 = vunpack.c.l.b16 %v52
  %v712 = vunpack.c.h.b16 %v52
  %v713 = vunpack.c.l.b16 %v53
  %v714 = vunpack.c.h.b16 %v53
  %v715 = vunpack.c.l.b16 %v54
  %v716 = vunpack.c.h.b16 %v54
  %v717 = vunpack.c.l.b16 %v55
  %v718 = vunpack.c.h.b16 %v55
  %v719 = vunpack.c.l.b16 %v56
  %v720 = vunpack.c.l.b16 %v57
  %v721 = vunpack.c.h.b16 %v57
  %v722 = vunpack.c.l.b16 %v58
  %v723 = vunpack.c.h.b16 %v58
  %v724 = vunpack.c.l.b16 %v59
  %v725 = vunpack.c.h.b16 %v59
  %v726 = vunpack.c.l.b16 %v60
  %v727 = vunpack.c.h.b16 %v60
  %v728 = vunpack.c.l.b16 %v61
  %v729 = vunpack.c.h.b16 %v61
  %v730 = vunpack.c.l.b16 %v62
  %v731 = vunpack.c.h.b16 %v62
  %v732 = vunpack.c.l.b16 %v63
  %v733 = vunpack.c.l.b16 %v64
  %v734 = vunpack.c.h.b16 %v64
  %v735 = vunpack.c.l.b16 %v65
  %v736 = vunpack.c.h.b16 %v65
  %v737 = vunpack.c.l.b16 %v66
  %v738 = vunpack.c.h.b16 %v66
  %v739 = vunpack.c.l.b16 %v67
  %v740 = vunpack.c.h.b16 %v67
  %v741 = vunpack.c.l.b16 %v68
  %v742 = vunpack.c.h.b16 %v68
  %v743 = vunpack.c.l.b16 %v69
  %v744 = vunpack.c.h.b16 %v69
  %v745 = vunpack.c.l.b16 %v70
  %v746 = vunpack.c.l.b16 %v71
  %v747 = vunpack.c.h.b16 %v71
  %v748 = vunpack.c.l.b16 %v72
  %v749 = vunpack.c.h.b16 %v72
  %v750 = vunpack.c.l.b16 %v73
  %v751 = vunpack.c.h.b16 %v73
  %v752 = vunpack.c.l.b16 %v74
  %v753 = vunpack.c.h.b16 %v74
  %v754 = vunpack.c.l.b16 %v75
  %v755 = vunpack.c.h.b16 %v75
  %v756 = vunpack.c.l.b16 %v76
  %v757 = vunpack.c.h.b16 %v76
  %v758 = vunpack.c.l.b16 %v77
  %v759 = vunpack.c.l.b16 %v78
  %v760 = vunpack.c.h.b16 %v78
  %v761 = vunpack.c.l.b16 %v79
  %v762 = vunpack.c.h.b16 %v79
  %v763 = vunpack.c.l.b16 %v80
  %v764 = vunpack.c.h.b16 %v80
  %v765 = vunpack.c.l.b16 %v81
  %v766 = vunpack.c.h.b16 %v81
  %v767 = vunpack.c.l.b16 %v82
  %v768 = vunpack.c.h.b16 %v82
  %v769 = vunpack.c.l.b16 %v83
  %v770 = vunpack.c.h.b16 %v83
  %v771 = vunpack.c.l.b16 %v84
  %v772 = vunpack.c.l.b16 %v85
  %v773 = vunpack.c.h.b16 %v85
  %v774 = vunpack.c.l.b16 %v86
  %v775 = vunpack.c.h.b16 %v86
  %v776 = vunpack.c.l.b16 %v87
  %v777 = vunpack.c.h.b16 %v87
  %v778 = vunpack.c.l.b16 %v88
  %v779 = vunpack.c.h.b16 %v88
  %v780 = vunpack.c.l.b16 %v89
  %v781 = vunpack.c.h.b16 %v89
  %v782 = vunpack.c.l.b16 %v90
  %v783 = vunpack.c.h.b16 %v90
  %v784 = vunpack.c.l.b16 %v91
  %v785 = vunpack.c.l.b16 %v92
  %v786 = vunpack.c.h.b16 %v92
  %v787 = vunpack.c.l.b16 %v93
  %v788 = vunpack.c.h.b16 %v93
  %v789 = vunpack.c.l.b16 %v94
  %v790 = vunpack.c.h.b16 %v94
  %v791 = vunpack.c.l.b16 %v95
  %v792 = vunpack.c.h.b16 %v95
  %v793 = vunpack.c.l.b16 %v96
  %v794 = vunpack.c.h.b16 %v96
  %v795 = vunpack.c.l.b16 %v97
  %v796 = vunpack.c.h.b16 %v97
  %v797 = vunpack.c.l.b16 %v98
  %v798 = vunpack.c.l.b16 %v99
  %v799 = vunpack.c.h.b16 %v99
  %v800 = vunpack.c.l.b16 %v100
  %v801 = vunpack.c.h.b16 %v100
  %v802 = vunpack.c.l.b16 %v101
  %v803 = vunpack.c.h.b16 %v101
  %v804 = vunpack.c.l.b16 %v102
  %v805 = vunpack.c.h.b16 %v102
  %v806 = vunpack.c.l.b16 %v103
  %v807 = vunpack.c.h.b16 %v103
  %v808 = vunpack.c.l.b16 %v104
  %v809 = vunpack.c.h.b16 %v104
  %v810 = vunpack.c.l.b16 %v105
  %v811 = vunpack.c.l.b16 %v106
  %v812 = vunpack.c.h.b16 %v106
  %v813 = vunpack.c.l.b16 %v107
  %v814 = vunpack.c.h.b16 %v107
  %v815 = vunpack.c.l.b16 %v108
  %v816 = vunpack.c.h.b16 %v108
  %v817 = vunpack.c.l.b16 %v109
  %v818 = vunpack.c.h.b16 %v109
  %v819 = vunpack.c.l.b16 %v110
  %v820 = vunpack.c.h.b16 %v110
  %v821 = vunpack.c.l.b16 %v111
  %v822 = vunpack.c.h.b16 %v111
  %v823 = vunpack.c.l.b16 %v112
  %v824 = vunpack.c.l.b16 %v113
  %v825 = vunpack.c.h.b16 %v113
  %v826 = vunpack.c.l.b16 %v114
  %v827 = vunpack.c.h.b16 %v114
  %v828 = vunpack.c.l.b16 %v115
  %v829 = vunpack.c.h.b16 %v115
  %v830 = vunpack.c.l.b16 %v116
  %v831 = vunpack.c.h.b16 %v116
  %v832 = vunpack.c.l.b16 %v117
  %v833 = vunpack.c.h.b16 %v117
  %v834 = vunpack.c.l.b16 %v118
  %v835 = vunpack.c.h.b16 %v118
  %v836 = vunpack.c.l.b16 %v119
  %v837 = vunpack.c.l.b16 %v120
  %v838 = vunpack.c.h.b16 %v120
  %v839 = vunpack.c.l.b16 %v121
  %v840 = vunpack.c.h.b16 %v121
  %v841 = vunpack.c.l.b16 %v122
  %v842 = vunpack.c.h.b16 %v122
  %v843 = vunpack.c.l.b16 %v123
  %v844 = vunpack.c.h.b16 %v123
  %v845 = vunpack.c.l.b16 %v124
  %v846 = vunpack.c.h.b16 %v124
  %v847 = vunpack.c.l.b16 %v125
  %v848 = vunpack.c.h.b16 %v125
  %v849 = vunpack.c.l.b16 %v126
  %v850 = vunpack.c.l.b16 %v127
  %v851 = vunpack.c.h.b16 %v127
  %v852 = vunpack.c.l.b16 %v128
  %v853 = vunpack.c.h.b16 %v128
  %v854 = vunpack.c.l.b16 %v129
  %v855 = vunpack.c.h.b16 %v129
  %v856 = vunpack.c.l.b16 %v130
  %v857 = vunpack.c.h.b16 %v130
  %v858 = vunpack.c.l.b16 %v131
  %v859 = vunpack.c.h.b16 %v131
  %v860 = vunpack.c.l.b16 %v132
  %v861 = vunpack.c.h.b16 %v132
  %v862 = vunpack.c.l.b16 %v133
  %v863 = vunpack.c.l.b16 %v134
  %v864 = vunpack.c.h.b16 %v134
  %v865 = vunpack.c.l.b16 %v135
  %v866 = vunpack.c.h.b16 %v135
  %v867 = vunpack.c.l.b16 %v136
  %v868 = vunpack.c.h.b16 %v136
  %v869 = vunpack.c.l.b16 %v137
  %v870 = vunpack.c.h.b16 %v137
  %v871 = vunpack.c.l.b16 %v138
  %v872 = vunpack.c.h.b16 %v138
  %v873 = vunpack.c.l.b16 %v139
  %v874 = vunpack.c.h.b16 %v139
  %v875 = vunpack.c.l.b16 %v140
  %v876 = vunpack.c.l.b16 %v141
  %v877 = vunpack.c.h.b16 %v141
  %v878 = vunpack.c.l.b16 %v142
  %v879 = vunpack.c.h.b16 %v142
  %v880 = vunpack.c.l.b16 %v143
  %v881 = vunpack.c.h.b16 %v143
  %v882 = vunpack.c.l.b16 %v144
  %v883 = vunpack.c.h.b16 %v144
  %v884 = vunpack.c.l.b16 %v145
  %v885 = vunpack.c.h.b16 %v145
  %v886 = vunpack.c.l.b16 %v146
  %v887 = vunpack.c.h.b16 %v146
  %v888 = vunpack.c.l.b16 %v147
  %v889 = vunpack.c.l.b16 %v148
  %v890 = vunpack.c.h.b16 %v148
  %v891 = vunpack.c.l.b16 %v149
  %v892 = vunpack.c.h.b16 %v149
  %v893 = vunpack.c.l.b16 %v150
  %v894 = vunpack.c.h.b16 %v150
  %v895 = vunpack.c.l.b16 %v151
  %v896 = vunpack.c.h.b16 %v151
  %v897 = vunpack.c.l.b16 %v152
  %v898 = vunpack.c.h.b16 %v152
  %v899 = vunpack.c.l.b16 %v153
  %v900 = vunpack.c.h.b16 %v153
  %v901 = vunpack.c.l.b16 %v154
  %v902 = vunpack.c.l.b16 %v155
  %v903 = vunpack.c.h.b16 %v155
  %v904 = vunpack.c.l.b16 %v156
  %v905 = vunpack.c.h.b16 %v156
  %v906 = vunpack.c.l.b16 %v157
  %v907 = vunpack.c.h.b16 %v157
  %v908 = vunpack.c.l.b16 %v158
  %v909 = vunpack.c.h.b16 %v158
  %v910 = vunpack.c.l.b16 %v159
  %v911 = vunpack.c.h.b16 %v159
  %v912 = vunpack.c.l.b16 %v160
  %v913 = vunpack.c.h.b16 %v160
  %v914 = vunpack.c.l.b16 %v161
  %v915 = vunpack.c.l.b16 %v162
  %v916 = vunpack.c.h.b16 %v162
  %v917 = vunpack.c.l.b16 %v163
  %v918 = vunpack.c.h.b16 %v163
  %v919 = vunpack.c.l.b16 %v164
  %v920 = vunpack.c.h.b16 %v164
  %v921 = vunpack.c.l.b16 %v165
  %v922 = vunpack.c.h.b16 %v165
  %v923 = vunpack.c.l.b16 %v166
  %v924 = vunpack.c.h.b16 %v166
  %v925 = vunpack.c.l.b16 %v167
  %v926 = vunpack.c.h.b16 %v167
  %v927 = vunpack.c.l.b16 %v168
  %v928 = vunpack.c.l.b16 %v169
  %v929 = vunpack.c.h.b16 %v169
  %v930 = vunpack.c.l.b16 %v170
  %v931 = vunpack.c.h.b16 %v170
  %v932 = vunpack.c.l.b16 %v171
  %v933 = vunpack.c.h.b16 %v171
  %v934 = vunpack.c.l.b16 %v172
  %v935 = vunpack.c.h.b16 %v172
  %v936 = vunpack.c.l.b16 %v173
  %v937 = vunpack.c.h.b16 %v173
  %v938 = vunpack.c.l.b16 %v174
  %v939 = vunpack.c.h.b16 %v174
  %v940 = vunpack.c.l.b16 %v175
  %v941 = vunpack.c.l.b16 %v176
  %v942 = vunpack.c.h.b16 %v176
  %v943 = vunpack.c.l.b16 %v177
  %v944 = vunpack.c.h.b16 %v177
  %v945 = vunpack.c.l.b16 %v178
  %v946 = vunpack.c.h.b16 %v178
  %v947 = vunpack.c.l.b16 %v179
  %v948 = vunpack.c.h.b16 %v179
  %v949 = vunpack.c.l.b16 %v180
  %v950 = vunpack.c.h.b16 %v180
  %v951 = vunpack.c.l.b16 %v181
  %v952 = vunpack.c.h.b16 %v181
  %v953 = vunpack.c.l.b16 %v182
  %v954 = vunpack.c.l.b16 %v183
  %v955 = vunpack.c.h.b16 %v183
  %v956 = vunpack.c.l.b16 %v184
  %v957 = vunpack.c.h.b16 %v184
  %v958 = vunpack.c.l.b16 %v185
  %v959 = vunpack.c.h.b16 %v185
  %v960 = vunpack.c.l.b16 %v186
  %v961 = vunpack.c.h.b16 %v186
  %v962 = vunpack.c.l.b16 %v187
  %v963 = vunpack.c.h.b16 %v187
  %v964 = vunpack.c.l.b16 %v188
  %v965 = vunpack.c.h.b16 %v188
  %v966 = vunpack.c.l.b16 %v189
  %v967 = vunpack.c.l.b16 %v190
  %v968 = vunpack.c.h.b16 %v190
  %v969 = vunpack.c.l.b16 %v191
  %v970 = vunpack.c.h.b16 %v191
  %v971 = vunpack.c.l.b16 %v192
  %v972 = vunpack.c.h.b16 %v192
  %v973 = vunpack.c.l.b16 %v193
  %v974 = vunpack.c.h.b16 %v193
  %v975 = vunpack.c.l.b16 %v194
  %v976 = vunpack.c.h.b16 %v194
  %v977 = vunpack.c.l.b16 %v195
  %v978 = vunpack.c.h.b16 %v195
  %v979 = vunpack.c.l.b16 %v196
  %v980 = vunpack.c.l.b16 %v197
  %v981 = vunpack.c.h.b16 %v197
  %v982 = vunpack.c.l.b16 %v198
  %v983 = vunpack.c.h.b16 %v198
  %v984 = vunpack.c.l.b16 %v199
  %v985 = vunpack.c.h.b16 %v199
  %v986 = vunpack.c.l.b16 %v200
  %v987 = vunpack.c.h.b16 %v200
  %v988 = vunpack.c.l.b16 %v201
  %v989 = vunpack.c.h.b16 %v201
  %v990 = vunpack.c.l.b16 %v202
  %v991 = vunpack.c.h.b16 %v202
  %v992 = vunpack.c.l.b16 %v203
  %v993 = vunpack.c.l.b16 %v204
  %v994 = vunpack.c.h.b16 %v204
  %v995 = vunpack.c.l.b16 %v205
  %v996 = vunpack.c.h.b16 %v205
  %v997 = vunpack.c.l.b16 %v206
  %v998 = vunpack.c.h.b16 %v206
  %v999 = vunpack.c.l.b16 %v207
  %v1000 = vunpack.c.h.b16 %v207
  %v1001 = vunpack.c.l.b16 %v208
  %v1002 = vunpack.c.h.b16 %v208
  %v1003 = vunpack.c.l.b16 %v209
  %v1004 = vunpack.c.h.b16 %v209
  %v1005 = vunpack.c.l.b16 %v210
  %v1006 = vunpack.c.l.b16 %v211
  %v1007 = vunpack.c.h.b16 %v211
  %v1008 = vunpack.c.l.b16 %v212
  %v1009 = vunpack.c.h.b16 %v212
  %v1010 = vunpack.c.l.b16 %v213
  %v1011 = vunpack.c.h.b16 %v213
  %v1012 = vunpack.c.l.b16 %v214
  %v1013 = vunpack.c.h.b16 %v214
  %v1014 = vunpack.c.l.b16 %v215
  %v1015 = vunpack.c.h.b16 %v215
  %v1016 = vunpack.c.l.b16 %v216
  %v1017 = vunpack.c.h.b16 %v216
  %v1018 = vunpack.c.l.b16 %v217
  %v1019 = vunpack.c.l.b16 %v218
  %v1020 = vunpack.c.h.b16 %v218
  %v1021 = vunpack.c.l.b16 %v219
  %v1022 = vunpack.c.h.b16 %v219
  %v1023 = vunpack.c.l.b16 %v220
  %v1024 = vunpack.c.h.b16 %v220
  %v1025 = vunpack.c.l.b16 %v221
  %v1026 = vunpack.c.h.b16 %v221
  %v1027 = vunpack.c.l.b16 %v222
  %v1028 = vunpack.c.h.b16 %v222
  %v1029 = vunpack.c.l.b16 %v223
  %v1030 = vunpack.c.h.b16 %v223
  %v1031 = vunpack.c.l.b16 %v224
  %v1032 = vpack.c.b16 %v655, %v642
  %v1033 = vpack.c.b16 %v656, %v643
  %v1034 = vpack.c.b16 %v657, %v644
  %v1035 = vpack.c.b16 %v658, %v645
  %v1036 = vpack.c.b16 %v659, %v646
  %v1037 = vpack.c.b16 %v660, %v647
  %v1038 = vpack.c.b16 %v661, %v648
  %v1039 = vpack.c.b16 %v662, %v649
  %v1040 = vpack.c.b16 %v663, %v650
  %v1041 = vpack.c.b16 %v664, %v651
  %v1042 = vpack.c.b16 %v665, %v652
  %v1043 = vpack.c.b16 %v666, %v653
  %v1044 = vpack.c.b16 %v667, %v654
  %v1045 = vpack.c.b16 %v681, %v668
  %v1046 = vpack.c.b16 %v682, %v669
  %v1047 = vpack.c.b16 %v683, %v670
  %v1048 = vpack.c.b16 %v684, %v671
  %v1049 = vpack.c.b16 %v685, %v672
  %v1050 = vpack.c.b16 %v686, %v673
  %v1051 = vpack.c.b16 %v687, %v674
  %v1052 = vpack.c.b16 %v688, %v675
  %v1053 = vpack.c.b16 %v689, %v676
  %v1054 = vpack.c.b16 %v690, %v677
  %v1055 = vpack.c.b16 %v691, %v678
  %v1056 = vpack.c.b16 %v692, %v679
  %v1057 = vpack.c.b16 %v693, %v680
  %v1058 = vpack.c.b16 %v707, %v694
  %v1059 = vpack.c.b16 %v708, %v695
  %v1060 = vpack.c.b16 %v709, %v696
  %v1061 = vpack.c.b16 %v710, %v697
  %v1062 = vpack.c.b16 %v711, %v698
  %v1063 = vpack.c.b16 %v712, %v699
  %v1064 = vpack.c.b16 %v713, %v700
  %v1065 = vpack.c.b16 %v714, %v701
  %v1066 = vpack.c.b16 %v715, %v702
  %v1067 = vpack.c.b16 %v716, %v703
  %v1068 = vpack.c.b16 %v717, %v704
  %v1069 = vpack.c.b16 %v718, %v705
  %v1070 = vpack.c.b16 %v719, %v706
  %v1071 = vpack.c.b16 %v733, %v720
  %v1072 = vpack.c.b16 %v734, %v721
  %v1073 = vpack.c.b16 %v735, %v722
  %v1074 = vpack.c.b16 %v736, %v723
  %v1075 = vpack.c.b16 %v737, %v724
  %v1076 = vpack.c.b16 %v738, %v725
  %v1077 = vpack.c.b16 %v739, %v726
  %v1078 = vpack.c.b16 %v740, %v727
  %v1079 = vpack.c.b16 %v741, %v728
  %v1080 = vpack.c.b16 %v742, %v729
  %v1081 = vpack.c.b16 %v743, %v730
  %v1082 = vpack.c.b16 %v744, %v731
  %v1083 = vpack.c.b16 %v745, %v732
  %v1084 = vpack.c.b16 %v759, %v746
  %v1085 = vpack.c.b16 %v760, %v747
  %v1086 = vpack.c.b16 %v761, %v748
  %v1087 = vpack.c.b16 %v762, %v749
  %v1088 = vpack.c.b16 %v763, %v750
  %v1089 = vpack.c.b16 %v764, %v751
  %v1090 = vpack.c.b16 %v765, %v752
  %v1091 = vpack.c.b16 %v766, %v753
  %v1092 = vpack.c.b16 %v767, %v754
  %v1093 = vpack.c.b16 %v768, %v755
  %v1094 = vpack.c.b16 %v769, %v756
  %v1095 = vpack.c.b16 %v770, %v757
  %v1096 = vpack.c.b16 %v771, %v758
  %v1097 = vpack.c.b16 %v785, %v772
  %v1098 = vpack.c.b16 %v786, %v773
  %v1099 = vpack.c.b16 %v787, %v774
  %v1100 = vpack.c.b16 %v788, %v775
  %v1101 = vpack.c.b16 %v789, %v776
  %v1102 = vpack.c.b16 %v790, %v777
  %v1103 = vpack.c.b16 %v791, %v778
  %v1104 = vpack.c.b16 %v792, %v779
  %v1105 = vpack.c.b16 %v793, %v780
  %v1106 = vpack.c.b16 %v794, %v781
  %v1107 = vpack.c.b16 %v795, %v782
  %v1108 = vpack.c.b16 %v796, %v783
  %v1109 = vpack.c.b16 %v797, %v784
  %v1110 = vpack.c.b16 %v811, %v798
  %v1111 = vpack.c.b16 %v812, %v799
  %v1112 = vpack.c.b16 %v813, %v800
  %v1113 = vpack.c.b16 %v814, %v801
  %v1114 = vpack.c.b16 %v815, %v802
  %v1115 = vpack.c.b16 %v816, %v803
  %v1116 = vpack.c.b16 %v817, %v804
  %v1117 = vpack.c.b16 %v818, %v805
  %v1118 = vpack.c.b16 %v819, %v806
  %v1119 = vpack.c.b16 %v820, %v807
  %v1120 = vpack.c.b16 %v821, %v808
  %v1121 = vpack.c.b16 %v822, %v809
  %v1122 = vpack.c.b16 %v823, %v810
  %v1123 = vpack.c.b16 %v837, %v824
  %v1124 = vpack.c.b16 %v838, %v825
  %v1125 = vpack.c.b16 %v839, %v826
  %v1126 = vpack.c.b16 %v840, %v827
  %v1127 = vpack.c.b16 %v841, %v828
  %v1128 = vpack.c.b16 %v842, %v829
  %v1129 = vpack.c.b16 %v843, %v830
  %v1130 = vpack.c.b16 %v844, %v831
  %v1131 = vpack.c.b16 %v845, %v832
  %v1132 = vpack.c.b16 %v846, %v833
  %v1133 = vpack.c.b16 %v847, %v834
  %v1134 = vpack.c.b16 %v848, %v835
  %v1135 = vpack.c.b16 %v849, %v836
  %v1136 = vpack.c.b16 %v863, %v850
  %v1137 = vpack.c.b16 %v864, %v851
  %v1138 = vpack.c.b16 %v865, %v852
  %v1139 = vpack.c.b16 %v866, %v853
  %v1140 = vpack.c.b16 %v867, %v854
  %v1141 = vpack.c.b16 %v868, %v855
  %v1142 = vpack.c.b16 %v869, %v856
  %v1143 = vpack.c.b16 %v870, %v857
  %v1144 = vpack.c.b16 %v871, %v858
  %v1145 = vpack.c.b16 %v872, %v859
  %v1146 = vpack.c.b16 %v873, %v860
  %v1147 = vpack.c.b16 %v874, %v861
  %v1148 = vpack.c.b16 %v875, %v862
  %v1149 = vpack.c.b16 %v889, %v876
  %v1150 = vpack.c.b16 %v890, %v877
  %v1151 = vpack.c.b16 %v891, %v878
  %v1152 = vpack.c.b16 %v892, %v879
  %v1153 = vpack.c.b16 %v893, %v880
  %v1154 = vpack.c.b16 %v894, %v881
  %v1155 = vpack.c.b16 %v895, %v882
  %v1156 = vpack.c.b16 %v896, %v883
  %v1157 = vpack.c.b16 %v897, %v884
  %v1158 = vpack.c.b16 %v898, %v885
  %v1159 = vpack.c.b16 %v899, %v886
  %v1160 = vpack.c.b16 %v900, %v887
  %v1161 = vpack.c.b16 %v901, %v888
  %v1162 = vpack.c.b16 %v915, %v902
  %v1163 = vpack.c.b16 %v916, %v903
  %v1164 = vpack.c.b16 %v917, %v904
  %v1165 = vpack.c.b16 %v918, %v905
  %v1166 = vpack.c.b16 %v919, %v906
  %v1167 = vpack.c.b16 %v920, %v907
  %v1168 = vpack.c.b16 %v921, %v908
  %v1169 = vpack.c.b16 %v922, %v909
  %v1170 = vpack.c.b16 %v923, %v910
  %v1171 = vpack.c.b16 %v924, %v911
  %v1172 = vpack.c.b16 %v925, %v912
  %v1173 = vpack.c.b16 %v926, %v913
  %v1174 = vpack.c.b16 %v927, %v914
  %v1175 = vpack.c.b16 %v941, %v928
  %v1176 = vpack.c.b16 %v942, %v929
  %v1177 = vpack.c.b16 %v943, %v930
  %v1178 = vpack.c.b16 %v944, %v931
  %v1179 = vpack.c.b16 %v945, %v932
  %v1180 = vpack.c.b16 %v946, %v933
  %v1181 = vpack.c.b16 %v947, %v934
  %v1182 = vpack.c.b16 %v948, %v935
  %v1183 = vpack.c.b16 %v949, %v936
  %v1184 = vpack.c.b16 %v950, %v937
  %v1185 = vpack.c.b16 %v951, %v938
  %v1186 = vpack.c.b16 %v952, %v939
  %v1187 = vpack.c.b16 %v953, %v940
  %v1188 = vpack.c.b16 %v967, %v954
  %v1189 = vpack.c.b16 %v968, %v955
  %v1190 = vpack.c.b16 %v969, %v956
  %v1191 = vpack.c.b16 %v970, %v957
  %v1192 = vpack.c.b16 %v971, %v958
  %v1193 = vpack.c.b16 %v972, %v959
  %v1194 = vpack.c.b16 %v973, %v960
  %v1195 = vpack.c.b16 %v974, %v961
  %v1196 = vpack.c.b16 %v975, %v962
  %v1197 = vpack.c.b16 %v976, %v963
  %v1198 = vpack.c.b16 %v977, %v964
  %v1199 = vpack.c.b16 %v978, %v965
  %v1200 = vpack.c.b16 %v979, %v966
  %v1201 = vpack.c.b16 %v993, %v980
  %v1202 = vpack.c.b16 %v994, %v981
  %v1203 = vpack.c.b16 %v995, %v982
  %v1204 = vpack.c.b16 %v996, %v983
  %v1205 = vpack.c.b16 %v997, %v984
  %v1206 = vpack.c.b16 %v998, %v985
  %v1207 = vpack.c.b16 %v999, %v986
  %v1208 = vpack.c.b16 %v1000, %v987
  %v1209 = vpack.c.b16 %v1001, %v988
  %v1210 = vpack.c.b16 %v1002, %v989
  %v1211 = vpack.c.b16 %v1003, %v990
  %v1212 = vpack.c.b16 %v1004, %v991
  %v1213 = vpack.c.b16 %v1005, %v992
  %v1214 = vpack.c.b16 %v1019, %v1006
  %v1215 = vpack.c.b16 %v1020, %v1007
  %v1216 = vpack.c.b16 %v1021, %v1008
  %v1217 = vpack.c.b16 %v1022, %v1009
  %v1218 = vpack.c.b16 %v1023, %v1010
  %v1219 = vpack.c.b16 %v1024, %v1011
  %v1220 = vpack.c.b16 %v1025, %v1012
  %v1221 = vpack.c.b16 %v1026, %v1013
  %v1222 = vpack.c.b16 %v1027, %v1014
  %v1223 = vpack.c.b16 %v1028, %v1015
  %v1224 = vpack.c.b16 %v1029, %v1016
  %v1225 = vpack.c.b16 %v1030, %v1017
  %v1226 = vpack.c.b16 %v1031, %v1018
  %v1607 = vunpack.c.l.b16 %v225
  %v1608 = vunpack.c.l.b16 %v226
  %v1609 = vunpack.c.l.b16 %v227
  %v1610 = vunpack.c.l.b16 %v228
  %v1611 = vunpack.c.l.b16 %v229
  %v1612 = vunpack.c.l.b16 %v230
  %v1613 = vunpack.c.l.b16 %v231
  %v1614 = vunpack.c.l.b16 %v232
  %v1615 = vunpack.c.l.b16 %v233
  %v1616 = vunpack.c.l.b16 %v234
  %v1617 = vunpack.c.l.b16 %v235
  %v1618 = vunpack.c.l.b16 %v236
  %v1619 = vunpack.c.l.b16 %v237
  %v1620 = vunpack.c.l.b16 %v238
  %v1621 = vunpack.c.l.b16 %v239
  %v1622 = vunpack.c.l.b16 %v240
  %v1623 = vunpack.c.l.b16 %v241
  %v1624 = vunpack.c.l.b16 %v242
  %v1625 = vunpack.c.l.b16 %v243
  %v1626 = vunpack.c.l.b16 %v244
  %v1627 = vunpack.c.l.b16 %v245
  %v1628 = vunpack.c.l.b16 %v246
  %v1629 = vunpack.c.l.b16 %v247
  %v1630 = vunpack.c.l.b16 %v248
  %v1631 = vunpack.c.l.b16 %v249
  %v1632 = vunpack.c.l.b16 %v250
  %v1633 = vunpack.c.l.b16 %v251
  %v1634 = vunpack.c.l.b16 %v252
  %v1635 = vunpack.c.l.b16 %v253
  %v1636 = vunpack.c.l.b16 %v254
  %v1637 = vunpack.c.l.b16 %v255
  %v1638 = vunpack.c.l.b16 %v256
  %v1639 = vunpack.c.l.b16 %v257
  %v1640 = vunpack.c.l.b16 %v258
  %v1641 = vunpack.c.l.b16 %v259
  %v1642 = vunpack.c.l.b16 %v260
  %v1643 = vunpack.c.l.b16 %v261
  %v1644 = vunpack.c.l.b16 %v262
  %v1645 = vunpack.c.l.b16 %v263
  %v1646 = vunpack.c.l.b16 %v264
  %v1647 = vunpack.c.l.b16 %v265
  %v1648 = vunpack.c.l.b16 %v266
  %v1649 = vunpack.c.l.b16 %v267
  %v1650 = vunpack.c.l.b16 %v268
  %v1651 = vunpack.c.l.b16 %v269
  %v1652 = vunpack.c.l.b16 %v270
  %v1653 = vunpack.c.l.b16 %v271
  %v1654 = vunpack.c.l.b16 %v272
  %v1655 = vunpack.c.l.b16 %v273
  %v1656 = vunpack.c.l.b16 %v274
  %v1657 = vunpack.c.l.b16 %v275
  %v1658 = vunpack.c.l.b16 %v276
  %v1659 = vunpack.c.l.b16 %v277
  %v1660 = vunpack.c.l.b16 %v278
  %v1661 = vunpack.c.l.b16 %v279
  %v1662 = vunpack.c.l.b16 %v280
  %v1663 = vunpack.c.l.b16 %v281
  %v1664 = vunpack.c.l.b16 %v282
  %v1665 = vunpack.c.l.b16 %v283
  %v1666 = vunpack.c.l.b16 %v284
  %v1667 = vunpack.c.l.b16 %v285
  %v1668 = vunpack.c.l.b16 %v286
  %v1669 = vunpack.c.l.b16 %v287
  %v1670 = vunpack.c.l.b16 %v288
  %v1671 = vunpack.c.l.b16 %v289
  %v1672 = vunpack.c.l.b16 %v290
  %v1673 = vunpack.c.l.b16 %v291
  %v1674 = vunpack.c.l.b16 %v292
  %v1675 = vunpack.c.l.b16 %v293
  %v1676 = vunpack.c.l.b16 %v294
  %v1677 = vunpack.c.l.b16 %v295
  %v1678 = vunpack.c.l.b16 %v296
  %v1679 = vunpack.c.l.b16 %v297
  %v1680 = vunpack.c.l.b16 %v298
  %v1681 = vunpack.c.l.b16 %v299
  %v1682 = vunpack.c.l.b16 %v300
  %v1683 = vunpack.c.l.b16 %v301
  %v1684 = vunpack.c.l.b16 %v302
  %v1685 = vunpack.c.l.b16 %v303
  %v1686 = vunpack.c.l.b16 %v304
  %v1687 = vunpack.c.l.b16 %v305
  %v1688 = vunpack.c.l.b16 %v306
  %v1689 = vunpack.c.l.b16 %v307
  %v1690 = vunpack.c.l.b16 %v308
  %v1691 = vunpack.c.l.b16 %v309
  %v1692 = vunpack.c.l.b16 %v310
  %v1693 = vunpack.c.l.b16 %v311
  %v1694 = vunpack.c.l.b16 %v312
  %v1695 = vunpack.c.l.b16 %v313
  %v1696 = vunpack.c.l.b16 %v314
  %v1697 = vunpack.c.l.b16 %v315
  %v1698 = vunpack.c.l.b16 %v316
  %v1699 = vunpack.c.l.b16 %v317
  %v1700 = vunpack.c.l.b16 %v318
  %v1701 = vunpack.c.l.b16 %v319
  %v1702 = vunpack.c.l.b16 %v320
  %v1703 = vunpack.c.l.b16 %v321
  %v1704 = vunpack.c.l.b16 %v322
  %v1705 = vunpack.c.l.b16 %v323
  %v1706 = vunpack.c.l.b16 %v324
  %v1707 = vunpack.c.l.b16 %v325
  %v1708 = vunpack.c.l.b16 %v326
  %v1709 = vunpack.c.l.b16 %v327
  %v1710 = vunpack.c.l.b16 %v328
  %v1711 = vunpack.c.l.b16 %v329
  %v1712 = vunpack.c.l.b16 %v330
  %v1713 = vunpack.c.l.b16 %v331
  %v1714 = vunpack.c.l.b16 %v332
  %v1715 = vunpack.c.l.b16 %v333
  %v1716 = vunpack.c.l.b16 %v334
  %v1717 = vunpack.c.l.b16 %v335
  %v1718 = vunpack.c.l.b16 %v336
  %v1719 = vunpack.c.l.b16 %v337
  %v1720 = vunpack.c.l.b16 %v338
  %v1721 = vunpack.c.l.b16 %v339
  %v1722 = vunpack.c.l.b16 %v340
  %v1723 = vunpack.c.l.b16 %v341
  %v1724 = vunpack.c.l.b16 %v342
  %v1725 = vunpack.c.l.b16 %v343
  %v1726 = vunpack.c.l.b16 %v344
  %v1727 = vunpack.c.l.b16 %v345
  %v1728 = vunpack.c.l.b16 %v346
  %v1729 = vunpack.c.l.b16 %v347
  %v1730 = vunpack.c.l.b16 %v348
  %v1731 = vunpack.c.l.b16 %v349
  %v1732 = vunpack.c.l.b16 %v350
  %v1733 = vunpack.c.l.b16 %v351
  %v1734 = vunpack.c.l.b16 %v352
  %v1735 = vunpack.c.l.b16 %v353
  %v1736 = vunpack.c.l.b16 %v354
  %v1737 = vunpack.c.l.b16 %v355
  %v1738 = vunpack.c.l.b16 %v356
  %v1739 = vunpack.c.l.b16 %v357
  %v1740 = vunpack.c.l.b16 %v358
  %v1741 = vunpack.c.l.b16 %v359
  %v1742 = vunpack.c.l.b16 %v360
  %v1743 = vunpack.c.l.b16 %v361
  %v1744 = vunpack.c.l.b16 %v362
  %v1745 = vunpack.c.l.b16 %v363
  %v1746 = vunpack.c.l.b16 %v364
  %v1747 = vunpack.c.l.b16 %v365
  %v1748 = vunpack.c.l.b16 %v366
  %v1749 = vunpack.c.l.b16 %v367
  %v1750 = vunpack.c.l.b16 %v368
  %v1751 = vunpack.c.l.b16 %v369
  %v1752 = vunpack.c.l.b16 %v370
  %v1753 = vunpack.c.l.b16 %v371
  %v1754 = vunpack.c.l.b16 %v372
  %v1755 = vunpack.c.l.b16 %v373
  %v1756 = vunpack.c.l.b16 %v374
  %v1757 = vunpack.c.l.b16 %v375
  %v1758 = vunpack.c.l.b16 %v376
  %v1759 = vunpack.c.l.b16 %v377
  %v1760 = vunpack.c.l.b16 %v378
  %v1761 = vunpack.c.l.b16 %v379
  %v1762 = vunpack.c.l.b16 %v380
  %v1763 = vunpack.c.l.b16 %v381
  %v1764 = vunpack.c.l.b16 %v382
  %v1765 = vunpack.c.l.b16 %v383
  %v1766 = vunpack.c.l.b16 %v384
  %v1767 = vunpack.c.l.b16 %v385
  %v1768 = vunpack.c.l.b16 %v386
  %v1769 = vunpack.c.l.b16 %v387
  %v1770 = vunpack.c.l.b16 %v388
  %v1771 = vunpack.c.l.b16 %v389
  %v1772 = vunpack.c.l.b16 %v390
  %v1773 = vunpack.c.l.b16 %v391
  %v1774 = vunpack.c.l.b16 %v392
  %v1775 = vunpack.c.l.b16 %v393
  %v1776 = vunpack.c.l.b16 %v394
  %v1777 = vunpack.c.l.b16 %v395
  %v1778 = vunpack.c.l.b16 %v396
  %v1779 = vunpack.c.l.b16 %v397
  %v1780 = vunpack.c.l.b16 %v398
  %v1781 = vunpack.c.l.b16 %v399
  %v1782 = vunpack.c.l.b16 %v400
  %v1783 = vunpack.c.l.b16 %v401
  %v1784 = vunpack.c.l.b16 %v402
  %v1785 = vunpack.c.l.b16 %v403
  %v1786 = vunpack.c.l.b16 %v404
  %v1787 = vunpack.c.l.b16 %v405
  %v1788 = vunpack.c.l.b16 %v406
  %v1789 = vunpack.c.l.b16 %v407
  %v1790 = vunpack.c.l.b16 %v408
  %v1791 = vunpack.c.l.b16 %v409
  %v1792 = vunpack.c.l.b16 %v410
  %v1793 = vunpack.c.l.b16 %v411
  %v1794 = vunpack.c.l.b16 %v412
  %v1795 = vunpack.c.l.b16 %v413
  %v1796 = vunpack.c.l.b16 %v414
  %v1797 = vunpack.c.l.b16 %v415
  %v1798 = vunpack.c.l.b16 %v416
  %v1799 = vunpack.c.l.b16 %v417
  %v1800 = vunpack.c.l.b16 %v418
  %v1801 = vunpack.c.l.b16 %v419
  %v1802 = vunpack.c.l.b16 %v420
  %v1803 = vunpack.c.l.b16 %v421
  %v1804 = vunpack.c.l.b16 %v422
  %v1805 = vunpack.c.l.b16 %v423
  %v1806 = vunpack.c.l.b16 %v424
  %v1807 = vpack.c.b16 %v1608, %v1607
  %v1808 = vpack.c.b16 %v1610, %v1609
  %v1809 = vpack.c.b16 %v1612, %v1611
  %v1810 = vpack.c.b16 %v1614, %v1613
  %v1811 = vpack.c.b16 %v1616, %v1615
  %v1812 = vpack.c.b16 %v1618, %v1617
  %v1813 = vpack.c.b16 %v1620, %v1619
  %v1814 = vpack.c.b16 %v1622, %v1621
  %v1815 = vpack.c.b16 %v1624, %v1623
  %v1816 = vpack.c.b16 %v1626, %v1625
  %v1817 = vpack.c.b16 %v1628, %v1627
  %v1818 = vpack.c.b16 %v1630, %v1629
  %v1819 = vpack.c.b16 %v1632, %v1631
  %v1820 = vpack.c.b16 %v1634, %v1633
  %v1821 = vpack.c.b16 %v1636, %v1635
  %v1822 = vpack.c.b16 %v1638, %v1637
  %v1823 = vpack.c.b16 %v1640, %v1639
  %v1824 = vpack.c.b16 %v1642, %v1641
  %v1825 = vpack.c.b16 %v1644, %v1643
  %v1826 = vpack.c.b16 %v1646, %v1645
  %v1827 = vpack.c.b16 %v1648, %v1647
  %v1828 = vpack.c.b16 %v1650, %v1649
  %v1829 = vpack.c.b16 %v1652, %v1651
  %v1830 = vpack.c.b16 %v1654, %v1653
  %v1831 = vpack.c.b16 %v1656, %v1655
  %v1832 = vpack.c.b16 %v1658, %v1657
  %v1833 = vpack.c.b16 %v1660, %v1659
  %v1834 = vpack.c.b16 %v1662, %v1661
  %v1835 = vpack.c.b16 %v1664, %v1663
  %v1836 = vpack.c.b16 %v1666, %v1665
  %v1837 = vpack.c.b16 %v1668, %v1667
  %v1838 = vpack.c.b16 %v1670, %v1669
  %v1839 = vpack.c.b16 %v1672, %v1671
  %v1840 = vpack.c.b16 %v1674, %v1673
  %v1841 = vpack.c.b16 %v1676, %v1675
  %v1842 = vpack.c.b16 %v1678, %v1677
  %v1843 = vpack.c.b16 %v1680, %v1679
  %v1844 = vpack.c.b16 %v1682, %v1681
  %v1845 = vpack.c.b16 %v1684, %v1683
  %v1846 = vpack.c.b16 %v1686, %v1685
  %v1847 = vpack.c.b16 %v1688, %v1687
  %v1848 = vpack.c.b16 %v1690, %v1689
  %v1849 = vpack.c.b16 %v1692, %v1691
  %v1850 = vpack.c.b16 %v1694, %v1693
  %v1851 = vpack.c.b16 %v1696, %v1695
  %v1852 = vpack.c.b16 %v1698, %v1697
  %v1853 = vpack.c.b16 %v1700, %v1699
  %v1854 = vpack.c.b16 %v1702, %v1701
  %v1855 = vpack.c.b16 %v1704, %v1703
  %v1856 = vpack.c.b16 %v1706, %v1705
  %v1857 = vpack.c.b16 %v1708, %v1707
  %v1858 = vpack.c.b16 %v1710, %v1709
  %v1859 = vpack.c.b16 %v1712, %v1711
  %v1860 = vpack.c.b16 %v1714, %v1713
  %v1861 = vpack.c.b16 %v1716, %v1715
  %v1862 = vpack.c.b16 %v1718, %v1717
  %v1863 = vpack.c.b16 %v1720, %v1719
  %v1864 = vpack.c.b16 %v1722, %v1721
  %v1865 = vpack.c.b16 %v1724, %v1723
  %v1866 = vpack.c.b16 %v1726, %v1725
  %v1867 = vpack.c.b16 %v1728, %v1727
  %v1868 = vpack.c.b16 %v1730, %v1729
  %v1869 = vpack.c.b16 %v1732, %v1731
  %v1870 = vpack.c.b16 %v1734, %v1733
  %v1871 = vpack.c.b16 %v1736, %v1735
  %v1872 = vpack.c.b16 %v1738, %v1737
  %v1873 = vpack.c.b16 %v1740, %v1739
  %v1874 = vpack.c.b16 %v1742, %v1741
  %v1875 = vpack.c.b16 %v1744, %v1743
  %v1876 = vpack.c.b16 %v1746, %v1745
  %v1877 = vpack.c.b16 %v1748, %v1747
  %v1878 = vpack.c.b16 %v1750, %v1749
  %v1879 = vpack.c.b16 %v1752, %v1751
  %v1880 = vpack.c.b16 %v1754, %v1753
  %v1881 = vpack.c.b16 %v1756, %v1755
  %v1882 = vpack.c.b16 %v1758, %v1757
  %v1883 = vpack.c.b16 %v1760, %v1759
  %v1884 = vpack.c.b16 %v1762, %v1761
  %v1885 = vpack.c.b16 %v1764, %v1763
  %v1886 = vpack.c.b16 %v1766, %v1765
  %v1887 = vpack.c.b16 %v1768, %v1767
  %v1888 = vpack.c.b16 %v1770, %v1769
  %v1889 = vpack.c.b16 %v1772, %v1771
  %v1890 = vpack.c.b16 %v1774, %v1773
  %v1891 = vpack.c.b16 %v1776, %v1775
  %v1892 = vpack.c.b16 %v1778, %v1777
  %v1893 = vpack.c.b16 %v1780, %v1779
  %v1894 = vpack.c.b16 %v1782, %v1781
  %v1895 = vpack.c.b16 %v1784, %v1783
  %v1896 = vpack.c.b16 %v1786, %v1785
  %v1897 = vpack.c.b16 %v1788, %v1787
  %v1898 = vpack.c.b16 %v1790, %v1789
  %v1899 = vpack.c.b16 %v1792, %v1791
  %v1900 = vpack.c.b16 %v1794, %v1793
  %v1901 = vpack.c.b16 %v1796, %v1795
  %v1902 = vpack.c.b16 %v1798, %v1797
  %v1903 = vpack.c.b16 %v1800, %v1799
  %v1904 = vpack.c.b16 %v1802, %v1801
  %v1905 = vpack.c.b16 %v1804, %v1803
  %v1906 = vpack.c.b16 %v1806, %v1805
  %vm2007 = vcmask 523264
  %v2009 = vsel %vm2007, %v1044, 0
  %v2012 = vsel %vm2007, %v1057, 0
  %v2015 = vsel %vm2007, %v1070, 0
  %v2018 = vsel %vm2007, %v1083, 0
  %v2021 = vsel %vm2007, %v1096, 0
  %v2024 = vsel %vm2007, %v1109, 0
  %v2027 = vsel %vm2007, %v1122, 0
  %v2030 = vsel %vm2007, %v1135, 0
  %v2033 = vsel %vm2007, %v1148, 0
  %v2036 = vsel %vm2007, %v1161, 0
  %v2039 = vsel %vm2007, %v1174, 0
  %v2042 = vsel %vm2007, %v1187, 0
  %v2045 = vsel %vm2007, %v1200, 0
  %v2048 = vsel %vm2007, %v1213, 0
  %v2051 = vsel %vm2007, %v1226, 0
  %2053 = vmatprep.subr.bf16.mxu0 0
  %2054 = vmatpush1.bf16.msra.mxu0 %v1814
  %2055 = vmatprep.subr.bf16.mxu0 0
  %2056 = vmatpush1.bf16.msra.mxu0 %v1813
  %2057 = vmatprep.subr.bf16.mxu0 0
  %2058 = vmatpush1.bf16.msra.mxu0 %v1812
  %2059 = vmatprep.subr.bf16.mxu0 0
  %2060 = vmatpush1.bf16.msra.mxu0 %v1811
  %2061 = vmatprep.subr.bf16.mxu0 0
  %2062 = vmatpush1.bf16.msra.mxu0 %v1810
  %2063 = vmatprep.subr.bf16.mxu0 0
  %2064 = vmatpush1.bf16.msra.mxu0 %v1809
  %2065 = vmatprep.subr.bf16.mxu0 0
  %2066 = vmatpush1.bf16.msra.mxu0 %v1808
  %2067 = vmatprep.subr.bf16.mxu0 0
  %2068 = vmatpush1.bf16.msra.mxu0 %v1807
  %2069 = vmatprep.subr.bf16.mxu0 0
  %2070 = vmatpush2.bf16.msra.mxu0 %v1822
  %2071 = vmatprep.subr.bf16.mxu0 0
  %2072 = vmatpush2.bf16.msra.mxu0 %v1821
  %2073 = vmatprep.subr.bf16.mxu0 0
  %2074 = vmatpush2.bf16.msra.mxu0 %v1820
  %2075 = vmatprep.subr.bf16.mxu0 0
  %2076 = vmatpush2.bf16.msra.mxu0 %v1819
  %2077 = vmatprep.subr.bf16.mxu0 0
  %2078 = vmatpush2.bf16.msra.mxu0 %v1818
  %2079 = vmatprep.subr.bf16.mxu0 0
  %2080 = vmatpush2.bf16.msra.mxu0 %v1817
  %2081 = vmatprep.subr.bf16.mxu0 0
  %2082 = vmatpush2.bf16.msra.mxu0 %v1816
  %2083 = vmatprep.subr.bf16.mxu0 0
  %2084 = vmatpush2.bf16.msra.mxu0 %v1815
  %2085 = vmatprep.mubr.bf16.mxu0 %v1033
  %2086 = vmatmul.mubr.bf16.gmra.mxu0 %v1032
  %v2087 = vpop.f32.mrf.mxu0
  %v2088 = vadd.f32 %v430, %v2087
  %v2089 = vpop.f32.mrf.mxu0
  %v2090 = vpop.f32.mrf.mxu0
  %v2091 = vadd.f32 %v430, %v2090
  %v2092 = vpop.f32.mrf.mxu0
  %2093 = vmatprep.mubr.bf16.mxu0 %v1046
  %2094 = vmatmul.mubr.bf16.gmra.mxu0 %v1045
  %v2095 = vpop.f32.mrf.mxu0
  %v2096 = vadd.f32 %v430, %v2095
  %v2097 = vpop.f32.mrf.mxu0
  %v2098 = vpop.f32.mrf.mxu0
  %v2099 = vadd.f32 %v430, %v2098
  %v2100 = vpop.f32.mrf.mxu0
  %2101 = vmatprep.mubr.bf16.mxu0 %v1059
  %2102 = vmatmul.mubr.bf16.gmra.mxu0 %v1058
  %v2103 = vpop.f32.mrf.mxu0
  %v2104 = vadd.f32 %v430, %v2103
  %v2105 = vpop.f32.mrf.mxu0
  %v2106 = vpop.f32.mrf.mxu0
  %v2107 = vadd.f32 %v430, %v2106
  %v2108 = vpop.f32.mrf.mxu0
  %2109 = vmatprep.mubr.bf16.mxu0 %v1072
  %2110 = vmatmul.mubr.bf16.gmra.mxu0 %v1071
  %v2111 = vpop.f32.mrf.mxu0
  %v2112 = vadd.f32 %v430, %v2111
  %v2113 = vpop.f32.mrf.mxu0
  %v2114 = vpop.f32.mrf.mxu0
  %v2115 = vadd.f32 %v430, %v2114
  %v2116 = vpop.f32.mrf.mxu0
  %2117 = vmatprep.mubr.bf16.mxu0 %v1085
  %2118 = vmatmul.mubr.bf16.gmra.mxu0 %v1084
  %v2119 = vpop.f32.mrf.mxu0
  %v2120 = vadd.f32 %v430, %v2119
  %v2121 = vpop.f32.mrf.mxu0
  %v2122 = vpop.f32.mrf.mxu0
  %v2123 = vadd.f32 %v430, %v2122
  %v2124 = vpop.f32.mrf.mxu0
  %2125 = vmatprep.mubr.bf16.mxu0 %v1098
  %2126 = vmatmul.mubr.bf16.gmra.mxu0 %v1097
  %v2127 = vpop.f32.mrf.mxu0
  %v2128 = vadd.f32 %v430, %v2127
  %v2129 = vpop.f32.mrf.mxu0
  %v2130 = vpop.f32.mrf.mxu0
  %v2131 = vadd.f32 %v430, %v2130
  %v2132 = vpop.f32.mrf.mxu0
  %2133 = vmatprep.mubr.bf16.mxu0 %v1111
  %2134 = vmatmul.mubr.bf16.gmra.mxu0 %v1110
  %v2135 = vpop.f32.mrf.mxu0
  %v2136 = vadd.f32 %v430, %v2135
  %v2137 = vpop.f32.mrf.mxu0
  %v2138 = vpop.f32.mrf.mxu0
  %v2139 = vadd.f32 %v430, %v2138
  %v2140 = vpop.f32.mrf.mxu0
  %2141 = vmatprep.mubr.bf16.mxu0 %v1124
  %2142 = vmatmul.mubr.bf16.gmra.mxu0 %v1123
  %v2143 = vpop.f32.mrf.mxu0
  %v2144 = vadd.f32 %v430, %v2143
  %v2145 = vpop.f32.mrf.mxu0
  %v2146 = vpop.f32.mrf.mxu0
  %v2147 = vadd.f32 %v430, %v2146
  %v2148 = vpop.f32.mrf.mxu0
  %2149 = vmatprep.mubr.bf16.mxu0 %v1137
  %2150 = vmatmul.mubr.bf16.gmra.mxu0 %v1136
  %v2151 = vpop.f32.mrf.mxu0
  %v2152 = vadd.f32 %v430, %v2151
  %v2153 = vpop.f32.mrf.mxu0
  %v2154 = vpop.f32.mrf.mxu0
  %v2155 = vadd.f32 %v430, %v2154
  %v2156 = vpop.f32.mrf.mxu0
  %2157 = vmatprep.mubr.bf16.mxu0 %v1150
  %2158 = vmatmul.mubr.bf16.gmra.mxu0 %v1149
  %v2159 = vpop.f32.mrf.mxu0
  %v2160 = vadd.f32 %v430, %v2159
  %v2161 = vpop.f32.mrf.mxu0
  %v2162 = vpop.f32.mrf.mxu0
  %v2163 = vadd.f32 %v430, %v2162
  %v2164 = vpop.f32.mrf.mxu0
  %2165 = vmatprep.mubr.bf16.mxu0 %v1163
  %2166 = vmatmul.mubr.bf16.gmra.mxu0 %v1162
  %v2167 = vpop.f32.mrf.mxu0
  %v2168 = vadd.f32 %v430, %v2167
  %v2169 = vpop.f32.mrf.mxu0
  %v2170 = vpop.f32.mrf.mxu0
  %v2171 = vadd.f32 %v430, %v2170
  %v2172 = vpop.f32.mrf.mxu0
  %2173 = vmatprep.mubr.bf16.mxu0 %v1176
  %2174 = vmatmul.mubr.bf16.gmra.mxu0 %v1175
  %v2175 = vpop.f32.mrf.mxu0
  %v2176 = vadd.f32 %v430, %v2175
  %v2177 = vpop.f32.mrf.mxu0
  %v2178 = vpop.f32.mrf.mxu0
  %v2179 = vadd.f32 %v430, %v2178
  %v2180 = vpop.f32.mrf.mxu0
  %2181 = vmatprep.mubr.bf16.mxu0 %v1189
  %2182 = vmatmul.mubr.bf16.gmra.mxu0 %v1188
  %v2183 = vpop.f32.mrf.mxu0
  %v2184 = vadd.f32 %v430, %v2183
  %v2185 = vpop.f32.mrf.mxu0
  %v2186 = vpop.f32.mrf.mxu0
  %v2187 = vadd.f32 %v430, %v2186
  %v2188 = vpop.f32.mrf.mxu0
  %2189 = vmatprep.mubr.bf16.mxu0 %v1202
  %2190 = vmatmul.mubr.bf16.gmra.mxu0 %v1201
  %v2191 = vpop.f32.mrf.mxu0
  %v2192 = vadd.f32 %v430, %v2191
  %v2193 = vpop.f32.mrf.mxu0
  %v2194 = vpop.f32.mrf.mxu0
  %v2195 = vadd.f32 %v430, %v2194
  %v2196 = vpop.f32.mrf.mxu0
  %2197 = vmatprep.mubr.bf16.mxu0 %v1215
  %2198 = vmatmul.mubr.bf16.gmra.mxu0 %v1214
  %v2199 = vpop.f32.mrf.mxu0
  %v2200 = vadd.f32 %v430, %v2199
  %v2201 = vpop.f32.mrf.mxu0
  %v2202 = vpop.f32.mrf.mxu0
  %v2203 = vadd.f32 %v430, %v2202
  %v2204 = vpop.f32.mrf.mxu0
  %2205 = vdwg.mxu0
  %2206 = vmatprep.subr.bf16.mxu0 0
  %2207 = vmatpush1.bf16.msra.mxu0 %v1830
  %2208 = vmatprep.subr.bf16.mxu0 0
  %2209 = vmatpush1.bf16.msra.mxu0 %v1829
  %2210 = vmatprep.subr.bf16.mxu0 0
  %2211 = vmatpush1.bf16.msra.mxu0 %v1828
  %2212 = vmatprep.subr.bf16.mxu0 0
  %2213 = vmatpush1.bf16.msra.mxu0 %v1827
  %2214 = vmatprep.subr.bf16.mxu0 0
  %2215 = vmatpush1.bf16.msra.mxu0 %v1826
  %2216 = vmatprep.subr.bf16.mxu0 0
  %2217 = vmatpush1.bf16.msra.mxu0 %v1825
  %2218 = vmatprep.subr.bf16.mxu0 0
  %2219 = vmatpush1.bf16.msra.mxu0 %v1824
  %2220 = vmatprep.subr.bf16.mxu0 0
  %2221 = vmatpush1.bf16.msra.mxu0 %v1823
  %2222 = vmatprep.subr.bf16.mxu0 0
  %2223 = vmatpush2.bf16.msra.mxu0 %v1838
  %2224 = vmatprep.subr.bf16.mxu0 0
  %2225 = vmatpush2.bf16.msra.mxu0 %v1837
  %2226 = vmatprep.subr.bf16.mxu0 0
  %2227 = vmatpush2.bf16.msra.mxu0 %v1836
  %2228 = vmatprep.subr.bf16.mxu0 0
  %2229 = vmatpush2.bf16.msra.mxu0 %v1835
  %2230 = vmatprep.subr.bf16.mxu0 0
  %2231 = vmatpush2.bf16.msra.mxu0 %v1834
  %2232 = vmatprep.subr.bf16.mxu0 0
  %2233 = vmatpush2.bf16.msra.mxu0 %v1833
  %2234 = vmatprep.subr.bf16.mxu0 0
  %2235 = vmatpush2.bf16.msra.mxu0 %v1832
  %2236 = vmatprep.subr.bf16.mxu0 0
  %2237 = vmatpush2.bf16.msra.mxu0 %v1831
  %2238 = vmatprep.mubr.bf16.mxu0 %v1035
  %2239 = vmatmul.mubr.bf16.gmra.mxu0 %v1034
  %v2240 = vpop.f32.mrf.mxu0
  %v2241 = vadd.f32 %v2088, %v2240
  %v2242 = vpop.f32.mrf.mxu0
  %v2243 = vpop.f32.mrf.mxu0
  %v2244 = vadd.f32 %v2091, %v2243
  %v2245 = vpop.f32.mrf.mxu0
  %2246 = vmatprep.mubr.bf16.mxu0 %v1048
  %2247 = vmatmul.mubr.bf16.gmra.mxu0 %v1047
  %v2248 = vpop.f32.mrf.mxu0
  %v2249 = vadd.f32 %v2096, %v2248
  %v2250 = vpop.f32.mrf.mxu0
  %v2251 = vpop.f32.mrf.mxu0
  %v2252 = vadd.f32 %v2099, %v2251
  %v2253 = vpop.f32.mrf.mxu0
  %2254 = vmatprep.mubr.bf16.mxu0 %v1061
  %2255 = vmatmul.mubr.bf16.gmra.mxu0 %v1060
  %v2256 = vpop.f32.mrf.mxu0
  %v2257 = vadd.f32 %v2104, %v2256
  %v2258 = vpop.f32.mrf.mxu0
  %v2259 = vpop.f32.mrf.mxu0
  %v2260 = vadd.f32 %v2107, %v2259
  %v2261 = vpop.f32.mrf.mxu0
  %2262 = vmatprep.mubr.bf16.mxu0 %v1074
  %2263 = vmatmul.mubr.bf16.gmra.mxu0 %v1073
  %v2264 = vpop.f32.mrf.mxu0
  %v2265 = vadd.f32 %v2112, %v2264
  %v2266 = vpop.f32.mrf.mxu0
  %v2267 = vpop.f32.mrf.mxu0
  %v2268 = vadd.f32 %v2115, %v2267
  %v2269 = vpop.f32.mrf.mxu0
  %2270 = vmatprep.mubr.bf16.mxu0 %v1087
  %2271 = vmatmul.mubr.bf16.gmra.mxu0 %v1086
  %v2272 = vpop.f32.mrf.mxu0
  %v2273 = vadd.f32 %v2120, %v2272
  %v2274 = vpop.f32.mrf.mxu0
  %v2275 = vpop.f32.mrf.mxu0
  %v2276 = vadd.f32 %v2123, %v2275
  %v2277 = vpop.f32.mrf.mxu0
  %2278 = vmatprep.mubr.bf16.mxu0 %v1100
  %2279 = vmatmul.mubr.bf16.gmra.mxu0 %v1099
  %v2280 = vpop.f32.mrf.mxu0
  %v2281 = vadd.f32 %v2128, %v2280
  %v2282 = vpop.f32.mrf.mxu0
  %v2283 = vpop.f32.mrf.mxu0
  %v2284 = vadd.f32 %v2131, %v2283
  %v2285 = vpop.f32.mrf.mxu0
  %2286 = vmatprep.mubr.bf16.mxu0 %v1113
  %2287 = vmatmul.mubr.bf16.gmra.mxu0 %v1112
  %v2288 = vpop.f32.mrf.mxu0
  %v2289 = vadd.f32 %v2136, %v2288
  %v2290 = vpop.f32.mrf.mxu0
  %v2291 = vpop.f32.mrf.mxu0
  %v2292 = vadd.f32 %v2139, %v2291
  %v2293 = vpop.f32.mrf.mxu0
  %2294 = vmatprep.mubr.bf16.mxu0 %v1126
  %2295 = vmatmul.mubr.bf16.gmra.mxu0 %v1125
  %v2296 = vpop.f32.mrf.mxu0
  %v2297 = vadd.f32 %v2144, %v2296
  %v2298 = vpop.f32.mrf.mxu0
  %v2299 = vpop.f32.mrf.mxu0
  %v2300 = vadd.f32 %v2147, %v2299
  %v2301 = vpop.f32.mrf.mxu0
  %2302 = vmatprep.mubr.bf16.mxu0 %v1139
  %2303 = vmatmul.mubr.bf16.gmra.mxu0 %v1138
  %v2304 = vpop.f32.mrf.mxu0
  %v2305 = vadd.f32 %v2152, %v2304
  %v2306 = vpop.f32.mrf.mxu0
  %v2307 = vpop.f32.mrf.mxu0
  %v2308 = vadd.f32 %v2155, %v2307
  %v2309 = vpop.f32.mrf.mxu0
  %2310 = vmatprep.mubr.bf16.mxu0 %v1152
  %2311 = vmatmul.mubr.bf16.gmra.mxu0 %v1151
  %v2312 = vpop.f32.mrf.mxu0
  %v2313 = vadd.f32 %v2160, %v2312
  %v2314 = vpop.f32.mrf.mxu0
  %v2315 = vpop.f32.mrf.mxu0
  %v2316 = vadd.f32 %v2163, %v2315
  %v2317 = vpop.f32.mrf.mxu0
  %2318 = vmatprep.mubr.bf16.mxu0 %v1165
  %2319 = vmatmul.mubr.bf16.gmra.mxu0 %v1164
  %v2320 = vpop.f32.mrf.mxu0
  %v2321 = vadd.f32 %v2168, %v2320
  %v2322 = vpop.f32.mrf.mxu0
  %v2323 = vpop.f32.mrf.mxu0
  %v2324 = vadd.f32 %v2171, %v2323
  %v2325 = vpop.f32.mrf.mxu0
  %2326 = vmatprep.mubr.bf16.mxu0 %v1178
  %2327 = vmatmul.mubr.bf16.gmra.mxu0 %v1177
  %v2328 = vpop.f32.mrf.mxu0
  %v2329 = vadd.f32 %v2176, %v2328
  %v2330 = vpop.f32.mrf.mxu0
  %v2331 = vpop.f32.mrf.mxu0
  %v2332 = vadd.f32 %v2179, %v2331
  %v2333 = vpop.f32.mrf.mxu0
  %2334 = vmatprep.mubr.bf16.mxu0 %v1191
  %2335 = vmatmul.mubr.bf16.gmra.mxu0 %v1190
  %v2336 = vpop.f32.mrf.mxu0
  %v2337 = vadd.f32 %v2184, %v2336
  %v2338 = vpop.f32.mrf.mxu0
  %v2339 = vpop.f32.mrf.mxu0
  %v2340 = vadd.f32 %v2187, %v2339
  %v2341 = vpop.f32.mrf.mxu0
  %2342 = vmatprep.mubr.bf16.mxu0 %v1204
  %2343 = vmatmul.mubr.bf16.gmra.mxu0 %v1203
  %v2344 = vpop.f32.mrf.mxu0
  %v2345 = vadd.f32 %v2192, %v2344
  %v2346 = vpop.f32.mrf.mxu0
  %v2347 = vpop.f32.mrf.mxu0
  %v2348 = vadd.f32 %v2195, %v2347
  %v2349 = vpop.f32.mrf.mxu0
  %2350 = vmatprep.mubr.bf16.mxu0 %v1217
  %2351 = vmatmul.mubr.bf16.gmra.mxu0 %v1216
  %v2352 = vpop.f32.mrf.mxu0
  %v2353 = vadd.f32 %v2200, %v2352
  %v2354 = vpop.f32.mrf.mxu0
  %v2355 = vpop.f32.mrf.mxu0
  %v2356 = vadd.f32 %v2203, %v2355
  %v2357 = vpop.f32.mrf.mxu0
  %2358 = vdwg.mxu0
  %2359 = vmatprep.subr.bf16.mxu0 0
  %2360 = vmatpush1.bf16.msra.mxu0 %v1846
  %2361 = vmatprep.subr.bf16.mxu0 0
  %2362 = vmatpush1.bf16.msra.mxu0 %v1845
  %2363 = vmatprep.subr.bf16.mxu0 0
  %2364 = vmatpush1.bf16.msra.mxu0 %v1844
  %2365 = vmatprep.subr.bf16.mxu0 0
  %2366 = vmatpush1.bf16.msra.mxu0 %v1843
  %2367 = vmatprep.subr.bf16.mxu0 0
  %2368 = vmatpush1.bf16.msra.mxu0 %v1842
  %2369 = vmatprep.subr.bf16.mxu0 0
  %2370 = vmatpush1.bf16.msra.mxu0 %v1841
  %2371 = vmatprep.subr.bf16.mxu0 0
  %2372 = vmatpush1.bf16.msra.mxu0 %v1840
  %2373 = vmatprep.subr.bf16.mxu0 0
  %2374 = vmatpush1.bf16.msra.mxu0 %v1839
  %2375 = vmatprep.subr.bf16.mxu0 0
  %2376 = vmatpush2.bf16.msra.mxu0 %v1854
  %2377 = vmatprep.subr.bf16.mxu0 0
  %2378 = vmatpush2.bf16.msra.mxu0 %v1853
  %2379 = vmatprep.subr.bf16.mxu0 0
  %2380 = vmatpush2.bf16.msra.mxu0 %v1852
  %2381 = vmatprep.subr.bf16.mxu0 0
  %2382 = vmatpush2.bf16.msra.mxu0 %v1851
  %2383 = vmatprep.subr.bf16.mxu0 0
  %2384 = vmatpush2.bf16.msra.mxu0 %v1850
  %2385 = vmatprep.subr.bf16.mxu0 0
  %2386 = vmatpush2.bf16.msra.mxu0 %v1849
  %2387 = vmatprep.subr.bf16.mxu0 0
  %2388 = vmatpush2.bf16.msra.mxu0 %v1848
  %2389 = vmatprep.subr.bf16.mxu0 0
  %2390 = vmatpush2.bf16.msra.mxu0 %v1847
  %2391 = vmatprep.mubr.bf16.mxu0 %v1037
  %2392 = vmatmul.mubr.bf16.gmra.mxu0 %v1036
  %v2393 = vpop.f32.mrf.mxu0
  %v2394 = vadd.f32 %v2241, %v2393
  %v2395 = vpop.f32.mrf.mxu0
  %v2396 = vpop.f32.mrf.mxu0
  %v2397 = vadd.f32 %v2244, %v2396
  %v2398 = vpop.f32.mrf.mxu0
  %2399 = vmatprep.mubr.bf16.mxu0 %v1050
  %2400 = vmatmul.mubr.bf16.gmra.mxu0 %v1049
  %v2401 = vpop.f32.mrf.mxu0
  %v2402 = vadd.f32 %v2249, %v2401
  %v2403 = vpop.f32.mrf.mxu0
  %v2404 = vpop.f32.mrf.mxu0
  %v2405 = vadd.f32 %v2252, %v2404
  %v2406 = vpop.f32.mrf.mxu0
  %2407 = vmatprep.mubr.bf16.mxu0 %v1063
  %2408 = vmatmul.mubr.bf16.gmra.mxu0 %v1062
  %v2409 = vpop.f32.mrf.mxu0
  %v2410 = vadd.f32 %v2257, %v2409
  %v2411 = vpop.f32.mrf.mxu0
  %v2412 = vpop.f32.mrf.mxu0
  %v2413 = vadd.f32 %v2260, %v2412
  %v2414 = vpop.f32.mrf.mxu0
  %2415 = vmatprep.mubr.bf16.mxu0 %v1076
  %2416 = vmatmul.mubr.bf16.gmra.mxu0 %v1075
  %v2417 = vpop.f32.mrf.mxu0
  %v2418 = vadd.f32 %v2265, %v2417
  %v2419 = vpop.f32.mrf.mxu0
  %v2420 = vpop.f32.mrf.mxu0
  %v2421 = vadd.f32 %v2268, %v2420
  %v2422 = vpop.f32.mrf.mxu0
  %2423 = vmatprep.mubr.bf16.mxu0 %v1089
  %2424 = vmatmul.mubr.bf16.gmra.mxu0 %v1088
  %v2425 = vpop.f32.mrf.mxu0
  %v2426 = vadd.f32 %v2273, %v2425
  %v2427 = vpop.f32.mrf.mxu0
  %v2428 = vpop.f32.mrf.mxu0
  %v2429 = vadd.f32 %v2276, %v2428
  %v2430 = vpop.f32.mrf.mxu0
  %2431 = vmatprep.mubr.bf16.mxu0 %v1102
  %2432 = vmatmul.mubr.bf16.gmra.mxu0 %v1101
  %v2433 = vpop.f32.mrf.mxu0
  %v2434 = vadd.f32 %v2281, %v2433
  %v2435 = vpop.f32.mrf.mxu0
  %v2436 = vpop.f32.mrf.mxu0
  %v2437 = vadd.f32 %v2284, %v2436
  %v2438 = vpop.f32.mrf.mxu0
  %2439 = vmatprep.mubr.bf16.mxu0 %v1115
  %2440 = vmatmul.mubr.bf16.gmra.mxu0 %v1114
  %v2441 = vpop.f32.mrf.mxu0
  %v2442 = vadd.f32 %v2289, %v2441
  %v2443 = vpop.f32.mrf.mxu0
  %v2444 = vpop.f32.mrf.mxu0
  %v2445 = vadd.f32 %v2292, %v2444
  %v2446 = vpop.f32.mrf.mxu0
  %2447 = vmatprep.mubr.bf16.mxu0 %v1128
  %2448 = vmatmul.mubr.bf16.gmra.mxu0 %v1127
  %v2449 = vpop.f32.mrf.mxu0
  %v2450 = vadd.f32 %v2297, %v2449
  %v2451 = vpop.f32.mrf.mxu0
  %v2452 = vpop.f32.mrf.mxu0
  %v2453 = vadd.f32 %v2300, %v2452
  %v2454 = vpop.f32.mrf.mxu0
  %2455 = vmatprep.mubr.bf16.mxu0 %v1141
  %2456 = vmatmul.mubr.bf16.gmra.mxu0 %v1140
  %v2457 = vpop.f32.mrf.mxu0
  %v2458 = vadd.f32 %v2305, %v2457
  %v2459 = vpop.f32.mrf.mxu0
  %v2460 = vpop.f32.mrf.mxu0
  %v2461 = vadd.f32 %v2308, %v2460
  %v2462 = vpop.f32.mrf.mxu0
  %2463 = vmatprep.mubr.bf16.mxu0 %v1154
  %2464 = vmatmul.mubr.bf16.gmra.mxu0 %v1153
  %v2465 = vpop.f32.mrf.mxu0
  %v2466 = vadd.f32 %v2313, %v2465
  %v2467 = vpop.f32.mrf.mxu0
  %v2468 = vpop.f32.mrf.mxu0
  %v2469 = vadd.f32 %v2316, %v2468
  %v2470 = vpop.f32.mrf.mxu0
  %2471 = vmatprep.mubr.bf16.mxu0 %v1167
  %2472 = vmatmul.mubr.bf16.gmra.mxu0 %v1166
  %v2473 = vpop.f32.mrf.mxu0
  %v2474 = vadd.f32 %v2321, %v2473
  %v2475 = vpop.f32.mrf.mxu0
  %v2476 = vpop.f32.mrf.mxu0
  %v2477 = vadd.f32 %v2324, %v2476
  %v2478 = vpop.f32.mrf.mxu0
  %2479 = vmatprep.mubr.bf16.mxu0 %v1180
  %2480 = vmatmul.mubr.bf16.gmra.mxu0 %v1179
  %v2481 = vpop.f32.mrf.mxu0
  %v2482 = vadd.f32 %v2329, %v2481
  %v2483 = vpop.f32.mrf.mxu0
  %v2484 = vpop.f32.mrf.mxu0
  %v2485 = vadd.f32 %v2332, %v2484
  %v2486 = vpop.f32.mrf.mxu0
  %2487 = vmatprep.mubr.bf16.mxu0 %v1193
  %2488 = vmatmul.mubr.bf16.gmra.mxu0 %v1192
  %v2489 = vpop.f32.mrf.mxu0
  %v2490 = vadd.f32 %v2337, %v2489
  %v2491 = vpop.f32.mrf.mxu0
  %v2492 = vpop.f32.mrf.mxu0
  %v2493 = vadd.f32 %v2340, %v2492
  %v2494 = vpop.f32.mrf.mxu0
  %2495 = vmatprep.mubr.bf16.mxu0 %v1206
  %2496 = vmatmul.mubr.bf16.gmra.mxu0 %v1205
  %v2497 = vpop.f32.mrf.mxu0
  %v2498 = vadd.f32 %v2345, %v2497
  %v2499 = vpop.f32.mrf.mxu0
  %v2500 = vpop.f32.mrf.mxu0
  %v2501 = vadd.f32 %v2348, %v2500
  %v2502 = vpop.f32.mrf.mxu0
  %2503 = vmatprep.mubr.bf16.mxu0 %v1219
  %2504 = vmatmul.mubr.bf16.gmra.mxu0 %v1218
  %v2505 = vpop.f32.mrf.mxu0
  %v2506 = vadd.f32 %v2353, %v2505
  %v2507 = vpop.f32.mrf.mxu0
  %v2508 = vpop.f32.mrf.mxu0
  %v2509 = vadd.f32 %v2356, %v2508
  %v2510 = vpop.f32.mrf.mxu0
  %2511 = vdwg.mxu0
  %2512 = vmatprep.subr.bf16.mxu0 0
  %2513 = vmatpush1.bf16.msra.mxu0 %v1862
  %2514 = vmatprep.subr.bf16.mxu0 0
  %2515 = vmatpush1.bf16.msra.mxu0 %v1861
  %2516 = vmatprep.subr.bf16.mxu0 0
  %2517 = vmatpush1.bf16.msra.mxu0 %v1860
  %2518 = vmatprep.subr.bf16.mxu0 0
  %2519 = vmatpush1.bf16.msra.mxu0 %v1859
  %2520 = vmatprep.subr.bf16.mxu0 0
  %2521 = vmatpush1.bf16.msra.mxu0 %v1858
  %2522 = vmatprep.subr.bf16.mxu0 0
  %2523 = vmatpush1.bf16.msra.mxu0 %v1857
  %2524 = vmatprep.subr.bf16.mxu0 0
  %2525 = vmatpush1.bf16.msra.mxu0 %v1856
  %2526 = vmatprep.subr.bf16.mxu0 0
  %2527 = vmatpush1.bf16.msra.mxu0 %v1855
  %2528 = vmatprep.subr.bf16.mxu0 0
  %2529 = vmatpush2.bf16.msra.mxu0 %v1870
  %2530 = vmatprep.subr.bf16.mxu0 0
  %2531 = vmatpush2.bf16.msra.mxu0 %v1869
  %2532 = vmatprep.subr.bf16.mxu0 0
  %2533 = vmatpush2.bf16.msra.mxu0 %v1868
  %2534 = vmatprep.subr.bf16.mxu0 0
  %2535 = vmatpush2.bf16.msra.mxu0 %v1867
  %2536 = vmatprep.subr.bf16.mxu0 0
  %2537 = vmatpush2.bf16.msra.mxu0 %v1866
  %2538 = vmatprep.subr.bf16.mxu0 0
  %2539 = vmatpush2.bf16.msra.mxu0 %v1865
  %2540 = vmatprep.subr.bf16.mxu0 0
  %2541 = vmatpush2.bf16.msra.mxu0 %v1864
  %2542 = vmatprep.subr.bf16.mxu0 0
  %2543 = vmatpush2.bf16.msra.mxu0 %v1863
  %2544 = vmatprep.mubr.bf16.mxu0 %v1039
  %2545 = vmatmul.mubr.bf16.gmra.mxu0 %v1038
  %v2546 = vpop.f32.mrf.mxu0
  %v2547 = vadd.f32 %v2394, %v2546
  %v2548 = vpop.f32.mrf.mxu0
  %v2549 = vpop.f32.mrf.mxu0
  %v2550 = vadd.f32 %v2397, %v2549
  %v2551 = vpop.f32.mrf.mxu0
  %2552 = vmatprep.mubr.bf16.mxu0 %v1052
  %2553 = vmatmul.mubr.bf16.gmra.mxu0 %v1051
  %v2554 = vpop.f32.mrf.mxu0
  %v2555 = vadd.f32 %v2402, %v2554
  %v2556 = vpop.f32.mrf.mxu0
  %v2557 = vpop.f32.mrf.mxu0
  %v2558 = vadd.f32 %v2405, %v2557
  %v2559 = vpop.f32.mrf.mxu0
  %2560 = vmatprep.mubr.bf16.mxu0 %v1065
  %2561 = vmatmul.mubr.bf16.gmra.mxu0 %v1064
  %v2562 = vpop.f32.mrf.mxu0
  %v2563 = vadd.f32 %v2410, %v2562
  %v2564 = vpop.f32.mrf.mxu0
  %v2565 = vpop.f32.mrf.mxu0
  %v2566 = vadd.f32 %v2413, %v2565
  %v2567 = vpop.f32.mrf.mxu0
  %2568 = vmatprep.mubr.bf16.mxu0 %v1078
  %2569 = vmatmul.mubr.bf16.gmra.mxu0 %v1077
  %v2570 = vpop.f32.mrf.mxu0
  %v2571 = vadd.f32 %v2418, %v2570
  %v2572 = vpop.f32.mrf.mxu0
  %v2573 = vpop.f32.mrf.mxu0
  %v2574 = vadd.f32 %v2421, %v2573
  %v2575 = vpop.f32.mrf.mxu0
  %2576 = vmatprep.mubr.bf16.mxu0 %v1091
  %2577 = vmatmul.mubr.bf16.gmra.mxu0 %v1090
  %v2578 = vpop.f32.mrf.mxu0
  %v2579 = vadd.f32 %v2426, %v2578
  %v2580 = vpop.f32.mrf.mxu0
  %v2581 = vpop.f32.mrf.mxu0
  %v2582 = vadd.f32 %v2429, %v2581
  %v2583 = vpop.f32.mrf.mxu0
  %2584 = vmatprep.mubr.bf16.mxu0 %v1104
  %2585 = vmatmul.mubr.bf16.gmra.mxu0 %v1103
  %v2586 = vpop.f32.mrf.mxu0
  %v2587 = vadd.f32 %v2434, %v2586
  %v2588 = vpop.f32.mrf.mxu0
  %v2589 = vpop.f32.mrf.mxu0
  %v2590 = vadd.f32 %v2437, %v2589
  %v2591 = vpop.f32.mrf.mxu0
  %2592 = vmatprep.mubr.bf16.mxu0 %v1117
  %2593 = vmatmul.mubr.bf16.gmra.mxu0 %v1116
  %v2594 = vpop.f32.mrf.mxu0
  %v2595 = vadd.f32 %v2442, %v2594
  %v2596 = vpop.f32.mrf.mxu0
  %v2597 = vpop.f32.mrf.mxu0
  %v2598 = vadd.f32 %v2445, %v2597
  %v2599 = vpop.f32.mrf.mxu0
  %2600 = vmatprep.mubr.bf16.mxu0 %v1130
  %2601 = vmatmul.mubr.bf16.gmra.mxu0 %v1129
  %v2602 = vpop.f32.mrf.mxu0
  %v2603 = vadd.f32 %v2450, %v2602
  %v2604 = vpop.f32.mrf.mxu0
  %v2605 = vpop.f32.mrf.mxu0
  %v2606 = vadd.f32 %v2453, %v2605
  %v2607 = vpop.f32.mrf.mxu0
  %2608 = vmatprep.mubr.bf16.mxu0 %v1143
  %2609 = vmatmul.mubr.bf16.gmra.mxu0 %v1142
  %v2610 = vpop.f32.mrf.mxu0
  %v2611 = vadd.f32 %v2458, %v2610
  %v2612 = vpop.f32.mrf.mxu0
  %v2613 = vpop.f32.mrf.mxu0
  %v2614 = vadd.f32 %v2461, %v2613
  %v2615 = vpop.f32.mrf.mxu0
  %2616 = vmatprep.mubr.bf16.mxu0 %v1156
  %2617 = vmatmul.mubr.bf16.gmra.mxu0 %v1155
  %v2618 = vpop.f32.mrf.mxu0
  %v2619 = vadd.f32 %v2466, %v2618
  %v2620 = vpop.f32.mrf.mxu0
  %v2621 = vpop.f32.mrf.mxu0
  %v2622 = vadd.f32 %v2469, %v2621
  %v2623 = vpop.f32.mrf.mxu0
  %2624 = vmatprep.mubr.bf16.mxu0 %v1169
  %2625 = vmatmul.mubr.bf16.gmra.mxu0 %v1168
  %v2626 = vpop.f32.mrf.mxu0
  %v2627 = vadd.f32 %v2474, %v2626
  %v2628 = vpop.f32.mrf.mxu0
  %v2629 = vpop.f32.mrf.mxu0
  %v2630 = vadd.f32 %v2477, %v2629
  %v2631 = vpop.f32.mrf.mxu0
  %2632 = vmatprep.mubr.bf16.mxu0 %v1182
  %2633 = vmatmul.mubr.bf16.gmra.mxu0 %v1181
  %v2634 = vpop.f32.mrf.mxu0
  %v2635 = vadd.f32 %v2482, %v2634
  %v2636 = vpop.f32.mrf.mxu0
  %v2637 = vpop.f32.mrf.mxu0
  %v2638 = vadd.f32 %v2485, %v2637
  %v2639 = vpop.f32.mrf.mxu0
  %2640 = vmatprep.mubr.bf16.mxu0 %v1195
  %2641 = vmatmul.mubr.bf16.gmra.mxu0 %v1194
  %v2642 = vpop.f32.mrf.mxu0
  %v2643 = vadd.f32 %v2490, %v2642
  %v2644 = vpop.f32.mrf.mxu0
  %v2645 = vpop.f32.mrf.mxu0
  %v2646 = vadd.f32 %v2493, %v2645
  %v2647 = vpop.f32.mrf.mxu0
  %2648 = vmatprep.mubr.bf16.mxu0 %v1208
  %2649 = vmatmul.mubr.bf16.gmra.mxu0 %v1207
  %v2650 = vpop.f32.mrf.mxu0
  %v2651 = vadd.f32 %v2498, %v2650
  %v2652 = vpop.f32.mrf.mxu0
  %v2653 = vpop.f32.mrf.mxu0
  %v2654 = vadd.f32 %v2501, %v2653
  %v2655 = vpop.f32.mrf.mxu0
  %2656 = vmatprep.mubr.bf16.mxu0 %v1221
  %2657 = vmatmul.mubr.bf16.gmra.mxu0 %v1220
  %v2658 = vpop.f32.mrf.mxu0
  %v2659 = vadd.f32 %v2506, %v2658
  %v2660 = vpop.f32.mrf.mxu0
  %v2661 = vpop.f32.mrf.mxu0
  %v2662 = vadd.f32 %v2509, %v2661
  %v2663 = vpop.f32.mrf.mxu0
  %2664 = vdwg.mxu0
  %2665 = vmatprep.subr.bf16.mxu0 0
  %2666 = vmatpush1.bf16.msra.mxu0 %v1878
  %2667 = vmatprep.subr.bf16.mxu0 0
  %2668 = vmatpush1.bf16.msra.mxu0 %v1877
  %2669 = vmatprep.subr.bf16.mxu0 0
  %2670 = vmatpush1.bf16.msra.mxu0 %v1876
  %2671 = vmatprep.subr.bf16.mxu0 0
  %2672 = vmatpush1.bf16.msra.mxu0 %v1875
  %2673 = vmatprep.subr.bf16.mxu0 0
  %2674 = vmatpush1.bf16.msra.mxu0 %v1874
  %2675 = vmatprep.subr.bf16.mxu0 0
  %2676 = vmatpush1.bf16.msra.mxu0 %v1873
  %2677 = vmatprep.subr.bf16.mxu0 0
  %2678 = vmatpush1.bf16.msra.mxu0 %v1872
  %2679 = vmatprep.subr.bf16.mxu0 0
  %2680 = vmatpush1.bf16.msra.mxu0 %v1871
  %2681 = vmatprep.subr.bf16.mxu0 0
  %2682 = vmatpush2.bf16.msra.mxu0 %v1886
  %2683 = vmatprep.subr.bf16.mxu0 0
  %2684 = vmatpush2.bf16.msra.mxu0 %v1885
  %2685 = vmatprep.subr.bf16.mxu0 0
  %2686 = vmatpush2.bf16.msra.mxu0 %v1884
  %2687 = vmatprep.subr.bf16.mxu0 0
  %2688 = vmatpush2.bf16.msra.mxu0 %v1883
  %2689 = vmatprep.subr.bf16.mxu0 0
  %2690 = vmatpush2.bf16.msra.mxu0 %v1882
  %2691 = vmatprep.subr.bf16.mxu0 0
  %2692 = vmatpush2.bf16.msra.mxu0 %v1881
  %2693 = vmatprep.subr.bf16.mxu0 0
  %2694 = vmatpush2.bf16.msra.mxu0 %v1880
  %2695 = vmatprep.subr.bf16.mxu0 0
  %2696 = vmatpush2.bf16.msra.mxu0 %v1879
  %2697 = vmatprep.mubr.bf16.mxu0 %v1041
  %2698 = vmatmul.mubr.bf16.gmra.mxu0 %v1040
  %v2699 = vpop.f32.mrf.mxu0
  %v2700 = vadd.f32 %v2547, %v2699
  %v2701 = vpop.f32.mrf.mxu0
  %v2702 = vpop.f32.mrf.mxu0
  %v2703 = vadd.f32 %v2550, %v2702
  %v2704 = vpop.f32.mrf.mxu0
  %2705 = vmatprep.mubr.bf16.mxu0 %v1054
  %2706 = vmatmul.mubr.bf16.gmra.mxu0 %v1053
  %v2707 = vpop.f32.mrf.mxu0
  %v2708 = vadd.f32 %v2555, %v2707
  %v2709 = vpop.f32.mrf.mxu0
  %v2710 = vpop.f32.mrf.mxu0
  %v2711 = vadd.f32 %v2558, %v2710
  %v2712 = vpop.f32.mrf.mxu0
  %2713 = vmatprep.mubr.bf16.mxu0 %v1067
  %2714 = vmatmul.mubr.bf16.gmra.mxu0 %v1066
  %v2715 = vpop.f32.mrf.mxu0
  %v2716 = vadd.f32 %v2563, %v2715
  %v2717 = vpop.f32.mrf.mxu0
  %v2718 = vpop.f32.mrf.mxu0
  %v2719 = vadd.f32 %v2566, %v2718
  %v2720 = vpop.f32.mrf.mxu0
  %2721 = vmatprep.mubr.bf16.mxu0 %v1080
  %2722 = vmatmul.mubr.bf16.gmra.mxu0 %v1079
  %v2723 = vpop.f32.mrf.mxu0
  %v2724 = vadd.f32 %v2571, %v2723
  %v2725 = vpop.f32.mrf.mxu0
  %v2726 = vpop.f32.mrf.mxu0
  %v2727 = vadd.f32 %v2574, %v2726
  %v2728 = vpop.f32.mrf.mxu0
  %2729 = vmatprep.mubr.bf16.mxu0 %v1093
  %2730 = vmatmul.mubr.bf16.gmra.mxu0 %v1092
  %v2731 = vpop.f32.mrf.mxu0
  %v2732 = vadd.f32 %v2579, %v2731
  %v2733 = vpop.f32.mrf.mxu0
  %v2734 = vpop.f32.mrf.mxu0
  %v2735 = vadd.f32 %v2582, %v2734
  %v2736 = vpop.f32.mrf.mxu0
  %2737 = vmatprep.mubr.bf16.mxu0 %v1106
  %2738 = vmatmul.mubr.bf16.gmra.mxu0 %v1105
  %v2739 = vpop.f32.mrf.mxu0
  %v2740 = vadd.f32 %v2587, %v2739
  %v2741 = vpop.f32.mrf.mxu0
  %v2742 = vpop.f32.mrf.mxu0
  %v2743 = vadd.f32 %v2590, %v2742
  %v2744 = vpop.f32.mrf.mxu0
  %2745 = vmatprep.mubr.bf16.mxu0 %v1119
  %2746 = vmatmul.mubr.bf16.gmra.mxu0 %v1118
  %v2747 = vpop.f32.mrf.mxu0
  %v2748 = vadd.f32 %v2595, %v2747
  %v2749 = vpop.f32.mrf.mxu0
  %v2750 = vpop.f32.mrf.mxu0
  %v2751 = vadd.f32 %v2598, %v2750
  %v2752 = vpop.f32.mrf.mxu0
  %2753 = vmatprep.mubr.bf16.mxu0 %v1132
  %2754 = vmatmul.mubr.bf16.gmra.mxu0 %v1131
  %v2755 = vpop.f32.mrf.mxu0
  %v2756 = vadd.f32 %v2603, %v2755
  %v2757 = vpop.f32.mrf.mxu0
  %v2758 = vpop.f32.mrf.mxu0
  %v2759 = vadd.f32 %v2606, %v2758
  %v2760 = vpop.f32.mrf.mxu0
  %2761 = vmatprep.mubr.bf16.mxu0 %v1145
  %2762 = vmatmul.mubr.bf16.gmra.mxu0 %v1144
  %v2763 = vpop.f32.mrf.mxu0
  %v2764 = vadd.f32 %v2611, %v2763
  %v2765 = vpop.f32.mrf.mxu0
  %v2766 = vpop.f32.mrf.mxu0
  %v2767 = vadd.f32 %v2614, %v2766
  %v2768 = vpop.f32.mrf.mxu0
  %2769 = vmatprep.mubr.bf16.mxu0 %v1158
  %2770 = vmatmul.mubr.bf16.gmra.mxu0 %v1157
  %v2771 = vpop.f32.mrf.mxu0
  %v2772 = vadd.f32 %v2619, %v2771
  %v2773 = vpop.f32.mrf.mxu0
  %v2774 = vpop.f32.mrf.mxu0
  %v2775 = vadd.f32 %v2622, %v2774
  %v2776 = vpop.f32.mrf.mxu0
  %2777 = vmatprep.mubr.bf16.mxu0 %v1171
  %2778 = vmatmul.mubr.bf16.gmra.mxu0 %v1170
  %v2779 = vpop.f32.mrf.mxu0
  %v2780 = vadd.f32 %v2627, %v2779
  %v2781 = vpop.f32.mrf.mxu0
  %v2782 = vpop.f32.mrf.mxu0
  %v2783 = vadd.f32 %v2630, %v2782
  %v2784 = vpop.f32.mrf.mxu0
  %2785 = vmatprep.mubr.bf16.mxu0 %v1184
  %2786 = vmatmul.mubr.bf16.gmra.mxu0 %v1183
  %v2787 = vpop.f32.mrf.mxu0
  %v2788 = vadd.f32 %v2635, %v2787
  %v2789 = vpop.f32.mrf.mxu0
  %v2790 = vpop.f32.mrf.mxu0
  %v2791 = vadd.f32 %v2638, %v2790
  %v2792 = vpop.f32.mrf.mxu0
  %2793 = vmatprep.mubr.bf16.mxu0 %v1197
  %2794 = vmatmul.mubr.bf16.gmra.mxu0 %v1196
  %v2795 = vpop.f32.mrf.mxu0
  %v2796 = vadd.f32 %v2643, %v2795
  %v2797 = vpop.f32.mrf.mxu0
  %v2798 = vpop.f32.mrf.mxu0
  %v2799 = vadd.f32 %v2646, %v2798
  %v2800 = vpop.f32.mrf.mxu0
  %2801 = vmatprep.mubr.bf16.mxu0 %v1210
  %2802 = vmatmul.mubr.bf16.gmra.mxu0 %v1209
  %v2803 = vpop.f32.mrf.mxu0
  %v2804 = vadd.f32 %v2651, %v2803
  %v2805 = vpop.f32.mrf.mxu0
  %v2806 = vpop.f32.mrf.mxu0
  %v2807 = vadd.f32 %v2654, %v2806
  %v2808 = vpop.f32.mrf.mxu0
  %2809 = vmatprep.mubr.bf16.mxu0 %v1223
  %2810 = vmatmul.mubr.bf16.gmra.mxu0 %v1222
  %v2811 = vpop.f32.mrf.mxu0
  %v2812 = vadd.f32 %v2659, %v2811
  %v2813 = vpop.f32.mrf.mxu0
  %v2814 = vpop.f32.mrf.mxu0
  %v2815 = vadd.f32 %v2662, %v2814
  %v2816 = vpop.f32.mrf.mxu0
  %2817 = vdwg.mxu0
  %2818 = vmatprep.subr.bf16.mxu0 0
  %2819 = vmatpush1.bf16.msra.mxu0 %v1894
  %2820 = vmatprep.subr.bf16.mxu0 0
  %2821 = vmatpush1.bf16.msra.mxu0 %v1893
  %2822 = vmatprep.subr.bf16.mxu0 0
  %2823 = vmatpush1.bf16.msra.mxu0 %v1892
  %2824 = vmatprep.subr.bf16.mxu0 0
  %2825 = vmatpush1.bf16.msra.mxu0 %v1891
  %2826 = vmatprep.subr.bf16.mxu0 0
  %2827 = vmatpush1.bf16.msra.mxu0 %v1890
  %2828 = vmatprep.subr.bf16.mxu0 0
  %2829 = vmatpush1.bf16.msra.mxu0 %v1889
  %2830 = vmatprep.subr.bf16.mxu0 0
  %2831 = vmatpush1.bf16.msra.mxu0 %v1888
  %2832 = vmatprep.subr.bf16.mxu0 0
  %2833 = vmatpush1.bf16.msra.mxu0 %v1887
  %2834 = vmatprep.subr.bf16.mxu0 0
  %2835 = vmatpush2.bf16.msra.mxu0 %v1902
  %2836 = vmatprep.subr.bf16.mxu0 0
  %2837 = vmatpush2.bf16.msra.mxu0 %v1901
  %2838 = vmatprep.subr.bf16.mxu0 0
  %2839 = vmatpush2.bf16.msra.mxu0 %v1900
  %2840 = vmatprep.subr.bf16.mxu0 0
  %2841 = vmatpush2.bf16.msra.mxu0 %v1899
  %2842 = vmatprep.subr.bf16.mxu0 0
  %2843 = vmatpush2.bf16.msra.mxu0 %v1898
  %2844 = vmatprep.subr.bf16.mxu0 0
  %2845 = vmatpush2.bf16.msra.mxu0 %v1897
  %2846 = vmatprep.subr.bf16.mxu0 0
  %2847 = vmatpush2.bf16.msra.mxu0 %v1896
  %2848 = vmatprep.subr.bf16.mxu0 0
  %2849 = vmatpush2.bf16.msra.mxu0 %v1895
  %2850 = vmatprep.mubr.bf16.mxu0 %v1043
  %2851 = vmatmul.mubr.bf16.gmra.mxu0 %v1042
  %v2852 = vpop.f32.mrf.mxu0
  %v2853 = vadd.f32 %v2700, %v2852
  %v2854 = vpop.f32.mrf.mxu0
  %v2855 = vpop.f32.mrf.mxu0
  %v2856 = vadd.f32 %v2703, %v2855
  %v2857 = vpop.f32.mrf.mxu0
  %2858 = vmatprep.mubr.bf16.mxu0 %v1056
  %2859 = vmatmul.mubr.bf16.gmra.mxu0 %v1055
  %v2860 = vpop.f32.mrf.mxu0
  %v2861 = vadd.f32 %v2708, %v2860
  %v2862 = vpop.f32.mrf.mxu0
  %v2863 = vpop.f32.mrf.mxu0
  %v2864 = vadd.f32 %v2711, %v2863
  %v2865 = vpop.f32.mrf.mxu0
  %2866 = vmatprep.mubr.bf16.mxu0 %v1069
  %2867 = vmatmul.mubr.bf16.gmra.mxu0 %v1068
  %v2868 = vpop.f32.mrf.mxu0
  %v2869 = vadd.f32 %v2716, %v2868
  %v2870 = vpop.f32.mrf.mxu0
  %v2871 = vpop.f32.mrf.mxu0
  %v2872 = vadd.f32 %v2719, %v2871
  %v2873 = vpop.f32.mrf.mxu0
  %2874 = vmatprep.mubr.bf16.mxu0 %v1082
  %2875 = vmatmul.mubr.bf16.gmra.mxu0 %v1081
  %v2876 = vpop.f32.mrf.mxu0
  %v2877 = vadd.f32 %v2724, %v2876
  %v2878 = vpop.f32.mrf.mxu0
  %v2879 = vpop.f32.mrf.mxu0
  %v2880 = vadd.f32 %v2727, %v2879
  %v2881 = vpop.f32.mrf.mxu0
  %2882 = vmatprep.mubr.bf16.mxu0 %v1095
  %2883 = vmatmul.mubr.bf16.gmra.mxu0 %v1094
  %v2884 = vpop.f32.mrf.mxu0
  %v2885 = vadd.f32 %v2732, %v2884
  %v2886 = vpop.f32.mrf.mxu0
  %v2887 = vpop.f32.mrf.mxu0
  %v2888 = vadd.f32 %v2735, %v2887
  %v2889 = vpop.f32.mrf.mxu0
  %2890 = vmatprep.mubr.bf16.mxu0 %v1108
  %2891 = vmatmul.mubr.bf16.gmra.mxu0 %v1107
  %v2892 = vpop.f32.mrf.mxu0
  %v2893 = vadd.f32 %v2740, %v2892
  %v2894 = vpop.f32.mrf.mxu0
  %v2895 = vpop.f32.mrf.mxu0
  %v2896 = vadd.f32 %v2743, %v2895
  %v2897 = vpop.f32.mrf.mxu0
  %2898 = vmatprep.mubr.bf16.mxu0 %v1121
  %2899 = vmatmul.mubr.bf16.gmra.mxu0 %v1120
  %v2900 = vpop.f32.mrf.mxu0
  %v2901 = vadd.f32 %v2748, %v2900
  %v2902 = vpop.f32.mrf.mxu0
  %v2903 = vpop.f32.mrf.mxu0
  %v2904 = vadd.f32 %v2751, %v2903
  %v2905 = vpop.f32.mrf.mxu0
  %2906 = vmatprep.mubr.bf16.mxu0 %v1134
  %2907 = vmatmul.mubr.bf16.gmra.mxu0 %v1133
  %v2908 = vpop.f32.mrf.mxu0
  %v2909 = vadd.f32 %v2756, %v2908
  %v2910 = vpop.f32.mrf.mxu0
  %v2911 = vpop.f32.mrf.mxu0
  %v2912 = vadd.f32 %v2759, %v2911
  %v2913 = vpop.f32.mrf.mxu0
  %2914 = vmatprep.mubr.bf16.mxu0 %v1147
  %2915 = vmatmul.mubr.bf16.gmra.mxu0 %v1146
  %v2916 = vpop.f32.mrf.mxu0
  %v2917 = vadd.f32 %v2764, %v2916
  %v2918 = vpop.f32.mrf.mxu0
  %v2919 = vpop.f32.mrf.mxu0
  %v2920 = vadd.f32 %v2767, %v2919
  %v2921 = vpop.f32.mrf.mxu0
  %2922 = vmatprep.mubr.bf16.mxu0 %v1160
  %2923 = vmatmul.mubr.bf16.gmra.mxu0 %v1159
  %v2924 = vpop.f32.mrf.mxu0
  %v2925 = vadd.f32 %v2772, %v2924
  %v2926 = vpop.f32.mrf.mxu0
  %v2927 = vpop.f32.mrf.mxu0
  %v2928 = vadd.f32 %v2775, %v2927
  %v2929 = vpop.f32.mrf.mxu0
  %2930 = vmatprep.mubr.bf16.mxu0 %v1173
  %2931 = vmatmul.mubr.bf16.gmra.mxu0 %v1172
  %v2932 = vpop.f32.mrf.mxu0
  %v2933 = vadd.f32 %v2780, %v2932
  %v2934 = vpop.f32.mrf.mxu0
  %v2935 = vpop.f32.mrf.mxu0
  %v2936 = vadd.f32 %v2783, %v2935
  %v2937 = vpop.f32.mrf.mxu0
  %2938 = vmatprep.mubr.bf16.mxu0 %v1186
  %2939 = vmatmul.mubr.bf16.gmra.mxu0 %v1185
  %v2940 = vpop.f32.mrf.mxu0
  %v2941 = vadd.f32 %v2788, %v2940
  %v2942 = vpop.f32.mrf.mxu0
  %v2943 = vpop.f32.mrf.mxu0
  %v2944 = vadd.f32 %v2791, %v2943
  %v2945 = vpop.f32.mrf.mxu0
  %2946 = vmatprep.mubr.bf16.mxu0 %v1199
  %2947 = vmatmul.mubr.bf16.gmra.mxu0 %v1198
  %v2948 = vpop.f32.mrf.mxu0
  %v2949 = vadd.f32 %v2796, %v2948
  %v2950 = vpop.f32.mrf.mxu0
  %v2951 = vpop.f32.mrf.mxu0
  %v2952 = vadd.f32 %v2799, %v2951
  %v2953 = vpop.f32.mrf.mxu0
  %2954 = vmatprep.mubr.bf16.mxu0 %v1212
  %2955 = vmatmul.mubr.bf16.gmra.mxu0 %v1211
  %v2956 = vpop.f32.mrf.mxu0
  %v2957 = vadd.f32 %v2804, %v2956
  %v2958 = vpop.f32.mrf.mxu0
  %v2959 = vpop.f32.mrf.mxu0
  %v2960 = vadd.f32 %v2807, %v2959
  %v2961 = vpop.f32.mrf.mxu0
  %2962 = vmatprep.mubr.bf16.mxu0 %v1225
  %2963 = vmatmul.mubr.bf16.gmra.mxu0 %v1224
  %v2964 = vpop.f32.mrf.mxu0
  %v2965 = vadd.f32 %v2812, %v2964
  %v2966 = vpop.f32.mrf.mxu0
  %v2967 = vpop.f32.mrf.mxu0
  %v2968 = vadd.f32 %v2815, %v2967
  %v2969 = vpop.f32.mrf.mxu0
  %2970 = vdwg.mxu0
  %2971 = vmatprep.subr.bf16.mxu0 0
  %2972 = vmatpush1.bf16.msra.mxu0 0
  %2973 = vmatprep.subr.bf16.mxu0 0
  %2974 = vmatpush1.bf16.msra.mxu0 0
  %2975 = vmatprep.subr.bf16.mxu0 0
  %2976 = vmatpush1.bf16.msra.mxu0 0
  %2977 = vmatprep.subr.bf16.mxu0 0
  %2978 = vmatpush1.bf16.msra.mxu0 0
  %2979 = vmatprep.subr.bf16.mxu0 0
  %2980 = vmatpush1.bf16.msra.mxu0 %v1906
  %2981 = vmatprep.subr.bf16.mxu0 0
  %2982 = vmatpush1.bf16.msra.mxu0 %v1905
  %2983 = vmatprep.subr.bf16.mxu0 0
  %2984 = vmatpush1.bf16.msra.mxu0 %v1904
  %2985 = vmatprep.subr.bf16.mxu0 0
  %2986 = vmatpush1.bf16.msra.mxu0 %v1903
  %2987 = vmatprep.subr.bf16.mxu0 0
  %2988 = vmatpush2.bf16.msra.mxu0 0
  %2989 = vmatprep.subr.bf16.mxu0 0
  %2990 = vmatpush2.bf16.msra.mxu0 0
  %2991 = vmatprep.subr.bf16.mxu0 0
  %2992 = vmatpush2.bf16.msra.mxu0 0
  %2993 = vmatprep.subr.bf16.mxu0 0
  %2994 = vmatpush2.bf16.msra.mxu0 0
  %2995 = vmatprep.subr.bf16.mxu0 0
  %2996 = vmatpush2.bf16.msra.mxu0 0
  %2997 = vmatprep.subr.bf16.mxu0 0
  %2998 = vmatpush2.bf16.msra.mxu0 0
  %2999 = vmatprep.subr.bf16.mxu0 0
  %3000 = vmatpush2.bf16.msra.mxu0 0
  %3001 = vmatprep.subr.bf16.mxu0 0
  %3002 = vmatpush2.bf16.msra.mxu0 0
  %3003 = vmatprep.mubr.bf16.mxu0 0
  %3004 = vmatmul.mubr.bf16.gmra.mxu0 %v2009
  %v3005 = vpop.f32.mrf.mxu0
  %v3006 = vadd.f32 %v2853, %v3005
  %v3007 = vpop.f32.mrf.mxu0
  %v3008 = vpop.f32.mrf.mxu0
  %v3009 = vadd.f32 %v2856, %v3008
  %v3010 = vpop.f32.mrf.mxu0
  %3011 = vmatprep.mubr.bf16.mxu0 0
  %3012 = vmatmul.mubr.bf16.gmra.mxu0 %v2012
  %v3013 = vpop.f32.mrf.mxu0
  %v3014 = vadd.f32 %v2861, %v3013
  %v3015 = vpop.f32.mrf.mxu0
  %v3016 = vpop.f32.mrf.mxu0
  %v3017 = vadd.f32 %v2864, %v3016
  %v3018 = vpop.f32.mrf.mxu0
  %3019 = vmatprep.mubr.bf16.mxu0 0
  %3020 = vmatmul.mubr.bf16.gmra.mxu0 %v2015
  %v3021 = vpop.f32.mrf.mxu0
  %v3022 = vadd.f32 %v2869, %v3021
  %v3023 = vpop.f32.mrf.mxu0
  %v3024 = vpop.f32.mrf.mxu0
  %v3025 = vadd.f32 %v2872, %v3024
  %v3026 = vpop.f32.mrf.mxu0
  %3027 = vmatprep.mubr.bf16.mxu0 0
  %3028 = vmatmul.mubr.bf16.gmra.mxu0 %v2018
  %v3029 = vpop.f32.mrf.mxu0
  %v3030 = vadd.f32 %v2877, %v3029
  %v3031 = vpop.f32.mrf.mxu0
  %v3032 = vpop.f32.mrf.mxu0
  %v3033 = vadd.f32 %v2880, %v3032
  %v3034 = vpop.f32.mrf.mxu0
  %3035 = vmatprep.mubr.bf16.mxu0 0
  %3036 = vmatmul.mubr.bf16.gmra.mxu0 %v2021
  %v3037 = vpop.f32.mrf.mxu0
  %v3038 = vadd.f32 %v2885, %v3037
  %v3039 = vpop.f32.mrf.mxu0
  %v3040 = vpop.f32.mrf.mxu0
  %v3041 = vadd.f32 %v2888, %v3040
  %v3042 = vpop.f32.mrf.mxu0
  %3043 = vmatprep.mubr.bf16.mxu0 0
  %3044 = vmatmul.mubr.bf16.gmra.mxu0 %v2024
  %v3045 = vpop.f32.mrf.mxu0
  %v3046 = vadd.f32 %v2893, %v3045
  %v3047 = vpop.f32.mrf.mxu0
  %v3048 = vpop.f32.mrf.mxu0
  %v3049 = vadd.f32 %v2896, %v3048
  %v3050 = vpop.f32.mrf.mxu0
  %3051 = vmatprep.mubr.bf16.mxu0 0
  %3052 = vmatmul.mubr.bf16.gmra.mxu0 %v2027
  %v3053 = vpop.f32.mrf.mxu0
  %v3054 = vadd.f32 %v2901, %v3053
  %v3055 = vpop.f32.mrf.mxu0
  %v3056 = vpop.f32.mrf.mxu0
  %v3057 = vadd.f32 %v2904, %v3056
  %v3058 = vpop.f32.mrf.mxu0
  %3059 = vmatprep.mubr.bf16.mxu0 0
  %3060 = vmatmul.mubr.bf16.gmra.mxu0 %v2030
  %v3061 = vpop.f32.mrf.mxu0
  %v3062 = vadd.f32 %v2909, %v3061
  %v3063 = vpop.f32.mrf.mxu0
  %v3064 = vpop.f32.mrf.mxu0
  %v3065 = vadd.f32 %v2912, %v3064
  %v3066 = vpop.f32.mrf.mxu0
  %3067 = vmatprep.mubr.bf16.mxu0 0
  %3068 = vmatmul.mubr.bf16.gmra.mxu0 %v2033
  %v3069 = vpop.f32.mrf.mxu0
  %v3070 = vadd.f32 %v2917, %v3069
  %v3071 = vpop.f32.mrf.mxu0
  %v3072 = vpop.f32.mrf.mxu0
  %v3073 = vadd.f32 %v2920, %v3072
  %v3074 = vpop.f32.mrf.mxu0
  %3075 = vmatprep.mubr.bf16.mxu0 0
  %3076 = vmatmul.mubr.bf16.gmra.mxu0 %v2036
  %v3077 = vpop.f32.mrf.mxu0
  %v3078 = vadd.f32 %v2925, %v3077
  %v3079 = vpop.f32.mrf.mxu0
  %v3080 = vpop.f32.mrf.mxu0
  %v3081 = vadd.f32 %v2928, %v3080
  %v3082 = vpop.f32.mrf.mxu0
  %3083 = vmatprep.mubr.bf16.mxu0 0
  %3084 = vmatmul.mubr.bf16.gmra.mxu0 %v2039
  %v3085 = vpop.f32.mrf.mxu0
  %v3086 = vadd.f32 %v2933, %v3085
  %v3087 = vpop.f32.mrf.mxu0
  %v3088 = vpop.f32.mrf.mxu0
  %v3089 = vadd.f32 %v2936, %v3088
  %v3090 = vpop.f32.mrf.mxu0
  %3091 = vmatprep.mubr.bf16.mxu0 0
  %3092 = vmatmul.mubr.bf16.gmra.mxu0 %v2042
  %v3093 = vpop.f32.mrf.mxu0
  %v3094 = vadd.f32 %v2941, %v3093
  %v3095 = vpop.f32.mrf.mxu0
  %v3096 = vpop.f32.mrf.mxu0
  %v3097 = vadd.f32 %v2944, %v3096
  %v3098 = vpop.f32.mrf.mxu0
  %3099 = vmatprep.mubr.bf16.mxu0 0
  %3100 = vmatmul.mubr.bf16.gmra.mxu0 %v2045
  %v3101 = vpop.f32.mrf.mxu0
  %v3102 = vadd.f32 %v2949, %v3101
  %v3103 = vpop.f32.mrf.mxu0
  %v3104 = vpop.f32.mrf.mxu0
  %v3105 = vadd.f32 %v2952, %v3104
  %v3106 = vpop.f32.mrf.mxu0
  %3107 = vmatprep.mubr.bf16.mxu0 0
  %3108 = vmatmul.mubr.bf16.gmra.mxu0 %v2048
  %v3109 = vpop.f32.mrf.mxu0
  %v3110 = vadd.f32 %v2957, %v3109
  %v3111 = vpop.f32.mrf.mxu0
  %v3112 = vpop.f32.mrf.mxu0
  %v3113 = vadd.f32 %v2960, %v3112
  %v3114 = vpop.f32.mrf.mxu0
  %3115 = vmatprep.mubr.bf16.mxu0 0
  %3116 = vmatmul.mubr.bf16.gmra.mxu0 %v2051
  %v3117 = vpop.f32.mrf.mxu0
  %v3118 = vadd.f32 %v2965, %v3117
  %v3119 = vpop.f32.mrf.mxu0
  %v3120 = vpop.f32.mrf.mxu0
  %v3121 = vadd.f32 %v2968, %v3120
  %v3122 = vpop.f32.mrf.mxu0
  %3123 = vdwg.mxu0
  %v3124 = vmax.f32 %v3006, 0.0
  %v3125 = vmax.f32 %v3009, 0.0
  %v3126 = vmax.f32 %v3014, 0.0
  %v3127 = vmax.f32 %v3017, 0.0
  %v3128 = vmax.f32 %v3022, 0.0
  %v3129 = vmax.f32 %v3025, 0.0
  %v3130 = vmax.f32 %v3030, 0.0
  %v3131 = vmax.f32 %v3033, 0.0
  %v3132 = vmax.f32 %v3038, 0.0
  %v3133 = vmax.f32 %v3041, 0.0
  %v3134 = vmax.f32 %v3046, 0.0
  %v3135 = vmax.f32 %v3049, 0.0
  %v3136 = vmax.f32 %v3054, 0.0
  %v3137 = vmax.f32 %v3057, 0.0
  %v3138 = vmax.f32 %v3062, 0.0
  %v3139 = vmax.f32 %v3065, 0.0
  %v3140 = vmax.f32 %v3070, 0.0
  %v3141 = vmax.f32 %v3073, 0.0
  %v3142 = vmax.f32 %v3078, 0.0
  %v3143 = vmax.f32 %v3081, 0.0
  %v3144 = vmax.f32 %v3086, 0.0
  %v3145 = vmax.f32 %v3089, 0.0
  %v3146 = vmax.f32 %v3094, 0.0
  %v3147 = vmax.f32 %v3097, 0.0
  %v3148 = vmax.f32 %v3102, 0.0
  %v3149 = vmax.f32 %v3105, 0.0
  %v3150 = vmax.f32 %v3110, 0.0
  %v3151 = vmax.f32 %v3113, 0.0
  %v3152 = vmax.f32 %v3118, 0.0
  %v3153 = vmax.f32 %v3121, 0.0
  %v3154 = vpack.c.bf16 %v3125, %v3124
  %v3155 = vpack.c.bf16 %v3127, %v3126
  %v3156 = vpack.c.bf16 %v3129, %v3128
  %v3157 = vpack.c.bf16 %v3131, %v3130
  %v3158 = vpack.c.bf16 %v3133, %v3132
  %v3159 = vpack.c.bf16 %v3135, %v3134
  %v3160 = vpack.c.bf16 %v3137, %v3136
  %v3161 = vpack.c.bf16 %v3139, %v3138
  %v3162 = vpack.c.bf16 %v3141, %v3140
  %v3163 = vpack.c.bf16 %v3143, %v3142
  %v3164 = vpack.c.bf16 %v3145, %v3144
  %v3165 = vpack.c.bf16 %v3147, %v3146
  %v3166 = vpack.c.bf16 %v3149, %v3148
  %v3167 = vpack.c.bf16 %v3151, %v3150
  %v3168 = vpack.c.bf16 %v3153, %v3152
  %v3184 = vunpack.c.l.b16 %v3154
  %v3185 = vunpack.c.h.b16 %v3154
  %v3186 = vunpack.c.l.b16 %v3155
  %v3187 = vunpack.c.h.b16 %v3155
  %v3188 = vunpack.c.l.b16 %v3156
  %v3189 = vunpack.c.h.b16 %v3156
  %v3190 = vunpack.c.l.b16 %v3157
  %v3191 = vunpack.c.h.b16 %v3157
  %v3192 = vunpack.c.l.b16 %v3158
  %v3193 = vunpack.c.h.b16 %v3158
  %v3194 = vunpack.c.l.b16 %v3159
  %v3195 = vunpack.c.h.b16 %v3159
  %v3196 = vunpack.c.l.b16 %v3160
  %v3197 = vunpack.c.h.b16 %v3160
  %v3198 = vunpack.c.l.b16 %v3161
  %v3199 = vunpack.c.h.b16 %v3161
  %v3200 = vunpack.c.l.b16 %v3162
  %v3201 = vunpack.c.h.b16 %v3162
  %v3202 = vunpack.c.l.b16 %v3163
  %v3203 = vunpack.c.h.b16 %v3163
  %v3204 = vunpack.c.l.b16 %v3164
  %v3205 = vunpack.c.h.b16 %v3164
  %v3206 = vunpack.c.l.b16 %v3165
  %v3207 = vunpack.c.h.b16 %v3165
  %v3208 = vunpack.c.l.b16 %v3166
  %v3209 = vunpack.c.h.b16 %v3166
  %v3210 = vunpack.c.l.b16 %v3167
  %v3211 = vunpack.c.h.b16 %v3167
  %v3212 = vunpack.c.l.b16 %v3168
  %v3213 = vunpack.c.h.b16 %v3168
  %v3214 = vpack.c.b16 %v3184, %v3184
  %v3215 = vpack.c.b16 %v3185, %v3185
  %v3216 = vpack.c.b16 %v3186, %v3186
  %v3217 = vpack.c.b16 %v3187, %v3187
  %v3218 = vpack.c.b16 %v3188, %v3188
  %v3219 = vpack.c.b16 %v3189, %v3189
  %v3220 = vpack.c.b16 %v3190, %v3190
  %v3221 = vpack.c.b16 %v3191, %v3191
  %v3222 = vpack.c.b16 %v3192, %v3192
  %v3223 = vpack.c.b16 %v3193, %v3193
  %v3224 = vpack.c.b16 %v3194, %v3194
  %v3225 = vpack.c.b16 %v3195, %v3195
  %v3226 = vpack.c.b16 %v3196, %v3196
  %v3227 = vpack.c.b16 %v3197, %v3197
  %v3228 = vpack.c.b16 %v3198, %v3198
  %v3229 = vpack.c.b16 %v3199, %v3199
  %v3230 = vpack.c.b16 %v3200, %v3200
  %v3231 = vpack.c.b16 %v3201, %v3201
  %v3232 = vpack.c.b16 %v3202, %v3202
  %v3233 = vpack.c.b16 %v3203, %v3203
  %v3234 = vpack.c.b16 %v3204, %v3204
  %v3235 = vpack.c.b16 %v3205, %v3205
  %v3236 = vpack.c.b16 %v3206, %v3206
  %v3237 = vpack.c.b16 %v3207, %v3207
  %v3238 = vpack.c.b16 %v3208, %v3208
  %v3239 = vpack.c.b16 %v3209, %v3209
  %v3240 = vpack.c.b16 %v3210, %v3210
  %v3241 = vpack.c.b16 %v3211, %v3211
  %v3242 = vpack.c.b16 %v3212, %v3212
  %v3243 = vpack.c.b16 %v3213, %v3213
  %3274 = vst [vmem:[%s3] sm:$0xf] %v3214
  %3275 = vst [vmem:[%s3 + $0x4] sm:$0xf] %v3215
  %3276 = vst [vmem:[%s3 + $0x8] sm:$0xf] %v3216
  %3277 = vst [vmem:[%s3 + $0xc] sm:$0xf] %v3217
  %3278 = vst [vmem:[%s3 + $0x10] sm:$0xf] %v3218
  %3279 = vst [vmem:[%s3 + $0x14] sm:$0xf] %v3219
  %3280 = vst [vmem:[%s3 + $0x18] sm:$0xf] %v3220
  %3281 = vst [vmem:[%s3 + $0x1c] sm:$0xf] %v3221
  %3282 = vst [vmem:[%s3 + $0x20] sm:$0xf] %v3222
  %3283 = vst [vmem:[%s3 + $0x24] sm:$0xf] %v3223
  %3284 = vst [vmem:[%s3 + $0x28] sm:$0xf] %v3224
  %3285 = vst [vmem:[%s3 + $0x2c] sm:$0xf] %v3225
  %3286 = vst [vmem:[%s3 + $0x30] sm:$0xf] %v3226
  %3287 = vst [vmem:[%s3 + $0x34] sm:$0xf] %v3227
  %3288 = vst [vmem:[%s3 + $0x38] sm:$0xf] %v3228
  %3289 = vst [vmem:[%s3 + $0x3c] sm:$0xf] %v3229
  %3290 = vst [vmem:[%s3 + $0x40] sm:$0xf] %v3230
  %3291 = vst [vmem:[%s3 + $0x44] sm:$0xf] %v3231
  %3292 = vst [vmem:[%s3 + $0x48] sm:$0xf] %v3232
  %3293 = vst [vmem:[%s3 + $0x4c] sm:$0xf] %v3233
  %3294 = vst [vmem:[%s3 + $0x50] sm:$0xf] %v3234
  %3295 = vst [vmem:[%s3 + $0x54] sm:$0xf] %v3235
  %3296 = vst [vmem:[%s3 + $0x58] sm:$0xf] %v3236
  %3297 = vst [vmem:[%s3 + $0x5c] sm:$0xf] %v3237
  %3298 = vst [vmem:[%s3 + $0x60] sm:$0xf] %v3238
  %3299 = vst [vmem:[%s3 + $0x64] sm:$0xf] %v3239
  %3300 = vst [vmem:[%s3 + $0x68] sm:$0xf] %v3240
  %3301 = vst [vmem:[%s3 + $0x6c] sm:$0xf] %v3241
  %3302 = vst [vmem:[%s3 + $0x70] sm:$0xf] %v3242
  %3303 = vst [vmem:[%s3 + $0x74] sm:$0x7] %v3243
  // Predicated region
  $region14: #{dqn_forward.5} parent=0 // pred_check
    _
  $region15: #{dqn_forward.5} parent=0 // pred_check_branch
    %3305 = sbr.rel (0) target = $region17
  $region16: #{dqn_forward.5} parent=0 // pred_region
    _
  $region17: #{dqn_forward.5} parent=0 // pred_fallthru
    _
  // Predicated region
  $region18: #{dqn_forward.5} parent=0 // pred_check
    _
  $region19: #{dqn_forward.5} parent=0 // pred_check_branch
    %3307 = sbr.rel (0) target = $region21
  $region20: #{dqn_forward.5} parent=0 // pred_region
    _
  $region21: #{dqn_forward.5} parent=0 // pred_fallthru
    _

// kernel: dqn_forward.7
$region0: #{dqn_forward.7}
  #allocation0 [shape = 'u32[]', space=smem, size = 0x4, offset = 0x4, fixed_abs, tag = 'smem constant byte address 0x4 - core index']
  #allocation1 [shape = 'u32[144,128]{1,0:T(1,128)}', space=vmem, size = 0x12000, scoped, tag = 'internal scratch']
  %s0 = inlined_call_operand.vmem [shape: bf16[2,1792], index: 0, kind: input, shape index: {}]
  %s1 = inlined_call_operand.vmem [shape: bf16[1792,2], index: 1, kind: input, shape index: {}]
  %s2 = inlined_call_operand.vmem [shape: f32[1,2], index: 2, kind: input, shape index: {}]
  %s3 = inlined_call_operand.hbm [shape: f32[2,2], index: 3, kind: output, shape index: {}]
  %s4 = sld [smem:[#allocation0]]
  $region22: #{dqn_forward.7} parent=0
    _
  %s6 = ssub.s32 1, %s4
  %s7 = scalar_select 0, %s6, %s4
  $region1: #{dqn_forward.7} parent=0
    #allocation2 [shape = 'u8[1024]{0}', space=vmem, size = 0x400, scoped, tag = 'output window, operand 0, single buffered']
    #allocation3 [shape = 's32[1]{0}', space=sflag, size = 0x4, scoped, tag = 'scoped memory for dqn_forward.7']
    %8 = vsyncpa [#allocation3], 0
    // Predicated region
    $region2: #{dqn_forward.7} parent=1 // pred_check
      _
    $region3: #{dqn_forward.7} parent=1 // pred_check_branch
      %10 = sbr.rel (0) target = $region5
    $region4: #{dqn_forward.7} parent=1 // pred_region
      _
    $region5: #{dqn_forward.7} parent=1 // pred_fallthru
      _
    // Predicated region
    $region6: #{dqn_forward.7} parent=1 // pred_check
      _
    $region7: #{dqn_forward.7} parent=1 // pred_check_branch
      %12 = sbr.rel (0) target = $region9
    $region8: #{dqn_forward.7} parent=1 // pred_region
      _
    $region9: #{dqn_forward.7} parent=1 // pred_fallthru
      _
    // Predicated region
    $region10: #{dqn_forward.7} parent=1 // pred_check
      _
    $region11: #{dqn_forward.7} parent=1 // pred_check_branch
      %14 = sbr.rel (0) target = $region13
    $region12: #{dqn_forward.7} parent=1 // pred_region
      _
    $region13: #{dqn_forward.7} parent=1 // pred_fallthru
      _
    %v16 = vld [vmem:[%s0] sm:$0xff]
    %v17 = vld [vmem:[%s0 + $0x8] sm:$0x3f]
    %v18 = vld [vmem:[%s1] sm:$0xf]
    %v19 = vld [vmem:[%s1 + $0x4] sm:$0xf]
    %v20 = vld [vmem:[%s1 + $0x8] sm:$0xf]
    %v21 = vld [vmem:[%s1 + $0xc] sm:$0xf]
    %v22 = vld [vmem:[%s1 + $0x10] sm:$0xf]
    %v23 = vld [vmem:[%s1 + $0x14] sm:$0xf]
    %v24 = vld [vmem:[%s1 + $0x18] sm:$0xf]
    %v25 = vld [vmem:[%s1 + $0x1c] sm:$0xf]
    %v26 = vld [vmem:[%s1 + $0x20] sm:$0xf]
    %v27 = vld [vmem:[%s1 + $0x24] sm:$0xf]
    %v28 = vld [vmem:[%s1 + $0x28] sm:$0xf]
    %v29 = vld [vmem:[%s1 + $0x2c] sm:$0xf]
    %v30 = vld [vmem:[%s1 + $0x30] sm:$0xf]
    %v31 = vld [vmem:[%s1 + $0x34] sm:$0xf]
    %v32 = vld [vmem:[%s1 + $0x38] sm:$0xf]
    %v33 = vld [vmem:[%s1 + $0x3c] sm:$0xf]
    %v34 = vld [vmem:[%s1 + $0x40] sm:$0xf]
    %v35 = vld [vmem:[%s1 + $0x44] sm:$0xf]
    %v36 = vld [vmem:[%s1 + $0x48] sm:$0xf]
    %v37 = vld [vmem:[%s1 + $0x4c] sm:$0xf]
    %v38 = vld [vmem:[%s1 + $0x50] sm:$0xf]
    %v39 = vld [vmem:[%s1 + $0x54] sm:$0xf]
    %v40 = vld [vmem:[%s1 + $0x58] sm:$0xf]
    %v41 = vld [vmem:[%s1 + $0x5c] sm:$0xf]
    %v42 = vld [vmem:[%s1 + $0x60] sm:$0xf]
    %v43 = vld [vmem:[%s1 + $0x64] sm:$0xf]
    %v44 = vld [vmem:[%s1 + $0x68] sm:$0xf]
    %v45 = vld [vmem:[%s1 + $0x6c] sm:$0xf]
    %v46 = vld [vmem:[%s1 + $0x70] sm:$0xf]
    %v47 = vld [vmem:[%s1 + $0x74] sm:$0xf]
    %v48 = vld [vmem:[%s1 + $0x78] sm:$0xf]
    %v49 = vld [vmem:[%s1 + $0x7c] sm:$0xf]
    %v50 = vld [vmem:[%s1 + $0x80] sm:$0xf]
    %v51 = vld [vmem:[%s1 + $0x84] sm:$0xf]
    %v52 = vld [vmem:[%s1 + $0x88] sm:$0xf]
    %v53 = vld [vmem:[%s1 + $0x8c] sm:$0xf]
    %v54 = vld [vmem:[%s1 + $0x90] sm:$0xf]
    %v55 = vld [vmem:[%s1 + $0x94] sm:$0xf]
    %v56 = vld [vmem:[%s1 + $0x98] sm:$0xf]
    %v57 = vld [vmem:[%s1 + $0x9c] sm:$0xf]
    %v58 = vld [vmem:[%s1 + $0xa0] sm:$0xf]
    %v59 = vld [vmem:[%s1 + $0xa4] sm:$0xf]
    %v60 = vld [vmem:[%s1 + $0xa8] sm:$0xf]
    %v61 = vld [vmem:[%s1 + $0xac] sm:$0xf]
    %v62 = vld [vmem:[%s1 + $0xb0] sm:$0xf]
    %v63 = vld [vmem:[%s1 + $0xb4] sm:$0xf]
    %v64 = vld [vmem:[%s1 + $0xb8] sm:$0xf]
    %v65 = vld [vmem:[%s1 + $0xbc] sm:$0xf]
    %v66 = vld [vmem:[%s1 + $0xc0] sm:$0xf]
    %v67 = vld [vmem:[%s1 + $0xc4] sm:$0xf]
    %v68 = vld [vmem:[%s1 + $0xc8] sm:$0xf]
    %v69 = vld [vmem:[%s1 + $0xcc] sm:$0xf]
    %v70 = vld [vmem:[%s1 + $0xd0] sm:$0xf]
    %v71 = vld [vmem:[%s1 + $0xd4] sm:$0xf]
    %v72 = vld [vmem:[%s1 + $0xd8] sm:$0xf]
    %v73 = vld [vmem:[%s1 + $0xdc] sm:$0xf]
    %v74 = vld [vmem:[%s1 + $0xe0] sm:$0xf]
    %v75 = vld [vmem:[%s1 + $0xe4] sm:$0xf]
    %v76 = vld [vmem:[%s1 + $0xe8] sm:$0xf]
    %v77 = vld [vmem:[%s1 + $0xec] sm:$0xf]
    %v78 = vld [vmem:[%s1 + $0xf0] sm:$0xf]
    %v79 = vld [vmem:[%s1 + $0xf4] sm:$0xf]
    %v80 = vld [vmem:[%s1 + $0xf8] sm:$0xf]
    %v81 = vld [vmem:[%s1 + $0xfc] sm:$0xf]
    %v82 = vld [vmem:[%s1 + $0x100] sm:$0xf]
    %v83 = vld [vmem:[%s1 + $0x104] sm:$0xf]
    %v84 = vld [vmem:[%s1 + $0x108] sm:$0xf]
    %v85 = vld [vmem:[%s1 + $0x10c] sm:$0xf]
    %v86 = vld [vmem:[%s1 + $0x110] sm:$0xf]
    %v87 = vld [vmem:[%s1 + $0x114] sm:$0xf]
    %v88 = vld [vmem:[%s1 + $0x118] sm:$0xf]
    %v89 = vld [vmem:[%s1 + $0x11c] sm:$0xf]
    %v90 = vld [vmem:[%s1 + $0x120] sm:$0xf]
    %v91 = vld [vmem:[%s1 + $0x124] sm:$0xf]
    %v92 = vld [vmem:[%s1 + $0x128] sm:$0xf]
    %v93 = vld [vmem:[%s1 + $0x12c] sm:$0xf]
    %v94 = vld [vmem:[%s1 + $0x130] sm:$0xf]
    %v95 = vld [vmem:[%s1 + $0x134] sm:$0xf]
    %v96 = vld [vmem:[%s1 + $0x138] sm:$0xf]
    %v97 = vld [vmem:[%s1 + $0x13c] sm:$0xf]
    %v98 = vld [vmem:[%s1 + $0x140] sm:$0xf]
    %v99 = vld [vmem:[%s1 + $0x144] sm:$0xf]
    %v100 = vld [vmem:[%s1 + $0x148] sm:$0xf]
    %v101 = vld [vmem:[%s1 + $0x14c] sm:$0xf]
    %v102 = vld [vmem:[%s1 + $0x150] sm:$0xf]
    %v103 = vld [vmem:[%s1 + $0x154] sm:$0xf]
    %v104 = vld [vmem:[%s1 + $0x158] sm:$0xf]
    %v105 = vld [vmem:[%s1 + $0x15c] sm:$0xf]
    %v106 = vld [vmem:[%s1 + $0x160] sm:$0xf]
    %v107 = vld [vmem:[%s1 + $0x164] sm:$0xf]
    %v108 = vld [vmem:[%s1 + $0x168] sm:$0xf]
    %v109 = vld [vmem:[%s1 + $0x16c] sm:$0xf]
    %v110 = vld [vmem:[%s1 + $0x170] sm:$0xf]
    %v111 = vld [vmem:[%s1 + $0x174] sm:$0xf]
    %v112 = vld [vmem:[%s1 + $0x178] sm:$0xf]
    %v113 = vld [vmem:[%s1 + $0x17c] sm:$0xf]
    %v114 = vld [vmem:[%s1 + $0x180] sm:$0xf]
    %v115 = vld [vmem:[%s1 + $0x184] sm:$0xf]
    %v116 = vld [vmem:[%s1 + $0x188] sm:$0xf]
    %v117 = vld [vmem:[%s1 + $0x18c] sm:$0xf]
    %v118 = vld [vmem:[%s1 + $0x190] sm:$0xf]
    %v119 = vld [vmem:[%s1 + $0x194] sm:$0xf]
    %v120 = vld [vmem:[%s1 + $0x198] sm:$0xf]
    %v121 = vld [vmem:[%s1 + $0x19c] sm:$0xf]
    %v122 = vld [vmem:[%s1 + $0x1a0] sm:$0xf]
    %v123 = vld [vmem:[%s1 + $0x1a4] sm:$0xf]
    %v124 = vld [vmem:[%s1 + $0x1a8] sm:$0xf]
    %v125 = vld [vmem:[%s1 + $0x1ac] sm:$0xf]
    %v126 = vld [vmem:[%s1 + $0x1b0] sm:$0xf]
    %v127 = vld [vmem:[%s1 + $0x1b4] sm:$0xf]
    %v128 = vld [vmem:[%s1 + $0x1b8] sm:$0xf]
    %v129 = vld [vmem:[%s1 + $0x1bc] sm:$0xf]
    %v130 = vld [vmem:[%s1 + $0x1c0] sm:$0xf]
    %v131 = vld [vmem:[%s1 + $0x1c4] sm:$0xf]
    %v132 = vld [vmem:[%s1 + $0x1c8] sm:$0xf]
    %v133 = vld [vmem:[%s1 + $0x1cc] sm:$0xf]
    %v134 = vld [vmem:[%s1 + $0x1d0] sm:$0xf]
    %v135 = vld [vmem:[%s1 + $0x1d4] sm:$0xf]
    %v136 = vld [vmem:[%s1 + $0x1d8] sm:$0xf]
    %v137 = vld [vmem:[%s1 + $0x1dc] sm:$0xf]
    %v138 = vld [vmem:[%s1 + $0x1e0] sm:$0xf]
    %v139 = vld [vmem:[%s1 + $0x1e4] sm:$0xf]
    %v140 = vld [vmem:[%s1 + $0x1e8] sm:$0xf]
    %v141 = vld [vmem:[%s1 + $0x1ec] sm:$0xf]
    %v142 = vld [vmem:[%s1 + $0x1f0] sm:$0xf]
    %v143 = vld [vmem:[%s1 + $0x1f4] sm:$0xf]
    %v144 = vld [vmem:[%s1 + $0x1f8] sm:$0xf]
    %v145 = vld [vmem:[%s1 + $0x1fc] sm:$0xf]
    %v146 = vld [vmem:[%s1 + $0x200] sm:$0xf]
    %v147 = vld [vmem:[%s1 + $0x204] sm:$0xf]
    %v148 = vld [vmem:[%s1 + $0x208] sm:$0xf]
    %v149 = vld [vmem:[%s1 + $0x20c] sm:$0xf]
    %v150 = vld [vmem:[%s1 + $0x210] sm:$0xf]
    %v151 = vld [vmem:[%s1 + $0x214] sm:$0xf]
    %v152 = vld [vmem:[%s1 + $0x218] sm:$0xf]
    %v153 = vld [vmem:[%s1 + $0x21c] sm:$0xf]
    %v154 = vld [vmem:[%s1 + $0x220] sm:$0xf]
    %v155 = vld [vmem:[%s1 + $0x224] sm:$0xf]
    %v156 = vld [vmem:[%s1 + $0x228] sm:$0xf]
    %v157 = vld [vmem:[%s1 + $0x22c] sm:$0xf]
    %v158 = vld [vmem:[%s1 + $0x230] sm:$0xf]
    %v159 = vld [vmem:[%s1 + $0x234] sm:$0xf]
    %v160 = vld [vmem:[%s1 + $0x238] sm:$0xf]
    %v161 = vld [vmem:[%s1 + $0x23c] sm:$0xf]
    %v162 = vld [vmem:[%s1 + $0x240] sm:$0xf]
    %v163 = vld [vmem:[%s1 + $0x244] sm:$0xf]
    %v164 = vld [vmem:[%s1 + $0x248] sm:$0xf]
    %v165 = vld [vmem:[%s1 + $0x24c] sm:$0xf]
    %v166 = vld [vmem:[%s1 + $0x250] sm:$0xf]
    %v167 = vld [vmem:[%s1 + $0x254] sm:$0xf]
    %v168 = vld [vmem:[%s1 + $0x258] sm:$0xf]
    %v169 = vld [vmem:[%s1 + $0x25c] sm:$0xf]
    %v170 = vld [vmem:[%s1 + $0x260] sm:$0xf]
    %v171 = vld [vmem:[%s1 + $0x264] sm:$0xf]
    %v172 = vld [vmem:[%s1 + $0x268] sm:$0xf]
    %v173 = vld [vmem:[%s1 + $0x26c] sm:$0xf]
    %v174 = vld [vmem:[%s1 + $0x270] sm:$0xf]
    %v175 = vld [vmem:[%s1 + $0x274] sm:$0xf]
    %v176 = vld [vmem:[%s1 + $0x278] sm:$0xf]
    %v177 = vld [vmem:[%s1 + $0x27c] sm:$0xf]
    %v178 = vld [vmem:[%s1 + $0x280] sm:$0xf]
    %v179 = vld [vmem:[%s1 + $0x284] sm:$0xf]
    %v180 = vld [vmem:[%s1 + $0x288] sm:$0xf]
    %v181 = vld [vmem:[%s1 + $0x28c] sm:$0xf]
    %v182 = vld [vmem:[%s1 + $0x290] sm:$0xf]
    %v183 = vld [vmem:[%s1 + $0x294] sm:$0xf]
    %v184 = vld [vmem:[%s1 + $0x298] sm:$0xf]
    %v185 = vld [vmem:[%s1 + $0x29c] sm:$0xf]
    %v186 = vld [vmem:[%s1 + $0x2a0] sm:$0xf]
    %v187 = vld [vmem:[%s1 + $0x2a4] sm:$0xf]
    %v188 = vld [vmem:[%s1 + $0x2a8] sm:$0xf]
    %v189 = vld [vmem:[%s1 + $0x2ac] sm:$0xf]
    %v190 = vld [vmem:[%s1 + $0x2b0] sm:$0xf]
    %v191 = vld [vmem:[%s1 + $0x2b4] sm:$0xf]
    %v192 = vld [vmem:[%s1 + $0x2b8] sm:$0xf]
    %v193 = vld [vmem:[%s1 + $0x2bc] sm:$0xf]
    %v194 = vld [vmem:[%s1 + $0x2c0] sm:$0xf]
    %v195 = vld [vmem:[%s1 + $0x2c4] sm:$0xf]
    %v196 = vld [vmem:[%s1 + $0x2c8] sm:$0xf]
    %v197 = vld [vmem:[%s1 + $0x2cc] sm:$0xf]
    %v198 = vld [vmem:[%s1 + $0x2d0] sm:$0xf]
    %v199 = vld [vmem:[%s1 + $0x2d4] sm:$0xf]
    %v200 = vld [vmem:[%s1 + $0x2d8] sm:$0xf]
    %v201 = vld [vmem:[%s1 + $0x2dc] sm:$0xf]
    %v202 = vld [vmem:[%s1 + $0x2e0] sm:$0xf]
    %v203 = vld [vmem:[%s1 + $0x2e4] sm:$0xf]
    %v204 = vld [vmem:[%s1 + $0x2e8] sm:$0xf]
    %v205 = vld [vmem:[%s1 + $0x2ec] sm:$0xf]
    %v206 = vld [vmem:[%s1 + $0x2f0] sm:$0xf]
    %v207 = vld [vmem:[%s1 + $0x2f4] sm:$0xf]
    %v208 = vld [vmem:[%s1 + $0x2f8] sm:$0xf]
    %v209 = vld [vmem:[%s1 + $0x2fc] sm:$0xf]
    %v210 = vld [vmem:[%s1 + $0x300] sm:$0xf]
    %v211 = vld [vmem:[%s1 + $0x304] sm:$0xf]
    %v212 = vld [vmem:[%s1 + $0x308] sm:$0xf]
    %v213 = vld [vmem:[%s1 + $0x30c] sm:$0xf]
    %v214 = vld [vmem:[%s1 + $0x310] sm:$0xf]
    %v215 = vld [vmem:[%s1 + $0x314] sm:$0xf]
    %v216 = vld [vmem:[%s1 + $0x318] sm:$0xf]
    %v217 = vld [vmem:[%s1 + $0x31c] sm:$0xf]
    %v218 = vld [vmem:[%s1 + $0x320] sm:$0xf]
    %v219 = vld [vmem:[%s1 + $0x324] sm:$0xf]
    %v220 = vld [vmem:[%s1 + $0x328] sm:$0xf]
    %v221 = vld [vmem:[%s1 + $0x32c] sm:$0xf]
    %v222 = vld [vmem:[%s1 + $0x330] sm:$0xf]
    %v223 = vld [vmem:[%s1 + $0x334] sm:$0xf]
    %v224 = vld [vmem:[%s1 + $0x338] sm:$0xf]
    %v225 = vld [vmem:[%s1 + $0x33c] sm:$0xf]
    %v226 = vld [vmem:[%s1 + $0x340] sm:$0xf]
    %v227 = vld [vmem:[%s1 + $0x344] sm:$0xf]
    %v228 = vld [vmem:[%s1 + $0x348] sm:$0xf]
    %v229 = vld [vmem:[%s1 + $0x34c] sm:$0xf]
    %v230 = vld [vmem:[%s1 + $0x350] sm:$0xf]
    %v231 = vld [vmem:[%s1 + $0x354] sm:$0xf]
    %v232 = vld [vmem:[%s1 + $0x358] sm:$0xf]
    %v233 = vld [vmem:[%s1 + $0x35c] sm:$0xf]
    %v234 = vld [vmem:[%s1 + $0x360] sm:$0xf]
    %v235 = vld [vmem:[%s1 + $0x364] sm:$0xf]
    %v236 = vld [vmem:[%s1 + $0x368] sm:$0xf]
    %v237 = vld [vmem:[%s1 + $0x36c] sm:$0xf]
    %v238 = vld [vmem:[%s1 + $0x370] sm:$0xf]
    %v239 = vld [vmem:[%s1 + $0x374] sm:$0xf]
    %v240 = vld [vmem:[%s1 + $0x378] sm:$0xf]
    %v241 = vld [vmem:[%s1 + $0x37c] sm:$0xf]
    %v242 = vld [vmem:[%s2] sm:$0x1]
    %v244 = vlaneseq
    %v245 = vshrl.u32 %v244, 7
    %v246 = vsub.s32 0, %v245
    %v247 = vrot.slane %v242, %v246
    %v251 = vcombine.high %v16, %v16
    %v253 = vunpack.c.l.s4 1966171168
    %v254 = vunpack.c.0.s8 %v253
    %v255 = vlaneseq
    %v256 = vshrl.u32 %v255, 7
    %v257 = vsub.s32 %v254, %v256
    %v258 = vrot.slane %v16, %v257
    %v260 = vunpack.c.l.s4 1966171168
    %v261 = vunpack.c.0.s8 %v260
    %v262 = vlaneseq
    %v263 = vshrl.u32 %v262, 7
    %v264 = vsub.s32 %v261, %v263
    %v265 = vrot.slane %v251, %v264
    %v266 = vcombine.high %v258, %v258
    %v267 = vcombine.high %v265, %v265
    %v269 = vunpack.c.l.s4 1966171168
    %v270 = vunpack.c.0.s8 %v269
    %v271 = vlaneseq
    %v272 = vshrl.u32 %v271, 7
    %v273 = vsub.s32 %v270, %v272
    %v274 = vrot.slane %v258, %v273
    %v276 = vunpack.c.l.s4 1966171168
    %v277 = vunpack.c.0.s8 %v276
    %v278 = vlaneseq
    %v279 = vshrl.u32 %v278, 7
    %v280 = vsub.s32 %v277, %v279
    %v281 = vrot.slane %v265, %v280
    %v283 = vunpack.c.l.s4 1966171168
    %v284 = vunpack.c.0.s8 %v283
    %v285 = vlaneseq
    %v286 = vshrl.u32 %v285, 7
    %v287 = vsub.s32 %v284, %v286
    %v288 = vrot.slane %v266, %v287
    %v290 = vunpack.c.l.s4 1966171168
    %v291 = vunpack.c.0.s8 %v290
    %v292 = vlaneseq
    %v293 = vshrl.u32 %v292, 7
    %v294 = vsub.s32 %v291, %v293
    %v295 = vrot.slane %v267, %v294
    %v296 = vcombine.high %v274, %v274
    %v297 = vcombine.high %v281, %v281
    %v298 = vcombine.high %v288, %v288
    %v299 = vcombine.high %v295, %v295
    %v300 = vcombine.high %v17, %v17
    %v302 = vunpack.c.l.s4 1966171168
    %v303 = vunpack.c.0.s8 %v302
    %v304 = vlaneseq
    %v305 = vshrl.u32 %v304, 7
    %v306 = vsub.s32 %v303, %v305
    %v307 = vrot.slane %v17, %v306
    %v309 = vunpack.c.l.s4 1966171168
    %v310 = vunpack.c.0.s8 %v309
    %v311 = vlaneseq
    %v312 = vshrl.u32 %v311, 7
    %v313 = vsub.s32 %v310, %v312
    %v314 = vrot.slane %v300, %v313
    %v315 = vcombine.high %v307, %v307
    %v316 = vcombine.high %v314, %v314
    %v318 = vunpack.c.l.s4 1966171168
    %v319 = vunpack.c.0.s8 %v318
    %v320 = vlaneseq
    %v321 = vshrl.u32 %v320, 7
    %v322 = vsub.s32 %v319, %v321
    %v323 = vrot.slane %v307, %v322
    %v325 = vunpack.c.l.s4 1966171168
    %v326 = vunpack.c.0.s8 %v325
    %v327 = vlaneseq
    %v328 = vshrl.u32 %v327, 7
    %v329 = vsub.s32 %v326, %v328
    %v330 = vrot.slane %v314, %v329
    %v332 = vunpack.c.l.s4 1966171168
    %v333 = vunpack.c.0.s8 %v332
    %v334 = vlaneseq
    %v335 = vshrl.u32 %v334, 7
    %v336 = vsub.s32 %v333, %v335
    %v337 = vrot.slane %v315, %v336
    %v339 = vunpack.c.l.s4 1966171168
    %v340 = vunpack.c.0.s8 %v339
    %v341 = vlaneseq
    %v342 = vshrl.u32 %v341, 7
    %v343 = vsub.s32 %v340, %v342
    %v344 = vrot.slane %v316, %v343
    %v345 = vcombine.high %v323, %v323
    %v346 = vcombine.high %v337, %v337
    %v585 = vunpack.c.l.b16 %v18
    %v586 = vunpack.c.l.b16 %v19
    %v587 = vunpack.c.l.b16 %v20
    %v588 = vunpack.c.l.b16 %v21
    %v589 = vunpack.c.l.b16 %v22
    %v590 = vunpack.c.l.b16 %v23
    %v591 = vunpack.c.l.b16 %v24
    %v592 = vunpack.c.l.b16 %v25
    %v593 = vunpack.c.l.b16 %v26
    %v594 = vunpack.c.l.b16 %v27
    %v595 = vunpack.c.l.b16 %v28
    %v596 = vunpack.c.l.b16 %v29
    %v597 = vunpack.c.l.b16 %v30
    %v598 = vunpack.c.l.b16 %v31
    %v599 = vunpack.c.l.b16 %v32
    %v600 = vunpack.c.l.b16 %v33
    %v601 = vunpack.c.l.b16 %v34
    %v602 = vunpack.c.l.b16 %v35
    %v603 = vunpack.c.l.b16 %v36
    %v604 = vunpack.c.l.b16 %v37
    %v605 = vunpack.c.l.b16 %v38
    %v606 = vunpack.c.l.b16 %v39
    %v607 = vunpack.c.l.b16 %v40
    %v608 = vunpack.c.l.b16 %v41
    %v609 = vunpack.c.l.b16 %v42
    %v610 = vunpack.c.l.b16 %v43
    %v611 = vunpack.c.l.b16 %v44
    %v612 = vunpack.c.l.b16 %v45
    %v613 = vunpack.c.l.b16 %v46
    %v614 = vunpack.c.l.b16 %v47
    %v615 = vunpack.c.l.b16 %v48
    %v616 = vunpack.c.l.b16 %v49
    %v617 = vunpack.c.l.b16 %v50
    %v618 = vunpack.c.l.b16 %v51
    %v619 = vunpack.c.l.b16 %v52
    %v620 = vunpack.c.l.b16 %v53
    %v621 = vunpack.c.l.b16 %v54
    %v622 = vunpack.c.l.b16 %v55
    %v623 = vunpack.c.l.b16 %v56
    %v624 = vunpack.c.l.b16 %v57
    %v625 = vunpack.c.l.b16 %v58
    %v626 = vunpack.c.l.b16 %v59
    %v627 = vunpack.c.l.b16 %v60
    %v628 = vunpack.c.l.b16 %v61
    %v629 = vunpack.c.l.b16 %v62
    %v630 = vunpack.c.l.b16 %v63
    %v631 = vunpack.c.l.b16 %v64
    %v632 = vunpack.c.l.b16 %v65
    %v633 = vunpack.c.l.b16 %v66
    %v634 = vunpack.c.l.b16 %v67
    %v635 = vunpack.c.l.b16 %v68
    %v636 = vunpack.c.l.b16 %v69
    %v637 = vunpack.c.l.b16 %v70
    %v638 = vunpack.c.l.b16 %v71
    %v639 = vunpack.c.l.b16 %v72
    %v640 = vunpack.c.l.b16 %v73
    %v641 = vunpack.c.l.b16 %v74
    %v642 = vunpack.c.l.b16 %v75
    %v643 = vunpack.c.l.b16 %v76
    %v644 = vunpack.c.l.b16 %v77
    %v645 = vunpack.c.l.b16 %v78
    %v646 = vunpack.c.l.b16 %v79
    %v647 = vunpack.c.l.b16 %v80
    %v648 = vunpack.c.l.b16 %v81
    %v649 = vunpack.c.l.b16 %v82
    %v650 = vunpack.c.l.b16 %v83
    %v651 = vunpack.c.l.b16 %v84
    %v652 = vunpack.c.l.b16 %v85
    %v653 = vunpack.c.l.b16 %v86
    %v654 = vunpack.c.l.b16 %v87
    %v655 = vunpack.c.l.b16 %v88
    %v656 = vunpack.c.l.b16 %v89
    %v657 = vunpack.c.l.b16 %v90
    %v658 = vunpack.c.l.b16 %v91
    %v659 = vunpack.c.l.b16 %v92
    %v660 = vunpack.c.l.b16 %v93
    %v661 = vunpack.c.l.b16 %v94
    %v662 = vunpack.c.l.b16 %v95
    %v663 = vunpack.c.l.b16 %v96
    %v664 = vunpack.c.l.b16 %v97
    %v665 = vunpack.c.l.b16 %v98
    %v666 = vunpack.c.l.b16 %v99
    %v667 = vunpack.c.l.b16 %v100
    %v668 = vunpack.c.l.b16 %v101
    %v669 = vunpack.c.l.b16 %v102
    %v670 = vunpack.c.l.b16 %v103
    %v671 = vunpack.c.l.b16 %v104
    %v672 = vunpack.c.l.b16 %v105
    %v673 = vunpack.c.l.b16 %v106
    %v674 = vunpack.c.l.b16 %v107
    %v675 = vunpack.c.l.b16 %v108
    %v676 = vunpack.c.l.b16 %v109
    %v677 = vunpack.c.l.b16 %v110
    %v678 = vunpack.c.l.b16 %v111
    %v679 = vunpack.c.l.b16 %v112
    %v680 = vunpack.c.l.b16 %v113
    %v681 = vunpack.c.l.b16 %v114
    %v682 = vunpack.c.l.b16 %v115
    %v683 = vunpack.c.l.b16 %v116
    %v684 = vunpack.c.l.b16 %v117
    %v685 = vunpack.c.l.b16 %v118
    %v686 = vunpack.c.l.b16 %v119
    %v687 = vunpack.c.l.b16 %v120
    %v688 = vunpack.c.l.b16 %v121
    %v689 = vunpack.c.l.b16 %v122
    %v690 = vunpack.c.l.b16 %v123
    %v691 = vunpack.c.l.b16 %v124
    %v692 = vunpack.c.l.b16 %v125
    %v693 = vunpack.c.l.b16 %v126
    %v694 = vunpack.c.l.b16 %v127
    %v695 = vunpack.c.l.b16 %v128
    %v696 = vunpack.c.l.b16 %v129
    %v697 = vunpack.c.l.b16 %v130
    %v698 = vunpack.c.l.b16 %v131
    %v699 = vunpack.c.l.b16 %v132
    %v700 = vunpack.c.l.b16 %v133
    %v701 = vunpack.c.l.b16 %v134
    %v702 = vunpack.c.l.b16 %v135
    %v703 = vunpack.c.l.b16 %v136
    %v704 = vunpack.c.l.b16 %v137
    %v705 = vunpack.c.l.b16 %v138
    %v706 = vunpack.c.l.b16 %v139
    %v707 = vunpack.c.l.b16 %v140
    %v708 = vunpack.c.l.b16 %v141
    %v709 = vunpack.c.l.b16 %v142
    %v710 = vunpack.c.l.b16 %v143
    %v711 = vunpack.c.l.b16 %v144
    %v712 = vunpack.c.l.b16 %v145
    %v713 = vunpack.c.l.b16 %v146
    %v714 = vunpack.c.l.b16 %v147
    %v715 = vunpack.c.l.b16 %v148
    %v716 = vunpack.c.l.b16 %v149
    %v717 = vunpack.c.l.b16 %v150
    %v718 = vunpack.c.l.b16 %v151
    %v719 = vunpack.c.l.b16 %v152
    %v720 = vunpack.c.l.b16 %v153
    %v721 = vunpack.c.l.b16 %v154
    %v722 = vunpack.c.l.b16 %v155
    %v723 = vunpack.c.l.b16 %v156
    %v724 = vunpack.c.l.b16 %v157
    %v725 = vunpack.c.l.b16 %v158
    %v726 = vunpack.c.l.b16 %v159
    %v727 = vunpack.c.l.b16 %v160
    %v728 = vunpack.c.l.b16 %v161
    %v729 = vunpack.c.l.b16 %v162
    %v730 = vunpack.c.l.b16 %v163
    %v731 = vunpack.c.l.b16 %v164
    %v732 = vunpack.c.l.b16 %v165
    %v733 = vunpack.c.l.b16 %v166
    %v734 = vunpack.c.l.b16 %v167
    %v735 = vunpack.c.l.b16 %v168
    %v736 = vunpack.c.l.b16 %v169
    %v737 = vunpack.c.l.b16 %v170
    %v738 = vunpack.c.l.b16 %v171
    %v739 = vunpack.c.l.b16 %v172
    %v740 = vunpack.c.l.b16 %v173
    %v741 = vunpack.c.l.b16 %v174
    %v742 = vunpack.c.l.b16 %v175
    %v743 = vunpack.c.l.b16 %v176
    %v744 = vunpack.c.l.b16 %v177
    %v745 = vunpack.c.l.b16 %v178
    %v746 = vunpack.c.l.b16 %v179
    %v747 = vunpack.c.l.b16 %v180
    %v748 = vunpack.c.l.b16 %v181
    %v749 = vunpack.c.l.b16 %v182
    %v750 = vunpack.c.l.b16 %v183
    %v751 = vunpack.c.l.b16 %v184
    %v752 = vunpack.c.l.b16 %v185
    %v753 = vunpack.c.l.b16 %v186
    %v754 = vunpack.c.l.b16 %v187
    %v755 = vunpack.c.l.b16 %v188
    %v756 = vunpack.c.l.b16 %v189
    %v757 = vunpack.c.l.b16 %v190
    %v758 = vunpack.c.l.b16 %v191
    %v759 = vunpack.c.l.b16 %v192
    %v760 = vunpack.c.l.b16 %v193
    %v761 = vunpack.c.l.b16 %v194
    %v762 = vunpack.c.l.b16 %v195
    %v763 = vunpack.c.l.b16 %v196
    %v764 = vunpack.c.l.b16 %v197
    %v765 = vunpack.c.l.b16 %v198
    %v766 = vunpack.c.l.b16 %v199
    %v767 = vunpack.c.l.b16 %v200
    %v768 = vunpack.c.l.b16 %v201
    %v769 = vunpack.c.l.b16 %v202
    %v770 = vunpack.c.l.b16 %v203
    %v771 = vunpack.c.l.b16 %v204
    %v772 = vunpack.c.l.b16 %v205
    %v773 = vunpack.c.l.b16 %v206
    %v774 = vunpack.c.l.b16 %v207
    %v775 = vunpack.c.l.b16 %v208
    %v776 = vunpack.c.l.b16 %v209
    %v777 = vunpack.c.l.b16 %v210
    %v778 = vunpack.c.l.b16 %v211
    %v779 = vunpack.c.l.b16 %v212
    %v780 = vunpack.c.l.b16 %v213
    %v781 = vunpack.c.l.b16 %v214
    %v782 = vunpack.c.l.b16 %v215
    %v783 = vunpack.c.l.b16 %v216
    %v784 = vunpack.c.l.b16 %v217
    %v785 = vunpack.c.l.b16 %v218
    %v786 = vunpack.c.l.b16 %v219
    %v787 = vunpack.c.l.b16 %v220
    %v788 = vunpack.c.l.b16 %v221
    %v789 = vunpack.c.l.b16 %v222
    %v790 = vunpack.c.l.b16 %v223
    %v791 = vunpack.c.l.b16 %v224
    %v792 = vunpack.c.l.b16 %v225
    %v793 = vunpack.c.l.b16 %v226
    %v794 = vunpack.c.l.b16 %v227
    %v795 = vunpack.c.l.b16 %v228
    %v796 = vunpack.c.l.b16 %v229
    %v797 = vunpack.c.l.b16 %v230
    %v798 = vunpack.c.l.b16 %v231
    %v799 = vunpack.c.l.b16 %v232
    %v800 = vunpack.c.l.b16 %v233
    %v801 = vunpack.c.l.b16 %v234
    %v802 = vunpack.c.l.b16 %v235
    %v803 = vunpack.c.l.b16 %v236
    %v804 = vunpack.c.l.b16 %v237
    %v805 = vunpack.c.l.b16 %v238
    %v806 = vunpack.c.l.b16 %v239
    %v807 = vunpack.c.l.b16 %v240
    %v808 = vunpack.c.l.b16 %v241
    %v809 = vpack.c.b16 %v586, %v585
    %v810 = vpack.c.b16 %v588, %v587
    %v811 = vpack.c.b16 %v590, %v589
    %v812 = vpack.c.b16 %v592, %v591
    %v813 = vpack.c.b16 %v594, %v593
    %v814 = vpack.c.b16 %v596, %v595
    %v815 = vpack.c.b16 %v598, %v597
    %v816 = vpack.c.b16 %v600, %v599
    %v817 = vpack.c.b16 %v602, %v601
    %v818 = vpack.c.b16 %v604, %v603
    %v819 = vpack.c.b16 %v606, %v605
    %v820 = vpack.c.b16 %v608, %v607
    %v821 = vpack.c.b16 %v610, %v609
    %v822 = vpack.c.b16 %v612, %v611
    %v823 = vpack.c.b16 %v614, %v613
    %v824 = vpack.c.b16 %v616, %v615
    %v825 = vpack.c.b16 %v618, %v617
    %v826 = vpack.c.b16 %v620, %v619
    %v827 = vpack.c.b16 %v622, %v621
    %v828 = vpack.c.b16 %v624, %v623
    %v829 = vpack.c.b16 %v626, %v625
    %v830 = vpack.c.b16 %v628, %v627
    %v831 = vpack.c.b16 %v630, %v629
    %v832 = vpack.c.b16 %v632, %v631
    %v833 = vpack.c.b16 %v634, %v633
    %v834 = vpack.c.b16 %v636, %v635
    %v835 = vpack.c.b16 %v638, %v637
    %v836 = vpack.c.b16 %v640, %v639
    %v837 = vpack.c.b16 %v642, %v641
    %v838 = vpack.c.b16 %v644, %v643
    %v839 = vpack.c.b16 %v646, %v645
    %v840 = vpack.c.b16 %v648, %v647
    %v841 = vpack.c.b16 %v650, %v649
    %v842 = vpack.c.b16 %v652, %v651
    %v843 = vpack.c.b16 %v654, %v653
    %v844 = vpack.c.b16 %v656, %v655
    %v845 = vpack.c.b16 %v658, %v657
    %v846 = vpack.c.b16 %v660, %v659
    %v847 = vpack.c.b16 %v662, %v661
    %v848 = vpack.c.b16 %v664, %v663
    %v849 = vpack.c.b16 %v666, %v665
    %v850 = vpack.c.b16 %v668, %v667
    %v851 = vpack.c.b16 %v670, %v669
    %v852 = vpack.c.b16 %v672, %v671
    %v853 = vpack.c.b16 %v674, %v673
    %v854 = vpack.c.b16 %v676, %v675
    %v855 = vpack.c.b16 %v678, %v677
    %v856 = vpack.c.b16 %v680, %v679
    %v857 = vpack.c.b16 %v682, %v681
    %v858 = vpack.c.b16 %v684, %v683
    %v859 = vpack.c.b16 %v686, %v685
    %v860 = vpack.c.b16 %v688, %v687
    %v861 = vpack.c.b16 %v690, %v689
    %v862 = vpack.c.b16 %v692, %v691
    %v863 = vpack.c.b16 %v694, %v693
    %v864 = vpack.c.b16 %v696, %v695
    %v865 = vpack.c.b16 %v698, %v697
    %v866 = vpack.c.b16 %v700, %v699
    %v867 = vpack.c.b16 %v702, %v701
    %v868 = vpack.c.b16 %v704, %v703
    %v869 = vpack.c.b16 %v706, %v705
    %v870 = vpack.c.b16 %v708, %v707
    %v871 = vpack.c.b16 %v710, %v709
    %v872 = vpack.c.b16 %v712, %v711
    %v873 = vpack.c.b16 %v714, %v713
    %v874 = vpack.c.b16 %v716, %v715
    %v875 = vpack.c.b16 %v718, %v717
    %v876 = vpack.c.b16 %v720, %v719
    %v877 = vpack.c.b16 %v722, %v721
    %v878 = vpack.c.b16 %v724, %v723
    %v879 = vpack.c.b16 %v726, %v725
    %v880 = vpack.c.b16 %v728, %v727
    %v881 = vpack.c.b16 %v730, %v729
    %v882 = vpack.c.b16 %v732, %v731
    %v883 = vpack.c.b16 %v734, %v733
    %v884 = vpack.c.b16 %v736, %v735
    %v885 = vpack.c.b16 %v738, %v737
    %v886 = vpack.c.b16 %v740, %v739
    %v887 = vpack.c.b16 %v742, %v741
    %v888 = vpack.c.b16 %v744, %v743
    %v889 = vpack.c.b16 %v746, %v745
    %v890 = vpack.c.b16 %v748, %v747
    %v891 = vpack.c.b16 %v750, %v749
    %v892 = vpack.c.b16 %v752, %v751
    %v893 = vpack.c.b16 %v754, %v753
    %v894 = vpack.c.b16 %v756, %v755
    %v895 = vpack.c.b16 %v758, %v757
    %v896 = vpack.c.b16 %v760, %v759
    %v897 = vpack.c.b16 %v762, %v761
    %v898 = vpack.c.b16 %v764, %v763
    %v899 = vpack.c.b16 %v766, %v765
    %v900 = vpack.c.b16 %v768, %v767
    %v901 = vpack.c.b16 %v770, %v769
    %v902 = vpack.c.b16 %v772, %v771
    %v903 = vpack.c.b16 %v774, %v773
    %v904 = vpack.c.b16 %v776, %v775
    %v905 = vpack.c.b16 %v778, %v777
    %v906 = vpack.c.b16 %v780, %v779
    %v907 = vpack.c.b16 %v782, %v781
    %v908 = vpack.c.b16 %v784, %v783
    %v909 = vpack.c.b16 %v786, %v785
    %v910 = vpack.c.b16 %v788, %v787
    %v911 = vpack.c.b16 %v790, %v789
    %v912 = vpack.c.b16 %v792, %v791
    %v913 = vpack.c.b16 %v794, %v793
    %v914 = vpack.c.b16 %v796, %v795
    %v915 = vpack.c.b16 %v798, %v797
    %v916 = vpack.c.b16 %v800, %v799
    %v917 = vpack.c.b16 %v802, %v801
    %v918 = vpack.c.b16 %v804, %v803
    %v919 = vpack.c.b16 %v806, %v805
    %v920 = vpack.c.b16 %v808, %v807
    %1033 = vmatprep.subr.bf16.mxu0 0
    %1034 = vmatpush1.bf16.msra.mxu0 %v816
    %1035 = vmatprep.subr.bf16.mxu0 0
    %1036 = vmatpush1.bf16.msra.mxu0 %v815
    %1037 = vmatprep.subr.bf16.mxu0 0
    %1038 = vmatpush1.bf16.msra.mxu0 %v814
    %1039 = vmatprep.subr.bf16.mxu0 0
    %1040 = vmatpush1.bf16.msra.mxu0 %v813
    %1041 = vmatprep.subr.bf16.mxu0 0
    %1042 = vmatpush1.bf16.msra.mxu0 %v812
    %1043 = vmatprep.subr.bf16.mxu0 0
    %1044 = vmatpush1.bf16.msra.mxu0 %v811
    %1045 = vmatprep.subr.bf16.mxu0 0
    %1046 = vmatpush1.bf16.msra.mxu0 %v810
    %1047 = vmatprep.subr.bf16.mxu0 0
    %1048 = vmatpush1.bf16.msra.mxu0 %v809
    %1049 = vmatprep.subr.bf16.mxu0 0
    %1050 = vmatpush2.bf16.msra.mxu0 %v824
    %1051 = vmatprep.subr.bf16.mxu0 0
    %1052 = vmatpush2.bf16.msra.mxu0 %v823
    %1053 = vmatprep.subr.bf16.mxu0 0
    %1054 = vmatpush2.bf16.msra.mxu0 %v822
    %1055 = vmatprep.subr.bf16.mxu0 0
    %1056 = vmatpush2.bf16.msra.mxu0 %v821
    %1057 = vmatprep.subr.bf16.mxu0 0
    %1058 = vmatpush2.bf16.msra.mxu0 %v820
    %1059 = vmatprep.subr.bf16.mxu0 0
    %1060 = vmatpush2.bf16.msra.mxu0 %v819
    %1061 = vmatprep.subr.bf16.mxu0 0
    %1062 = vmatpush2.bf16.msra.mxu0 %v818
    %1063 = vmatprep.subr.bf16.mxu0 0
    %1064 = vmatpush2.bf16.msra.mxu0 %v817
    %1065 = vmatprep.mubr.bf16.mxu0 %v288
    %1066 = vmatmul.mubr.bf16.gmra.mxu0 %v274
    %v1067 = vpop.f32.mrf.mxu0
    %v1068 = vadd.f32 %v247, %v1067
    %v1069 = vpop.f32.mrf.mxu0
    %v1070 = vpop.f32.mrf.mxu0
    %v1071 = vpop.f32.mrf.mxu0
    %1072 = vdwg.mxu0
    %1073 = vmatprep.subr.bf16.mxu0 0
    %1074 = vmatpush1.bf16.msra.mxu0 %v832
    %1075 = vmatprep.subr.bf16.mxu0 0
    %1076 = vmatpush1.bf16.msra.mxu0 %v831
    %1077 = vmatprep.subr.bf16.mxu0 0
    %1078 = vmatpush1.bf16.msra.mxu0 %v830
    %1079 = vmatprep.subr.bf16.mxu0 0
    %1080 = vmatpush1.bf16.msra.mxu0 %v829
    %1081 = vmatprep.subr.bf16.mxu0 0
    %1082 = vmatpush1.bf16.msra.mxu0 %v828
    %1083 = vmatprep.subr.bf16.mxu0 0
    %1084 = vmatpush1.bf16.msra.mxu0 %v827
    %1085 = vmatprep.subr.bf16.mxu0 0
    %1086 = vmatpush1.bf16.msra.mxu0 %v826
    %1087 = vmatprep.subr.bf16.mxu0 0
    %1088 = vmatpush1.bf16.msra.mxu0 %v825
    %1089 = vmatprep.subr.bf16.mxu0 0
    %1090 = vmatpush2.bf16.msra.mxu0 %v840
    %1091 = vmatprep.subr.bf16.mxu0 0
    %1092 = vmatpush2.bf16.msra.mxu0 %v839
    %1093 = vmatprep.subr.bf16.mxu0 0
    %1094 = vmatpush2.bf16.msra.mxu0 %v838
    %1095 = vmatprep.subr.bf16.mxu0 0
    %1096 = vmatpush2.bf16.msra.mxu0 %v837
    %1097 = vmatprep.subr.bf16.mxu0 0
    %1098 = vmatpush2.bf16.msra.mxu0 %v836
    %1099 = vmatprep.subr.bf16.mxu0 0
    %1100 = vmatpush2.bf16.msra.mxu0 %v835
    %1101 = vmatprep.subr.bf16.mxu0 0
    %1102 = vmatpush2.bf16.msra.mxu0 %v834
    %1103 = vmatprep.subr.bf16.mxu0 0
    %1104 = vmatpush2.bf16.msra.mxu0 %v833
    %1105 = vmatprep.mubr.bf16.mxu0 %v298
    %1106 = vmatmul.mubr.bf16.gmra.mxu0 %v296
    %v1107 = vpop.f32.mrf.mxu0
    %v1108 = vadd.f32 %v1068, %v1107
    %v1109 = vpop.f32.mrf.mxu0
    %v1110 = vpop.f32.mrf.mxu0
    %v1111 = vpop.f32.mrf.mxu0
    %1112 = vdwg.mxu0
    %1113 = vmatprep.subr.bf16.mxu0 0
    %1114 = vmatpush1.bf16.msra.mxu0 %v848
    %1115 = vmatprep.subr.bf16.mxu0 0
    %1116 = vmatpush1.bf16.msra.mxu0 %v847
    %1117 = vmatprep.subr.bf16.mxu0 0
    %1118 = vmatpush1.bf16.msra.mxu0 %v846
    %1119 = vmatprep.subr.bf16.mxu0 0
    %1120 = vmatpush1.bf16.msra.mxu0 %v845
    %1121 = vmatprep.subr.bf16.mxu0 0
    %1122 = vmatpush1.bf16.msra.mxu0 %v844
    %1123 = vmatprep.subr.bf16.mxu0 0
    %1124 = vmatpush1.bf16.msra.mxu0 %v843
    %1125 = vmatprep.subr.bf16.mxu0 0
    %1126 = vmatpush1.bf16.msra.mxu0 %v842
    %1127 = vmatprep.subr.bf16.mxu0 0
    %1128 = vmatpush1.bf16.msra.mxu0 %v841
    %1129 = vmatprep.subr.bf16.mxu0 0
    %1130 = vmatpush2.bf16.msra.mxu0 %v856
    %1131 = vmatprep.subr.bf16.mxu0 0
    %1132 = vmatpush2.bf16.msra.mxu0 %v855
    %1133 = vmatprep.subr.bf16.mxu0 0
    %1134 = vmatpush2.bf16.msra.mxu0 %v854
    %1135 = vmatprep.subr.bf16.mxu0 0
    %1136 = vmatpush2.bf16.msra.mxu0 %v853
    %1137 = vmatprep.subr.bf16.mxu0 0
    %1138 = vmatpush2.bf16.msra.mxu0 %v852
    %1139 = vmatprep.subr.bf16.mxu0 0
    %1140 = vmatpush2.bf16.msra.mxu0 %v851
    %1141 = vmatprep.subr.bf16.mxu0 0
    %1142 = vmatpush2.bf16.msra.mxu0 %v850
    %1143 = vmatprep.subr.bf16.mxu0 0
    %1144 = vmatpush2.bf16.msra.mxu0 %v849
    %1145 = vmatprep.mubr.bf16.mxu0 %v295
    %1146 = vmatmul.mubr.bf16.gmra.mxu0 %v281
    %v1147 = vpop.f32.mrf.mxu0
    %v1148 = vadd.f32 %v1108, %v1147
    %v1149 = vpop.f32.mrf.mxu0
    %v1150 = vpop.f32.mrf.mxu0
    %v1151 = vpop.f32.mrf.mxu0
    %1152 = vdwg.mxu0
    %1153 = vmatprep.subr.bf16.mxu0 0
    %1154 = vmatpush1.bf16.msra.mxu0 %v864
    %1155 = vmatprep.subr.bf16.mxu0 0
    %1156 = vmatpush1.bf16.msra.mxu0 %v863
    %1157 = vmatprep.subr.bf16.mxu0 0
    %1158 = vmatpush1.bf16.msra.mxu0 %v862
    %1159 = vmatprep.subr.bf16.mxu0 0
    %1160 = vmatpush1.bf16.msra.mxu0 %v861
    %1161 = vmatprep.subr.bf16.mxu0 0
    %1162 = vmatpush1.bf16.msra.mxu0 %v860
    %1163 = vmatprep.subr.bf16.mxu0 0
    %1164 = vmatpush1.bf16.msra.mxu0 %v859
    %1165 = vmatprep.subr.bf16.mxu0 0
    %1166 = vmatpush1.bf16.msra.mxu0 %v858
    %1167 = vmatprep.subr.bf16.mxu0 0
    %1168 = vmatpush1.bf16.msra.mxu0 %v857
    %1169 = vmatprep.subr.bf16.mxu0 0
    %1170 = vmatpush2.bf16.msra.mxu0 %v872
    %1171 = vmatprep.subr.bf16.mxu0 0
    %1172 = vmatpush2.bf16.msra.mxu0 %v871
    %1173 = vmatprep.subr.bf16.mxu0 0
    %1174 = vmatpush2.bf16.msra.mxu0 %v870
    %1175 = vmatprep.subr.bf16.mxu0 0
    %1176 = vmatpush2.bf16.msra.mxu0 %v869
    %1177 = vmatprep.subr.bf16.mxu0 0
    %1178 = vmatpush2.bf16.msra.mxu0 %v868
    %1179 = vmatprep.subr.bf16.mxu0 0
    %1180 = vmatpush2.bf16.msra.mxu0 %v867
    %1181 = vmatprep.subr.bf16.mxu0 0
    %1182 = vmatpush2.bf16.msra.mxu0 %v866
    %1183 = vmatprep.subr.bf16.mxu0 0
    %1184 = vmatpush2.bf16.msra.mxu0 %v865
    %1185 = vmatprep.mubr.bf16.mxu0 %v299
    %1186 = vmatmul.mubr.bf16.gmra.mxu0 %v297
    %v1187 = vpop.f32.mrf.mxu0
    %v1188 = vadd.f32 %v1148, %v1187
    %v1189 = vpop.f32.mrf.mxu0
    %v1190 = vpop.f32.mrf.mxu0
    %v1191 = vpop.f32.mrf.mxu0
    %1192 = vdwg.mxu0
    %1193 = vmatprep.subr.bf16.mxu0 0
    %1194 = vmatpush1.bf16.msra.mxu0 %v880
    %1195 = vmatprep.subr.bf16.mxu0 0
    %1196 = vmatpush1.bf16.msra.mxu0 %v879
    %1197 = vmatprep.subr.bf16.mxu0 0
    %1198 = vmatpush1.bf16.msra.mxu0 %v878
    %1199 = vmatprep.subr.bf16.mxu0 0
    %1200 = vmatpush1.bf16.msra.mxu0 %v877
    %1201 = vmatprep.subr.bf16.mxu0 0
    %1202 = vmatpush1.bf16.msra.mxu0 %v876
    %1203 = vmatprep.subr.bf16.mxu0 0
    %1204 = vmatpush1.bf16.msra.mxu0 %v875
    %1205 = vmatprep.subr.bf16.mxu0 0
    %1206 = vmatpush1.bf16.msra.mxu0 %v874
    %1207 = vmatprep.subr.bf16.mxu0 0
    %1208 = vmatpush1.bf16.msra.mxu0 %v873
    %1209 = vmatprep.subr.bf16.mxu0 0
    %1210 = vmatpush2.bf16.msra.mxu0 %v888
    %1211 = vmatprep.subr.bf16.mxu0 0
    %1212 = vmatpush2.bf16.msra.mxu0 %v887
    %1213 = vmatprep.subr.bf16.mxu0 0
    %1214 = vmatpush2.bf16.msra.mxu0 %v886
    %1215 = vmatprep.subr.bf16.mxu0 0
    %1216 = vmatpush2.bf16.msra.mxu0 %v885
    %1217 = vmatprep.subr.bf16.mxu0 0
    %1218 = vmatpush2.bf16.msra.mxu0 %v884
    %1219 = vmatprep.subr.bf16.mxu0 0
    %1220 = vmatpush2.bf16.msra.mxu0 %v883
    %1221 = vmatprep.subr.bf16.mxu0 0
    %1222 = vmatpush2.bf16.msra.mxu0 %v882
    %1223 = vmatprep.subr.bf16.mxu0 0
    %1224 = vmatpush2.bf16.msra.mxu0 %v881
    %1225 = vmatprep.mubr.bf16.mxu0 %v337
    %1226 = vmatmul.mubr.bf16.gmra.mxu0 %v323
    %v1227 = vpop.f32.mrf.mxu0
    %v1228 = vadd.f32 %v1188, %v1227
    %v1229 = vpop.f32.mrf.mxu0
    %v1230 = vpop.f32.mrf.mxu0
    %v1231 = vpop.f32.mrf.mxu0
    %1232 = vdwg.mxu0
    %1233 = vmatprep.subr.bf16.mxu0 0
    %1234 = vmatpush1.bf16.msra.mxu0 %v896
    %1235 = vmatprep.subr.bf16.mxu0 0
    %1236 = vmatpush1.bf16.msra.mxu0 %v895
    %1237 = vmatprep.subr.bf16.mxu0 0
    %1238 = vmatpush1.bf16.msra.mxu0 %v894
    %1239 = vmatprep.subr.bf16.mxu0 0
    %1240 = vmatpush1.bf16.msra.mxu0 %v893
    %1241 = vmatprep.subr.bf16.mxu0 0
    %1242 = vmatpush1.bf16.msra.mxu0 %v892
    %1243 = vmatprep.subr.bf16.mxu0 0
    %1244 = vmatpush1.bf16.msra.mxu0 %v891
    %1245 = vmatprep.subr.bf16.mxu0 0
    %1246 = vmatpush1.bf16.msra.mxu0 %v890
    %1247 = vmatprep.subr.bf16.mxu0 0
    %1248 = vmatpush1.bf16.msra.mxu0 %v889
    %1249 = vmatprep.subr.bf16.mxu0 0
    %1250 = vmatpush2.bf16.msra.mxu0 %v904
    %1251 = vmatprep.subr.bf16.mxu0 0
    %1252 = vmatpush2.bf16.msra.mxu0 %v903
    %1253 = vmatprep.subr.bf16.mxu0 0
    %1254 = vmatpush2.bf16.msra.mxu0 %v902
    %1255 = vmatprep.subr.bf16.mxu0 0
    %1256 = vmatpush2.bf16.msra.mxu0 %v901
    %1257 = vmatprep.subr.bf16.mxu0 0
    %1258 = vmatpush2.bf16.msra.mxu0 %v900
    %1259 = vmatprep.subr.bf16.mxu0 0
    %1260 = vmatpush2.bf16.msra.mxu0 %v899
    %1261 = vmatprep.subr.bf16.mxu0 0
    %1262 = vmatpush2.bf16.msra.mxu0 %v898
    %1263 = vmatprep.subr.bf16.mxu0 0
    %1264 = vmatpush2.bf16.msra.mxu0 %v897
    %1265 = vmatprep.mubr.bf16.mxu0 %v346
    %1266 = vmatmul.mubr.bf16.gmra.mxu0 %v345
    %v1267 = vpop.f32.mrf.mxu0
    %v1268 = vadd.f32 %v1228, %v1267
    %v1269 = vpop.f32.mrf.mxu0
    %v1270 = vpop.f32.mrf.mxu0
    %v1271 = vpop.f32.mrf.mxu0
    %1272 = vdwg.mxu0
    %1273 = vmatprep.subr.bf16.mxu0 0
    %1274 = vmatpush1.bf16.msra.mxu0 %v912
    %1275 = vmatprep.subr.bf16.mxu0 0
    %1276 = vmatpush1.bf16.msra.mxu0 %v911
    %1277 = vmatprep.subr.bf16.mxu0 0
    %1278 = vmatpush1.bf16.msra.mxu0 %v910
    %1279 = vmatprep.subr.bf16.mxu0 0
    %1280 = vmatpush1.bf16.msra.mxu0 %v909
    %1281 = vmatprep.subr.bf16.mxu0 0
    %1282 = vmatpush1.bf16.msra.mxu0 %v908
    %1283 = vmatprep.subr.bf16.mxu0 0
    %1284 = vmatpush1.bf16.msra.mxu0 %v907
    %1285 = vmatprep.subr.bf16.mxu0 0
    %1286 = vmatpush1.bf16.msra.mxu0 %v906
    %1287 = vmatprep.subr.bf16.mxu0 0
    %1288 = vmatpush1.bf16.msra.mxu0 %v905
    %1289 = vmatprep.subr.bf16.mxu0 0
    %1290 = vmatpush2.bf16.msra.mxu0 %v920
    %1291 = vmatprep.subr.bf16.mxu0 0
    %1292 = vmatpush2.bf16.msra.mxu0 %v919
    %1293 = vmatprep.subr.bf16.mxu0 0
    %1294 = vmatpush2.bf16.msra.mxu0 %v918
    %1295 = vmatprep.subr.bf16.mxu0 0
    %1296 = vmatpush2.bf16.msra.mxu0 %v917
    %1297 = vmatprep.subr.bf16.mxu0 0
    %1298 = vmatpush2.bf16.msra.mxu0 %v916
    %1299 = vmatprep.subr.bf16.mxu0 0
    %1300 = vmatpush2.bf16.msra.mxu0 %v915
    %1301 = vmatprep.subr.bf16.mxu0 0
    %1302 = vmatpush2.bf16.msra.mxu0 %v914
    %1303 = vmatprep.subr.bf16.mxu0 0
    %1304 = vmatpush2.bf16.msra.mxu0 %v913
    %1305 = vmatprep.mubr.bf16.mxu0 %v344
    %1306 = vmatmul.mubr.bf16.gmra.mxu0 %v330
    %v1307 = vpop.f32.mrf.mxu0
    %v1308 = vadd.f32 %v1268, %v1307
    %v1309 = vpop.f32.mrf.mxu0
    %v1310 = vpop.f32.mrf.mxu0
    %v1311 = vpop.f32.mrf.mxu0
    %1312 = vdwg.mxu0
    %vm1313 = vcmask 9216
    %1314 = vst.msk [vmem:[#allocation2] sm:$0x3] %vm1313, %v1308
    // Predicated region
    $region14: #{dqn_forward.7} parent=1 // pred_check
      _
    $region15: #{dqn_forward.7} parent=1 // pred_check_branch
      %1316 = sbr.rel (0) target = $region17
    $region16: #{dqn_forward.7} parent=1 // pred_region
      %s1318 = ssub.s32 32, 32
      %1319 = vsyncadd [#allocation3], %s1318
      %s1321 = sshll.u32 [#allocation2], 4
      %s1322 = int_to_ptr.vmem [resolvable:$true] %s1321
      %1324 = dma.vmem_to_hbm [thread:$0]  %s1322, 32, %s3, [#allocation3]
    $region17: #{dqn_forward.7} parent=1 // pred_fallthru
      _
    // Predicated region
    $region18: #{dqn_forward.7} parent=1 // pred_check
      _
    $region19: #{dqn_forward.7} parent=1 // pred_check_branch
      %1326 = sbr.rel (0) target = $region21
    $region20: #{dqn_forward.7} parent=1 // pred_region
      %1327 = dma.done [#allocation3], 32
    $region21: #{dqn_forward.7} parent=1 // pred_fallthru
      _
    %1328 = vsyncpa [#allocation3], 1

// kernel: dqn_forward.6
$region0: #{dqn_forward.6}
  #allocation0 [shape = 'u32[]', space=smem, size = 0x4, offset = 0x4, fixed_abs, tag = 'smem constant byte address 0x4 - core index']
  #allocation1 [shape = 'u32[144,128]{1,0:T(1,128)}', space=vmem, size = 0x12000, scoped, tag = 'internal scratch']
  %s0 = inlined_call_operand.vmem [shape: bf16[28,3200], index: 0, kind: input, shape index: {}]
  %s1 = inlined_call_operand.vmem [shape: bf16[3200,128], index: 1, kind: input, shape index: {}]
  %s2 = inlined_call_operand.vmem [shape: f32[1,128], index: 2, kind: input, shape index: {}]
  %s3 = inlined_call_operand.vmem [shape: bf16[28,128], index: 3, kind: output, shape index: {}]
  %s4 = sld [smem:[#allocation0]]
  $region22: #{dqn_forward.6} parent=0
    _
  %s6 = ssub.s32 1, %s4
  %s7 = scalar_select 0, %s6, %s4
  // Predicated region
  $region2: #{dqn_forward.6} parent=0 // pred_check
    _
  $region3: #{dqn_forward.6} parent=0 // pred_check_branch
    %9 = sbr.rel (0) target = $region5
  $region4: #{dqn_forward.6} parent=0 // pred_region
    _
  $region5: #{dqn_forward.6} parent=0 // pred_fallthru
    _
  // Predicated region
  $region6: #{dqn_forward.6} parent=0 // pred_check
    _
  $region7: #{dqn_forward.6} parent=0 // pred_check_branch
    %11 = sbr.rel (0) target = $region9
  $region8: #{dqn_forward.6} parent=0 // pred_region
    _
  $region9: #{dqn_forward.6} parent=0 // pred_fallthru
    _
  // Predicated region
  $region10: #{dqn_forward.6} parent=0 // pred_check
    _
  $region11: #{dqn_forward.6} parent=0 // pred_check_branch
    %13 = sbr.rel (0) target = $region13
  $region12: #{dqn_forward.6} parent=0 // pred_region
    _
  $region13: #{dqn_forward.6} parent=0 // pred_fallthru
    _
  %v15 = vld [vmem:[%s0] sm:$0xff]
  %v16 = vld [vmem:[%s0 + $0x8] sm:$0xff]
  %v17 = vld [vmem:[%s0 + $0x10] sm:$0xff]
  %v18 = vld [vmem:[%s0 + $0x18] sm:$0xff]
  %v19 = vld [vmem:[%s0 + $0x20] sm:$0xff]
  %v20 = vld [vmem:[%s0 + $0x28] sm:$0xff]
  %v21 = vld [vmem:[%s0 + $0x30] sm:$0xff]
  %v22 = vld [vmem:[%s0 + $0x38] sm:$0xff]
  %v23 = vld [vmem:[%s0 + $0x40] sm:$0xff]
  %v24 = vld [vmem:[%s0 + $0x48] sm:$0xff]
  %v25 = vld [vmem:[%s0 + $0x50] sm:$0xff]
  %v26 = vld [vmem:[%s0 + $0x58] sm:$0xff]
  %v27 = vld [vmem:[%s0 + $0x60] sm:$0xf]
  %v28 = vld [vmem:[%s0 + $0x64] sm:$0xff]
  %v29 = vld [vmem:[%s0 + $0x6c] sm:$0xff]
  %v30 = vld [vmem:[%s0 + $0x74] sm:$0xff]
  %v31 = vld [vmem:[%s0 + $0x7c] sm:$0xff]
  %v32 = vld [vmem:[%s0 + $0x84] sm:$0xff]
  %v33 = vld [vmem:[%s0 + $0x8c] sm:$0xff]
  %v34 = vld [vmem:[%s0 + $0x94] sm:$0xff]
  %v35 = vld [vmem:[%s0 + $0x9c] sm:$0xff]
  %v36 = vld [vmem:[%s0 + $0xa4] sm:$0xff]
  %v37 = vld [vmem:[%s0 + $0xac] sm:$0xff]
  %v38 = vld [vmem:[%s0 + $0xb4] sm:$0xff]
  %v39 = vld [vmem:[%s0 + $0xbc] sm:$0xff]
  %v40 = vld [vmem:[%s0 + $0xc4] sm:$0xf]
  %v41 = vld [vmem:[%s0 + $0xc8] sm:$0xff]
  %v42 = vld [vmem:[%s0 + $0xd0] sm:$0xff]
  %v43 = vld [vmem:[%s0 + $0xd8] sm:$0xff]
  %v44 = vld [vmem:[%s0 + $0xe0] sm:$0xff]
  %v45 = vld [vmem:[%s0 + $0xe8] sm:$0xff]
  %v46 = vld [vmem:[%s0 + $0xf0] sm:$0xff]
  %v47 = vld [vmem:[%s0 + $0xf8] sm:$0xff]
  %v48 = vld [vmem:[%s0 + $0x100] sm:$0xff]
  %v49 = vld [vmem:[%s0 + $0x108] sm:$0xff]
  %v50 = vld [vmem:[%s0 + $0x110] sm:$0xff]
  %v51 = vld [vmem:[%s0 + $0x118] sm:$0xff]
  %v52 = vld [vmem:[%s0 + $0x120] sm:$0xff]
  %v53 = vld [vmem:[%s0 + $0x128] sm:$0xf]
  %v54 = vld [vmem:[%s0 + $0x12c] sm:$0x33]
  %v55 = vld [vmem:[%s0 + $0x134] sm:$0x33]
  %v56 = vld [vmem:[%s0 + $0x13c] sm:$0x33]
  %v57 = vld [vmem:[%s0 + $0x144] sm:$0x33]
  %v58 = vld [vmem:[%s0 + $0x14c] sm:$0x33]
  %v59 = vld [vmem:[%s0 + $0x154] sm:$0x33]
  %v60 = vld [vmem:[%s0 + $0x15c] sm:$0x33]
  %v61 = vld [vmem:[%s0 + $0x164] sm:$0x33]
  %v62 = vld [vmem:[%s0 + $0x16c] sm:$0x33]
  %v63 = vld [vmem:[%s0 + $0x174] sm:$0x33]
  %v64 = vld [vmem:[%s0 + $0x17c] sm:$0x33]
  %v65 = vld [vmem:[%s0 + $0x184] sm:$0x33]
  %v66 = vld [vmem:[%s0 + $0x18c] sm:$0x3]
  %v67 = vld [vmem:[%s1] sm:$0xf]
  %v68 = vld [vmem:[%s1 + $0x4] sm:$0xf]
  %v69 = vld [vmem:[%s1 + $0x8] sm:$0xf]
  %v70 = vld [vmem:[%s1 + $0xc] sm:$0xf]
  %v71 = vld [vmem:[%s1 + $0x10] sm:$0xf]
  %v72 = vld [vmem:[%s1 + $0x14] sm:$0xf]
  %v73 = vld [vmem:[%s1 + $0x18] sm:$0xf]
  %v74 = vld [vmem:[%s1 + $0x1c] sm:$0xf]
  %v75 = vld [vmem:[%s1 + $0x20] sm:$0xf]
  %v76 = vld [vmem:[%s1 + $0x24] sm:$0xf]
  %v77 = vld [vmem:[%s1 + $0x28] sm:$0xf]
  %v78 = vld [vmem:[%s1 + $0x2c] sm:$0xf]
  %v79 = vld [vmem:[%s1 + $0x30] sm:$0xf]
  %v80 = vld [vmem:[%s1 + $0x34] sm:$0xf]
  %v81 = vld [vmem:[%s1 + $0x38] sm:$0xf]
  %v82 = vld [vmem:[%s1 + $0x3c] sm:$0xf]
  %v83 = vld [vmem:[%s1 + $0x40] sm:$0xf]
  %v84 = vld [vmem:[%s1 + $0x44] sm:$0xf]
  %v85 = vld [vmem:[%s1 + $0x48] sm:$0xf]
  %v86 = vld [vmem:[%s1 + $0x4c] sm:$0xf]
  %v87 = vld [vmem:[%s1 + $0x50] sm:$0xf]
  %v88 = vld [vmem:[%s1 + $0x54] sm:$0xf]
  %v89 = vld [vmem:[%s1 + $0x58] sm:$0xf]
  %v90 = vld [vmem:[%s1 + $0x5c] sm:$0xf]
  %v91 = vld [vmem:[%s1 + $0x60] sm:$0xf]
  %v92 = vld [vmem:[%s1 + $0x64] sm:$0xf]
  %v93 = vld [vmem:[%s1 + $0x68] sm:$0xf]
  %v94 = vld [vmem:[%s1 + $0x6c] sm:$0xf]
  %v95 = vld [vmem:[%s1 + $0x70] sm:$0xf]
  %v96 = vld [vmem:[%s1 + $0x74] sm:$0xf]
  %v97 = vld [vmem:[%s1 + $0x78] sm:$0xf]
  %v98 = vld [vmem:[%s1 + $0x7c] sm:$0xf]
  %v99 = vld [vmem:[%s1 + $0x80] sm:$0xf]
  %v100 = vld [vmem:[%s1 + $0x84] sm:$0xf]
  %v101 = vld [vmem:[%s1 + $0x88] sm:$0xf]
  %v102 = vld [vmem:[%s1 + $0x8c] sm:$0xf]
  %v103 = vld [vmem:[%s1 + $0x90] sm:$0xf]
  %v104 = vld [vmem:[%s1 + $0x94] sm:$0xf]
  %v105 = vld [vmem:[%s1 + $0x98] sm:$0xf]
  %v106 = vld [vmem:[%s1 + $0x9c] sm:$0xf]
  %v107 = vld [vmem:[%s1 + $0xa0] sm:$0xf]
  %v108 = vld [vmem:[%s1 + $0xa4] sm:$0xf]
  %v109 = vld [vmem:[%s1 + $0xa8] sm:$0xf]
  %v110 = vld [vmem:[%s1 + $0xac] sm:$0xf]
  %v111 = vld [vmem:[%s1 + $0xb0] sm:$0xf]
  %v112 = vld [vmem:[%s1 + $0xb4] sm:$0xf]
  %v113 = vld [vmem:[%s1 + $0xb8] sm:$0xf]
  %v114 = vld [vmem:[%s1 + $0xbc] sm:$0xf]
  %v115 = vld [vmem:[%s1 + $0xc0] sm:$0xf]
  %v116 = vld [vmem:[%s1 + $0xc4] sm:$0xf]
  %v117 = vld [vmem:[%s1 + $0xc8] sm:$0xf]
  %v118 = vld [vmem:[%s1 + $0xcc] sm:$0xf]
  %v119 = vld [vmem:[%s1 + $0xd0] sm:$0xf]
  %v120 = vld [vmem:[%s1 + $0xd4] sm:$0xf]
  %v121 = vld [vmem:[%s1 + $0xd8] sm:$0xf]
  %v122 = vld [vmem:[%s1 + $0xdc] sm:$0xf]
  %v123 = vld [vmem:[%s1 + $0xe0] sm:$0xf]
  %v124 = vld [vmem:[%s1 + $0xe4] sm:$0xf]
  %v125 = vld [vmem:[%s1 + $0xe8] sm:$0xf]
  %v126 = vld [vmem:[%s1 + $0xec] sm:$0xf]
  %v127 = vld [vmem:[%s1 + $0xf0] sm:$0xf]
  %v128 = vld [vmem:[%s1 + $0xf4] sm:$0xf]
  %v129 = vld [vmem:[%s1 + $0xf8] sm:$0xf]
  %v130 = vld [vmem:[%s1 + $0xfc] sm:$0xf]
  %v131 = vld [vmem:[%s1 + $0x100] sm:$0xf]
  %v132 = vld [vmem:[%s1 + $0x104] sm:$0xf]
  %v133 = vld [vmem:[%s1 + $0x108] sm:$0xf]
  %v134 = vld [vmem:[%s1 + $0x10c] sm:$0xf]
  %v135 = vld [vmem:[%s1 + $0x110] sm:$0xf]
  %v136 = vld [vmem:[%s1 + $0x114] sm:$0xf]
  %v137 = vld [vmem:[%s1 + $0x118] sm:$0xf]
  %v138 = vld [vmem:[%s1 + $0x11c] sm:$0xf]
  %v139 = vld [vmem:[%s1 + $0x120] sm:$0xf]
  %v140 = vld [vmem:[%s1 + $0x124] sm:$0xf]
  %v141 = vld [vmem:[%s1 + $0x128] sm:$0xf]
  %v142 = vld [vmem:[%s1 + $0x12c] sm:$0xf]
  %v143 = vld [vmem:[%s1 + $0x130] sm:$0xf]
  %v144 = vld [vmem:[%s1 + $0x134] sm:$0xf]
  %v145 = vld [vmem:[%s1 + $0x138] sm:$0xf]
  %v146 = vld [vmem:[%s1 + $0x13c] sm:$0xf]
  %v147 = vld [vmem:[%s1 + $0x140] sm:$0xf]
  %v148 = vld [vmem:[%s1 + $0x144] sm:$0xf]
  %v149 = vld [vmem:[%s1 + $0x148] sm:$0xf]
  %v150 = vld [vmem:[%s1 + $0x14c] sm:$0xf]
  %v151 = vld [vmem:[%s1 + $0x150] sm:$0xf]
  %v152 = vld [vmem:[%s1 + $0x154] sm:$0xf]
  %v153 = vld [vmem:[%s1 + $0x158] sm:$0xf]
  %v154 = vld [vmem:[%s1 + $0x15c] sm:$0xf]
  %v155 = vld [vmem:[%s1 + $0x160] sm:$0xf]
  %v156 = vld [vmem:[%s1 + $0x164] sm:$0xf]
  %v157 = vld [vmem:[%s1 + $0x168] sm:$0xf]
  %v158 = vld [vmem:[%s1 + $0x16c] sm:$0xf]
  %v159 = vld [vmem:[%s1 + $0x170] sm:$0xf]
  %v160 = vld [vmem:[%s1 + $0x174] sm:$0xf]
  %v161 = vld [vmem:[%s1 + $0x178] sm:$0xf]
  %v162 = vld [vmem:[%s1 + $0x17c] sm:$0xf]
  %v163 = vld [vmem:[%s1 + $0x180] sm:$0xf]
  %v164 = vld [vmem:[%s1 + $0x184] sm:$0xf]
  %v165 = vld [vmem:[%s1 + $0x188] sm:$0xf]
  %v166 = vld [vmem:[%s1 + $0x18c] sm:$0xf]
  %v167 = vld [vmem:[%s1 + $0x190] sm:$0xf]
  %v168 = vld [vmem:[%s1 + $0x194] sm:$0xf]
  %v169 = vld [vmem:[%s1 + $0x198] sm:$0xf]
  %v170 = vld [vmem:[%s1 + $0x19c] sm:$0xf]
  %v171 = vld [vmem:[%s1 + $0x1a0] sm:$0xf]
  %v172 = vld [vmem:[%s1 + $0x1a4] sm:$0xf]
  %v173 = vld [vmem:[%s1 + $0x1a8] sm:$0xf]
  %v174 = vld [vmem:[%s1 + $0x1ac] sm:$0xf]
  %v175 = vld [vmem:[%s1 + $0x1b0] sm:$0xf]
  %v176 = vld [vmem:[%s1 + $0x1b4] sm:$0xf]
  %v177 = vld [vmem:[%s1 + $0x1b8] sm:$0xf]
  %v178 = vld [vmem:[%s1 + $0x1bc] sm:$0xf]
  %v179 = vld [vmem:[%s1 + $0x1c0] sm:$0xf]
  %v180 = vld [vmem:[%s1 + $0x1c4] sm:$0xf]
  %v181 = vld [vmem:[%s1 + $0x1c8] sm:$0xf]
  %v182 = vld [vmem:[%s1 + $0x1cc] sm:$0xf]
  %v183 = vld [vmem:[%s1 + $0x1d0] sm:$0xf]
  %v184 = vld [vmem:[%s1 + $0x1d4] sm:$0xf]
  %v185 = vld [vmem:[%s1 + $0x1d8] sm:$0xf]
  %v186 = vld [vmem:[%s1 + $0x1dc] sm:$0xf]
  %v187 = vld [vmem:[%s1 + $0x1e0] sm:$0xf]
  %v188 = vld [vmem:[%s1 + $0x1e4] sm:$0xf]
  %v189 = vld [vmem:[%s1 + $0x1e8] sm:$0xf]
  %v190 = vld [vmem:[%s1 + $0x1ec] sm:$0xf]
  %v191 = vld [vmem:[%s1 + $0x1f0] sm:$0xf]
  %v192 = vld [vmem:[%s1 + $0x1f4] sm:$0xf]
  %v193 = vld [vmem:[%s1 + $0x1f8] sm:$0xf]
  %v194 = vld [vmem:[%s1 + $0x1fc] sm:$0xf]
  %v195 = vld [vmem:[%s1 + $0x200] sm:$0xf]
  %v196 = vld [vmem:[%s1 + $0x204] sm:$0xf]
  %v197 = vld [vmem:[%s1 + $0x208] sm:$0xf]
  %v198 = vld [vmem:[%s1 + $0x20c] sm:$0xf]
  %v199 = vld [vmem:[%s1 + $0x210] sm:$0xf]
  %v200 = vld [vmem:[%s1 + $0x214] sm:$0xf]
  %v201 = vld [vmem:[%s1 + $0x218] sm:$0xf]
  %v202 = vld [vmem:[%s1 + $0x21c] sm:$0xf]
  %v203 = vld [vmem:[%s1 + $0x220] sm:$0xf]
  %v204 = vld [vmem:[%s1 + $0x224] sm:$0xf]
  %v205 = vld [vmem:[%s1 + $0x228] sm:$0xf]
  %v206 = vld [vmem:[%s1 + $0x22c] sm:$0xf]
  %v207 = vld [vmem:[%s1 + $0x230] sm:$0xf]
  %v208 = vld [vmem:[%s1 + $0x234] sm:$0xf]
  %v209 = vld [vmem:[%s1 + $0x238] sm:$0xf]
  %v210 = vld [vmem:[%s1 + $0x23c] sm:$0xf]
  %v211 = vld [vmem:[%s1 + $0x240] sm:$0xf]
  %v212 = vld [vmem:[%s1 + $0x244] sm:$0xf]
  %v213 = vld [vmem:[%s1 + $0x248] sm:$0xf]
  %v214 = vld [vmem:[%s1 + $0x24c] sm:$0xf]
  %v215 = vld [vmem:[%s1 + $0x250] sm:$0xf]
  %v216 = vld [vmem:[%s1 + $0x254] sm:$0xf]
  %v217 = vld [vmem:[%s1 + $0x258] sm:$0xf]
  %v218 = vld [vmem:[%s1 + $0x25c] sm:$0xf]
  %v219 = vld [vmem:[%s1 + $0x260] sm:$0xf]
  %v220 = vld [vmem:[%s1 + $0x264] sm:$0xf]
  %v221 = vld [vmem:[%s1 + $0x268] sm:$0xf]
  %v222 = vld [vmem:[%s1 + $0x26c] sm:$0xf]
  %v223 = vld [vmem:[%s1 + $0x270] sm:$0xf]
  %v224 = vld [vmem:[%s1 + $0x274] sm:$0xf]
  %v225 = vld [vmem:[%s1 + $0x278] sm:$0xf]
  %v226 = vld [vmem:[%s1 + $0x27c] sm:$0xf]
  %v227 = vld [vmem:[%s1 + $0x280] sm:$0xf]
  %v228 = vld [vmem:[%s1 + $0x284] sm:$0xf]
  %v229 = vld [vmem:[%s1 + $0x288] sm:$0xf]
  %v230 = vld [vmem:[%s1 + $0x28c] sm:$0xf]
  %v231 = vld [vmem:[%s1 + $0x290] sm:$0xf]
  %v232 = vld [vmem:[%s1 + $0x294] sm:$0xf]
  %v233 = vld [vmem:[%s1 + $0x298] sm:$0xf]
  %v234 = vld [vmem:[%s1 + $0x29c] sm:$0xf]
  %v235 = vld [vmem:[%s1 + $0x2a0] sm:$0xf]
  %v236 = vld [vmem:[%s1 + $0x2a4] sm:$0xf]
  %v237 = vld [vmem:[%s1 + $0x2a8] sm:$0xf]
  %v238 = vld [vmem:[%s1 + $0x2ac] sm:$0xf]
  %v239 = vld [vmem:[%s1 + $0x2b0] sm:$0xf]
  %v240 = vld [vmem:[%s1 + $0x2b4] sm:$0xf]
  %v241 = vld [vmem:[%s1 + $0x2b8] sm:$0xf]
  %v242 = vld [vmem:[%s1 + $0x2bc] sm:$0xf]
  %v243 = vld [vmem:[%s1 + $0x2c0] sm:$0xf]
  %v244 = vld [vmem:[%s1 + $0x2c4] sm:$0xf]
  %v245 = vld [vmem:[%s1 + $0x2c8] sm:$0xf]
  %v246 = vld [vmem:[%s1 + $0x2cc] sm:$0xf]
  %v247 = vld [vmem:[%s1 + $0x2d0] sm:$0xf]
  %v248 = vld [vmem:[%s1 + $0x2d4] sm:$0xf]
  %v249 = vld [vmem:[%s1 + $0x2d8] sm:$0xf]
  %v250 = vld [vmem:[%s1 + $0x2dc] sm:$0xf]
  %v251 = vld [vmem:[%s1 + $0x2e0] sm:$0xf]
  %v252 = vld [vmem:[%s1 + $0x2e4] sm:$0xf]
  %v253 = vld [vmem:[%s1 + $0x2e8] sm:$0xf]
  %v254 = vld [vmem:[%s1 + $0x2ec] sm:$0xf]
  %v255 = vld [vmem:[%s1 + $0x2f0] sm:$0xf]
  %v256 = vld [vmem:[%s1 + $0x2f4] sm:$0xf]
  %v257 = vld [vmem:[%s1 + $0x2f8] sm:$0xf]
  %v258 = vld [vmem:[%s1 + $0x2fc] sm:$0xf]
  %v259 = vld [vmem:[%s1 + $0x300] sm:$0xf]
  %v260 = vld [vmem:[%s1 + $0x304] sm:$0xf]
  %v261 = vld [vmem:[%s1 + $0x308] sm:$0xf]
  %v262 = vld [vmem:[%s1 + $0x30c] sm:$0xf]
  %v263 = vld [vmem:[%s1 + $0x310] sm:$0xf]
  %v264 = vld [vmem:[%s1 + $0x314] sm:$0xf]
  %v265 = vld [vmem:[%s1 + $0x318] sm:$0xf]
  %v266 = vld [vmem:[%s1 + $0x31c] sm:$0xf]
  %v267 = vld [vmem:[%s1 + $0x320] sm:$0xf]
  %v268 = vld [vmem:[%s1 + $0x324] sm:$0xf]
  %v269 = vld [vmem:[%s1 + $0x328] sm:$0xf]
  %v270 = vld [vmem:[%s1 + $0x32c] sm:$0xf]
  %v271 = vld [vmem:[%s1 + $0x330] sm:$0xf]
  %v272 = vld [vmem:[%s1 + $0x334] sm:$0xf]
  %v273 = vld [vmem:[%s1 + $0x338] sm:$0xf]
  %v274 = vld [vmem:[%s1 + $0x33c] sm:$0xf]
  %v275 = vld [vmem:[%s1 + $0x340] sm:$0xf]
  %v276 = vld [vmem:[%s1 + $0x344] sm:$0xf]
  %v277 = vld [vmem:[%s1 + $0x348] sm:$0xf]
  %v278 = vld [vmem:[%s1 + $0x34c] sm:$0xf]
  %v279 = vld [vmem:[%s1 + $0x350] sm:$0xf]
  %v280 = vld [vmem:[%s1 + $0x354] sm:$0xf]
  %v281 = vld [vmem:[%s1 + $0x358] sm:$0xf]
  %v282 = vld [vmem:[%s1 + $0x35c] sm:$0xf]
  %v283 = vld [vmem:[%s1 + $0x360] sm:$0xf]
  %v284 = vld [vmem:[%s1 + $0x364] sm:$0xf]
  %v285 = vld [vmem:[%s1 + $0x368] sm:$0xf]
  %v286 = vld [vmem:[%s1 + $0x36c] sm:$0xf]
  %v287 = vld [vmem:[%s1 + $0x370] sm:$0xf]
  %v288 = vld [vmem:[%s1 + $0x374] sm:$0xf]
  %v289 = vld [vmem:[%s1 + $0x378] sm:$0xf]
  %v290 = vld [vmem:[%s1 + $0x37c] sm:$0xf]
  %v291 = vld [vmem:[%s1 + $0x380] sm:$0xf]
  %v292 = vld [vmem:[%s1 + $0x384] sm:$0xf]
  %v293 = vld [vmem:[%s1 + $0x388] sm:$0xf]
  %v294 = vld [vmem:[%s1 + $0x38c] sm:$0xf]
  %v295 = vld [vmem:[%s1 + $0x390] sm:$0xf]
  %v296 = vld [vmem:[%s1 + $0x394] sm:$0xf]
  %v297 = vld [vmem:[%s1 + $0x398] sm:$0xf]
  %v298 = vld [vmem:[%s1 + $0x39c] sm:$0xf]
  %v299 = vld [vmem:[%s1 + $0x3a0] sm:$0xf]
  %v300 = vld [vmem:[%s1 + $0x3a4] sm:$0xf]
  %v301 = vld [vmem:[%s1 + $0x3a8] sm:$0xf]
  %v302 = vld [vmem:[%s1 + $0x3ac] sm:$0xf]
  %v303 = vld [vmem:[%s1 + $0x3b0] sm:$0xf]
  %v304 = vld [vmem:[%s1 + $0x3b4] sm:$0xf]
  %v305 = vld [vmem:[%s1 + $0x3b8] sm:$0xf]
  %v306 = vld [vmem:[%s1 + $0x3bc] sm:$0xf]
  %v307 = vld [vmem:[%s1 + $0x3c0] sm:$0xf]
  %v308 = vld [vmem:[%s1 + $0x3c4] sm:$0xf]
  %v309 = vld [vmem:[%s1 + $0x3c8] sm:$0xf]
  %v310 = vld [vmem:[%s1 + $0x3cc] sm:$0xf]
  %v311 = vld [vmem:[%s1 + $0x3d0] sm:$0xf]
  %v312 = vld [vmem:[%s1 + $0x3d4] sm:$0xf]
  %v313 = vld [vmem:[%s1 + $0x3d8] sm:$0xf]
  %v314 = vld [vmem:[%s1 + $0x3dc] sm:$0xf]
  %v315 = vld [vmem:[%s1 + $0x3e0] sm:$0xf]
  %v316 = vld [vmem:[%s1 + $0x3e4] sm:$0xf]
  %v317 = vld [vmem:[%s1 + $0x3e8] sm:$0xf]
  %v318 = vld [vmem:[%s1 + $0x3ec] sm:$0xf]
  %v319 = vld [vmem:[%s1 + $0x3f0] sm:$0xf]
  %v320 = vld [vmem:[%s1 + $0x3f4] sm:$0xf]
  %v321 = vld [vmem:[%s1 + $0x3f8] sm:$0xf]
  %v322 = vld [vmem:[%s1 + $0x3fc] sm:$0xf]
  %v323 = vld [vmem:[%s1 + $0x400] sm:$0xf]
  %v324 = vld [vmem:[%s1 + $0x404] sm:$0xf]
  %v325 = vld [vmem:[%s1 + $0x408] sm:$0xf]
  %v326 = vld [vmem:[%s1 + $0x40c] sm:$0xf]
  %v327 = vld [vmem:[%s1 + $0x410] sm:$0xf]
  %v328 = vld [vmem:[%s1 + $0x414] sm:$0xf]
  %v329 = vld [vmem:[%s1 + $0x418] sm:$0xf]
  %v330 = vld [vmem:[%s1 + $0x41c] sm:$0xf]
  %v331 = vld [vmem:[%s1 + $0x420] sm:$0xf]
  %v332 = vld [vmem:[%s1 + $0x424] sm:$0xf]
  %v333 = vld [vmem:[%s1 + $0x428] sm:$0xf]
  %v334 = vld [vmem:[%s1 + $0x42c] sm:$0xf]
  %v335 = vld [vmem:[%s1 + $0x430] sm:$0xf]
  %v336 = vld [vmem:[%s1 + $0x434] sm:$0xf]
  %v337 = vld [vmem:[%s1 + $0x438] sm:$0xf]
  %v338 = vld [vmem:[%s1 + $0x43c] sm:$0xf]
  %v339 = vld [vmem:[%s1 + $0x440] sm:$0xf]
  %v340 = vld [vmem:[%s1 + $0x444] sm:$0xf]
  %v341 = vld [vmem:[%s1 + $0x448] sm:$0xf]
  %v342 = vld [vmem:[%s1 + $0x44c] sm:$0xf]
  %v343 = vld [vmem:[%s1 + $0x450] sm:$0xf]
  %v344 = vld [vmem:[%s1 + $0x454] sm:$0xf]
  %v345 = vld [vmem:[%s1 + $0x458] sm:$0xf]
  %v346 = vld [vmem:[%s1 + $0x45c] sm:$0xf]
  %v347 = vld [vmem:[%s1 + $0x460] sm:$0xf]
  %v348 = vld [vmem:[%s1 + $0x464] sm:$0xf]
  %v349 = vld [vmem:[%s1 + $0x468] sm:$0xf]
  %v350 = vld [vmem:[%s1 + $0x46c] sm:$0xf]
  %v351 = vld [vmem:[%s1 + $0x470] sm:$0xf]
  %v352 = vld [vmem:[%s1 + $0x474] sm:$0xf]
  %v353 = vld [vmem:[%s1 + $0x478] sm:$0xf]
  %v354 = vld [vmem:[%s1 + $0x47c] sm:$0xf]
  %v355 = vld [vmem:[%s1 + $0x480] sm:$0xf]
  %v356 = vld [vmem:[%s1 + $0x484] sm:$0xf]
  %v357 = vld [vmem:[%s1 + $0x488] sm:$0xf]
  %v358 = vld [vmem:[%s1 + $0x48c] sm:$0xf]
  %v359 = vld [vmem:[%s1 + $0x490] sm:$0xf]
  %v360 = vld [vmem:[%s1 + $0x494] sm:$0xf]
  %v361 = vld [vmem:[%s1 + $0x498] sm:$0xf]
  %v362 = vld [vmem:[%s1 + $0x49c] sm:$0xf]
  %v363 = vld [vmem:[%s1 + $0x4a0] sm:$0xf]
  %v364 = vld [vmem:[%s1 + $0x4a4] sm:$0xf]
  %v365 = vld [vmem:[%s1 + $0x4a8] sm:$0xf]
  %v366 = vld [vmem:[%s1 + $0x4ac] sm:$0xf]
  %v367 = vld [vmem:[%s1 + $0x4b0] sm:$0xf]
  %v368 = vld [vmem:[%s1 + $0x4b4] sm:$0xf]
  %v369 = vld [vmem:[%s1 + $0x4b8] sm:$0xf]
  %v370 = vld [vmem:[%s1 + $0x4bc] sm:$0xf]
  %v371 = vld [vmem:[%s1 + $0x4c0] sm:$0xf]
  %v372 = vld [vmem:[%s1 + $0x4c4] sm:$0xf]
  %v373 = vld [vmem:[%s1 + $0x4c8] sm:$0xf]
  %v374 = vld [vmem:[%s1 + $0x4cc] sm:$0xf]
  %v375 = vld [vmem:[%s1 + $0x4d0] sm:$0xf]
  %v376 = vld [vmem:[%s1 + $0x4d4] sm:$0xf]
  %v377 = vld [vmem:[%s1 + $0x4d8] sm:$0xf]
  %v378 = vld [vmem:[%s1 + $0x4dc] sm:$0xf]
  %v379 = vld [vmem:[%s1 + $0x4e0] sm:$0xf]
  %v380 = vld [vmem:[%s1 + $0x4e4] sm:$0xf]
  %v381 = vld [vmem:[%s1 + $0x4e8] sm:$0xf]
  %v382 = vld [vmem:[%s1 + $0x4ec] sm:$0xf]
  %v383 = vld [vmem:[%s1 + $0x4f0] sm:$0xf]
  %v384 = vld [vmem:[%s1 + $0x4f4] sm:$0xf]
  %v385 = vld [vmem:[%s1 + $0x4f8] sm:$0xf]
  %v386 = vld [vmem:[%s1 + $0x4fc] sm:$0xf]
  %v387 = vld [vmem:[%s1 + $0x500] sm:$0xf]
  %v388 = vld [vmem:[%s1 + $0x504] sm:$0xf]
  %v389 = vld [vmem:[%s1 + $0x508] sm:$0xf]
  %v390 = vld [vmem:[%s1 + $0x50c] sm:$0xf]
  %v391 = vld [vmem:[%s1 + $0x510] sm:$0xf]
  %v392 = vld [vmem:[%s1 + $0x514] sm:$0xf]
  %v393 = vld [vmem:[%s1 + $0x518] sm:$0xf]
  %v394 = vld [vmem:[%s1 + $0x51c] sm:$0xf]
  %v395 = vld [vmem:[%s1 + $0x520] sm:$0xf]
  %v396 = vld [vmem:[%s1 + $0x524] sm:$0xf]
  %v397 = vld [vmem:[%s1 + $0x528] sm:$0xf]
  %v398 = vld [vmem:[%s1 + $0x52c] sm:$0xf]
  %v399 = vld [vmem:[%s1 + $0x530] sm:$0xf]
  %v400 = vld [vmem:[%s1 + $0x534] sm:$0xf]
  %v401 = vld [vmem:[%s1 + $0x538] sm:$0xf]
  %v402 = vld [vmem:[%s1 + $0x53c] sm:$0xf]
  %v403 = vld [vmem:[%s1 + $0x540] sm:$0xf]
  %v404 = vld [vmem:[%s1 + $0x544] sm:$0xf]
  %v405 = vld [vmem:[%s1 + $0x548] sm:$0xf]
  %v406 = vld [vmem:[%s1 + $0x54c] sm:$0xf]
  %v407 = vld [vmem:[%s1 + $0x550] sm:$0xf]
  %v408 = vld [vmem:[%s1 + $0x554] sm:$0xf]
  %v409 = vld [vmem:[%s1 + $0x558] sm:$0xf]
  %v410 = vld [vmem:[%s1 + $0x55c] sm:$0xf]
  %v411 = vld [vmem:[%s1 + $0x560] sm:$0xf]
  %v412 = vld [vmem:[%s1 + $0x564] sm:$0xf]
  %v413 = vld [vmem:[%s1 + $0x568] sm:$0xf]
  %v414 = vld [vmem:[%s1 + $0x56c] sm:$0xf]
  %v415 = vld [vmem:[%s1 + $0x570] sm:$0xf]
  %v416 = vld [vmem:[%s1 + $0x574] sm:$0xf]
  %v417 = vld [vmem:[%s1 + $0x578] sm:$0xf]
  %v418 = vld [vmem:[%s1 + $0x57c] sm:$0xf]
  %v419 = vld [vmem:[%s1 + $0x580] sm:$0xf]
  %v420 = vld [vmem:[%s1 + $0x584] sm:$0xf]
  %v421 = vld [vmem:[%s1 + $0x588] sm:$0xf]
  %v422 = vld [vmem:[%s1 + $0x58c] sm:$0xf]
  %v423 = vld [vmem:[%s1 + $0x590] sm:$0xf]
  %v424 = vld [vmem:[%s1 + $0x594] sm:$0xf]
  %v425 = vld [vmem:[%s1 + $0x598] sm:$0xf]
  %v426 = vld [vmem:[%s1 + $0x59c] sm:$0xf]
  %v427 = vld [vmem:[%s1 + $0x5a0] sm:$0xf]
  %v428 = vld [vmem:[%s1 + $0x5a4] sm:$0xf]
  %v429 = vld [vmem:[%s1 + $0x5a8] sm:$0xf]
  %v430 = vld [vmem:[%s1 + $0x5ac] sm:$0xf]
  %v431 = vld [vmem:[%s1 + $0x5b0] sm:$0xf]
  %v432 = vld [vmem:[%s1 + $0x5b4] sm:$0xf]
  %v433 = vld [vmem:[%s1 + $0x5b8] sm:$0xf]
  %v434 = vld [vmem:[%s1 + $0x5bc] sm:$0xf]
  %v435 = vld [vmem:[%s1 + $0x5c0] sm:$0xf]
  %v436 = vld [vmem:[%s1 + $0x5c4] sm:$0xf]
  %v437 = vld [vmem:[%s1 + $0x5c8] sm:$0xf]
  %v438 = vld [vmem:[%s1 + $0x5cc] sm:$0xf]
  %v439 = vld [vmem:[%s1 + $0x5d0] sm:$0xf]
  %v440 = vld [vmem:[%s1 + $0x5d4] sm:$0xf]
  %v441 = vld [vmem:[%s1 + $0x5d8] sm:$0xf]
  %v442 = vld [vmem:[%s1 + $0x5dc] sm:$0xf]
  %v443 = vld [vmem:[%s1 + $0x5e0] sm:$0xf]
  %v444 = vld [vmem:[%s1 + $0x5e4] sm:$0xf]
  %v445 = vld [vmem:[%s1 + $0x5e8] sm:$0xf]
  %v446 = vld [vmem:[%s1 + $0x5ec] sm:$0xf]
  %v447 = vld [vmem:[%s1 + $0x5f0] sm:$0xf]
  %v448 = vld [vmem:[%s1 + $0x5f4] sm:$0xf]
  %v449 = vld [vmem:[%s1 + $0x5f8] sm:$0xf]
  %v450 = vld [vmem:[%s1 + $0x5fc] sm:$0xf]
  %v451 = vld [vmem:[%s1 + $0x600] sm:$0xf]
  %v452 = vld [vmem:[%s1 + $0x604] sm:$0xf]
  %v453 = vld [vmem:[%s1 + $0x608] sm:$0xf]
  %v454 = vld [vmem:[%s1 + $0x60c] sm:$0xf]
  %v455 = vld [vmem:[%s1 + $0x610] sm:$0xf]
  %v456 = vld [vmem:[%s1 + $0x614] sm:$0xf]
  %v457 = vld [vmem:[%s1 + $0x618] sm:$0xf]
  %v458 = vld [vmem:[%s1 + $0x61c] sm:$0xf]
  %v459 = vld [vmem:[%s1 + $0x620] sm:$0xf]
  %v460 = vld [vmem:[%s1 + $0x624] sm:$0xf]
  %v461 = vld [vmem:[%s1 + $0x628] sm:$0xf]
  %v462 = vld [vmem:[%s1 + $0x62c] sm:$0xf]
  %v463 = vld [vmem:[%s1 + $0x630] sm:$0xf]
  %v464 = vld [vmem:[%s1 + $0x634] sm:$0xf]
  %v465 = vld [vmem:[%s1 + $0x638] sm:$0xf]
  %v466 = vld [vmem:[%s1 + $0x63c] sm:$0xf]
  %v467 = vld [vmem:[%s2] sm:$0x1]
  %v469 = vlaneseq
  %v470 = vshrl.u32 %v469, 7
  %v471 = vsub.s32 0, %v470
  %v472 = vrot.slane %v467, %v471
  %v526 = vunpack.c.l.b16 %v15
  %v527 = vunpack.c.h.b16 %v15
  %v528 = vunpack.c.l.b16 %v16
  %v529 = vunpack.c.h.b16 %v16
  %v530 = vunpack.c.l.b16 %v17
  %v531 = vunpack.c.h.b16 %v17
  %v532 = vunpack.c.l.b16 %v18
  %v533 = vunpack.c.h.b16 %v18
  %v534 = vunpack.c.l.b16 %v19
  %v535 = vunpack.c.h.b16 %v19
  %v536 = vunpack.c.l.b16 %v20
  %v537 = vunpack.c.h.b16 %v20
  %v538 = vunpack.c.l.b16 %v21
  %v539 = vunpack.c.h.b16 %v21
  %v540 = vunpack.c.l.b16 %v22
  %v541 = vunpack.c.h.b16 %v22
  %v542 = vunpack.c.l.b16 %v23
  %v543 = vunpack.c.h.b16 %v23
  %v544 = vunpack.c.l.b16 %v24
  %v545 = vunpack.c.h.b16 %v24
  %v546 = vunpack.c.l.b16 %v25
  %v547 = vunpack.c.h.b16 %v25
  %v548 = vunpack.c.l.b16 %v26
  %v549 = vunpack.c.h.b16 %v26
  %v550 = vunpack.c.l.b16 %v27
  %v551 = vunpack.c.l.b16 %v28
  %v552 = vunpack.c.h.b16 %v28
  %v553 = vunpack.c.l.b16 %v29
  %v554 = vunpack.c.h.b16 %v29
  %v555 = vunpack.c.l.b16 %v30
  %v556 = vunpack.c.h.b16 %v30
  %v557 = vunpack.c.l.b16 %v31
  %v558 = vunpack.c.h.b16 %v31
  %v559 = vunpack.c.l.b16 %v32
  %v560 = vunpack.c.h.b16 %v32
  %v561 = vunpack.c.l.b16 %v33
  %v562 = vunpack.c.h.b16 %v33
  %v563 = vunpack.c.l.b16 %v34
  %v564 = vunpack.c.h.b16 %v34
  %v565 = vunpack.c.l.b16 %v35
  %v566 = vunpack.c.h.b16 %v35
  %v567 = vunpack.c.l.b16 %v36
  %v568 = vunpack.c.h.b16 %v36
  %v569 = vunpack.c.l.b16 %v37
  %v570 = vunpack.c.h.b16 %v37
  %v571 = vunpack.c.l.b16 %v38
  %v572 = vunpack.c.h.b16 %v38
  %v573 = vunpack.c.l.b16 %v39
  %v574 = vunpack.c.h.b16 %v39
  %v575 = vunpack.c.l.b16 %v40
  %v576 = vunpack.c.l.b16 %v41
  %v577 = vunpack.c.h.b16 %v41
  %v578 = vunpack.c.l.b16 %v42
  %v579 = vunpack.c.h.b16 %v42
  %v580 = vunpack.c.l.b16 %v43
  %v581 = vunpack.c.h.b16 %v43
  %v582 = vunpack.c.l.b16 %v44
  %v583 = vunpack.c.h.b16 %v44
  %v584 = vunpack.c.l.b16 %v45
  %v585 = vunpack.c.h.b16 %v45
  %v586 = vunpack.c.l.b16 %v46
  %v587 = vunpack.c.h.b16 %v46
  %v588 = vunpack.c.l.b16 %v47
  %v589 = vunpack.c.h.b16 %v47
  %v590 = vunpack.c.l.b16 %v48
  %v591 = vunpack.c.h.b16 %v48
  %v592 = vunpack.c.l.b16 %v49
  %v593 = vunpack.c.h.b16 %v49
  %v594 = vunpack.c.l.b16 %v50
  %v595 = vunpack.c.h.b16 %v50
  %v596 = vunpack.c.l.b16 %v51
  %v597 = vunpack.c.h.b16 %v51
  %v598 = vunpack.c.l.b16 %v52
  %v599 = vunpack.c.h.b16 %v52
  %v600 = vunpack.c.l.b16 %v53
  %v601 = vunpack.c.l.b16 %v54
  %v602 = vunpack.c.h.b16 %v54
  %v603 = vunpack.c.l.b16 %v55
  %v604 = vunpack.c.h.b16 %v55
  %v605 = vunpack.c.l.b16 %v56
  %v606 = vunpack.c.h.b16 %v56
  %v607 = vunpack.c.l.b16 %v57
  %v608 = vunpack.c.h.b16 %v57
  %v609 = vunpack.c.l.b16 %v58
  %v610 = vunpack.c.h.b16 %v58
  %v611 = vunpack.c.l.b16 %v59
  %v612 = vunpack.c.h.b16 %v59
  %v613 = vunpack.c.l.b16 %v60
  %v614 = vunpack.c.h.b16 %v60
  %v615 = vunpack.c.l.b16 %v61
  %v616 = vunpack.c.h.b16 %v61
  %v617 = vunpack.c.l.b16 %v62
  %v618 = vunpack.c.h.b16 %v62
  %v619 = vunpack.c.l.b16 %v63
  %v620 = vunpack.c.h.b16 %v63
  %v621 = vunpack.c.l.b16 %v64
  %v622 = vunpack.c.h.b16 %v64
  %v623 = vunpack.c.l.b16 %v65
  %v624 = vunpack.c.h.b16 %v65
  %v625 = vunpack.c.l.b16 %v66
  %v626 = vpack.c.b16 %v551, %v526
  %v627 = vpack.c.b16 %v552, %v527
  %v628 = vpack.c.b16 %v553, %v528
  %v629 = vpack.c.b16 %v554, %v529
  %v630 = vpack.c.b16 %v555, %v530
  %v631 = vpack.c.b16 %v556, %v531
  %v632 = vpack.c.b16 %v557, %v532
  %v633 = vpack.c.b16 %v558, %v533
  %v634 = vpack.c.b16 %v559, %v534
  %v635 = vpack.c.b16 %v560, %v535
  %v636 = vpack.c.b16 %v561, %v536
  %v637 = vpack.c.b16 %v562, %v537
  %v638 = vpack.c.b16 %v563, %v538
  %v639 = vpack.c.b16 %v564, %v539
  %v640 = vpack.c.b16 %v565, %v540
  %v641 = vpack.c.b16 %v566, %v541
  %v642 = vpack.c.b16 %v567, %v542
  %v643 = vpack.c.b16 %v568, %v543
  %v644 = vpack.c.b16 %v569, %v544
  %v645 = vpack.c.b16 %v570, %v545
  %v646 = vpack.c.b16 %v571, %v546
  %v647 = vpack.c.b16 %v572, %v547
  %v648 = vpack.c.b16 %v573, %v548
  %v649 = vpack.c.b16 %v574, %v549
  %v650 = vpack.c.b16 %v575, %v550
  %v651 = vpack.c.b16 %v601, %v576
  %v652 = vpack.c.b16 %v602, %v577
  %v653 = vpack.c.b16 %v603, %v578
  %v654 = vpack.c.b16 %v604, %v579
  %v655 = vpack.c.b16 %v605, %v580
  %v656 = vpack.c.b16 %v606, %v581
  %v657 = vpack.c.b16 %v607, %v582
  %v658 = vpack.c.b16 %v608, %v583
  %v659 = vpack.c.b16 %v609, %v584
  %v660 = vpack.c.b16 %v610, %v585
  %v661 = vpack.c.b16 %v611, %v586
  %v662 = vpack.c.b16 %v612, %v587
  %v663 = vpack.c.b16 %v613, %v588
  %v664 = vpack.c.b16 %v614, %v589
  %v665 = vpack.c.b16 %v615, %v590
  %v666 = vpack.c.b16 %v616, %v591
  %v667 = vpack.c.b16 %v617, %v592
  %v668 = vpack.c.b16 %v618, %v593
  %v669 = vpack.c.b16 %v619, %v594
  %v670 = vpack.c.b16 %v620, %v595
  %v671 = vpack.c.b16 %v621, %v596
  %v672 = vpack.c.b16 %v622, %v597
  %v673 = vpack.c.b16 %v623, %v598
  %v674 = vpack.c.b16 %v624, %v599
  %v675 = vpack.c.b16 %v625, %v600
  %v1126 = vunpack.c.l.b16 %v67
  %v1127 = vunpack.c.l.b16 %v68
  %v1128 = vunpack.c.l.b16 %v69
  %v1129 = vunpack.c.l.b16 %v70
  %v1130 = vunpack.c.l.b16 %v71
  %v1131 = vunpack.c.l.b16 %v72
  %v1132 = vunpack.c.l.b16 %v73
  %v1133 = vunpack.c.l.b16 %v74
  %v1134 = vunpack.c.l.b16 %v75
  %v1135 = vunpack.c.l.b16 %v76
  %v1136 = vunpack.c.l.b16 %v77
  %v1137 = vunpack.c.l.b16 %v78
  %v1138 = vunpack.c.l.b16 %v79
  %v1139 = vunpack.c.l.b16 %v80
  %v1140 = vunpack.c.l.b16 %v81
  %v1141 = vunpack.c.l.b16 %v82
  %v1142 = vunpack.c.l.b16 %v83
  %v1143 = vunpack.c.l.b16 %v84
  %v1144 = vunpack.c.l.b16 %v85
  %v1145 = vunpack.c.l.b16 %v86
  %v1146 = vunpack.c.l.b16 %v87
  %v1147 = vunpack.c.l.b16 %v88
  %v1148 = vunpack.c.l.b16 %v89
  %v1149 = vunpack.c.l.b16 %v90
  %v1150 = vunpack.c.l.b16 %v91
  %v1151 = vunpack.c.l.b16 %v92
  %v1152 = vunpack.c.l.b16 %v93
  %v1153 = vunpack.c.l.b16 %v94
  %v1154 = vunpack.c.l.b16 %v95
  %v1155 = vunpack.c.l.b16 %v96
  %v1156 = vunpack.c.l.b16 %v97
  %v1157 = vunpack.c.l.b16 %v98
  %v1158 = vunpack.c.l.b16 %v99
  %v1159 = vunpack.c.l.b16 %v100
  %v1160 = vunpack.c.l.b16 %v101
  %v1161 = vunpack.c.l.b16 %v102
  %v1162 = vunpack.c.l.b16 %v103
  %v1163 = vunpack.c.l.b16 %v104
  %v1164 = vunpack.c.l.b16 %v105
  %v1165 = vunpack.c.l.b16 %v106
  %v1166 = vunpack.c.l.b16 %v107
  %v1167 = vunpack.c.l.b16 %v108
  %v1168 = vunpack.c.l.b16 %v109
  %v1169 = vunpack.c.l.b16 %v110
  %v1170 = vunpack.c.l.b16 %v111
  %v1171 = vunpack.c.l.b16 %v112
  %v1172 = vunpack.c.l.b16 %v113
  %v1173 = vunpack.c.l.b16 %v114
  %v1174 = vunpack.c.l.b16 %v115
  %v1175 = vunpack.c.l.b16 %v116
  %v1176 = vunpack.c.l.b16 %v117
  %v1177 = vunpack.c.l.b16 %v118
  %v1178 = vunpack.c.l.b16 %v119
  %v1179 = vunpack.c.l.b16 %v120
  %v1180 = vunpack.c.l.b16 %v121
  %v1181 = vunpack.c.l.b16 %v122
  %v1182 = vunpack.c.l.b16 %v123
  %v1183 = vunpack.c.l.b16 %v124
  %v1184 = vunpack.c.l.b16 %v125
  %v1185 = vunpack.c.l.b16 %v126
  %v1186 = vunpack.c.l.b16 %v127
  %v1187 = vunpack.c.l.b16 %v128
  %v1188 = vunpack.c.l.b16 %v129
  %v1189 = vunpack.c.l.b16 %v130
  %v1190 = vunpack.c.l.b16 %v131
  %v1191 = vunpack.c.l.b16 %v132
  %v1192 = vunpack.c.l.b16 %v133
  %v1193 = vunpack.c.l.b16 %v134
  %v1194 = vunpack.c.l.b16 %v135
  %v1195 = vunpack.c.l.b16 %v136
  %v1196 = vunpack.c.l.b16 %v137
  %v1197 = vunpack.c.l.b16 %v138
  %v1198 = vunpack.c.l.b16 %v139
  %v1199 = vunpack.c.l.b16 %v140
  %v1200 = vunpack.c.l.b16 %v141
  %v1201 = vunpack.c.l.b16 %v142
  %v1202 = vunpack.c.l.b16 %v143
  %v1203 = vunpack.c.l.b16 %v144
  %v1204 = vunpack.c.l.b16 %v145
  %v1205 = vunpack.c.l.b16 %v146
  %v1206 = vunpack.c.l.b16 %v147
  %v1207 = vunpack.c.l.b16 %v148
  %v1208 = vunpack.c.l.b16 %v149
  %v1209 = vunpack.c.l.b16 %v150
  %v1210 = vunpack.c.l.b16 %v151
  %v1211 = vunpack.c.l.b16 %v152
  %v1212 = vunpack.c.l.b16 %v153
  %v1213 = vunpack.c.l.b16 %v154
  %v1214 = vunpack.c.l.b16 %v155
  %v1215 = vunpack.c.l.b16 %v156
  %v1216 = vunpack.c.l.b16 %v157
  %v1217 = vunpack.c.l.b16 %v158
  %v1218 = vunpack.c.l.b16 %v159
  %v1219 = vunpack.c.l.b16 %v160
  %v1220 = vunpack.c.l.b16 %v161
  %v1221 = vunpack.c.l.b16 %v162
  %v1222 = vunpack.c.l.b16 %v163
  %v1223 = vunpack.c.l.b16 %v164
  %v1224 = vunpack.c.l.b16 %v165
  %v1225 = vunpack.c.l.b16 %v166
  %v1226 = vunpack.c.l.b16 %v167
  %v1227 = vunpack.c.l.b16 %v168
  %v1228 = vunpack.c.l.b16 %v169
  %v1229 = vunpack.c.l.b16 %v170
  %v1230 = vunpack.c.l.b16 %v171
  %v1231 = vunpack.c.l.b16 %v172
  %v1232 = vunpack.c.l.b16 %v173
  %v1233 = vunpack.c.l.b16 %v174
  %v1234 = vunpack.c.l.b16 %v175
  %v1235 = vunpack.c.l.b16 %v176
  %v1236 = vunpack.c.l.b16 %v177
  %v1237 = vunpack.c.l.b16 %v178
  %v1238 = vunpack.c.l.b16 %v179
  %v1239 = vunpack.c.l.b16 %v180
  %v1240 = vunpack.c.l.b16 %v181
  %v1241 = vunpack.c.l.b16 %v182
  %v1242 = vunpack.c.l.b16 %v183
  %v1243 = vunpack.c.l.b16 %v184
  %v1244 = vunpack.c.l.b16 %v185
  %v1245 = vunpack.c.l.b16 %v186
  %v1246 = vunpack.c.l.b16 %v187
  %v1247 = vunpack.c.l.b16 %v188
  %v1248 = vunpack.c.l.b16 %v189
  %v1249 = vunpack.c.l.b16 %v190
  %v1250 = vunpack.c.l.b16 %v191
  %v1251 = vunpack.c.l.b16 %v192
  %v1252 = vunpack.c.l.b16 %v193
  %v1253 = vunpack.c.l.b16 %v194
  %v1254 = vunpack.c.l.b16 %v195
  %v1255 = vunpack.c.l.b16 %v196
  %v1256 = vunpack.c.l.b16 %v197
  %v1257 = vunpack.c.l.b16 %v198
  %v1258 = vunpack.c.l.b16 %v199
  %v1259 = vunpack.c.l.b16 %v200
  %v1260 = vunpack.c.l.b16 %v201
  %v1261 = vunpack.c.l.b16 %v202
  %v1262 = vunpack.c.l.b16 %v203
  %v1263 = vunpack.c.l.b16 %v204
  %v1264 = vunpack.c.l.b16 %v205
  %v1265 = vunpack.c.l.b16 %v206
  %v1266 = vunpack.c.l.b16 %v207
  %v1267 = vunpack.c.l.b16 %v208
  %v1268 = vunpack.c.l.b16 %v209
  %v1269 = vunpack.c.l.b16 %v210
  %v1270 = vunpack.c.l.b16 %v211
  %v1271 = vunpack.c.l.b16 %v212
  %v1272 = vunpack.c.l.b16 %v213
  %v1273 = vunpack.c.l.b16 %v214
  %v1274 = vunpack.c.l.b16 %v215
  %v1275 = vunpack.c.l.b16 %v216
  %v1276 = vunpack.c.l.b16 %v217
  %v1277 = vunpack.c.l.b16 %v218
  %v1278 = vunpack.c.l.b16 %v219
  %v1279 = vunpack.c.l.b16 %v220
  %v1280 = vunpack.c.l.b16 %v221
  %v1281 = vunpack.c.l.b16 %v222
  %v1282 = vunpack.c.l.b16 %v223
  %v1283 = vunpack.c.l.b16 %v224
  %v1284 = vunpack.c.l.b16 %v225
  %v1285 = vunpack.c.l.b16 %v226
  %v1286 = vunpack.c.l.b16 %v227
  %v1287 = vunpack.c.l.b16 %v228
  %v1288 = vunpack.c.l.b16 %v229
  %v1289 = vunpack.c.l.b16 %v230
  %v1290 = vunpack.c.l.b16 %v231
  %v1291 = vunpack.c.l.b16 %v232
  %v1292 = vunpack.c.l.b16 %v233
  %v1293 = vunpack.c.l.b16 %v234
  %v1294 = vunpack.c.l.b16 %v235
  %v1295 = vunpack.c.l.b16 %v236
  %v1296 = vunpack.c.l.b16 %v237
  %v1297 = vunpack.c.l.b16 %v238
  %v1298 = vunpack.c.l.b16 %v239
  %v1299 = vunpack.c.l.b16 %v240
  %v1300 = vunpack.c.l.b16 %v241
  %v1301 = vunpack.c.l.b16 %v242
  %v1302 = vunpack.c.l.b16 %v243
  %v1303 = vunpack.c.l.b16 %v244
  %v1304 = vunpack.c.l.b16 %v245
  %v1305 = vunpack.c.l.b16 %v246
  %v1306 = vunpack.c.l.b16 %v247
  %v1307 = vunpack.c.l.b16 %v248
  %v1308 = vunpack.c.l.b16 %v249
  %v1309 = vunpack.c.l.b16 %v250
  %v1310 = vunpack.c.l.b16 %v251
  %v1311 = vunpack.c.l.b16 %v252
  %v1312 = vunpack.c.l.b16 %v253
  %v1313 = vunpack.c.l.b16 %v254
  %v1314 = vunpack.c.l.b16 %v255
  %v1315 = vunpack.c.l.b16 %v256
  %v1316 = vunpack.c.l.b16 %v257
  %v1317 = vunpack.c.l.b16 %v258
  %v1318 = vunpack.c.l.b16 %v259
  %v1319 = vunpack.c.l.b16 %v260
  %v1320 = vunpack.c.l.b16 %v261
  %v1321 = vunpack.c.l.b16 %v262
  %v1322 = vunpack.c.l.b16 %v263
  %v1323 = vunpack.c.l.b16 %v264
  %v1324 = vunpack.c.l.b16 %v265
  %v1325 = vunpack.c.l.b16 %v266
  %v1326 = vunpack.c.l.b16 %v267
  %v1327 = vunpack.c.l.b16 %v268
  %v1328 = vunpack.c.l.b16 %v269
  %v1329 = vunpack.c.l.b16 %v270
  %v1330 = vunpack.c.l.b16 %v271
  %v1331 = vunpack.c.l.b16 %v272
  %v1332 = vunpack.c.l.b16 %v273
  %v1333 = vunpack.c.l.b16 %v274
  %v1334 = vunpack.c.l.b16 %v275
  %v1335 = vunpack.c.l.b16 %v276
  %v1336 = vunpack.c.l.b16 %v277
  %v1337 = vunpack.c.l.b16 %v278
  %v1338 = vunpack.c.l.b16 %v279
  %v1339 = vunpack.c.l.b16 %v280
  %v1340 = vunpack.c.l.b16 %v281
  %v1341 = vunpack.c.l.b16 %v282
  %v1342 = vunpack.c.l.b16 %v283
  %v1343 = vunpack.c.l.b16 %v284
  %v1344 = vunpack.c.l.b16 %v285
  %v1345 = vunpack.c.l.b16 %v286
  %v1346 = vunpack.c.l.b16 %v287
  %v1347 = vunpack.c.l.b16 %v288
  %v1348 = vunpack.c.l.b16 %v289
  %v1349 = vunpack.c.l.b16 %v290
  %v1350 = vunpack.c.l.b16 %v291
  %v1351 = vunpack.c.l.b16 %v292
  %v1352 = vunpack.c.l.b16 %v293
  %v1353 = vunpack.c.l.b16 %v294
  %v1354 = vunpack.c.l.b16 %v295
  %v1355 = vunpack.c.l.b16 %v296
  %v1356 = vunpack.c.l.b16 %v297
  %v1357 = vunpack.c.l.b16 %v298
  %v1358 = vunpack.c.l.b16 %v299
  %v1359 = vunpack.c.l.b16 %v300
  %v1360 = vunpack.c.l.b16 %v301
  %v1361 = vunpack.c.l.b16 %v302
  %v1362 = vunpack.c.l.b16 %v303
  %v1363 = vunpack.c.l.b16 %v304
  %v1364 = vunpack.c.l.b16 %v305
  %v1365 = vunpack.c.l.b16 %v306
  %v1366 = vunpack.c.l.b16 %v307
  %v1367 = vunpack.c.l.b16 %v308
  %v1368 = vunpack.c.l.b16 %v309
  %v1369 = vunpack.c.l.b16 %v310
  %v1370 = vunpack.c.l.b16 %v311
  %v1371 = vunpack.c.l.b16 %v312
  %v1372 = vunpack.c.l.b16 %v313
  %v1373 = vunpack.c.l.b16 %v314
  %v1374 = vunpack.c.l.b16 %v315
  %v1375 = vunpack.c.l.b16 %v316
  %v1376 = vunpack.c.l.b16 %v317
  %v1377 = vunpack.c.l.b16 %v318
  %v1378 = vunpack.c.l.b16 %v319
  %v1379 = vunpack.c.l.b16 %v320
  %v1380 = vunpack.c.l.b16 %v321
  %v1381 = vunpack.c.l.b16 %v322
  %v1382 = vunpack.c.l.b16 %v323
  %v1383 = vunpack.c.l.b16 %v324
  %v1384 = vunpack.c.l.b16 %v325
  %v1385 = vunpack.c.l.b16 %v326
  %v1386 = vunpack.c.l.b16 %v327
  %v1387 = vunpack.c.l.b16 %v328
  %v1388 = vunpack.c.l.b16 %v329
  %v1389 = vunpack.c.l.b16 %v330
  %v1390 = vunpack.c.l.b16 %v331
  %v1391 = vunpack.c.l.b16 %v332
  %v1392 = vunpack.c.l.b16 %v333
  %v1393 = vunpack.c.l.b16 %v334
  %v1394 = vunpack.c.l.b16 %v335
  %v1395 = vunpack.c.l.b16 %v336
  %v1396 = vunpack.c.l.b16 %v337
  %v1397 = vunpack.c.l.b16 %v338
  %v1398 = vunpack.c.l.b16 %v339
  %v1399 = vunpack.c.l.b16 %v340
  %v1400 = vunpack.c.l.b16 %v341
  %v1401 = vunpack.c.l.b16 %v342
  %v1402 = vunpack.c.l.b16 %v343
  %v1403 = vunpack.c.l.b16 %v344
  %v1404 = vunpack.c.l.b16 %v345
  %v1405 = vunpack.c.l.b16 %v346
  %v1406 = vunpack.c.l.b16 %v347
  %v1407 = vunpack.c.l.b16 %v348
  %v1408 = vunpack.c.l.b16 %v349
  %v1409 = vunpack.c.l.b16 %v350
  %v1410 = vunpack.c.l.b16 %v351
  %v1411 = vunpack.c.l.b16 %v352
  %v1412 = vunpack.c.l.b16 %v353
  %v1413 = vunpack.c.l.b16 %v354
  %v1414 = vunpack.c.l.b16 %v355
  %v1415 = vunpack.c.l.b16 %v356
  %v1416 = vunpack.c.l.b16 %v357
  %v1417 = vunpack.c.l.b16 %v358
  %v1418 = vunpack.c.l.b16 %v359
  %v1419 = vunpack.c.l.b16 %v360
  %v1420 = vunpack.c.l.b16 %v361
  %v1421 = vunpack.c.l.b16 %v362
  %v1422 = vunpack.c.l.b16 %v363
  %v1423 = vunpack.c.l.b16 %v364
  %v1424 = vunpack.c.l.b16 %v365
  %v1425 = vunpack.c.l.b16 %v366
  %v1426 = vunpack.c.l.b16 %v367
  %v1427 = vunpack.c.l.b16 %v368
  %v1428 = vunpack.c.l.b16 %v369
  %v1429 = vunpack.c.l.b16 %v370
  %v1430 = vunpack.c.l.b16 %v371
  %v1431 = vunpack.c.l.b16 %v372
  %v1432 = vunpack.c.l.b16 %v373
  %v1433 = vunpack.c.l.b16 %v374
  %v1434 = vunpack.c.l.b16 %v375
  %v1435 = vunpack.c.l.b16 %v376
  %v1436 = vunpack.c.l.b16 %v377
  %v1437 = vunpack.c.l.b16 %v378
  %v1438 = vunpack.c.l.b16 %v379
  %v1439 = vunpack.c.l.b16 %v380
  %v1440 = vunpack.c.l.b16 %v381
  %v1441 = vunpack.c.l.b16 %v382
  %v1442 = vunpack.c.l.b16 %v383
  %v1443 = vunpack.c.l.b16 %v384
  %v1444 = vunpack.c.l.b16 %v385
  %v1445 = vunpack.c.l.b16 %v386
  %v1446 = vunpack.c.l.b16 %v387
  %v1447 = vunpack.c.l.b16 %v388
  %v1448 = vunpack.c.l.b16 %v389
  %v1449 = vunpack.c.l.b16 %v390
  %v1450 = vunpack.c.l.b16 %v391
  %v1451 = vunpack.c.l.b16 %v392
  %v1452 = vunpack.c.l.b16 %v393
  %v1453 = vunpack.c.l.b16 %v394
  %v1454 = vunpack.c.l.b16 %v395
  %v1455 = vunpack.c.l.b16 %v396
  %v1456 = vunpack.c.l.b16 %v397
  %v1457 = vunpack.c.l.b16 %v398
  %v1458 = vunpack.c.l.b16 %v399
  %v1459 = vunpack.c.l.b16 %v400
  %v1460 = vunpack.c.l.b16 %v401
  %v1461 = vunpack.c.l.b16 %v402
  %v1462 = vunpack.c.l.b16 %v403
  %v1463 = vunpack.c.l.b16 %v404
  %v1464 = vunpack.c.l.b16 %v405
  %v1465 = vunpack.c.l.b16 %v406
  %v1466 = vunpack.c.l.b16 %v407
  %v1467 = vunpack.c.l.b16 %v408
  %v1468 = vunpack.c.l.b16 %v409
  %v1469 = vunpack.c.l.b16 %v410
  %v1470 = vunpack.c.l.b16 %v411
  %v1471 = vunpack.c.l.b16 %v412
  %v1472 = vunpack.c.l.b16 %v413
  %v1473 = vunpack.c.l.b16 %v414
  %v1474 = vunpack.c.l.b16 %v415
  %v1475 = vunpack.c.l.b16 %v416
  %v1476 = vunpack.c.l.b16 %v417
  %v1477 = vunpack.c.l.b16 %v418
  %v1478 = vunpack.c.l.b16 %v419
  %v1479 = vunpack.c.l.b16 %v420
  %v1480 = vunpack.c.l.b16 %v421
  %v1481 = vunpack.c.l.b16 %v422
  %v1482 = vunpack.c.l.b16 %v423
  %v1483 = vunpack.c.l.b16 %v424
  %v1484 = vunpack.c.l.b16 %v425
  %v1485 = vunpack.c.l.b16 %v426
  %v1486 = vunpack.c.l.b16 %v427
  %v1487 = vunpack.c.l.b16 %v428
  %v1488 = vunpack.c.l.b16 %v429
  %v1489 = vunpack.c.l.b16 %v430
  %v1490 = vunpack.c.l.b16 %v431
  %v1491 = vunpack.c.l.b16 %v432
  %v1492 = vunpack.c.l.b16 %v433
  %v1493 = vunpack.c.l.b16 %v434
  %v1494 = vunpack.c.l.b16 %v435
  %v1495 = vunpack.c.l.b16 %v436
  %v1496 = vunpack.c.l.b16 %v437
  %v1497 = vunpack.c.l.b16 %v438
  %v1498 = vunpack.c.l.b16 %v439
  %v1499 = vunpack.c.l.b16 %v440
  %v1500 = vunpack.c.l.b16 %v441
  %v1501 = vunpack.c.l.b16 %v442
  %v1502 = vunpack.c.l.b16 %v443
  %v1503 = vunpack.c.l.b16 %v444
  %v1504 = vunpack.c.l.b16 %v445
  %v1505 = vunpack.c.l.b16 %v446
  %v1506 = vunpack.c.l.b16 %v447
  %v1507 = vunpack.c.l.b16 %v448
  %v1508 = vunpack.c.l.b16 %v449
  %v1509 = vunpack.c.l.b16 %v450
  %v1510 = vunpack.c.l.b16 %v451
  %v1511 = vunpack.c.l.b16 %v452
  %v1512 = vunpack.c.l.b16 %v453
  %v1513 = vunpack.c.l.b16 %v454
  %v1514 = vunpack.c.l.b16 %v455
  %v1515 = vunpack.c.l.b16 %v456
  %v1516 = vunpack.c.l.b16 %v457
  %v1517 = vunpack.c.l.b16 %v458
  %v1518 = vunpack.c.l.b16 %v459
  %v1519 = vunpack.c.l.b16 %v460
  %v1520 = vunpack.c.l.b16 %v461
  %v1521 = vunpack.c.l.b16 %v462
  %v1522 = vunpack.c.l.b16 %v463
  %v1523 = vunpack.c.l.b16 %v464
  %v1524 = vunpack.c.l.b16 %v465
  %v1525 = vunpack.c.l.b16 %v466
  %v1526 = vpack.c.b16 %v1127, %v1126
  %v1527 = vpack.c.b16 %v1129, %v1128
  %v1528 = vpack.c.b16 %v1131, %v1130
  %v1529 = vpack.c.b16 %v1133, %v1132
  %v1530 = vpack.c.b16 %v1135, %v1134
  %v1531 = vpack.c.b16 %v1137, %v1136
  %v1532 = vpack.c.b16 %v1139, %v1138
  %v1533 = vpack.c.b16 %v1141, %v1140
  %v1534 = vpack.c.b16 %v1143, %v1142
  %v1535 = vpack.c.b16 %v1145, %v1144
  %v1536 = vpack.c.b16 %v1147, %v1146
  %v1537 = vpack.c.b16 %v1149, %v1148
  %v1538 = vpack.c.b16 %v1151, %v1150
  %v1539 = vpack.c.b16 %v1153, %v1152
  %v1540 = vpack.c.b16 %v1155, %v1154
  %v1541 = vpack.c.b16 %v1157, %v1156
  %v1542 = vpack.c.b16 %v1159, %v1158
  %v1543 = vpack.c.b16 %v1161, %v1160
  %v1544 = vpack.c.b16 %v1163, %v1162
  %v1545 = vpack.c.b16 %v1165, %v1164
  %v1546 = vpack.c.b16 %v1167, %v1166
  %v1547 = vpack.c.b16 %v1169, %v1168
  %v1548 = vpack.c.b16 %v1171, %v1170
  %v1549 = vpack.c.b16 %v1173, %v1172
  %v1550 = vpack.c.b16 %v1175, %v1174
  %v1551 = vpack.c.b16 %v1177, %v1176
  %v1552 = vpack.c.b16 %v1179, %v1178
  %v1553 = vpack.c.b16 %v1181, %v1180
  %v1554 = vpack.c.b16 %v1183, %v1182
  %v1555 = vpack.c.b16 %v1185, %v1184
  %v1556 = vpack.c.b16 %v1187, %v1186
  %v1557 = vpack.c.b16 %v1189, %v1188
  %v1558 = vpack.c.b16 %v1191, %v1190
  %v1559 = vpack.c.b16 %v1193, %v1192
  %v1560 = vpack.c.b16 %v1195, %v1194
  %v1561 = vpack.c.b16 %v1197, %v1196
  %v1562 = vpack.c.b16 %v1199, %v1198
  %v1563 = vpack.c.b16 %v1201, %v1200
  %v1564 = vpack.c.b16 %v1203, %v1202
  %v1565 = vpack.c.b16 %v1205, %v1204
  %v1566 = vpack.c.b16 %v1207, %v1206
  %v1567 = vpack.c.b16 %v1209, %v1208
  %v1568 = vpack.c.b16 %v1211, %v1210
  %v1569 = vpack.c.b16 %v1213, %v1212
  %v1570 = vpack.c.b16 %v1215, %v1214
  %v1571 = vpack.c.b16 %v1217, %v1216
  %v1572 = vpack.c.b16 %v1219, %v1218
  %v1573 = vpack.c.b16 %v1221, %v1220
  %v1574 = vpack.c.b16 %v1223, %v1222
  %v1575 = vpack.c.b16 %v1225, %v1224
  %v1576 = vpack.c.b16 %v1227, %v1226
  %v1577 = vpack.c.b16 %v1229, %v1228
  %v1578 = vpack.c.b16 %v1231, %v1230
  %v1579 = vpack.c.b16 %v1233, %v1232
  %v1580 = vpack.c.b16 %v1235, %v1234
  %v1581 = vpack.c.b16 %v1237, %v1236
  %v1582 = vpack.c.b16 %v1239, %v1238
  %v1583 = vpack.c.b16 %v1241, %v1240
  %v1584 = vpack.c.b16 %v1243, %v1242
  %v1585 = vpack.c.b16 %v1245, %v1244
  %v1586 = vpack.c.b16 %v1247, %v1246
  %v1587 = vpack.c.b16 %v1249, %v1248
  %v1588 = vpack.c.b16 %v1251, %v1250
  %v1589 = vpack.c.b16 %v1253, %v1252
  %v1590 = vpack.c.b16 %v1255, %v1254
  %v1591 = vpack.c.b16 %v1257, %v1256
  %v1592 = vpack.c.b16 %v1259, %v1258
  %v1593 = vpack.c.b16 %v1261, %v1260
  %v1594 = vpack.c.b16 %v1263, %v1262
  %v1595 = vpack.c.b16 %v1265, %v1264
  %v1596 = vpack.c.b16 %v1267, %v1266
  %v1597 = vpack.c.b16 %v1269, %v1268
  %v1598 = vpack.c.b16 %v1271, %v1270
  %v1599 = vpack.c.b16 %v1273, %v1272
  %v1600 = vpack.c.b16 %v1275, %v1274
  %v1601 = vpack.c.b16 %v1277, %v1276
  %v1602 = vpack.c.b16 %v1279, %v1278
  %v1603 = vpack.c.b16 %v1281, %v1280
  %v1604 = vpack.c.b16 %v1283, %v1282
  %v1605 = vpack.c.b16 %v1285, %v1284
  %v1606 = vpack.c.b16 %v1287, %v1286
  %v1607 = vpack.c.b16 %v1289, %v1288
  %v1608 = vpack.c.b16 %v1291, %v1290
  %v1609 = vpack.c.b16 %v1293, %v1292
  %v1610 = vpack.c.b16 %v1295, %v1294
  %v1611 = vpack.c.b16 %v1297, %v1296
  %v1612 = vpack.c.b16 %v1299, %v1298
  %v1613 = vpack.c.b16 %v1301, %v1300
  %v1614 = vpack.c.b16 %v1303, %v1302
  %v1615 = vpack.c.b16 %v1305, %v1304
  %v1616 = vpack.c.b16 %v1307, %v1306
  %v1617 = vpack.c.b16 %v1309, %v1308
  %v1618 = vpack.c.b16 %v1311, %v1310
  %v1619 = vpack.c.b16 %v1313, %v1312
  %v1620 = vpack.c.b16 %v1315, %v1314
  %v1621 = vpack.c.b16 %v1317, %v1316
  %v1622 = vpack.c.b16 %v1319, %v1318
  %v1623 = vpack.c.b16 %v1321, %v1320
  %v1624 = vpack.c.b16 %v1323, %v1322
  %v1625 = vpack.c.b16 %v1325, %v1324
  %v1626 = vpack.c.b16 %v1327, %v1326
  %v1627 = vpack.c.b16 %v1329, %v1328
  %v1628 = vpack.c.b16 %v1331, %v1330
  %v1629 = vpack.c.b16 %v1333, %v1332
  %v1630 = vpack.c.b16 %v1335, %v1334
  %v1631 = vpack.c.b16 %v1337, %v1336
  %v1632 = vpack.c.b16 %v1339, %v1338
  %v1633 = vpack.c.b16 %v1341, %v1340
  %v1634 = vpack.c.b16 %v1343, %v1342
  %v1635 = vpack.c.b16 %v1345, %v1344
  %v1636 = vpack.c.b16 %v1347, %v1346
  %v1637 = vpack.c.b16 %v1349, %v1348
  %v1638 = vpack.c.b16 %v1351, %v1350
  %v1639 = vpack.c.b16 %v1353, %v1352
  %v1640 = vpack.c.b16 %v1355, %v1354
  %v1641 = vpack.c.b16 %v1357, %v1356
  %v1642 = vpack.c.b16 %v1359, %v1358
  %v1643 = vpack.c.b16 %v1361, %v1360
  %v1644 = vpack.c.b16 %v1363, %v1362
  %v1645 = vpack.c.b16 %v1365, %v1364
  %v1646 = vpack.c.b16 %v1367, %v1366
  %v1647 = vpack.c.b16 %v1369, %v1368
  %v1648 = vpack.c.b16 %v1371, %v1370
  %v1649 = vpack.c.b16 %v1373, %v1372
  %v1650 = vpack.c.b16 %v1375, %v1374
  %v1651 = vpack.c.b16 %v1377, %v1376
  %v1652 = vpack.c.b16 %v1379, %v1378
  %v1653 = vpack.c.b16 %v1381, %v1380
  %v1654 = vpack.c.b16 %v1383, %v1382
  %v1655 = vpack.c.b16 %v1385, %v1384
  %v1656 = vpack.c.b16 %v1387, %v1386
  %v1657 = vpack.c.b16 %v1389, %v1388
  %v1658 = vpack.c.b16 %v1391, %v1390
  %v1659 = vpack.c.b16 %v1393, %v1392
  %v1660 = vpack.c.b16 %v1395, %v1394
  %v1661 = vpack.c.b16 %v1397, %v1396
  %v1662 = vpack.c.b16 %v1399, %v1398
  %v1663 = vpack.c.b16 %v1401, %v1400
  %v1664 = vpack.c.b16 %v1403, %v1402
  %v1665 = vpack.c.b16 %v1405, %v1404
  %v1666 = vpack.c.b16 %v1407, %v1406
  %v1667 = vpack.c.b16 %v1409, %v1408
  %v1668 = vpack.c.b16 %v1411, %v1410
  %v1669 = vpack.c.b16 %v1413, %v1412
  %v1670 = vpack.c.b16 %v1415, %v1414
  %v1671 = vpack.c.b16 %v1417, %v1416
  %v1672 = vpack.c.b16 %v1419, %v1418
  %v1673 = vpack.c.b16 %v1421, %v1420
  %v1674 = vpack.c.b16 %v1423, %v1422
  %v1675 = vpack.c.b16 %v1425, %v1424
  %v1676 = vpack.c.b16 %v1427, %v1426
  %v1677 = vpack.c.b16 %v1429, %v1428
  %v1678 = vpack.c.b16 %v1431, %v1430
  %v1679 = vpack.c.b16 %v1433, %v1432
  %v1680 = vpack.c.b16 %v1435, %v1434
  %v1681 = vpack.c.b16 %v1437, %v1436
  %v1682 = vpack.c.b16 %v1439, %v1438
  %v1683 = vpack.c.b16 %v1441, %v1440
  %v1684 = vpack.c.b16 %v1443, %v1442
  %v1685 = vpack.c.b16 %v1445, %v1444
  %v1686 = vpack.c.b16 %v1447, %v1446
  %v1687 = vpack.c.b16 %v1449, %v1448
  %v1688 = vpack.c.b16 %v1451, %v1450
  %v1689 = vpack.c.b16 %v1453, %v1452
  %v1690 = vpack.c.b16 %v1455, %v1454
  %v1691 = vpack.c.b16 %v1457, %v1456
  %v1692 = vpack.c.b16 %v1459, %v1458
  %v1693 = vpack.c.b16 %v1461, %v1460
  %v1694 = vpack.c.b16 %v1463, %v1462
  %v1695 = vpack.c.b16 %v1465, %v1464
  %v1696 = vpack.c.b16 %v1467, %v1466
  %v1697 = vpack.c.b16 %v1469, %v1468
  %v1698 = vpack.c.b16 %v1471, %v1470
  %v1699 = vpack.c.b16 %v1473, %v1472
  %v1700 = vpack.c.b16 %v1475, %v1474
  %v1701 = vpack.c.b16 %v1477, %v1476
  %v1702 = vpack.c.b16 %v1479, %v1478
  %v1703 = vpack.c.b16 %v1481, %v1480
  %v1704 = vpack.c.b16 %v1483, %v1482
  %v1705 = vpack.c.b16 %v1485, %v1484
  %v1706 = vpack.c.b16 %v1487, %v1486
  %v1707 = vpack.c.b16 %v1489, %v1488
  %v1708 = vpack.c.b16 %v1491, %v1490
  %v1709 = vpack.c.b16 %v1493, %v1492
  %v1710 = vpack.c.b16 %v1495, %v1494
  %v1711 = vpack.c.b16 %v1497, %v1496
  %v1712 = vpack.c.b16 %v1499, %v1498
  %v1713 = vpack.c.b16 %v1501, %v1500
  %v1714 = vpack.c.b16 %v1503, %v1502
  %v1715 = vpack.c.b16 %v1505, %v1504
  %v1716 = vpack.c.b16 %v1507, %v1506
  %v1717 = vpack.c.b16 %v1509, %v1508
  %v1718 = vpack.c.b16 %v1511, %v1510
  %v1719 = vpack.c.b16 %v1513, %v1512
  %v1720 = vpack.c.b16 %v1515, %v1514
  %v1721 = vpack.c.b16 %v1517, %v1516
  %v1722 = vpack.c.b16 %v1519, %v1518
  %v1723 = vpack.c.b16 %v1521, %v1520
  %v1724 = vpack.c.b16 %v1523, %v1522
  %v1725 = vpack.c.b16 %v1525, %v1524
  %1926 = vmatprep.subr.bf16.mxu0 0
  %1927 = vmatpush1.bf16.msra.mxu0 %v1533
  %1928 = vmatprep.subr.bf16.mxu0 0
  %1929 = vmatpush1.bf16.msra.mxu0 %v1532
  %1930 = vmatprep.subr.bf16.mxu0 0
  %1931 = vmatpush1.bf16.msra.mxu0 %v1531
  %1932 = vmatprep.subr.bf16.mxu0 0
  %1933 = vmatpush1.bf16.msra.mxu0 %v1530
  %1934 = vmatprep.subr.bf16.mxu0 0
  %1935 = vmatpush1.bf16.msra.mxu0 %v1529
  %1936 = vmatprep.subr.bf16.mxu0 0
  %1937 = vmatpush1.bf16.msra.mxu0 %v1528
  %1938 = vmatprep.subr.bf16.mxu0 0
  %1939 = vmatpush1.bf16.msra.mxu0 %v1527
  %1940 = vmatprep.subr.bf16.mxu0 0
  %1941 = vmatpush1.bf16.msra.mxu0 %v1526
  %1942 = vmatprep.subr.bf16.mxu0 0
  %1943 = vmatpush2.bf16.msra.mxu0 %v1541
  %1944 = vmatprep.subr.bf16.mxu0 0
  %1945 = vmatpush2.bf16.msra.mxu0 %v1540
  %1946 = vmatprep.subr.bf16.mxu0 0
  %1947 = vmatpush2.bf16.msra.mxu0 %v1539
  %1948 = vmatprep.subr.bf16.mxu0 0
  %1949 = vmatpush2.bf16.msra.mxu0 %v1538
  %1950 = vmatprep.subr.bf16.mxu0 0
  %1951 = vmatpush2.bf16.msra.mxu0 %v1537
  %1952 = vmatprep.subr.bf16.mxu0 0
  %1953 = vmatpush2.bf16.msra.mxu0 %v1536
  %1954 = vmatprep.subr.bf16.mxu0 0
  %1955 = vmatpush2.bf16.msra.mxu0 %v1535
  %1956 = vmatprep.subr.bf16.mxu0 0
  %1957 = vmatpush2.bf16.msra.mxu0 %v1534
  %1958 = vmatprep.mubr.bf16.mxu0 %v627
  %1959 = vmatmul.mubr.bf16.gmra.mxu0 %v626
  %v1960 = vpop.f32.mrf.mxu0
  %v1961 = vadd.f32 %v472, %v1960
  %v1962 = vpop.f32.mrf.mxu0
  %v1963 = vpop.f32.mrf.mxu0
  %v1964 = vadd.f32 %v472, %v1963
  %v1965 = vpop.f32.mrf.mxu0
  %1966 = vmatprep.mubr.bf16.mxu0 %v652
  %1967 = vmatmul.mubr.bf16.gmra.mxu0 %v651
  %v1968 = vpop.f32.mrf.mxu0
  %v1969 = vadd.f32 %v472, %v1968
  %v1970 = vpop.f32.mrf.mxu0
  %v1971 = vpop.f32.mrf.mxu0
  %v1972 = vadd.f32 %v472, %v1971
  %v1973 = vpop.f32.mrf.mxu0
  %1974 = vdwg.mxu0
  %1975 = vmatprep.subr.bf16.mxu0 0
  %1976 = vmatpush1.bf16.msra.mxu0 %v1549
  %1977 = vmatprep.subr.bf16.mxu0 0
  %1978 = vmatpush1.bf16.msra.mxu0 %v1548
  %1979 = vmatprep.subr.bf16.mxu0 0
  %1980 = vmatpush1.bf16.msra.mxu0 %v1547
  %1981 = vmatprep.subr.bf16.mxu0 0
  %1982 = vmatpush1.bf16.msra.mxu0 %v1546
  %1983 = vmatprep.subr.bf16.mxu0 0
  %1984 = vmatpush1.bf16.msra.mxu0 %v1545
  %1985 = vmatprep.subr.bf16.mxu0 0
  %1986 = vmatpush1.bf16.msra.mxu0 %v1544
  %1987 = vmatprep.subr.bf16.mxu0 0
  %1988 = vmatpush1.bf16.msra.mxu0 %v1543
  %1989 = vmatprep.subr.bf16.mxu0 0
  %1990 = vmatpush1.bf16.msra.mxu0 %v1542
  %1991 = vmatprep.subr.bf16.mxu0 0
  %1992 = vmatpush2.bf16.msra.mxu0 %v1557
  %1993 = vmatprep.subr.bf16.mxu0 0
  %1994 = vmatpush2.bf16.msra.mxu0 %v1556
  %1995 = vmatprep.subr.bf16.mxu0 0
  %1996 = vmatpush2.bf16.msra.mxu0 %v1555
  %1997 = vmatprep.subr.bf16.mxu0 0
  %1998 = vmatpush2.bf16.msra.mxu0 %v1554
  %1999 = vmatprep.subr.bf16.mxu0 0
  %2000 = vmatpush2.bf16.msra.mxu0 %v1553
  %2001 = vmatprep.subr.bf16.mxu0 0
  %2002 = vmatpush2.bf16.msra.mxu0 %v1552
  %2003 = vmatprep.subr.bf16.mxu0 0
  %2004 = vmatpush2.bf16.msra.mxu0 %v1551
  %2005 = vmatprep.subr.bf16.mxu0 0
  %2006 = vmatpush2.bf16.msra.mxu0 %v1550
  %2007 = vmatprep.mubr.bf16.mxu0 %v629
  %2008 = vmatmul.mubr.bf16.gmra.mxu0 %v628
  %v2009 = vpop.f32.mrf.mxu0
  %v2010 = vadd.f32 %v1961, %v2009
  %v2011 = vpop.f32.mrf.mxu0
  %v2012 = vpop.f32.mrf.mxu0
  %v2013 = vadd.f32 %v1964, %v2012
  %v2014 = vpop.f32.mrf.mxu0
  %2015 = vmatprep.mubr.bf16.mxu0 %v654
  %2016 = vmatmul.mubr.bf16.gmra.mxu0 %v653
  %v2017 = vpop.f32.mrf.mxu0
  %v2018 = vadd.f32 %v1969, %v2017
  %v2019 = vpop.f32.mrf.mxu0
  %v2020 = vpop.f32.mrf.mxu0
  %v2021 = vadd.f32 %v1972, %v2020
  %v2022 = vpop.f32.mrf.mxu0
  %2023 = vdwg.mxu0
  %2024 = vmatprep.subr.bf16.mxu0 0
  %2025 = vmatpush1.bf16.msra.mxu0 %v1565
  %2026 = vmatprep.subr.bf16.mxu0 0
  %2027 = vmatpush1.bf16.msra.mxu0 %v1564
  %2028 = vmatprep.subr.bf16.mxu0 0
  %2029 = vmatpush1.bf16.msra.mxu0 %v1563
  %2030 = vmatprep.subr.bf16.mxu0 0
  %2031 = vmatpush1.bf16.msra.mxu0 %v1562
  %2032 = vmatprep.subr.bf16.mxu0 0
  %2033 = vmatpush1.bf16.msra.mxu0 %v1561
  %2034 = vmatprep.subr.bf16.mxu0 0
  %2035 = vmatpush1.bf16.msra.mxu0 %v1560
  %2036 = vmatprep.subr.bf16.mxu0 0
  %2037 = vmatpush1.bf16.msra.mxu0 %v1559
  %2038 = vmatprep.subr.bf16.mxu0 0
  %2039 = vmatpush1.bf16.msra.mxu0 %v1558
  %2040 = vmatprep.subr.bf16.mxu0 0
  %2041 = vmatpush2.bf16.msra.mxu0 %v1573
  %2042 = vmatprep.subr.bf16.mxu0 0
  %2043 = vmatpush2.bf16.msra.mxu0 %v1572
  %2044 = vmatprep.subr.bf16.mxu0 0
  %2045 = vmatpush2.bf16.msra.mxu0 %v1571
  %2046 = vmatprep.subr.bf16.mxu0 0
  %2047 = vmatpush2.bf16.msra.mxu0 %v1570
  %2048 = vmatprep.subr.bf16.mxu0 0
  %2049 = vmatpush2.bf16.msra.mxu0 %v1569
  %2050 = vmatprep.subr.bf16.mxu0 0
  %2051 = vmatpush2.bf16.msra.mxu0 %v1568
  %2052 = vmatprep.subr.bf16.mxu0 0
  %2053 = vmatpush2.bf16.msra.mxu0 %v1567
  %2054 = vmatprep.subr.bf16.mxu0 0
  %2055 = vmatpush2.bf16.msra.mxu0 %v1566
  %2056 = vmatprep.mubr.bf16.mxu0 %v631
  %2057 = vmatmul.mubr.bf16.gmra.mxu0 %v630
  %v2058 = vpop.f32.mrf.mxu0
  %v2059 = vadd.f32 %v2010, %v2058
  %v2060 = vpop.f32.mrf.mxu0
  %v2061 = vpop.f32.mrf.mxu0
  %v2062 = vadd.f32 %v2013, %v2061
  %v2063 = vpop.f32.mrf.mxu0
  %2064 = vmatprep.mubr.bf16.mxu0 %v656
  %2065 = vmatmul.mubr.bf16.gmra.mxu0 %v655
  %v2066 = vpop.f32.mrf.mxu0
  %v2067 = vadd.f32 %v2018, %v2066
  %v2068 = vpop.f32.mrf.mxu0
  %v2069 = vpop.f32.mrf.mxu0
  %v2070 = vadd.f32 %v2021, %v2069
  %v2071 = vpop.f32.mrf.mxu0
  %2072 = vdwg.mxu0
  %2073 = vmatprep.subr.bf16.mxu0 0
  %2074 = vmatpush1.bf16.msra.mxu0 %v1581
  %2075 = vmatprep.subr.bf16.mxu0 0
  %2076 = vmatpush1.bf16.msra.mxu0 %v1580
  %2077 = vmatprep.subr.bf16.mxu0 0
  %2078 = vmatpush1.bf16.msra.mxu0 %v1579
  %2079 = vmatprep.subr.bf16.mxu0 0
  %2080 = vmatpush1.bf16.msra.mxu0 %v1578
  %2081 = vmatprep.subr.bf16.mxu0 0
  %2082 = vmatpush1.bf16.msra.mxu0 %v1577
  %2083 = vmatprep.subr.bf16.mxu0 0
  %2084 = vmatpush1.bf16.msra.mxu0 %v1576
  %2085 = vmatprep.subr.bf16.mxu0 0
  %2086 = vmatpush1.bf16.msra.mxu0 %v1575
  %2087 = vmatprep.subr.bf16.mxu0 0
  %2088 = vmatpush1.bf16.msra.mxu0 %v1574
  %2089 = vmatprep.subr.bf16.mxu0 0
  %2090 = vmatpush2.bf16.msra.mxu0 %v1589
  %2091 = vmatprep.subr.bf16.mxu0 0
  %2092 = vmatpush2.bf16.msra.mxu0 %v1588
  %2093 = vmatprep.subr.bf16.mxu0 0
  %2094 = vmatpush2.bf16.msra.mxu0 %v1587
  %2095 = vmatprep.subr.bf16.mxu0 0
  %2096 = vmatpush2.bf16.msra.mxu0 %v1586
  %2097 = vmatprep.subr.bf16.mxu0 0
  %2098 = vmatpush2.bf16.msra.mxu0 %v1585
  %2099 = vmatprep.subr.bf16.mxu0 0
  %2100 = vmatpush2.bf16.msra.mxu0 %v1584
  %2101 = vmatprep.subr.bf16.mxu0 0
  %2102 = vmatpush2.bf16.msra.mxu0 %v1583
  %2103 = vmatprep.subr.bf16.mxu0 0
  %2104 = vmatpush2.bf16.msra.mxu0 %v1582
  %2105 = vmatprep.mubr.bf16.mxu0 %v633
  %2106 = vmatmul.mubr.bf16.gmra.mxu0 %v632
  %v2107 = vpop.f32.mrf.mxu0
  %v2108 = vadd.f32 %v2059, %v2107
  %v2109 = vpop.f32.mrf.mxu0
  %v2110 = vpop.f32.mrf.mxu0
  %v2111 = vadd.f32 %v2062, %v2110
  %v2112 = vpop.f32.mrf.mxu0
  %2113 = vmatprep.mubr.bf16.mxu0 %v658
  %2114 = vmatmul.mubr.bf16.gmra.mxu0 %v657
  %v2115 = vpop.f32.mrf.mxu0
  %v2116 = vadd.f32 %v2067, %v2115
  %v2117 = vpop.f32.mrf.mxu0
  %v2118 = vpop.f32.mrf.mxu0
  %v2119 = vadd.f32 %v2070, %v2118
  %v2120 = vpop.f32.mrf.mxu0
  %2121 = vdwg.mxu0
  %2122 = vmatprep.subr.bf16.mxu0 0
  %2123 = vmatpush1.bf16.msra.mxu0 %v1597
  %2124 = vmatprep.subr.bf16.mxu0 0
  %2125 = vmatpush1.bf16.msra.mxu0 %v1596
  %2126 = vmatprep.subr.bf16.mxu0 0
  %2127 = vmatpush1.bf16.msra.mxu0 %v1595
  %2128 = vmatprep.subr.bf16.mxu0 0
  %2129 = vmatpush1.bf16.msra.mxu0 %v1594
  %2130 = vmatprep.subr.bf16.mxu0 0
  %2131 = vmatpush1.bf16.msra.mxu0 %v1593
  %2132 = vmatprep.subr.bf16.mxu0 0
  %2133 = vmatpush1.bf16.msra.mxu0 %v1592
  %2134 = vmatprep.subr.bf16.mxu0 0
  %2135 = vmatpush1.bf16.msra.mxu0 %v1591
  %2136 = vmatprep.subr.bf16.mxu0 0
  %2137 = vmatpush1.bf16.msra.mxu0 %v1590
  %2138 = vmatprep.subr.bf16.mxu0 0
  %2139 = vmatpush2.bf16.msra.mxu0 %v1605
  %2140 = vmatprep.subr.bf16.mxu0 0
  %2141 = vmatpush2.bf16.msra.mxu0 %v1604
  %2142 = vmatprep.subr.bf16.mxu0 0
  %2143 = vmatpush2.bf16.msra.mxu0 %v1603
  %2144 = vmatprep.subr.bf16.mxu0 0
  %2145 = vmatpush2.bf16.msra.mxu0 %v1602
  %2146 = vmatprep.subr.bf16.mxu0 0
  %2147 = vmatpush2.bf16.msra.mxu0 %v1601
  %2148 = vmatprep.subr.bf16.mxu0 0
  %2149 = vmatpush2.bf16.msra.mxu0 %v1600
  %2150 = vmatprep.subr.bf16.mxu0 0
  %2151 = vmatpush2.bf16.msra.mxu0 %v1599
  %2152 = vmatprep.subr.bf16.mxu0 0
  %2153 = vmatpush2.bf16.msra.mxu0 %v1598
  %2154 = vmatprep.mubr.bf16.mxu0 %v635
  %2155 = vmatmul.mubr.bf16.gmra.mxu0 %v634
  %v2156 = vpop.f32.mrf.mxu0
  %v2157 = vadd.f32 %v2108, %v2156
  %v2158 = vpop.f32.mrf.mxu0
  %v2159 = vpop.f32.mrf.mxu0
  %v2160 = vadd.f32 %v2111, %v2159
  %v2161 = vpop.f32.mrf.mxu0
  %2162 = vmatprep.mubr.bf16.mxu0 %v660
  %2163 = vmatmul.mubr.bf16.gmra.mxu0 %v659
  %v2164 = vpop.f32.mrf.mxu0
  %v2165 = vadd.f32 %v2116, %v2164
  %v2166 = vpop.f32.mrf.mxu0
  %v2167 = vpop.f32.mrf.mxu0
  %v2168 = vadd.f32 %v2119, %v2167
  %v2169 = vpop.f32.mrf.mxu0
  %2170 = vdwg.mxu0
  %2171 = vmatprep.subr.bf16.mxu0 0
  %2172 = vmatpush1.bf16.msra.mxu0 %v1613
  %2173 = vmatprep.subr.bf16.mxu0 0
  %2174 = vmatpush1.bf16.msra.mxu0 %v1612
  %2175 = vmatprep.subr.bf16.mxu0 0
  %2176 = vmatpush1.bf16.msra.mxu0 %v1611
  %2177 = vmatprep.subr.bf16.mxu0 0
  %2178 = vmatpush1.bf16.msra.mxu0 %v1610
  %2179 = vmatprep.subr.bf16.mxu0 0
  %2180 = vmatpush1.bf16.msra.mxu0 %v1609
  %2181 = vmatprep.subr.bf16.mxu0 0
  %2182 = vmatpush1.bf16.msra.mxu0 %v1608
  %2183 = vmatprep.subr.bf16.mxu0 0
  %2184 = vmatpush1.bf16.msra.mxu0 %v1607
  %2185 = vmatprep.subr.bf16.mxu0 0
  %2186 = vmatpush1.bf16.msra.mxu0 %v1606
  %2187 = vmatprep.subr.bf16.mxu0 0
  %2188 = vmatpush2.bf16.msra.mxu0 %v1621
  %2189 = vmatprep.subr.bf16.mxu0 0
  %2190 = vmatpush2.bf16.msra.mxu0 %v1620
  %2191 = vmatprep.subr.bf16.mxu0 0
  %2192 = vmatpush2.bf16.msra.mxu0 %v1619
  %2193 = vmatprep.subr.bf16.mxu0 0
  %2194 = vmatpush2.bf16.msra.mxu0 %v1618
  %2195 = vmatprep.subr.bf16.mxu0 0
  %2196 = vmatpush2.bf16.msra.mxu0 %v1617
  %2197 = vmatprep.subr.bf16.mxu0 0
  %2198 = vmatpush2.bf16.msra.mxu0 %v1616
  %2199 = vmatprep.subr.bf16.mxu0 0
  %2200 = vmatpush2.bf16.msra.mxu0 %v1615
  %2201 = vmatprep.subr.bf16.mxu0 0
  %2202 = vmatpush2.bf16.msra.mxu0 %v1614
  %2203 = vmatprep.mubr.bf16.mxu0 %v637
  %2204 = vmatmul.mubr.bf16.gmra.mxu0 %v636
  %v2205 = vpop.f32.mrf.mxu0
  %v2206 = vadd.f32 %v2157, %v2205
  %v2207 = vpop.f32.mrf.mxu0
  %v2208 = vpop.f32.mrf.mxu0
  %v2209 = vadd.f32 %v2160, %v2208
  %v2210 = vpop.f32.mrf.mxu0
  %2211 = vmatprep.mubr.bf16.mxu0 %v662
  %2212 = vmatmul.mubr.bf16.gmra.mxu0 %v661
  %v2213 = vpop.f32.mrf.mxu0
  %v2214 = vadd.f32 %v2165, %v2213
  %v2215 = vpop.f32.mrf.mxu0
  %v2216 = vpop.f32.mrf.mxu0
  %v2217 = vadd.f32 %v2168, %v2216
  %v2218 = vpop.f32.mrf.mxu0
  %2219 = vdwg.mxu0
  %2220 = vmatprep.subr.bf16.mxu0 0
  %2221 = vmatpush1.bf16.msra.mxu0 %v1629
  %2222 = vmatprep.subr.bf16.mxu0 0
  %2223 = vmatpush1.bf16.msra.mxu0 %v1628
  %2224 = vmatprep.subr.bf16.mxu0 0
  %2225 = vmatpush1.bf16.msra.mxu0 %v1627
  %2226 = vmatprep.subr.bf16.mxu0 0
  %2227 = vmatpush1.bf16.msra.mxu0 %v1626
  %2228 = vmatprep.subr.bf16.mxu0 0
  %2229 = vmatpush1.bf16.msra.mxu0 %v1625
  %2230 = vmatprep.subr.bf16.mxu0 0
  %2231 = vmatpush1.bf16.msra.mxu0 %v1624
  %2232 = vmatprep.subr.bf16.mxu0 0
  %2233 = vmatpush1.bf16.msra.mxu0 %v1623
  %2234 = vmatprep.subr.bf16.mxu0 0
  %2235 = vmatpush1.bf16.msra.mxu0 %v1622
  %2236 = vmatprep.subr.bf16.mxu0 0
  %2237 = vmatpush2.bf16.msra.mxu0 %v1637
  %2238 = vmatprep.subr.bf16.mxu0 0
  %2239 = vmatpush2.bf16.msra.mxu0 %v1636
  %2240 = vmatprep.subr.bf16.mxu0 0
  %2241 = vmatpush2.bf16.msra.mxu0 %v1635
  %2242 = vmatprep.subr.bf16.mxu0 0
  %2243 = vmatpush2.bf16.msra.mxu0 %v1634
  %2244 = vmatprep.subr.bf16.mxu0 0
  %2245 = vmatpush2.bf16.msra.mxu0 %v1633
  %2246 = vmatprep.subr.bf16.mxu0 0
  %2247 = vmatpush2.bf16.msra.mxu0 %v1632
  %2248 = vmatprep.subr.bf16.mxu0 0
  %2249 = vmatpush2.bf16.msra.mxu0 %v1631
  %2250 = vmatprep.subr.bf16.mxu0 0
  %2251 = vmatpush2.bf16.msra.mxu0 %v1630
  %2252 = vmatprep.mubr.bf16.mxu0 %v639
  %2253 = vmatmul.mubr.bf16.gmra.mxu0 %v638
  %v2254 = vpop.f32.mrf.mxu0
  %v2255 = vadd.f32 %v2206, %v2254
  %v2256 = vpop.f32.mrf.mxu0
  %v2257 = vpop.f32.mrf.mxu0
  %v2258 = vadd.f32 %v2209, %v2257
  %v2259 = vpop.f32.mrf.mxu0
  %2260 = vmatprep.mubr.bf16.mxu0 %v664
  %2261 = vmatmul.mubr.bf16.gmra.mxu0 %v663
  %v2262 = vpop.f32.mrf.mxu0
  %v2263 = vadd.f32 %v2214, %v2262
  %v2264 = vpop.f32.mrf.mxu0
  %v2265 = vpop.f32.mrf.mxu0
  %v2266 = vadd.f32 %v2217, %v2265
  %v2267 = vpop.f32.mrf.mxu0
  %2268 = vdwg.mxu0
  %2269 = vmatprep.subr.bf16.mxu0 0
  %2270 = vmatpush1.bf16.msra.mxu0 %v1645
  %2271 = vmatprep.subr.bf16.mxu0 0
  %2272 = vmatpush1.bf16.msra.mxu0 %v1644
  %2273 = vmatprep.subr.bf16.mxu0 0
  %2274 = vmatpush1.bf16.msra.mxu0 %v1643
  %2275 = vmatprep.subr.bf16.mxu0 0
  %2276 = vmatpush1.bf16.msra.mxu0 %v1642
  %2277 = vmatprep.subr.bf16.mxu0 0
  %2278 = vmatpush1.bf16.msra.mxu0 %v1641
  %2279 = vmatprep.subr.bf16.mxu0 0
  %2280 = vmatpush1.bf16.msra.mxu0 %v1640
  %2281 = vmatprep.subr.bf16.mxu0 0
  %2282 = vmatpush1.bf16.msra.mxu0 %v1639
  %2283 = vmatprep.subr.bf16.mxu0 0
  %2284 = vmatpush1.bf16.msra.mxu0 %v1638
  %2285 = vmatprep.subr.bf16.mxu0 0
  %2286 = vmatpush2.bf16.msra.mxu0 %v1653
  %2287 = vmatprep.subr.bf16.mxu0 0
  %2288 = vmatpush2.bf16.msra.mxu0 %v1652
  %2289 = vmatprep.subr.bf16.mxu0 0
  %2290 = vmatpush2.bf16.msra.mxu0 %v1651
  %2291 = vmatprep.subr.bf16.mxu0 0
  %2292 = vmatpush2.bf16.msra.mxu0 %v1650
  %2293 = vmatprep.subr.bf16.mxu0 0
  %2294 = vmatpush2.bf16.msra.mxu0 %v1649
  %2295 = vmatprep.subr.bf16.mxu0 0
  %2296 = vmatpush2.bf16.msra.mxu0 %v1648
  %2297 = vmatprep.subr.bf16.mxu0 0
  %2298 = vmatpush2.bf16.msra.mxu0 %v1647
  %2299 = vmatprep.subr.bf16.mxu0 0
  %2300 = vmatpush2.bf16.msra.mxu0 %v1646
  %2301 = vmatprep.mubr.bf16.mxu0 %v641
  %2302 = vmatmul.mubr.bf16.gmra.mxu0 %v640
  %v2303 = vpop.f32.mrf.mxu0
  %v2304 = vadd.f32 %v2255, %v2303
  %v2305 = vpop.f32.mrf.mxu0
  %v2306 = vpop.f32.mrf.mxu0
  %v2307 = vadd.f32 %v2258, %v2306
  %v2308 = vpop.f32.mrf.mxu0
  %2309 = vmatprep.mubr.bf16.mxu0 %v666
  %2310 = vmatmul.mubr.bf16.gmra.mxu0 %v665
  %v2311 = vpop.f32.mrf.mxu0
  %v2312 = vadd.f32 %v2263, %v2311
  %v2313 = vpop.f32.mrf.mxu0
  %v2314 = vpop.f32.mrf.mxu0
  %v2315 = vadd.f32 %v2266, %v2314
  %v2316 = vpop.f32.mrf.mxu0
  %2317 = vdwg.mxu0
  %2318 = vmatprep.subr.bf16.mxu0 0
  %2319 = vmatpush1.bf16.msra.mxu0 %v1661
  %2320 = vmatprep.subr.bf16.mxu0 0
  %2321 = vmatpush1.bf16.msra.mxu0 %v1660
  %2322 = vmatprep.subr.bf16.mxu0 0
  %2323 = vmatpush1.bf16.msra.mxu0 %v1659
  %2324 = vmatprep.subr.bf16.mxu0 0
  %2325 = vmatpush1.bf16.msra.mxu0 %v1658
  %2326 = vmatprep.subr.bf16.mxu0 0
  %2327 = vmatpush1.bf16.msra.mxu0 %v1657
  %2328 = vmatprep.subr.bf16.mxu0 0
  %2329 = vmatpush1.bf16.msra.mxu0 %v1656
  %2330 = vmatprep.subr.bf16.mxu0 0
  %2331 = vmatpush1.bf16.msra.mxu0 %v1655
  %2332 = vmatprep.subr.bf16.mxu0 0
  %2333 = vmatpush1.bf16.msra.mxu0 %v1654
  %2334 = vmatprep.subr.bf16.mxu0 0
  %2335 = vmatpush2.bf16.msra.mxu0 %v1669
  %2336 = vmatprep.subr.bf16.mxu0 0
  %2337 = vmatpush2.bf16.msra.mxu0 %v1668
  %2338 = vmatprep.subr.bf16.mxu0 0
  %2339 = vmatpush2.bf16.msra.mxu0 %v1667
  %2340 = vmatprep.subr.bf16.mxu0 0
  %2341 = vmatpush2.bf16.msra.mxu0 %v1666
  %2342 = vmatprep.subr.bf16.mxu0 0
  %2343 = vmatpush2.bf16.msra.mxu0 %v1665
  %2344 = vmatprep.subr.bf16.mxu0 0
  %2345 = vmatpush2.bf16.msra.mxu0 %v1664
  %2346 = vmatprep.subr.bf16.mxu0 0
  %2347 = vmatpush2.bf16.msra.mxu0 %v1663
  %2348 = vmatprep.subr.bf16.mxu0 0
  %2349 = vmatpush2.bf16.msra.mxu0 %v1662
  %2350 = vmatprep.mubr.bf16.mxu0 %v643
  %2351 = vmatmul.mubr.bf16.gmra.mxu0 %v642
  %v2352 = vpop.f32.mrf.mxu0
  %v2353 = vadd.f32 %v2304, %v2352
  %v2354 = vpop.f32.mrf.mxu0
  %v2355 = vpop.f32.mrf.mxu0
  %v2356 = vadd.f32 %v2307, %v2355
  %v2357 = vpop.f32.mrf.mxu0
  %2358 = vmatprep.mubr.bf16.mxu0 %v668
  %2359 = vmatmul.mubr.bf16.gmra.mxu0 %v667
  %v2360 = vpop.f32.mrf.mxu0
  %v2361 = vadd.f32 %v2312, %v2360
  %v2362 = vpop.f32.mrf.mxu0
  %v2363 = vpop.f32.mrf.mxu0
  %v2364 = vadd.f32 %v2315, %v2363
  %v2365 = vpop.f32.mrf.mxu0
  %2366 = vdwg.mxu0
  %2367 = vmatprep.subr.bf16.mxu0 0
  %2368 = vmatpush1.bf16.msra.mxu0 %v1677
  %2369 = vmatprep.subr.bf16.mxu0 0
  %2370 = vmatpush1.bf16.msra.mxu0 %v1676
  %2371 = vmatprep.subr.bf16.mxu0 0
  %2372 = vmatpush1.bf16.msra.mxu0 %v1675
  %2373 = vmatprep.subr.bf16.mxu0 0
  %2374 = vmatpush1.bf16.msra.mxu0 %v1674
  %2375 = vmatprep.subr.bf16.mxu0 0
  %2376 = vmatpush1.bf16.msra.mxu0 %v1673
  %2377 = vmatprep.subr.bf16.mxu0 0
  %2378 = vmatpush1.bf16.msra.mxu0 %v1672
  %2379 = vmatprep.subr.bf16.mxu0 0
  %2380 = vmatpush1.bf16.msra.mxu0 %v1671
  %2381 = vmatprep.subr.bf16.mxu0 0
  %2382 = vmatpush1.bf16.msra.mxu0 %v1670
  %2383 = vmatprep.subr.bf16.mxu0 0
  %2384 = vmatpush2.bf16.msra.mxu0 %v1685
  %2385 = vmatprep.subr.bf16.mxu0 0
  %2386 = vmatpush2.bf16.msra.mxu0 %v1684
  %2387 = vmatprep.subr.bf16.mxu0 0
  %2388 = vmatpush2.bf16.msra.mxu0 %v1683
  %2389 = vmatprep.subr.bf16.mxu0 0
  %2390 = vmatpush2.bf16.msra.mxu0 %v1682
  %2391 = vmatprep.subr.bf16.mxu0 0
  %2392 = vmatpush2.bf16.msra.mxu0 %v1681
  %2393 = vmatprep.subr.bf16.mxu0 0
  %2394 = vmatpush2.bf16.msra.mxu0 %v1680
  %2395 = vmatprep.subr.bf16.mxu0 0
  %2396 = vmatpush2.bf16.msra.mxu0 %v1679
  %2397 = vmatprep.subr.bf16.mxu0 0
  %2398 = vmatpush2.bf16.msra.mxu0 %v1678
  %2399 = vmatprep.mubr.bf16.mxu0 %v645
  %2400 = vmatmul.mubr.bf16.gmra.mxu0 %v644
  %v2401 = vpop.f32.mrf.mxu0
  %v2402 = vadd.f32 %v2353, %v2401
  %v2403 = vpop.f32.mrf.mxu0
  %v2404 = vpop.f32.mrf.mxu0
  %v2405 = vadd.f32 %v2356, %v2404
  %v2406 = vpop.f32.mrf.mxu0
  %2407 = vmatprep.mubr.bf16.mxu0 %v670
  %2408 = vmatmul.mubr.bf16.gmra.mxu0 %v669
  %v2409 = vpop.f32.mrf.mxu0
  %v2410 = vadd.f32 %v2361, %v2409
  %v2411 = vpop.f32.mrf.mxu0
  %v2412 = vpop.f32.mrf.mxu0
  %v2413 = vadd.f32 %v2364, %v2412
  %v2414 = vpop.f32.mrf.mxu0
  %2415 = vdwg.mxu0
  %2416 = vmatprep.subr.bf16.mxu0 0
  %2417 = vmatpush1.bf16.msra.mxu0 %v1693
  %2418 = vmatprep.subr.bf16.mxu0 0
  %2419 = vmatpush1.bf16.msra.mxu0 %v1692
  %2420 = vmatprep.subr.bf16.mxu0 0
  %2421 = vmatpush1.bf16.msra.mxu0 %v1691
  %2422 = vmatprep.subr.bf16.mxu0 0
  %2423 = vmatpush1.bf16.msra.mxu0 %v1690
  %2424 = vmatprep.subr.bf16.mxu0 0
  %2425 = vmatpush1.bf16.msra.mxu0 %v1689
  %2426 = vmatprep.subr.bf16.mxu0 0
  %2427 = vmatpush1.bf16.msra.mxu0 %v1688
  %2428 = vmatprep.subr.bf16.mxu0 0
  %2429 = vmatpush1.bf16.msra.mxu0 %v1687
  %2430 = vmatprep.subr.bf16.mxu0 0
  %2431 = vmatpush1.bf16.msra.mxu0 %v1686
  %2432 = vmatprep.subr.bf16.mxu0 0
  %2433 = vmatpush2.bf16.msra.mxu0 %v1701
  %2434 = vmatprep.subr.bf16.mxu0 0
  %2435 = vmatpush2.bf16.msra.mxu0 %v1700
  %2436 = vmatprep.subr.bf16.mxu0 0
  %2437 = vmatpush2.bf16.msra.mxu0 %v1699
  %2438 = vmatprep.subr.bf16.mxu0 0
  %2439 = vmatpush2.bf16.msra.mxu0 %v1698
  %2440 = vmatprep.subr.bf16.mxu0 0
  %2441 = vmatpush2.bf16.msra.mxu0 %v1697
  %2442 = vmatprep.subr.bf16.mxu0 0
  %2443 = vmatpush2.bf16.msra.mxu0 %v1696
  %2444 = vmatprep.subr.bf16.mxu0 0
  %2445 = vmatpush2.bf16.msra.mxu0 %v1695
  %2446 = vmatprep.subr.bf16.mxu0 0
  %2447 = vmatpush2.bf16.msra.mxu0 %v1694
  %2448 = vmatprep.mubr.bf16.mxu0 %v647
  %2449 = vmatmul.mubr.bf16.gmra.mxu0 %v646
  %v2450 = vpop.f32.mrf.mxu0
  %v2451 = vadd.f32 %v2402, %v2450
  %v2452 = vpop.f32.mrf.mxu0
  %v2453 = vpop.f32.mrf.mxu0
  %v2454 = vadd.f32 %v2405, %v2453
  %v2455 = vpop.f32.mrf.mxu0
  %2456 = vmatprep.mubr.bf16.mxu0 %v672
  %2457 = vmatmul.mubr.bf16.gmra.mxu0 %v671
  %v2458 = vpop.f32.mrf.mxu0
  %v2459 = vadd.f32 %v2410, %v2458
  %v2460 = vpop.f32.mrf.mxu0
  %v2461 = vpop.f32.mrf.mxu0
  %v2462 = vadd.f32 %v2413, %v2461
  %v2463 = vpop.f32.mrf.mxu0
  %2464 = vdwg.mxu0
  %2465 = vmatprep.subr.bf16.mxu0 0
  %2466 = vmatpush1.bf16.msra.mxu0 %v1709
  %2467 = vmatprep.subr.bf16.mxu0 0
  %2468 = vmatpush1.bf16.msra.mxu0 %v1708
  %2469 = vmatprep.subr.bf16.mxu0 0
  %2470 = vmatpush1.bf16.msra.mxu0 %v1707
  %2471 = vmatprep.subr.bf16.mxu0 0
  %2472 = vmatpush1.bf16.msra.mxu0 %v1706
  %2473 = vmatprep.subr.bf16.mxu0 0
  %2474 = vmatpush1.bf16.msra.mxu0 %v1705
  %2475 = vmatprep.subr.bf16.mxu0 0
  %2476 = vmatpush1.bf16.msra.mxu0 %v1704
  %2477 = vmatprep.subr.bf16.mxu0 0
  %2478 = vmatpush1.bf16.msra.mxu0 %v1703
  %2479 = vmatprep.subr.bf16.mxu0 0
  %2480 = vmatpush1.bf16.msra.mxu0 %v1702
  %2481 = vmatprep.subr.bf16.mxu0 0
  %2482 = vmatpush2.bf16.msra.mxu0 %v1717
  %2483 = vmatprep.subr.bf16.mxu0 0
  %2484 = vmatpush2.bf16.msra.mxu0 %v1716
  %2485 = vmatprep.subr.bf16.mxu0 0
  %2486 = vmatpush2.bf16.msra.mxu0 %v1715
  %2487 = vmatprep.subr.bf16.mxu0 0
  %2488 = vmatpush2.bf16.msra.mxu0 %v1714
  %2489 = vmatprep.subr.bf16.mxu0 0
  %2490 = vmatpush2.bf16.msra.mxu0 %v1713
  %2491 = vmatprep.subr.bf16.mxu0 0
  %2492 = vmatpush2.bf16.msra.mxu0 %v1712
  %2493 = vmatprep.subr.bf16.mxu0 0
  %2494 = vmatpush2.bf16.msra.mxu0 %v1711
  %2495 = vmatprep.subr.bf16.mxu0 0
  %2496 = vmatpush2.bf16.msra.mxu0 %v1710
  %2497 = vmatprep.mubr.bf16.mxu0 %v649
  %2498 = vmatmul.mubr.bf16.gmra.mxu0 %v648
  %v2499 = vpop.f32.mrf.mxu0
  %v2500 = vadd.f32 %v2451, %v2499
  %v2501 = vpop.f32.mrf.mxu0
  %v2502 = vpop.f32.mrf.mxu0
  %v2503 = vadd.f32 %v2454, %v2502
  %v2504 = vpop.f32.mrf.mxu0
  %2505 = vmatprep.mubr.bf16.mxu0 %v674
  %2506 = vmatmul.mubr.bf16.gmra.mxu0 %v673
  %v2507 = vpop.f32.mrf.mxu0
  %v2508 = vadd.f32 %v2459, %v2507
  %v2509 = vpop.f32.mrf.mxu0
  %v2510 = vpop.f32.mrf.mxu0
  %v2511 = vadd.f32 %v2462, %v2510
  %v2512 = vpop.f32.mrf.mxu0
  %2513 = vdwg.mxu0
  %2514 = vmatprep.subr.bf16.mxu0 0
  %2515 = vmatpush1.bf16.msra.mxu0 %v1725
  %2516 = vmatprep.subr.bf16.mxu0 0
  %2517 = vmatpush1.bf16.msra.mxu0 %v1724
  %2518 = vmatprep.subr.bf16.mxu0 0
  %2519 = vmatpush1.bf16.msra.mxu0 %v1723
  %2520 = vmatprep.subr.bf16.mxu0 0
  %2521 = vmatpush1.bf16.msra.mxu0 %v1722
  %2522 = vmatprep.subr.bf16.mxu0 0
  %2523 = vmatpush1.bf16.msra.mxu0 %v1721
  %2524 = vmatprep.subr.bf16.mxu0 0
  %2525 = vmatpush1.bf16.msra.mxu0 %v1720
  %2526 = vmatprep.subr.bf16.mxu0 0
  %2527 = vmatpush1.bf16.msra.mxu0 %v1719
  %2528 = vmatprep.subr.bf16.mxu0 0
  %2529 = vmatpush1.bf16.msra.mxu0 %v1718
  %2530 = vmatprep.subr.bf16.mxu0 0
  %2531 = vmatpush2.bf16.msra.mxu0 0
  %2532 = vmatprep.subr.bf16.mxu0 0
  %2533 = vmatpush2.bf16.msra.mxu0 0
  %2534 = vmatprep.subr.bf16.mxu0 0
  %2535 = vmatpush2.bf16.msra.mxu0 0
  %2536 = vmatprep.subr.bf16.mxu0 0
  %2537 = vmatpush2.bf16.msra.mxu0 0
  %2538 = vmatprep.subr.bf16.mxu0 0
  %2539 = vmatpush2.bf16.msra.mxu0 0
  %2540 = vmatprep.subr.bf16.mxu0 0
  %2541 = vmatpush2.bf16.msra.mxu0 0
  %2542 = vmatprep.subr.bf16.mxu0 0
  %2543 = vmatpush2.bf16.msra.mxu0 0
  %2544 = vmatprep.subr.bf16.mxu0 0
  %2545 = vmatpush2.bf16.msra.mxu0 0
  %2546 = vmatprep.mubr.bf16.mxu0 0
  %2547 = vmatmul.mubr.bf16.gmra.mxu0 %v650
  %v2548 = vpop.f32.mrf.mxu0
  %v2549 = vadd.f32 %v2500, %v2548
  %v2550 = vpop.f32.mrf.mxu0
  %v2551 = vpop.f32.mrf.mxu0
  %v2552 = vadd.f32 %v2503, %v2551
  %v2553 = vpop.f32.mrf.mxu0
  %2554 = vmatprep.mubr.bf16.mxu0 0
  %2555 = vmatmul.mubr.bf16.gmra.mxu0 %v675
  %v2556 = vpop.f32.mrf.mxu0
  %v2557 = vadd.f32 %v2508, %v2556
  %v2558 = vpop.f32.mrf.mxu0
  %v2559 = vpop.f32.mrf.mxu0
  %v2560 = vadd.f32 %v2511, %v2559
  %v2561 = vpop.f32.mrf.mxu0
  %2562 = vdwg.mxu0
  %v2563 = vmax.f32 %v2549, 0.0
  %v2564 = vmax.f32 %v2552, 0.0
  %v2565 = vmax.f32 %v2557, 0.0
  %v2566 = vmax.f32 %v2560, 0.0
  %v2567 = vpack.c.bf16 %v2564, %v2563
  %v2568 = vpack.c.bf16 %v2566, %v2565
  %v2571 = vunpack.c.l.b16 %v2567
  %v2572 = vunpack.c.h.b16 %v2567
  %v2573 = vunpack.c.l.b16 %v2568
  %v2574 = vunpack.c.h.b16 %v2568
  %v2575 = vpack.c.b16 %v2571, %v2571
  %v2576 = vpack.c.b16 %v2572, %v2572
  %v2577 = vpack.c.b16 %v2573, %v2573
  %v2578 = vpack.c.b16 %v2574, %v2574
  %2583 = vst [vmem:[%s3] sm:$0xf] %v2575
  %2584 = vst [vmem:[%s3 + $0x4] sm:$0xf] %v2576
  %2585 = vst [vmem:[%s3 + $0x8] sm:$0xf] %v2577
  %2586 = vst [vmem:[%s3 + $0xc] sm:$0x3] %v2578
  // Predicated region
  $region14: #{dqn_forward.6} parent=0 // pred_check
    _
  $region15: #{dqn_forward.6} parent=0 // pred_check_branch
    %2588 = sbr.rel (0) target = $region17
  $region16: #{dqn_forward.6} parent=0 // pred_region
    _
  $region17: #{dqn_forward.6} parent=0 // pred_fallthru
    _
  // Predicated region
  $region18: #{dqn_forward.6} parent=0 // pred_check
    _
  $region19: #{dqn_forward.6} parent=0 // pred_check_branch
    %2590 = sbr.rel (0) target = $region21
  $region20: #{dqn_forward.6} parent=0 // pred_region
    _
  $region21: #{dqn_forward.6} parent=0 // pred_fallthru
    _

</llo_original>
